<compile_context>
chip_gen: v5e
topology: v5e:2x2
jax: 0.10.0
libtpu: 0.0.40
codegen_flags: <defaults>
</compile_context>

<pallas_src>
import functools

import jax
import jax.numpy as jnp
from jax.experimental import pallas as pl
from jax.experimental.pallas import tpu as pltpu


# ----------------------------------------------------------------------------
# Model configuration (mirrors __init__ of ResTCNDrivingGlobal)
# ----------------------------------------------------------------------------

OBSERVE_LENGTH = 8
PREDICT_LENGTH = 2
OUTPUT_DIM = 2

CNN_FC_HIDDEN1 = 1024
CNN_FC_HIDDEN2 = 768
CNN_EMBED_DIM = 512

TCN_ENC_IN_DIM = 0          # enc_in_dim=0 so the TCN input dim matches forward()
TCN_DEC_OUT_DIM = 128
TCN_N_LAYERS = 2
TCN_KERNEL_SIZE = 3
BN_EPS = 1e-5

FEAT_C, FEAT_H, FEAT_W = 64, 4, 4   # synthetic frozen-backbone featmap dims


# ----------------------------------------------------------------------------
# Pallas kernels
# ----------------------------------------------------------------------------

def _mish(y):
    # numerically-stable softplus, then mish(y) = y * tanh(softplus(y))
    sp = jnp.log1p(jnp.exp(-jnp.abs(y))) + jnp.maximum(y, 0.0)
    return y * jnp.tanh(sp)


def _mlp3_kernel(x_ref, w1_ref, b1_ref, w2_ref, b2_ref, w3_ref, b3_ref, o_ref, *, act):
    """Fused 3-layer MLP: (linear + folded-eval-BN + activation) x2 -> linear.

    Weights are bf16, accumulation f32; intermediates never leave VMEM.
    """
    def lin(h, w_ref, b_ref):
        return jnp.dot(h.astype(w_ref.dtype), w_ref[...],
                       preferred_element_type=jnp.float32) + b_ref[...]

    h = x_ref[...].astype(jnp.float32)
    h = lin(h, w1_ref, b1_ref)
    h = jnp.maximum(h, 0.0) if act == "relu" else _mish(h)
    h = lin(h, w2_ref, b2_ref)
    h = jnp.maximum(h, 0.0) if act == "relu" else _mish(h)
    h = lin(h, w3_ref, b3_ref)
    o_ref[...] = h.astype(o_ref.dtype)


def _shift_rows(h, shift, B, T):
    """h: (B*T, C) batch-major. Returns hs with hs[b*T+t] = h[b*T+t-shift] (0 if t<shift).

    Implements the causal left zero-padding (Conv1d pad + Chomp1d) in-kernel.
    """
    if shift == 0:
        return h
    C = h.shape[-1]
    z = jnp.zeros((shift, C), h.dtype)
    parts = []
    for b in range(B):                       # static unroll (B is tiny)
        parts.append(z)
        parts.append(h[b * T:(b + 1) * T - shift, :])
    return jnp.concatenate(parts, axis=0)


def _causal_conv(h, w_ref, b_ref, dilation, B, T, K, relu):
    """Dilated causal Conv1d with batch folded into the matmul M dimension.

    h: (B*T, Cin) f32; w_ref: (K, Cin, Cout) bf16; b_ref: (1, Cout) f32.
    """
    Cout = w_ref.shape[-1]
    acc = jnp.zeros((B * T, Cout), jnp.float32)
    for j in range(K):                       # static unroll over kernel taps
        shift = (K - 1 - j) * dilation
        xs = _shift_rows(h, shift, B, T)
        acc = acc + jnp.dot(xs.astype(w_ref.dtype), w_ref[j],
                            preferred_element_type=jnp.float32)
    acc = acc + b_ref[...]
    if relu:
        acc = jnp.maximum(acc, 0.0)
    return acc


def _tcn_tower_kernel(x_ref, *refs, B, T, K, layer_has_down, dilations):
    """One full TemporalConvNet tower (all TemporalBlocks) for the whole batch.

    Grid axis 0 selects the tower (0 = speed, 1 = dir) via the weight BlockSpecs.
    The output block (B, C, T) is written channel-major (an in-kernel transpose),
    matching the PyTorch (B, C, T) layout before .reshape(-1, C*T).
    """
    o_ref = refs[-1]
    wrefs = refs[:-1]
    h = x_ref[...].astype(jnp.float32)               # (B*T, Cin0)
    idx = 0
    for has_down, dil in zip(layer_has_down, dilations):
        w1, b1, w2, b2 = wrefs[idx:idx + 4]
        idx += 4
        a = _causal_conv(h, w1, b1, dil, B, T, K, relu=True)
        a = _causal_conv(a, w2, b2, dil, B, T, K, relu=True)
        if has_down:                                  # 1x1 downsample on residual path
            wd, bd = wrefs[idx:idx + 2]
            idx += 2
            res = jnp.dot(h.astype(wd.dtype), wd[...],
                          preferred_element_type=jnp.float32) + bd[...]
        else:
            res = h
        h = jnp.maximum(a + res, 0.0)                 # TemporalBlock epilogue
    # channel-major store: per batch element transpose (T, C) -> (C, T)
    for b in range(B):
        o_ref[b] = jnp.transpose(h[b * T:(b + 1) * T, :]).astype(o_ref.dtype)


# ----------------------------------------------------------------------------
# Pallas wrappers
# ----------------------------------------------------------------------------

def _full_spec(a):
    return pl.BlockSpec(a.shape, lambda i, nd=a.ndim: (0,) * nd)


def pallas_mlp3(x, w1, b1, w2, b2, w3, b3, act):
    """One fused pallas_call for a 3-layer MLP head."""
    M = x.shape[0]
    N = w3.shape[-1]
    args = (x, w1, b1, w2, b2, w3, b3)
    kernel = functools.partial(_mlp3_kernel, act=act)
    return pl.pallas_call(
        kernel,
        out_shape=jax.ShapeDtypeStruct((M, N), jnp.float32),
        grid=(1,),
        in_specs=[_full_spec(a) for a in args],
        out_specs=pl.BlockSpec((M, N), lambda i: (0, 0)),
    )(*args)


def pallas_dual_tcn(x2d, layers, B, T):
    """Both TCN towers in one pallas_call.

    x2d: (B*T, Cin) visual features (batch-major).
    returns (2B, C, T): rows [0:B] = speed tower, rows [B:2B] = dir tower.
    """
    K = TCN_KERNEL_SIZE
    C = TCN_DEC_OUT_DIM

    in_arrays = [x2d]
    in_specs = [pl.BlockSpec(x2d.shape, lambda g: (0, 0))]

    def add_tower_param(a):
        # leading dim (size 2) indexes the tower; squeeze it out of the kernel ref
        in_arrays.append(a)
        in_specs.append(pl.BlockSpec(
            (None,) + a.shape[1:],
            lambda g, nd=a.ndim: (g,) + (0,) * (nd - 1)))

    layer_has_down, dilations = [], []
    for li, L in enumerate(layers):
        dilations.append(2 ** li)
        layer_has_down.append("d_w" in L)
        add_tower_param(L["c1_w"])
        add_tower_param(L["c1_b"])
        add_tower_param(L["c2_w"])
        add_tower_param(L["c2_b"])
        if "d_w" in L:
            add_tower_param(L["d_w"])
            add_tower_param(L["d_b"])

    kernel = functools.partial(
        _tcn_tower_kernel, B=B, T=T, K=K,
        layer_has_down=tuple(layer_has_down), dilations=tuple(dilations))

    return pl.pallas_call(
        kernel,
        out_shape=jax.ShapeDtypeStruct((2 * B, C, T), jnp.float32),
        grid=(2,),                                   # one grid step per tower
        in_specs=in_specs,
        out_specs=pl.BlockSpec((B, C, T), lambda g: (g, 0, 0)),
        compiler_params=pltpu.CompilerParams(dimension_semantics=("parallel",)),
    )(*in_arrays)


# ----------------------------------------------------------------------------
# Parameters (mirrors the PyTorch module; eval-mode BN, synthetic values)
# ----------------------------------------------------------------------------

def _init_params(key):
    """Deterministic synthetic parameters (per-module layout, like the nn.Module)."""
    p = {}
    ks = iter(jax.random.split(key, 64))

    def w(shape, scale=0.05):
        return (scale * jax.random.normal(next(ks), shape)).astype(jnp.float32)

    # eval-mode BN with fresh running stats: mean=0, var=1, gamma=1, beta=0
    def bn(n):
        scale = jnp.full((n,), 1.0 / jnp.sqrt(1.0 + BN_EPS), jnp.float32)
        shift = jnp.zeros((n,), jnp.float32)
        return scale, shift

    enc = {
        "fc1_w": w((FEAT_C, CNN_FC_HIDDEN1)), "fc1_b": w((CNN_FC_HIDDEN1,)),
        "fc2_w": w((CNN_FC_HIDDEN1, CNN_FC_HIDDEN2)), "fc2_b": w((CNN_FC_HIDDEN2,)),
        "fc3_w": w((CNN_FC_HIDDEN2, CNN_EMBED_DIM)), "fc3_b": w((CNN_EMBED_DIM,)),
    }
    enc["bn1_scale"], enc["bn1_shift"] = bn(CNN_FC_HIDDEN1)
    enc["bn2_scale"], enc["bn2_shift"] = bn(CNN_FC_HIDDEN2)
    p["enc"] = enc

    def make_tcn():
        layers = []
        cin = CNN_EMBED_DIM + TCN_ENC_IN_DIM
        for _ in range(TCN_N_LAYERS):
            cout = TCN_DEC_OUT_DIM
            blk = {
                "conv1_w": w((TCN_KERNEL_SIZE, cin, cout)), "conv1_b": w((cout,)),
                "conv2_w": w((TCN_KERNEL_SIZE, cout, cout)), "conv2_b": w((cout,)),
            }
            if cin != cout:       # 1x1 downsample conv on the residual path
                blk["down_w"] = w((cin, cout))
                blk["down_b"] = w((cout,))
            layers.append(blk)
            cin = cout
        return layers

    p["tcn_speed"] = make_tcn()
    p["tcn_dir"] = make_tcn()

    fc = {
        "l1_w": w((TCN_DEC_OUT_DIM * OBSERVE_LENGTH, 64)), "l1_b": w((64,)),
        "l2_w": w((64, 64)), "l2_b": w((64,)),
        "l3_w": w((64, OUTPUT_DIM * PREDICT_LENGTH)),
        "l3_b": w((OUTPUT_DIM * PREDICT_LENGTH,)),
    }
    fc["bn1_scale"], fc["bn1_shift"] = bn(64)
    fc["bn2_scale"], fc["bn2_shift"] = bn(64)
    p["fc"] = fc
    return p


def _fold_bn(w, b, scale=None, shift=None):
    """Fold eval-mode BN (y = (xW+b)*scale + shift) into the Linear; bf16 weights."""
    w = jnp.asarray(w, jnp.float32)
    b = jnp.asarray(b, jnp.float32)
    if scale is not None:
        w = w * scale[None, :]
        b = b * scale + shift
    return w.astype(jnp.bfloat16), b.reshape(1, -1).astype(jnp.float32)


def fuse_params(p):
    """One-time prep (outside jit): fold BN, stack the two TCN towers, cast to bf16."""
    e = p["enc"]
    enc = {}
    enc["w1"], enc["b1"] = _fold_bn(e["fc1_w"], e["fc1_b"], e["bn1_scale"], e["bn1_shift"])
    enc["w2"], enc["b2"] = _fold_bn(e["fc2_w"], e["fc2_b"], e["bn2_scale"], e["bn2_shift"])
    enc["w3"], enc["b3"] = _fold_bn(e["fc3_w"], e["fc3_b"])

    tcn = []
    for ls, ld in zip(p["tcn_speed"], p["tcn_dir"]):
        L = {
            "c1_w": jnp.stack([ls["conv1_w"], ld["conv1_w"]]).astype(jnp.bfloat16),
            "c1_b": jnp.stack([ls["conv1_b"], ld["conv1_b"]])[:, None, :].astype(jnp.float32),
            "c2_w": jnp.stack([ls["conv2_w"], ld["conv2_w"]]).astype(jnp.bfloat16),
            "c2_b": jnp.stack([ls["conv2_b"], ld["conv2_b"]])[:, None, :].astype(jnp.float32),
        }
        if "down_w" in ls:
            L["d_w"] = jnp.stack([ls["down_w"], ld["down_w"]]).astype(jnp.bfloat16)
            L["d_b"] = jnp.stack([ls["down_b"], ld["down_b"]])[:, None, :].astype(jnp.float32)
        tcn.append(L)

    f = p["fc"]
    fc = {}
    fc["w1"], fc["b1"] = _fold_bn(f["l1_w"], f["l1_b"], f["bn1_scale"], f["bn1_shift"])
    fc["w2"], fc["b2"] = _fold_bn(f["l2_w"], f["l2_b"], f["bn2_scale"], f["bn2_shift"])
    fc["w3"], fc["b3"] = _fold_bn(f["l3_w"], f["l3_b"])

    return {"enc": enc, "tcn": tcn, "fc": fc}


# ----------------------------------------------------------------------------
# Forward pass
# ----------------------------------------------------------------------------

def res_tcn_driving_global_forward(fp, feats):
    """Tensor-input path of ResTCNDrivingGlobal.forward.

    feats: (B, T=observe_length, Cf, H, W) frozen global featmaps.
    returns: (2B, output_dim * predict_length) == torch.cat([speed_out, dir_out], 0)
    """
    B, T = feats.shape[:2]

    # frozen-backbone spatial mean pool, then fused encoder head (1 pallas_call)
    pooled = feats.mean(axis=(3, 4)).reshape(B * T, FEAT_C)
    e = fp["enc"]
    visual = pallas_mlp3(pooled, e["w1"], e["b1"], e["w2"], e["b2"],
                         e["w3"], e["b3"], act="relu")             # (B*T, 512)

    # both TCN towers in one pallas_call; output already channel-major per tower
    tcn_out = pallas_dual_tcn(visual, fp["tcn"], B, T)             # (2B, C, T)
    flat = tcn_out.reshape(2 * B, TCN_DEC_OUT_DIM * T)             # == PyTorch reshape(-1, C*T)

    # shared fc head run once on stacked [speed; dir] rows (1 pallas_call);
    # row order already equals cat([speed_out, dir_out], dim=0)
    f = fp["fc"]
    out = pallas_mlp3(flat, f["w1"], f["b1"], f["w2"], f["b2"],
                      f["w3"], f["b3"], act="mish")                # (2B, out_dim*pred_len)
    return out


# ----------------------------------------------------------------------------
# Main
# ----------------------------------------------------------------------------

if __name__ == "__main__":
    key = jax.random.PRNGKey(0)
    pkey, xkey = jax.random.split(key)
    params = _init_params(pkey)
    fused = fuse_params(params)   # one-time: fold BN, stack towers, bf16 weights

    B = 2
    feats = jax.random.normal(
        xkey, (B, OBSERVE_LENGTH, FEAT_C, FEAT_H, FEAT_W), dtype=jnp.float32)

    out = jax.jit(res_tcn_driving_global_forward)(fused, feats)
    out = jax.block_until_ready(out)

    assert out.shape == (2 * B, OUTPUT_DIM * PREDICT_LENGTH), out.shape
    assert jnp.all(jnp.isfinite(out))
    print("KERNEL_OK")
</pallas_src>

<mosaic_0001>
module attributes {stable_mosaic.version = 11 : i64} {
  func.func @_mlp3_kernel(%arg0: i32, %arg1: memref<16x64xf32, #tpu.memory_space<vmem>>, %arg2: memref<64x1024xbf16, #tpu.memory_space<vmem>>, %arg3: memref<1x1024xf32, #tpu.memory_space<vmem>>, %arg4: memref<1024x768xbf16, #tpu.memory_space<vmem>>, %arg5: memref<1x768xf32, #tpu.memory_space<vmem>>, %arg6: memref<768x512xbf16, #tpu.memory_space<vmem>>, %arg7: memref<1x512xf32, #tpu.memory_space<vmem>>, %arg8: memref<16x512xf32, #tpu.memory_space<vmem>>) attributes {dimension_semantics = [#tpu.dimension_semantics<arbitrary>], iteration_bounds = array<i64: 1>, scalar_prefetch = 0 : i64, scratch_operands = 0 : i64, tpu.core_type = #tpu.core_type<tc>, window_params = [{pipeline_mode = #tpu.pipeline_mode<synchronous>, transform_indices = @transform_0, window_bounds = array<i64: 16, 64>}, {pipeline_mode = #tpu.pipeline_mode<synchronous>, transform_indices = @transform_1, window_bounds = array<i64: 64, 1024>}, {pipeline_mode = #tpu.pipeline_mode<synchronous>, transform_indices = @transform_2, window_bounds = array<i64: 1, 1024>}, {pipeline_mode = #tpu.pipeline_mode<synchronous>, transform_indices = @transform_3, window_bounds = array<i64: 1024, 768>}, {pipeline_mode = #tpu.pipeline_mode<synchronous>, transform_indices = @transform_4, window_bounds = array<i64: 1, 768>}, {pipeline_mode = #tpu.pipeline_mode<synchronous>, transform_indices = @transform_5, window_bounds = array<i64: 768, 512>}, {pipeline_mode = #tpu.pipeline_mode<synchronous>, transform_indices = @transform_6, window_bounds = array<i64: 1, 512>}, {pipeline_mode = #tpu.pipeline_mode<synchronous>, transform_indices = @transform_7, window_bounds = array<i64: 16, 512>}]} {
    %c0 = arith.constant 0 : index
    %c0_0 = arith.constant 0 : index
    %0 = vector.load %arg1[%c0, %c0_0] : memref<16x64xf32, #tpu.memory_space<vmem>>, vector<16x64xf32>
    %1 = arith.truncf %0 : vector<16x64xf32> to vector<16x64xbf16>
    %c0_1 = arith.constant 0 : index
    %c0_2 = arith.constant 0 : index
    %2 = vector.load %arg2[%c0_1, %c0_2] : memref<64x1024xbf16, #tpu.memory_space<vmem>>, vector<64x1024xbf16>
    %cst = arith.constant dense<0.000000e+00> : vector<16x1024xf32>
    %3 = tpu.matmul %1, %2, %cst {dimension_numbers = #tpu.dot_dimension_numbers<[1], [0], [0], [1], [0, 0, 1, 1], [], []>} : vector<16x64xbf16>, vector<64x1024xbf16>, vector<16x1024xf32> -> vector<16x1024xf32>
    %c0_3 = arith.constant 0 : index
    %c0_4 = arith.constant 0 : index
    %4 = vector.load %arg3[%c0_3, %c0_4] : memref<1x1024xf32, #tpu.memory_space<vmem>>, vector<1x1024xf32>
    %5 = vector.broadcast %4 : vector<1x1024xf32> to vector<16x1024xf32>
    %6 = arith.addf %3, %5 : vector<16x1024xf32>
    %cst_5 = arith.constant 0.000000e+00 : f32
    %7 = vector.broadcast %cst_5 : f32 to vector<16x1024xf32>
    %8 = arith.maximumf %6, %7 : vector<16x1024xf32>
    %9 = arith.truncf %8 : vector<16x1024xf32> to vector<16x1024xbf16>
    %c0_6 = arith.constant 0 : index
    %c0_7 = arith.constant 0 : index
    %10 = vector.load %arg4[%c0_6, %c0_7] : memref<1024x768xbf16, #tpu.memory_space<vmem>>, vector<1024x768xbf16>
    %cst_8 = arith.constant dense<0.000000e+00> : vector<16x768xf32>
    %11 = tpu.matmul %9, %10, %cst_8 {dimension_numbers = #tpu.dot_dimension_numbers<[1], [0], [0], [1], [0, 0, 1, 1], [], []>} : vector<16x1024xbf16>, vector<1024x768xbf16>, vector<16x768xf32> -> vector<16x768xf32>
    %c0_9 = arith.constant 0 : index
    %c0_10 = arith.constant 0 : index
    %12 = vector.load %arg5[%c0_9, %c0_10] : memref<1x768xf32, #tpu.memory_space<vmem>>, vector<1x768xf32>
    %13 = vector.broadcast %12 : vector<1x768xf32> to vector<16x768xf32>
    %14 = arith.addf %11, %13 : vector<16x768xf32>
    %cst_11 = arith.constant 0.000000e+00 : f32
    %15 = vector.broadcast %cst_11 : f32 to vector<16x768xf32>
    %16 = arith.maximumf %14, %15 : vector<16x768xf32>
    %17 = arith.truncf %16 : vector<16x768xf32> to vector<16x768xbf16>
    %c0_12 = arith.constant 0 : index
    %c0_13 = arith.constant 0 : index
    %18 = vector.load %arg6[%c0_12, %c0_13] : memref<768x512xbf16, #tpu.memory_space<vmem>>, vector<768x512xbf16>
    %cst_14 = arith.constant dense<0.000000e+00> : vector<16x512xf32>
    %19 = tpu.matmul %17, %18, %cst_14 {dimension_numbers = #tpu.dot_dimension_numbers<[1], [0], [0], [1], [0, 0, 1, 1], [], []>} : vector<16x768xbf16>, vector<768x512xbf16>, vector<16x512xf32> -> vector<16x512xf32>
    %c0_15 = arith.constant 0 : index
    %c0_16 = arith.constant 0 : index
    %20 = vector.load %arg7[%c0_15, %c0_16] : memref<1x512xf32, #tpu.memory_space<vmem>>, vector<1x512xf32>
    %21 = vector.broadcast %20 : vector<1x512xf32> to vector<16x512xf32>
    %22 = arith.addf %19, %21 : vector<16x512xf32>
    %c0_17 = arith.constant 0 : index
    %c0_18 = arith.constant 0 : index
    %23 = vector.load %arg8[%c0_17, %c0_18] : memref<16x512xf32, #tpu.memory_space<vmem>>, vector<16x512xf32>
    tpu.vector_store %arg8[%c0_17, %c0_18], %22 {strides = array<i32>} : memref<16x512xf32, #tpu.memory_space<vmem>>, vector<16x512xf32>,
    return
  }
  func.func @transform_0(%arg0: i32) -> (i32, i32) {
    %c0_i32 = arith.constant 0 : i32
    %c0_i32_0 = arith.constant 0 : i32
    %c0_i32_1 = arith.constant 0 : i32
    return %c0_i32, %c0_i32_0 : i32, i32
  }
  func.func @transform_1(%arg0: i32) -> (i32, i32) {
    %c0_i32 = arith.constant 0 : i32
    %c0_i32_0 = arith.constant 0 : i32
    %c0_i32_1 = arith.constant 0 : i32
    return %c0_i32, %c0_i32_0 : i32, i32
  }
  func.func @transform_2(%arg0: i32) -> (i32, i32) {
    %c0_i32 = arith.constant 0 : i32
    %c0_i32_0 = arith.constant 0 : i32
    %c0_i32_1 = arith.constant 0 : i32
    return %c0_i32, %c0_i32_0 : i32, i32
  }
  func.func @transform_3(%arg0: i32) -> (i32, i32) {
    %c0_i32 = arith.constant 0 : i32
    %c0_i32_0 = arith.constant 0 : i32
    %c0_i32_1 = arith.constant 0 : i32
    return %c0_i32, %c0_i32_0 : i32, i32
  }
  func.func @transform_4(%arg0: i32) -> (i32, i32) {
    %c0_i32 = arith.constant 0 : i32
    %c0_i32_0 = arith.constant 0 : i32
    %c0_i32_1 = arith.constant 0 : i32
    return %c0_i32, %c0_i32_0 : i32, i32
  }
  func.func @transform_5(%arg0: i32) -> (i32, i32) {
    %c0_i32 = arith.constant 0 : i32
    %c0_i32_0 = arith.constant 0 : i32
    %c0_i32_1 = arith.constant 0 : i32
    return %c0_i32, %c0_i32_0 : i32, i32
  }
  func.func @transform_6(%arg0: i32) -> (i32, i32) {
    %c0_i32 = arith.constant 0 : i32
    %c0_i32_0 = arith.constant 0 : i32
    %c0_i32_1 = arith.constant 0 : i32
    return %c0_i32, %c0_i32_0 : i32, i32
  }
  func.func @transform_7(%arg0: i32) -> (i32, i32) {
    %c0_i32 = arith.constant 0 : i32
    %c0_i32_0 = arith.constant 0 : i32
    %c0_i32_1 = arith.constant 0 : i32
    return %c0_i32, %c0_i32_0 : i32, i32
  }
}

module attributes {stable_mosaic.version = 11 : i64} {
  func.func @_tcn_tower_kernel(%arg0: i32, %arg1: memref<16x512xf32, #tpu.memory_space<vmem>>, %arg2: memref<1x3x512x128xbf16, #tpu.memory_space<vmem>>, %arg3: memref<1x1x128xf32, #tpu.memory_space<vmem>>, %arg4: memref<1x3x128x128xbf16, #tpu.memory_space<vmem>>, %arg5: memref<1x1x128xf32, #tpu.memory_space<vmem>>, %arg6: memref<1x512x128xbf16, #tpu.memory_space<vmem>>, %arg7: memref<1x1x128xf32, #tpu.memory_space<vmem>>, %arg8: memref<1x3x128x128xbf16, #tpu.memory_space<vmem>>, %arg9: memref<1x1x128xf32, #tpu.memory_space<vmem>>, %arg10: memref<1x3x128x128xbf16, #tpu.memory_space<vmem>>, %arg11: memref<1x1x128xf32, #tpu.memory_space<vmem>>, %arg12: memref<2x128x8xf32, #tpu.memory_space<vmem>>) attributes {dimension_semantics = [#tpu.dimension_semantics<parallel>], iteration_bounds = array<i64: 2>, scalar_prefetch = 0 : i64, scratch_operands = 0 : i64, tpu.core_type = #tpu.core_type<tc>, window_params = [{pipeline_mode = #tpu.pipeline_mode<synchronous>, transform_indices = @transform_0, window_bounds = array<i64: 16, 512>}, {transform_indices = @transform_1, window_bounds = array<i64: 1, 3, 512, 128>}, {transform_indices = @transform_2, window_bounds = array<i64: 1, 1, 128>}, {transform_indices = @transform_3, window_bounds = array<i64: 1, 3, 128, 128>}, {transform_indices = @transform_4, window_bounds = array<i64: 1, 1, 128>}, {transform_indices = @transform_5, window_bounds = array<i64: 1, 512, 128>}, {transform_indices = @transform_6, window_bounds = array<i64: 1, 1, 128>}, {transform_indices = @transform_7, window_bounds = array<i64: 1, 3, 128, 128>}, {transform_indices = @transform_8, window_bounds = array<i64: 1, 1, 128>}, {transform_indices = @transform_9, window_bounds = array<i64: 1, 3, 128, 128>}, {transform_indices = @transform_10, window_bounds = array<i64: 1, 1, 128>}, {transform_indices = @transform_11, window_bounds = array<i64: 2, 128, 8>}]} {
    %c0 = arith.constant 0 : index
    %c0_0 = arith.constant 0 : index
    %0 = vector.load %arg1[%c0, %c0_0] : memref<16x512xf32, #tpu.memory_space<vmem>>, vector<16x512xf32>
    %cst = arith.constant 0.000000e+00 : f32
    %1 = vector.broadcast %cst : f32 to vector<16x128xf32>
    %cst_1 = arith.constant 0.000000e+00 : f32
    %2 = vector.broadcast %cst_1 : f32 to vector<2x512xf32>
    %3 = vector.extract_strided_slice %0 {offsets = [0, 0], sizes = [6, 512], strides = [1, 1]} : vector<16x512xf32> to vector<6x512xf32>
    %4 = vector.extract_strided_slice %0 {offsets = [8, 0], sizes = [6, 512], strides = [1, 1]} : vector<16x512xf32> to vector<6x512xf32>
    %5 = tpu.concatenate %2, %3, %2, %4 in 0 : vector<2x512xf32>, vector<6x512xf32>, vector<2x512xf32>, vector<6x512xf32> -> vector<16x512xf32>
    %6 = arith.truncf %5 : vector<16x512xf32> to vector<16x512xbf16>
    %c0_2 = arith.constant 0 : index
    %c0_3 = arith.constant 0 : index
    %c0_4 = arith.constant 0 : index
    %c0_5 = arith.constant 0 : index
    %7 = vector.load %arg2[%c0_2, %c0_3, %c0_4, %c0_5] : memref<1x3x512x128xbf16, #tpu.memory_space<vmem>>, vector<1x1x512x128xbf16>
    %8 = vector.shape_cast %7 : vector<1x1x512x128xbf16> to vector<512x128xbf16>
    %cst_6 = arith.constant dense<0.000000e+00> : vector<16x128xf32>
    %9 = tpu.matmul %6, %8, %cst_6 {dimension_numbers = #tpu.dot_dimension_numbers<[1], [0], [0], [1], [0, 0, 1, 1], [], []>} : vector<16x512xbf16>, vector<512x128xbf16>, vector<16x128xf32> -> vector<16x128xf32>
    %10 = arith.addf %1, %9 : vector<16x128xf32>
    %cst_7 = arith.constant 0.000000e+00 : f32
    %11 = vector.broadcast %cst_7 : f32 to vector<1x512xf32>
    %12 = vector.extract_strided_slice %0 {offsets = [0, 0], sizes = [7, 512], strides = [1, 1]} : vector<16x512xf32> to vector<7x512xf32>
    %13 = vector.extract_strided_slice %0 {offsets = [8, 0], sizes = [7, 512], strides = [1, 1]} : vector<16x512xf32> to vector<7x512xf32>
    %14 = tpu.concatenate %11, %12, %11, %13 in 0 : vector<1x512xf32>, vector<7x512xf32>, vector<1x512xf32>, vector<7x512xf32> -> vector<16x512xf32>
    %15 = arith.truncf %14 : vector<16x512xf32> to vector<16x512xbf16>
    %c0_8 = arith.constant 0 : index
    %c1 = arith.constant 1 : index
    %c0_9 = arith.constant 0 : index
    %c0_10 = arith.constant 0 : index
    %16 = vector.load %arg2[%c0_8, %c1, %c0_9, %c0_10] : memref<1x3x512x128xbf16, #tpu.memory_space<vmem>>, vector<1x1x512x128xbf16>
    %17 = vector.shape_cast %16 : vector<1x1x512x128xbf16> to vector<512x128xbf16>
    %cst_11 = arith.constant dense<0.000000e+00> : vector<16x128xf32>
    %18 = tpu.matmul %15, %17, %cst_11 {dimension_numbers = #tpu.dot_dimension_numbers<[1], [0], [0], [1], [0, 0, 1, 1], [], []>} : vector<16x512xbf16>, vector<512x128xbf16>, vector<16x128xf32> -> vector<16x128xf32>
    %19 = arith.addf %10, %18 : vector<16x128xf32>
    %20 = arith.truncf %0 : vector<16x512xf32> to vector<16x512xbf16>
    %c0_12 = arith.constant 0 : index
    %c2 = arith.constant 2 : index
    %c0_13 = arith.constant 0 : index
    %c0_14 = arith.constant 0 : index
    %21 = vector.load %arg2[%c0_12, %c2, %c0_13, %c0_14] : memref<1x3x512x128xbf16, #tpu.memory_space<vmem>>, vector<1x1x512x128xbf16>
    %22 = vector.shape_cast %21 : vector<1x1x512x128xbf16> to vector<512x128xbf16>
    %cst_15 = arith.constant dense<0.000000e+00> : vector<16x128xf32>
    %23 = tpu.matmul %20, %22, %cst_15 {dimension_numbers = #tpu.dot_dimension_numbers<[1], [0], [0], [1], [0, 0, 1, 1], [], []>} : vector<16x512xbf16>, vector<512x128xbf16>, vector<16x128xf32> -> vector<16x128xf32>
    %24 = arith.addf %19, %23 : vector<16x128xf32>
    %c0_16 = arith.constant 0 : index
    %c0_17 = arith.constant 0 : index
    %c0_18 = arith.constant 0 : index
    %25 = vector.load %arg3[%c0_16, %c0_17, %c0_18] : memref<1x1x128xf32, #tpu.memory_space<vmem>>, vector<1x1x128xf32>
    %26 = vector.shape_cast %25 : vector<1x1x128xf32> to vector<1x128xf32>
    %27 = vector.broadcast %26 : vector<1x128xf32> to vector<16x128xf32>
    %28 = arith.addf %24, %27 : vector<16x128xf32>
    %cst_19 = arith.constant 0.000000e+00 : f32
    %29 = vector.broadcast %cst_19 : f32 to vector<16x128xf32>
    %30 = arith.maximumf %28, %29 : vector<16x128xf32>
    %cst_20 = arith.constant 0.000000e+00 : f32
    %31 = vector.broadcast %cst_20 : f32 to vector<16x128xf32>
    %cst_21 = arith.constant 0.000000e+00 : f32
    %32 = vector.broadcast %cst_21 : f32 to vector<2x128xf32>
    %33 = vector.extract_strided_slice %30 {offsets = [0, 0], sizes = [6, 128], strides = [1, 1]} : vector<16x128xf32> to vector<6x128xf32>
    %34 = vector.extract_strided_slice %30 {offsets = [8, 0], sizes = [6, 128], strides = [1, 1]} : vector<16x128xf32> to vector<6x128xf32>
    %35 = tpu.concatenate %32, %33, %32, %34 in 0 : vector<2x128xf32>, vector<6x128xf32>, vector<2x128xf32>, vector<6x128xf32> -> vector<16x128xf32>
    %36 = arith.truncf %35 : vector<16x128xf32> to vector<16x128xbf16>
    %c0_22 = arith.constant 0 : index
    %c0_23 = arith.constant 0 : index
    %c0_24 = arith.constant 0 : index
    %c0_25 = arith.constant 0 : index
    %37 = vector.load %arg4[%c0_22, %c0_23, %c0_24, %c0_25] : memref<1x3x128x128xbf16, #tpu.memory_space<vmem>>, vector<1x1x128x128xbf16>
    %38 = vector.shape_cast %37 : vector<1x1x128x128xbf16> to vector<128x128xbf16>
    %cst_26 = arith.constant dense<0.000000e+00> : vector<16x128xf32>
    %39 = tpu.matmul %36, %38, %cst_26 {dimension_numbers = #tpu.dot_dimension_numbers<[1], [0], [0], [1], [0, 0, 1, 1], [], []>} : vector<16x128xbf16>, vector<128x128xbf16>, vector<16x128xf32> -> vector<16x128xf32>
    %40 = arith.addf %31, %39 : vector<16x128xf32>
    %cst_27 = arith.constant 0.000000e+00 : f32
    %41 = vector.broadcast %cst_27 : f32 to vector<1x128xf32>
    %42 = vector.extract_strided_slice %30 {offsets = [0, 0], sizes = [7, 128], strides = [1, 1]} : vector<16x128xf32> to vector<7x128xf32>
    %43 = vector.extract_strided_slice %30 {offsets = [8, 0], sizes = [7, 128], strides = [1, 1]} : vector<16x128xf32> to vector<7x128xf32>
    %44 = tpu.concatenate %41, %42, %41, %43 in 0 : vector<1x128xf32>, vector<7x128xf32>, vector<1x128xf32>, vector<7x128xf32> -> vector<16x128xf32>
    %45 = arith.truncf %44 : vector<16x128xf32> to vector<16x128xbf16>
    %c0_28 = arith.constant 0 : index
    %c1_29 = arith.constant 1 : index
    %c0_30 = arith.constant 0 : index
    %c0_31 = arith.constant 0 : index
    %46 = vector.load %arg4[%c0_28, %c1_29, %c0_30, %c0_31] : memref<1x3x128x128xbf16, #tpu.memory_space<vmem>>, vector<1x1x128x128xbf16>
    %47 = vector.shape_cast %46 : vector<1x1x128x128xbf16> to vector<128x128xbf16>
    %cst_32 = arith.constant dense<0.000000e+00> : vector<16x128xf32>
    %48 = tpu.matmul %45, %47, %cst_32 {dimension_numbers = #tpu.dot_dimension_numbers<[1], [0], [0], [1], [0, 0, 1, 1], [], []>} : vector<16x128xbf16>, vector<128x128xbf16>, vector<16x128xf32> -> vector<16x128xf32>
    %49 = arith.addf %40, %48 : vector<16x128xf32>
    %50 = arith.truncf %30 : vector<16x128xf32> to vector<16x128xbf16>
    %c0_33 = arith.constant 0 : index
    %c2_34 = arith.constant 2 : index
    %c0_35 = arith.constant 0 : index
    %c0_36 = arith.constant 0 : index
    %51 = vector.load %arg4[%c0_33, %c2_34, %c0_35, %c0_36] : memref<1x3x128x128xbf16, #tpu.memory_space<vmem>>, vector<1x1x128x128xbf16>
    %52 = vector.shape_cast %51 : vector<1x1x128x128xbf16> to vector<128x128xbf16>
    %cst_37 = arith.constant dense<0.000000e+00> : vector<16x128xf32>
    %53 = tpu.matmul %50, %52, %cst_37 {dimension_numbers = #tpu.dot_dimension_numbers<[1], [0], [0], [1], [0, 0, 1, 1], [], []>} : vector<16x128xbf16>, vector<128x128xbf16>, vector<16x128xf32> -> vector<16x128xf32>
    %54 = arith.addf %49, %53 : vector<16x128xf32>
    %c0_38 = arith.constant 0 : index
    %c0_39 = arith.constant 0 : index
    %c0_40 = arith.constant 0 : index
    %55 = vector.load %arg5[%c0_38, %c0_39, %c0_40] : memref<1x1x128xf32, #tpu.memory_space<vmem>>, vector<1x1x128xf32>
    %56 = vector.shape_cast %55 : vector<1x1x128xf32> to vector<1x128xf32>
    %57 = vector.broadcast %56 : vector<1x128xf32> to vector<16x128xf32>
    %58 = arith.addf %54, %57 : vector<16x128xf32>
    %cst_41 = arith.constant 0.000000e+00 : f32
    %59 = vector.broadcast %cst_41 : f32 to vector<16x128xf32>
    %60 = arith.maximumf %58, %59 : vector<16x128xf32>
    %61 = arith.truncf %0 : vector<16x512xf32> to vector<16x512xbf16>
    %c0_42 = arith.constant 0 : index
    %c0_43 = arith.constant 0 : index
    %c0_44 = arith.constant 0 : index
    %62 = vector.load %arg6[%c0_42, %c0_43, %c0_44] : memref<1x512x128xbf16, #tpu.memory_space<vmem>>, vector<1x512x128xbf16>
    %63 = vector.shape_cast %62 : vector<1x512x128xbf16> to vector<512x128xbf16>
    %cst_45 = arith.constant dense<0.000000e+00> : vector<16x128xf32>
    %64 = tpu.matmul %61, %63, %cst_45 {dimension_numbers = #tpu.dot_dimension_numbers<[1], [0], [0], [1], [0, 0, 1, 1], [], []>} : vector<16x512xbf16>, vector<512x128xbf16>, vector<16x128xf32> -> vector<16x128xf32>
    %c0_46 = arith.constant 0 : index
    %c0_47 = arith.constant 0 : index
    %c0_48 = arith.constant 0 : index
    %65 = vector.load %arg7[%c0_46, %c0_47, %c0_48] : memref<1x1x128xf32, #tpu.memory_space<vmem>>, vector<1x1x128xf32>
    %66 = vector.shape_cast %65 : vector<1x1x128xf32> to vector<1x128xf32>
    %67 = vector.broadcast %66 : vector<1x128xf32> to vector<16x128xf32>
    %68 = arith.addf %64, %67 : vector<16x128xf32>
    %69 = arith.addf %60, %68 : vector<16x128xf32>
    %cst_49 = arith.constant 0.000000e+00 : f32
    %70 = vector.broadcast %cst_49 : f32 to vector<16x128xf32>
    %71 = arith.maximumf %69, %70 : vector<16x128xf32>
    %cst_50 = arith.constant 0.000000e+00 : f32
    %72 = vector.broadcast %cst_50 : f32 to vector<16x128xf32>
    %cst_51 = arith.constant 0.000000e+00 : f32
    %73 = vector.broadcast %cst_51 : f32 to vector<4x128xf32>
    %74 = vector.extract_strided_slice %71 {offsets = [0, 0], sizes = [4, 128], strides = [1, 1]} : vector<16x128xf32> to vector<4x128xf32>
    %75 = vector.extract_strided_slice %71 {offsets = [8, 0], sizes = [4, 128], strides = [1, 1]} : vector<16x128xf32> to vector<4x128xf32>
    %76 = tpu.concatenate %73, %74, %73, %75 in 0 : vector<4x128xf32>, vector<4x128xf32>, vector<4x128xf32>, vector<4x128xf32> -> vector<16x128xf32>
    %77 = arith.truncf %76 : vector<16x128xf32> to vector<16x128xbf16>
    %c0_52 = arith.constant 0 : index
    %c0_53 = arith.constant 0 : index
    %c0_54 = arith.constant 0 : index
    %c0_55 = arith.constant 0 : index
    %78 = vector.load %arg8[%c0_52, %c0_53, %c0_54, %c0_55] : memref<1x3x128x128xbf16, #tpu.memory_space<vmem>>, vector<1x1x128x128xbf16>
    %79 = vector.shape_cast %78 : vector<1x1x128x128xbf16> to vector<128x128xbf16>
    %cst_56 = arith.constant dense<0.000000e+00> : vector<16x128xf32>
    %80 = tpu.matmul %77, %79, %cst_56 {dimension_numbers = #tpu.dot_dimension_numbers<[1], [0], [0], [1], [0, 0, 1, 1], [], []>} : vector<16x128xbf16>, vector<128x128xbf16>, vector<16x128xf32> -> vector<16x128xf32>
    %81 = arith.addf %72, %80 : vector<16x128xf32>
    %cst_57 = arith.constant 0.000000e+00 : f32
    %82 = vector.broadcast %cst_57 : f32 to vector<2x128xf32>
    %83 = vector.extract_strided_slice %71 {offsets = [0, 0], sizes = [6, 128], strides = [1, 1]} : vector<16x128xf32> to vector<6x128xf32>
    %84 = vector.extract_strided_slice %71 {offsets = [8, 0], sizes = [6, 128], strides = [1, 1]} : vector<16x128xf32> to vector<6x128xf32>
    %85 = tpu.concatenate %82, %83, %82, %84 in 0 : vector<2x128xf32>, vector<6x128xf32>, vector<2x128xf32>, vector<6x128xf32> -> vector<16x128xf32>
    %86 = arith.truncf %85 : vector<16x128xf32> to vector<16x128xbf16>
    %c0_58 = arith.constant 0 : index
    %c1_59 = arith.constant 1 : index
    %c0_60 = arith.constant 0 : index
    %c0_61 = arith.constant 0 : index
    %87 = vector.load %arg8[%c0_58, %c1_59, %c0_60, %c0_61] : memref<1x3x128x128xbf16, #tpu.memory_space<vmem>>, vector<1x1x128x128xbf16>
    %88 = vector.shape_cast %87 : vector<1x1x128x128xbf16> to vector<128x128xbf16>
    %cst_62 = arith.constant dense<0.000000e+00> : vector<16x128xf32>
    %89 = tpu.matmul %86, %88, %cst_62 {dimension_numbers = #tpu.dot_dimension_numbers<[1], [0], [0], [1], [0, 0, 1, 1], [], []>} : vector<16x128xbf16>, vector<128x128xbf16>, vector<16x128xf32> -> vector<16x128xf32>
    %90 = arith.addf %81, %89 : vector<16x128xf32>
    %91 = arith.truncf %71 : vector<16x128xf32> to vector<16x128xbf16>
    %c0_63 = arith.constant 0 : index
    %c2_64 = arith.constant 2 : index
    %c0_65 = arith.constant 0 : index
    %c0_66 = arith.constant 0 : index
    %92 = vector.load %arg8[%c0_63, %c2_64, %c0_65, %c0_66] : memref<1x3x128x128xbf16, #tpu.memory_space<vmem>>, vector<1x1x128x128xbf16>
    %93 = vector.shape_cast %92 : vector<1x1x128x128xbf16> to vector<128x128xbf16>
    %cst_67 = arith.constant dense<0.000000e+00> : vector<16x128xf32>
    %94 = tpu.matmul %91, %93, %cst_67 {dimension_numbers = #tpu.dot_dimension_numbers<[1], [0], [0], [1], [0, 0, 1, 1], [], []>} : vector<16x128xbf16>, vector<128x128xbf16>, vector<16x128xf32> -> vector<16x128xf32>
    %95 = arith.addf %90, %94 : vector<16x128xf32>
    %c0_68 = arith.constant 0 : index
    %c0_69 = arith.constant 0 : index
    %c0_70 = arith.constant 0 : index
    %96 = vector.load %arg9[%c0_68, %c0_69, %c0_70] : memref<1x1x128xf32, #tpu.memory_space<vmem>>, vector<1x1x128xf32>
    %97 = vector.shape_cast %96 : vector<1x1x128xf32> to vector<1x128xf32>
    %98 = vector.broadcast %97 : vector<1x128xf32> to vector<16x128xf32>
    %99 = arith.addf %95, %98 : vector<16x128xf32>
    %cst_71 = arith.constant 0.000000e+00 : f32
    %100 = vector.broadcast %cst_71 : f32 to vector<16x128xf32>
    %101 = arith.maximumf %99, %100 : vector<16x128xf32>
    %cst_72 = arith.constant 0.000000e+00 : f32
    %102 = vector.broadcast %cst_72 : f32 to vector<16x128xf32>
    %cst_73 = arith.constant 0.000000e+00 : f32
    %103 = vector.broadcast %cst_73 : f32 to vector<4x128xf32>
    %104 = vector.extract_strided_slice %101 {offsets = [0, 0], sizes = [4, 128], strides = [1, 1]} : vector<16x128xf32> to vector<4x128xf32>
    %105 = vector.extract_strided_slice %101 {offsets = [8, 0], sizes = [4, 128], strides = [1, 1]} : vector<16x128xf32> to vector<4x128xf32>
    %106 = tpu.concatenate %103, %104, %103, %105 in 0 : vector<4x128xf32>, vector<4x128xf32>, vector<4x128xf32>, vector<4x128xf32> -> vector<16x128xf32>
    %107 = arith.truncf %106 : vector<16x128xf32> to vector<16x128xbf16>
    %c0_74 = arith.constant 0 : index
    %c0_75 = arith.constant 0 : index
    %c0_76 = arith.constant 0 : index
    %c0_77 = arith.constant 0 : index
    %108 = vector.load %arg10[%c0_74, %c0_75, %c0_76, %c0_77] : memref<1x3x128x128xbf16, #tpu.memory_space<vmem>>, vector<1x1x128x128xbf16>
    %109 = vector.shape_cast %108 : vector<1x1x128x128xbf16> to vector<128x128xbf16>
    %cst_78 = arith.constant dense<0.000000e+00> : vector<16x128xf32>
    %110 = tpu.matmul %107, %109, %cst_78 {dimension_numbers = #tpu.dot_dimension_numbers<[1], [0], [0], [1], [0, 0, 1, 1], [], []>} : vector<16x128xbf16>, vector<128x128xbf16>, vector<16x128xf32> -> vector<16x128xf32>
    %111 = arith.addf %102, %110 : vector<16x128xf32>
    %cst_79 = arith.constant 0.000000e+00 : f32
    %112 = vector.broadcast %cst_79 : f32 to vector<2x128xf32>
    %113 = vector.extract_strided_slice %101 {offsets = [0, 0], sizes = [6, 128], strides = [1, 1]} : vector<16x128xf32> to vector<6x128xf32>
    %114 = vector.extract_strided_slice %101 {offsets = [8, 0], sizes = [6, 128], strides = [1, 1]} : vector<16x128xf32> to vector<6x128xf32>
    %115 = tpu.concatenate %112, %113, %112, %114 in 0 : vector<2x128xf32>, vector<6x128xf32>, vector<2x128xf32>, vector<6x128xf32> -> vector<16x128xf32>
    %116 = arith.truncf %115 : vector<16x128xf32> to vector<16x128xbf16>
    %c0_80 = arith.constant 0 : index
    %c1_81 = arith.constant 1 : index
    %c0_82 = arith.constant 0 : index
    %c0_83 = arith.constant 0 : index
    %117 = vector.load %arg10[%c0_80, %c1_81, %c0_82, %c0_83] : memref<1x3x128x128xbf16, #tpu.memory_space<vmem>>, vector<1x1x128x128xbf16>
    %118 = vector.shape_cast %117 : vector<1x1x128x128xbf16> to vector<128x128xbf16>
    %cst_84 = arith.constant dense<0.000000e+00> : vector<16x128xf32>
    %119 = tpu.matmul %116, %118, %cst_84 {dimension_numbers = #tpu.dot_dimension_numbers<[1], [0], [0], [1], [0, 0, 1, 1], [], []>} : vector<16x128xbf16>, vector<128x128xbf16>, vector<16x128xf32> -> vector<16x128xf32>
    %120 = arith.addf %111, %119 : vector<16x128xf32>
    %121 = arith.truncf %101 : vector<16x128xf32> to vector<16x128xbf16>
    %c0_85 = arith.constant 0 : index
    %c2_86 = arith.constant 2 : index
    %c0_87 = arith.constant 0 : index
    %c0_88 = arith.constant 0 : index
    %122 = vector.load %arg10[%c0_85, %c2_86, %c0_87, %c0_88] : memref<1x3x128x128xbf16, #tpu.memory_space<vmem>>, vector<1x1x128x128xbf16>
    %123 = vector.shape_cast %122 : vector<1x1x128x128xbf16> to vector<128x128xbf16>
    %cst_89 = arith.constant dense<0.000000e+00> : vector<16x128xf32>
    %124 = tpu.matmul %121, %123, %cst_89 {dimension_numbers = #tpu.dot_dimension_numbers<[1], [0], [0], [1], [0, 0, 1, 1], [], []>} : vector<16x128xbf16>, vector<128x128xbf16>, vector<16x128xf32> -> vector<16x128xf32>
    %125 = arith.addf %120, %124 : vector<16x128xf32>
    %c0_90 = arith.constant 0 : index
    %c0_91 = arith.constant 0 : index
    %c0_92 = arith.constant 0 : index
    %126 = vector.load %arg11[%c0_90, %c0_91, %c0_92] : memref<1x1x128xf32, #tpu.memory_space<vmem>>, vector<1x1x128xf32>
    %127 = vector.shape_cast %126 : vector<1x1x128xf32> to vector<1x128xf32>
    %128 = vector.broadcast %127 : vector<1x128xf32> to vector<16x128xf32>
    %129 = arith.addf %125, %128 : vector<16x128xf32>
    %cst_93 = arith.constant 0.000000e+00 : f32
    %130 = vector.broadcast %cst_93 : f32 to vector<16x128xf32>
    %131 = arith.maximumf %129, %130 : vector<16x128xf32>
    %132 = arith.addf %131, %71 : vector<16x128xf32>
    %cst_94 = arith.constant 0.000000e+00 : f32
    %133 = vector.broadcast %cst_94 : f32 to vector<16x128xf32>
    %134 = arith.maximumf %132, %133 : vector<16x128xf32>
    %135 = vector.extract_strided_slice %134 {offsets = [0, 0], sizes = [8, 128], strides = [1, 1]} : vector<16x128xf32> to vector<8x128xf32>
    %136 = tpu.transpose %135, [1, 0] : vector<8x128xf32> -> vector<128x8xf32>
    %c0_95 = arith.constant 0 : index
    %c0_96 = arith.constant 0 : index
    %c0_97 = arith.constant 0 : index
    %137 = vector.load %arg12[%c0_95, %c0_96, %c0_97] : memref<2x128x8xf32, #tpu.memory_space<vmem>>, vector<1x128x8xf32>
    %138 = vector.shape_cast %137 : vector<1x128x8xf32> to vector<128x8xf32>
    %139 = vector.shape_cast %136 : vector<128x8xf32> to vector<1x128x8xf32>
    tpu.vector_store %arg12[%c0_95, %c0_96, %c0_97], %139 {strides = array<i32>} : memref<2x128x8xf32, #tpu.memory_space<vmem>>, vector<1x128x8xf32>,
    %140 = vector.extract_strided_slice %134 {offsets = [8, 0], sizes = [8, 128], strides = [1, 1]} : vector<16x128xf32> to vector<8x128xf32>
    %141 = tpu.transpose %140, [1, 0] : vector<8x128xf32> -> vector<128x8xf32>
    %c1_98 = arith.constant 1 : index
    %c0_99 = arith.constant 0 : index
    %c0_100 = arith.constant 0 : index
    %142 = vector.load %arg12[%c1_98, %c0_99, %c0_100] : memref<2x128x8xf32, #tpu.memory_space<vmem>>, vector<1x128x8xf32>
    %143 = vector.shape_cast %142 : vector<1x128x8xf32> to vector<128x8xf32>
    %144 = vector.shape_cast %141 : vector<128x8xf32> to vector<1x128x8xf32>
    tpu.vector_store %arg12[%c1_98, %c0_99, %c0_100], %144 {strides = array<i32>} : memref<2x128x8xf32, #tpu.memory_space<vmem>>, vector<1x128x8xf32>,
    return
  }
  func.func @transform_0(%arg0: i32) -> (i32, i32) {
    %c0_i32 = arith.constant 0 : i32
    %c0_i32_0 = arith.constant 0 : i32
    %c0_i32_1 = arith.constant 0 : i32
    return %c0_i32, %c0_i32_0 : i32, i32
  }
  func.func @transform_1(%arg0: i32) -> (i32, i32, i32, i32) {
    %c0_i32 = arith.constant 0 : i32
    %c0_i32_0 = arith.constant 0 : i32
    %c0_i32_1 = arith.constant 0 : i32
    %c0_i32_2 = arith.constant 0 : i32
    return %arg0, %c0_i32, %c0_i32_0, %c0_i32_1 : i32, i32, i32, i32
  }
  func.func @transform_2(%arg0: i32) -> (i32, i32, i32) {
    %c0_i32 = arith.constant 0 : i32
    %c0_i32_0 = arith.constant 0 : i32
    %c0_i32_1 = arith.constant 0 : i32
    return %arg0, %c0_i32, %c0_i32_0 : i32, i32, i32
  }
  func.func @transform_3(%arg0: i32) -> (i32, i32, i32, i32) {
    %c0_i32 = arith.constant 0 : i32
    %c0_i32_0 = arith.constant 0 : i32
    %c0_i32_1 = arith.constant 0 : i32
    %c0_i32_2 = arith.constant 0 : i32
    return %arg0, %c0_i32, %c0_i32_0, %c0_i32_1 : i32, i32, i32, i32
  }
  func.func @transform_4(%arg0: i32) -> (i32, i32, i32) {
    %c0_i32 = arith.constant 0 : i32
    %c0_i32_0 = arith.constant 0 : i32
    %c0_i32_1 = arith.constant 0 : i32
    return %arg0, %c0_i32, %c0_i32_0 : i32, i32, i32
  }
  func.func @transform_5(%arg0: i32) -> (i32, i32, i32) {
    %c0_i32 = arith.constant 0 : i32
    %c0_i32_0 = arith.constant 0 : i32
    %c0_i32_1 = arith.constant 0 : i32
    return %arg0, %c0_i32, %c0_i32_0 : i32, i32, i32
  }
  func.func @transform_6(%arg0: i32) -> (i32, i32, i32) {
    %c0_i32 = arith.constant 0 : i32
    %c0_i32_0 = arith.constant 0 : i32
    %c0_i32_1 = arith.constant 0 : i32
    return %arg0, %c0_i32, %c0_i32_0 : i32, i32, i32
  }
  func.func @transform_7(%arg0: i32) -> (i32, i32, i32, i32) {
    %c0_i32 = arith.constant 0 : i32
    %c0_i32_0 = arith.constant 0 : i32
    %c0_i32_1 = arith.constant 0 : i32
    %c0_i32_2 = arith.constant 0 : i32
    return %arg0, %c0_i32, %c0_i32_0, %c0_i32_1 : i32, i32, i32, i32
  }
  func.func @transform_8(%arg0: i32) -> (i32, i32, i32) {
    %c0_i32 = arith.constant 0 : i32
    %c0_i32_0 = arith.constant 0 : i32
    %c0_i32_1 = arith.constant 0 : i32
    return %arg0, %c0_i32, %c0_i32_0 : i32, i32, i32
  }
  func.func @transform_9(%arg0: i32) -> (i32, i32, i32, i32) {
    %c0_i32 = arith.constant 0 : i32
    %c0_i32_0 = arith.constant 0 : i32
    %c0_i32_1 = arith.constant 0 : i32
    %c0_i32_2 = arith.constant 0 : i32
    return %arg0, %c0_i32, %c0_i32_0, %c0_i32_1 : i32, i32, i32, i32
  }
  func.func @transform_10(%arg0: i32) -> (i32, i32, i32) {
    %c0_i32 = arith.constant 0 : i32
    %c0_i32_0 = arith.constant 0 : i32
    %c0_i32_1 = arith.constant 0 : i32
    return %arg0, %c0_i32, %c0_i32_0 : i32, i32, i32
  }
  func.func @transform_11(%arg0: i32) -> (i32, i32, i32) {
    %c0_i32 = arith.constant 0 : i32
    %c0_i32_0 = arith.constant 0 : i32
    %c0_i32_1 = arith.constant 0 : i32
    return %arg0, %c0_i32, %c0_i32_0 : i32, i32, i32
  }
}

module attributes {stable_mosaic.version = 11 : i64} {
  func.func @_mlp3_kernel(%arg0: i32, %arg1: memref<4x1024xf32, #tpu.memory_space<vmem>>, %arg2: memref<1024x64xbf16, #tpu.memory_space<vmem>>, %arg3: memref<1x64xf32, #tpu.memory_space<vmem>>, %arg4: memref<64x64xbf16, #tpu.memory_space<vmem>>, %arg5: memref<1x64xf32, #tpu.memory_space<vmem>>, %arg6: memref<64x4xbf16, #tpu.memory_space<vmem>>, %arg7: memref<1x4xf32, #tpu.memory_space<vmem>>, %arg8: memref<4x4xf32, #tpu.memory_space<vmem>>) attributes {dimension_semantics = [#tpu.dimension_semantics<arbitrary>], iteration_bounds = array<i64: 1>, scalar_prefetch = 0 : i64, scratch_operands = 0 : i64, tpu.core_type = #tpu.core_type<tc>, window_params = [{pipeline_mode = #tpu.pipeline_mode<synchronous>, transform_indices = @transform_0, window_bounds = array<i64: 4, 1024>}, {pipeline_mode = #tpu.pipeline_mode<synchronous>, transform_indices = @transform_1, window_bounds = array<i64: 1024, 64>}, {pipeline_mode = #tpu.pipeline_mode<synchronous>, transform_indices = @transform_2, window_bounds = array<i64: 1, 64>}, {pipeline_mode = #tpu.pipeline_mode<synchronous>, transform_indices = @transform_3, window_bounds = array<i64: 64, 64>}, {pipeline_mode = #tpu.pipeline_mode<synchronous>, transform_indices = @transform_4, window_bounds = array<i64: 1, 64>}, {pipeline_mode = #tpu.pipeline_mode<synchronous>, transform_indices = @transform_5, window_bounds = array<i64: 64, 4>}, {pipeline_mode = #tpu.pipeline_mode<synchronous>, transform_indices = @transform_6, window_bounds = array<i64: 1, 4>}, {pipeline_mode = #tpu.pipeline_mode<synchronous>, transform_indices = @transform_7, window_bounds = array<i64: 4, 4>}]} {
    %c0 = arith.constant 0 : index
    %c0_0 = arith.constant 0 : index
    %0 = vector.load %arg1[%c0, %c0_0] : memref<4x1024xf32, #tpu.memory_space<vmem>>, vector<4x1024xf32>
    %1 = arith.truncf %0 : vector<4x1024xf32> to vector<4x1024xbf16>
    %c0_1 = arith.constant 0 : index
    %c0_2 = arith.constant 0 : index
    %2 = vector.load %arg2[%c0_1, %c0_2] : memref<1024x64xbf16, #tpu.memory_space<vmem>>, vector<1024x64xbf16>
    %cst = arith.constant dense<0.000000e+00> : vector<4x64xf32>
    %3 = tpu.matmul %1, %2, %cst {dimension_numbers = #tpu.dot_dimension_numbers<[1], [0], [0], [1], [0, 0, 1, 1], [], []>} : vector<4x1024xbf16>, vector<1024x64xbf16>, vector<4x64xf32> -> vector<4x64xf32>
    %c0_3 = arith.constant 0 : index
    %c0_4 = arith.constant 0 : index
    %4 = vector.load %arg3[%c0_3, %c0_4] : memref<1x64xf32, #tpu.memory_space<vmem>>, vector<1x64xf32>
    %5 = vector.broadcast %4 : vector<1x64xf32> to vector<4x64xf32>
    %6 = arith.addf %3, %5 : vector<4x64xf32>
    %7 = math.absf %6 : vector<4x64xf32>
    %cst_5 = arith.constant 0.000000e+00 : f32
    %8 = vector.broadcast %cst_5 : f32 to vector<4x64xf32>
    %9 = arith.subf %8, %7 : vector<4x64xf32>
    %10 = math.exp %9 : vector<4x64xf32>
    %11 = math.log1p %10 : vector<4x64xf32>
    %cst_6 = arith.constant 0.000000e+00 : f32
    %12 = vector.broadcast %cst_6 : f32 to vector<4x64xf32>
    %13 = arith.maximumf %6, %12 : vector<4x64xf32>
    %14 = arith.addf %11, %13 : vector<4x64xf32>
    %15 = math.tanh %14 : vector<4x64xf32>
    %16 = arith.mulf %6, %15 : vector<4x64xf32>
    %17 = arith.truncf %16 : vector<4x64xf32> to vector<4x64xbf16>
    %c0_7 = arith.constant 0 : index
    %c0_8 = arith.constant 0 : index
    %18 = vector.load %arg4[%c0_7, %c0_8] : memref<64x64xbf16, #tpu.memory_space<vmem>>, vector<64x64xbf16>
    %cst_9 = arith.constant dense<0.000000e+00> : vector<4x64xf32>
    %19 = tpu.matmul %17, %18, %cst_9 {dimension_numbers = #tpu.dot_dimension_numbers<[1], [0], [0], [1], [0, 0, 1, 1], [], []>} : vector<4x64xbf16>, vector<64x64xbf16>, vector<4x64xf32> -> vector<4x64xf32>
    %c0_10 = arith.constant 0 : index
    %c0_11 = arith.constant 0 : index
    %20 = vector.load %arg5[%c0_10, %c0_11] : memref<1x64xf32, #tpu.memory_space<vmem>>, vector<1x64xf32>
    %21 = vector.broadcast %20 : vector<1x64xf32> to vector<4x64xf32>
    %22 = arith.addf %19, %21 : vector<4x64xf32>
    %23 = math.absf %22 : vector<4x64xf32>
    %cst_12 = arith.constant 0.000000e+00 : f32
    %24 = vector.broadcast %cst_12 : f32 to vector<4x64xf32>
    %25 = arith.subf %24, %23 : vector<4x64xf32>
    %26 = math.exp %25 : vector<4x64xf32>
    %27 = math.log1p %26 : vector<4x64xf32>
    %cst_13 = arith.constant 0.000000e+00 : f32
    %28 = vector.broadcast %cst_13 : f32 to vector<4x64xf32>
    %29 = arith.maximumf %22, %28 : vector<4x64xf32>
    %30 = arith.addf %27, %29 : vector<4x64xf32>
    %31 = math.tanh %30 : vector<4x64xf32>
    %32 = arith.mulf %22, %31 : vector<4x64xf32>
    %33 = arith.truncf %32 : vector<4x64xf32> to vector<4x64xbf16>
    %c0_14 = arith.constant 0 : index
    %c0_15 = arith.constant 0 : index
    %34 = vector.load %arg6[%c0_14, %c0_15] : memref<64x4xbf16, #tpu.memory_space<vmem>>, vector<64x4xbf16>
    %cst_16 = arith.constant dense<0.000000e+00> : vector<4x4xf32>
    %35 = tpu.matmul %33, %34, %cst_16 {dimension_numbers = #tpu.dot_dimension_numbers<[1], [0], [0], [1], [0, 0, 1, 1], [], []>} : vector<4x64xbf16>, vector<64x4xbf16>, vector<4x4xf32> -> vector<4x4xf32>
    %c0_17 = arith.constant 0 : index
    %c0_18 = arith.constant 0 : index
    %36 = vector.load %arg7[%c0_17, %c0_18] : memref<1x4xf32, #tpu.memory_space<vmem>>, vector<1x4xf32>
    %37 = vector.broadcast %36 : vector<1x4xf32> to vector<4x4xf32>
    %38 = arith.addf %35, %37 : vector<4x4xf32>
    %c0_19 = arith.constant 0 : index
    %c0_20 = arith.constant 0 : index
    %39 = vector.load %arg8[%c0_19, %c0_20] : memref<4x4xf32, #tpu.memory_space<vmem>>, vector<4x4xf32>
    tpu.vector_store %arg8[%c0_19, %c0_20], %38 {strides = array<i32>} : memref<4x4xf32, #tpu.memory_space<vmem>>, vector<4x4xf32>,
    return
  }
  func.func @transform_0(%arg0: i32) -> (i32, i32) {
    %c0_i32 = arith.constant 0 : i32
    %c0_i32_0 = arith.constant 0 : i32
    %c0_i32_1 = arith.constant 0 : i32
    return %c0_i32, %c0_i32_0 : i32, i32
  }
  func.func @transform_1(%arg0: i32) -> (i32, i32) {
    %c0_i32 = arith.constant 0 : i32
    %c0_i32_0 = arith.constant 0 : i32
    %c0_i32_1 = arith.constant 0 : i32
    return %c0_i32, %c0_i32_0 : i32, i32
  }
  func.func @transform_2(%arg0: i32) -> (i32, i32) {
    %c0_i32 = arith.constant 0 : i32
    %c0_i32_0 = arith.constant 0 : i32
    %c0_i32_1 = arith.constant 0 : i32
    return %c0_i32, %c0_i32_0 : i32, i32
  }
  func.func @transform_3(%arg0: i32) -> (i32, i32) {
    %c0_i32 = arith.constant 0 : i32
    %c0_i32_0 = arith.constant 0 : i32
    %c0_i32_1 = arith.constant 0 : i32
    return %c0_i32, %c0_i32_0 : i32, i32
  }
  func.func @transform_4(%arg0: i32) -> (i32, i32) {
    %c0_i32 = arith.constant 0 : i32
    %c0_i32_0 = arith.constant 0 : i32
    %c0_i32_1 = arith.constant 0 : i32
    return %c0_i32, %c0_i32_0 : i32, i32
  }
  func.func @transform_5(%arg0: i32) -> (i32, i32) {
    %c0_i32 = arith.constant 0 : i32
    %c0_i32_0 = arith.constant 0 : i32
    %c0_i32_1 = arith.constant 0 : i32
    return %c0_i32, %c0_i32_0 : i32, i32
  }
  func.func @transform_6(%arg0: i32) -> (i32, i32) {
    %c0_i32 = arith.constant 0 : i32
    %c0_i32_0 = arith.constant 0 : i32
    %c0_i32_1 = arith.constant 0 : i32
    return %c0_i32, %c0_i32_0 : i32, i32
  }
  func.func @transform_7(%arg0: i32) -> (i32, i32) {
    %c0_i32 = arith.constant 0 : i32
    %c0_i32_0 = arith.constant 0 : i32
    %c0_i32_1 = arith.constant 0 : i32
    return %c0_i32, %c0_i32_0 : i32, i32
  }
}

</mosaic_0001>

<llo_original>
// kernel: res_tcn_driving_global_forward.4
$region0: #{res_tcn_driving_global_forward.4}
  #allocation0 [shape = 'u32[]', space=smem, size = 0x4, offset = 0x4, fixed_abs, tag = 'smem constant byte address 0x4 - core index']
  #allocation1 [shape = 'u32[72,128]{1,0:T(1,128)}', space=vmem, size = 0x9000, scoped, tag = 'internal scratch']
  %s0 = inlined_call_operand.vmem [shape: f32[16,512], index: 0, kind: input, shape index: {}]
  %s1 = inlined_call_operand.hbm [shape: bf16[2,3,512,128], index: 1, kind: input, shape index: {}]
  %s2 = inlined_call_operand.hbm [shape: f32[2,1,128], index: 2, kind: input, shape index: {}]
  %s3 = inlined_call_operand.hbm [shape: bf16[2,3,128,128], index: 3, kind: input, shape index: {}]
  %s4 = inlined_call_operand.hbm [shape: f32[2,1,128], index: 4, kind: input, shape index: {}]
  %s5 = inlined_call_operand.hbm [shape: bf16[2,512,128], index: 5, kind: input, shape index: {}]
  %s6 = inlined_call_operand.hbm [shape: f32[2,1,128], index: 6, kind: input, shape index: {}]
  %s7 = inlined_call_operand.hbm [shape: bf16[2,3,128,128], index: 7, kind: input, shape index: {}]
  %s8 = inlined_call_operand.hbm [shape: f32[2,1,128], index: 8, kind: input, shape index: {}]
  %s9 = inlined_call_operand.hbm [shape: bf16[2,3,128,128], index: 9, kind: input, shape index: {}]
  %s10 = inlined_call_operand.hbm [shape: f32[2,1,128], index: 10, kind: input, shape index: {}]
  %s11 = inlined_call_operand.vmem [shape: f32[4,128,8], index: 11, kind: output, shape index: {}]
  %s12 = sld [smem:[#allocation0]]
  $region117: #{res_tcn_driving_global_forward.4} parent=0
    _
  %s14 = ssub.s32 1, %s12
  %s15 = scalar_select 0, %s14, %s12
  $region1: #{res_tcn_driving_global_forward.4} parent=0
    #allocation2 [shape = 'u8[786432]{0}', space=vmem, size = 0xc0000, scoped, tag = 'input window, operand 1']
    #allocation3 [shape = 's32[2]{0}', space=sflag, size = 0x8, scoped, tag = 'scoped memory for res_tcn_driving_global_forward.4']
    #allocation4 [shape = 'u8[1024]{0}', space=vmem, size = 0x400, scoped, tag = 'input window, operand 2']
    #allocation5 [shape = 's32[2]{0}', space=sflag, size = 0x8, scoped, tag = 'scoped memory for res_tcn_driving_global_forward.4']
    #allocation6 [shape = 'u8[196608]{0}', space=vmem, size = 0x30000, scoped, tag = 'input window, operand 3']
    #allocation7 [shape = 'u8[1024]{0}', space=vmem, size = 0x400, scoped, tag = 'input window, operand 4']
    #allocation8 [shape = 's32[2]{0}', space=sflag, size = 0x8, scoped, tag = 'scoped memory for res_tcn_driving_global_forward.4']
    #allocation9 [shape = 'u8[262144]{0}', space=vmem, size = 0x40000, scoped, tag = 'input window, operand 5']
    #allocation10 [shape = 'u8[1024]{0}', space=vmem, size = 0x400, scoped, tag = 'input window, operand 6']
    #allocation11 [shape = 's32[2]{0}', space=sflag, size = 0x8, scoped, tag = 'scoped memory for res_tcn_driving_global_forward.4']
    #allocation12 [shape = 'u8[196608]{0}', space=vmem, size = 0x30000, scoped, tag = 'input window, operand 7']
    #allocation13 [shape = 'u8[1024]{0}', space=vmem, size = 0x400, scoped, tag = 'input window, operand 8']
    #allocation14 [shape = 's32[2]{0}', space=sflag, size = 0x8, scoped, tag = 'scoped memory for res_tcn_driving_global_forward.4']
    #allocation15 [shape = 'u8[196608]{0}', space=vmem, size = 0x30000, scoped, tag = 'input window, operand 9']
    #allocation16 [shape = 'u8[1024]{0}', space=vmem, size = 0x400, scoped, tag = 'input window, operand 10']
    #allocation17 [shape = 's32[2]{0}', space=sflag, size = 0x8, scoped, tag = 'scoped memory for res_tcn_driving_global_forward.4']
    %16 = vsyncpa [#allocation3], 0
    %s17 = scalar_lea.sflag [#allocation3], 1
    %18 = vsyncpa %s17, 0
    %19 = vsyncpa [#allocation5], 0
    %s20 = scalar_lea.sflag [#allocation5], 1
    %21 = vsyncpa %s20, 0
    %22 = vsyncpa [#allocation8], 0
    %s23 = scalar_lea.sflag [#allocation8], 1
    %24 = vsyncpa %s23, 0
    %25 = vsyncpa [#allocation11], 0
    %s26 = scalar_lea.sflag [#allocation11], 1
    %27 = vsyncpa %s26, 0
    %28 = vsyncpa [#allocation14], 0
    %s29 = scalar_lea.sflag [#allocation14], 1
    %30 = vsyncpa %s29, 0
    %31 = vsyncpa [#allocation17], 0
    %s32 = scalar_lea.sflag [#allocation17], 1
    %33 = vsyncpa %s32, 0
    loop: start=0, step=1, limit=4
    $region2: #{res_tcn_driving_global_forward.4} parent=1 // loop_pre_header
      _
    $region3: #{res_tcn_driving_global_forward.4} parent=1 // loop_header
      %s35 = sphi 0, %s39
      %p36 = scmp.ge.s32.totalorder %s35, 4
      %s43 = sphi 0, %s43
      %s45 = sphi 0, %s43
      %s46 = sphi 0, %s45
      %s60 = sphi 0, %s46
      %s66 = sphi 0, %s68
      %s69 = sphi 0, %s66
      %s70 = sphi 0, %s69
      %s86 = sphi 0, %s70
      %s92 = sphi 0, %s94
      %s95 = sphi 0, %s92
      %s96 = sphi 0, %s95
      %s112 = sphi 0, %s96
      %s118 = sphi 0, %s120
      %s121 = sphi 0, %s118
      %s122 = sphi 0, %s121
      %s138 = sphi 0, %s122
      %s144 = sphi 0, %s146
      %s147 = sphi 0, %s144
      %s148 = sphi 0, %s147
      %s164 = sphi 0, %s148
      %s170 = sphi 0, %s172
      %s173 = sphi 0, %s170
      %s174 = sphi 0, %s173
      %s190 = sphi 0, %s174
      %s196 = sphi 0, %s198
      %s199 = sphi 0, %s196
      %s200 = sphi 0, %s199
      %s216 = sphi 0, %s200
      %s222 = sphi 0, %s224
      %s225 = sphi 0, %s222
      %s226 = sphi 0, %s225
      %s242 = sphi 0, %s226
      %s248 = sphi 0, %s250
      %s251 = sphi 0, %s248
      %s252 = sphi 0, %s251
      %s268 = sphi 0, %s252
      %s274 = sphi 0, %s276
      %s277 = sphi 0, %s274
      %s278 = sphi 0, %s277
      %s294 = sphi 0, %s278
      %s300 = sphi 0, %s302
      %s303 = sphi 0, %s300
      %s304 = sphi 0, %s303
      %s320 = sphi 0, %s304
      %s326 = sphi 0, %s328
      %s329 = sphi 0, %s326
      %s330 = sphi 0, %s329
      %s346 = sphi 0, %s330
    $region4: #{res_tcn_driving_global_forward.4} parent=1 // loop_header_branch
      %38 = sbr.rel (%p36) target = $region8
    $region5: #{res_tcn_driving_global_forward.4} parent=1 // loop_body
      %s40 = ssub.s32 %s35, 1
      %s41 = ssub.s32 %s35, 2
      %s42 = sadd.s32 %s35, 1
      %s44 = sadd.s32 %s43, 1
      %p47 = scmp.eq.s32.totalorder %s35, 1
      %p48 = scmp.ne.s32.totalorder %s43, %s45
      %p49 = scmp.eq.s32.totalorder %s35, 0
      %p50 = por %p48, %p49
      %p51 = scmp.ne.s32.totalorder %s43, %s45
      %p52 = scmp.eq.s32.totalorder %s40, 1
      %p53 = por %p51, %p52
      %p54 = scmp.ne.s32.totalorder %s45, %s46
      %p55 = scmp.eq.s32.totalorder %s40, 0
      %p56 = por %p54, %p55
      %p57 = scmp.ne.s32.totalorder %s45, %s46
      %p58 = scmp.eq.s32.totalorder %s41, 1
      %p59 = por %p57, %p58
      %p61 = scmp.ne.s32.totalorder %s46, %s60
      %p62 = scmp.eq.s32.totalorder %s41, 0
      %p63 = por %p61, %p62
      %s64 = ssub.s32 %s35, %s42
      %p65 = scmp.eq.s32.totalorder %s64, 0
      %s67 = sadd.s32 %s66, 1
      %s68 = scalar_select %p65, %s66, %s67
      %p71 = pneg %p65
      %p72 = scmp.eq.s32.totalorder %s35, 1
      %p73 = por %p71, %p72
      %p74 = scmp.ne.s32.totalorder %s66, %s69
      %p75 = scmp.eq.s32.totalorder %s35, 0
      %p76 = por %p74, %p75
      %p77 = scmp.ne.s32.totalorder %s66, %s69
      %p78 = scmp.eq.s32.totalorder %s40, 1
      %p79 = por %p77, %p78
      %p80 = scmp.ne.s32.totalorder %s69, %s70
      %p81 = scmp.eq.s32.totalorder %s40, 0
      %p82 = por %p80, %p81
      %p83 = scmp.ne.s32.totalorder %s69, %s70
      %p84 = scmp.eq.s32.totalorder %s41, 1
      %p85 = por %p83, %p84
      %p87 = scmp.ne.s32.totalorder %s70, %s86
      %p88 = scmp.eq.s32.totalorder %s41, 0
      %p89 = por %p87, %p88
      %s90 = ssub.s32 %s35, %s42
      %p91 = scmp.eq.s32.totalorder %s90, 0
      %s93 = sadd.s32 %s92, 1
      %s94 = scalar_select %p91, %s92, %s93
      %p97 = pneg %p91
      %p98 = scmp.eq.s32.totalorder %s35, 1
      %p99 = por %p97, %p98
      %p100 = scmp.ne.s32.totalorder %s92, %s95
      %p101 = scmp.eq.s32.totalorder %s35, 0
      %p102 = por %p100, %p101
      %p103 = scmp.ne.s32.totalorder %s92, %s95
      %p104 = scmp.eq.s32.totalorder %s40, 1
      %p105 = por %p103, %p104
      %p106 = scmp.ne.s32.totalorder %s95, %s96
      %p107 = scmp.eq.s32.totalorder %s40, 0
      %p108 = por %p106, %p107
      %p109 = scmp.ne.s32.totalorder %s95, %s96
      %p110 = scmp.eq.s32.totalorder %s41, 1
      %p111 = por %p109, %p110
      %p113 = scmp.ne.s32.totalorder %s96, %s112
      %p114 = scmp.eq.s32.totalorder %s41, 0
      %p115 = por %p113, %p114
      %s116 = ssub.s32 %s35, %s42
      %p117 = scmp.eq.s32.totalorder %s116, 0
      %s119 = sadd.s32 %s118, 1
      %s120 = scalar_select %p117, %s118, %s119
      %p123 = pneg %p117
      %p124 = scmp.eq.s32.totalorder %s35, 1
      %p125 = por %p123, %p124
      %p126 = scmp.ne.s32.totalorder %s118, %s121
      %p127 = scmp.eq.s32.totalorder %s35, 0
      %p128 = por %p126, %p127
      %p129 = scmp.ne.s32.totalorder %s118, %s121
      %p130 = scmp.eq.s32.totalorder %s40, 1
      %p131 = por %p129, %p130
      %p132 = scmp.ne.s32.totalorder %s121, %s122
      %p133 = scmp.eq.s32.totalorder %s40, 0
      %p134 = por %p132, %p133
      %p135 = scmp.ne.s32.totalorder %s121, %s122
      %p136 = scmp.eq.s32.totalorder %s41, 1
      %p137 = por %p135, %p136
      %p139 = scmp.ne.s32.totalorder %s122, %s138
      %p140 = scmp.eq.s32.totalorder %s41, 0
      %p141 = por %p139, %p140
      %s142 = ssub.s32 %s35, %s42
      %p143 = scmp.eq.s32.totalorder %s142, 0
      %s145 = sadd.s32 %s144, 1
      %s146 = scalar_select %p143, %s144, %s145
      %p149 = pneg %p143
      %p150 = scmp.eq.s32.totalorder %s35, 1
      %p151 = por %p149, %p150
      %p152 = scmp.ne.s32.totalorder %s144, %s147
      %p153 = scmp.eq.s32.totalorder %s35, 0
      %p154 = por %p152, %p153
      %p155 = scmp.ne.s32.totalorder %s144, %s147
      %p156 = scmp.eq.s32.totalorder %s40, 1
      %p157 = por %p155, %p156
      %p158 = scmp.ne.s32.totalorder %s147, %s148
      %p159 = scmp.eq.s32.totalorder %s40, 0
      %p160 = por %p158, %p159
      %p161 = scmp.ne.s32.totalorder %s147, %s148
      %p162 = scmp.eq.s32.totalorder %s41, 1
      %p163 = por %p161, %p162
      %p165 = scmp.ne.s32.totalorder %s148, %s164
      %p166 = scmp.eq.s32.totalorder %s41, 0
      %p167 = por %p165, %p166
      %s168 = ssub.s32 %s35, %s42
      %p169 = scmp.eq.s32.totalorder %s168, 0
      %s171 = sadd.s32 %s170, 1
      %s172 = scalar_select %p169, %s170, %s171
      %p175 = pneg %p169
      %p176 = scmp.eq.s32.totalorder %s35, 1
      %p177 = por %p175, %p176
      %p178 = scmp.ne.s32.totalorder %s170, %s173
      %p179 = scmp.eq.s32.totalorder %s35, 0
      %p180 = por %p178, %p179
      %p181 = scmp.ne.s32.totalorder %s170, %s173
      %p182 = scmp.eq.s32.totalorder %s40, 1
      %p183 = por %p181, %p182
      %p184 = scmp.ne.s32.totalorder %s173, %s174
      %p185 = scmp.eq.s32.totalorder %s40, 0
      %p186 = por %p184, %p185
      %p187 = scmp.ne.s32.totalorder %s173, %s174
      %p188 = scmp.eq.s32.totalorder %s41, 1
      %p189 = por %p187, %p188
      %p191 = scmp.ne.s32.totalorder %s174, %s190
      %p192 = scmp.eq.s32.totalorder %s41, 0
      %p193 = por %p191, %p192
      %s194 = ssub.s32 %s35, %s42
      %p195 = scmp.eq.s32.totalorder %s194, 0
      %s197 = sadd.s32 %s196, 1
      %s198 = scalar_select %p195, %s196, %s197
      %p201 = pneg %p195
      %p202 = scmp.eq.s32.totalorder %s35, 1
      %p203 = por %p201, %p202
      %p204 = scmp.ne.s32.totalorder %s196, %s199
      %p205 = scmp.eq.s32.totalorder %s35, 0
      %p206 = por %p204, %p205
      %p207 = scmp.ne.s32.totalorder %s196, %s199
      %p208 = scmp.eq.s32.totalorder %s40, 1
      %p209 = por %p207, %p208
      %p210 = scmp.ne.s32.totalorder %s199, %s200
      %p211 = scmp.eq.s32.totalorder %s40, 0
      %p212 = por %p210, %p211
      %p213 = scmp.ne.s32.totalorder %s199, %s200
      %p214 = scmp.eq.s32.totalorder %s41, 1
      %p215 = por %p213, %p214
      %p217 = scmp.ne.s32.totalorder %s200, %s216
      %p218 = scmp.eq.s32.totalorder %s41, 0
      %p219 = por %p217, %p218
      %s220 = ssub.s32 %s35, %s42
      %p221 = scmp.eq.s32.totalorder %s220, 0
      %s223 = sadd.s32 %s222, 1
      %s224 = scalar_select %p221, %s222, %s223
      %p227 = pneg %p221
      %p228 = scmp.eq.s32.totalorder %s35, 1
      %p229 = por %p227, %p228
      %p230 = scmp.ne.s32.totalorder %s222, %s225
      %p231 = scmp.eq.s32.totalorder %s35, 0
      %p232 = por %p230, %p231
      %p233 = scmp.ne.s32.totalorder %s222, %s225
      %p234 = scmp.eq.s32.totalorder %s40, 1
      %p235 = por %p233, %p234
      %p236 = scmp.ne.s32.totalorder %s225, %s226
      %p237 = scmp.eq.s32.totalorder %s40, 0
      %p238 = por %p236, %p237
      %p239 = scmp.ne.s32.totalorder %s225, %s226
      %p240 = scmp.eq.s32.totalorder %s41, 1
      %p241 = por %p239, %p240
      %p243 = scmp.ne.s32.totalorder %s226, %s242
      %p244 = scmp.eq.s32.totalorder %s41, 0
      %p245 = por %p243, %p244
      %s246 = ssub.s32 %s35, %s42
      %p247 = scmp.eq.s32.totalorder %s246, 0
      %s249 = sadd.s32 %s248, 1
      %s250 = scalar_select %p247, %s248, %s249
      %p253 = pneg %p247
      %p254 = scmp.eq.s32.totalorder %s35, 1
      %p255 = por %p253, %p254
      %p256 = scmp.ne.s32.totalorder %s248, %s251
      %p257 = scmp.eq.s32.totalorder %s35, 0
      %p258 = por %p256, %p257
      %p259 = scmp.ne.s32.totalorder %s248, %s251
      %p260 = scmp.eq.s32.totalorder %s40, 1
      %p261 = por %p259, %p260
      %p262 = scmp.ne.s32.totalorder %s251, %s252
      %p263 = scmp.eq.s32.totalorder %s40, 0
      %p264 = por %p262, %p263
      %p265 = scmp.ne.s32.totalorder %s251, %s252
      %p266 = scmp.eq.s32.totalorder %s41, 1
      %p267 = por %p265, %p266
      %p269 = scmp.ne.s32.totalorder %s252, %s268
      %p270 = scmp.eq.s32.totalorder %s41, 0
      %p271 = por %p269, %p270
      %s272 = ssub.s32 %s35, %s42
      %p273 = scmp.eq.s32.totalorder %s272, 0
      %s275 = sadd.s32 %s274, 1
      %s276 = scalar_select %p273, %s274, %s275
      %p279 = pneg %p273
      %p280 = scmp.eq.s32.totalorder %s35, 1
      %p281 = por %p279, %p280
      %p282 = scmp.ne.s32.totalorder %s274, %s277
      %p283 = scmp.eq.s32.totalorder %s35, 0
      %p284 = por %p282, %p283
      %p285 = scmp.ne.s32.totalorder %s274, %s277
      %p286 = scmp.eq.s32.totalorder %s40, 1
      %p287 = por %p285, %p286
      %p288 = scmp.ne.s32.totalorder %s277, %s278
      %p289 = scmp.eq.s32.totalorder %s40, 0
      %p290 = por %p288, %p289
      %p291 = scmp.ne.s32.totalorder %s277, %s278
      %p292 = scmp.eq.s32.totalorder %s41, 1
      %p293 = por %p291, %p292
      %p295 = scmp.ne.s32.totalorder %s278, %s294
      %p296 = scmp.eq.s32.totalorder %s41, 0
      %p297 = por %p295, %p296
      %s298 = ssub.s32 %s35, %s42
      %p299 = scmp.eq.s32.totalorder %s298, 0
      %s301 = sadd.s32 %s300, 1
      %s302 = scalar_select %p299, %s300, %s301
      %p305 = pneg %p299
      %p306 = scmp.eq.s32.totalorder %s35, 1
      %p307 = por %p305, %p306
      %p308 = scmp.ne.s32.totalorder %s300, %s303
      %p309 = scmp.eq.s32.totalorder %s35, 0
      %p310 = por %p308, %p309
      %p311 = scmp.ne.s32.totalorder %s300, %s303
      %p312 = scmp.eq.s32.totalorder %s40, 1
      %p313 = por %p311, %p312
      %p314 = scmp.ne.s32.totalorder %s303, %s304
      %p315 = scmp.eq.s32.totalorder %s40, 0
      %p316 = por %p314, %p315
      %p317 = scmp.ne.s32.totalorder %s303, %s304
      %p318 = scmp.eq.s32.totalorder %s41, 1
      %p319 = por %p317, %p318
      %p321 = scmp.ne.s32.totalorder %s304, %s320
      %p322 = scmp.eq.s32.totalorder %s41, 0
      %p323 = por %p321, %p322
      %s324 = ssub.s32 %s35, %s42
      %p325 = scmp.eq.s32.totalorder %s324, 0
      %s327 = sadd.s32 %s326, 1
      %s328 = scalar_select %p325, %s326, %s327
      %p331 = pneg %p325
      %p332 = scmp.eq.s32.totalorder %s35, 1
      %p333 = por %p331, %p332
      %p334 = scmp.ne.s32.totalorder %s326, %s329
      %p335 = scmp.eq.s32.totalorder %s35, 0
      %p336 = por %p334, %p335
      %p337 = scmp.ne.s32.totalorder %s326, %s329
      %p338 = scmp.eq.s32.totalorder %s40, 1
      %p339 = por %p337, %p338
      %p340 = scmp.ne.s32.totalorder %s329, %s330
      %p341 = scmp.eq.s32.totalorder %s40, 0
      %p342 = por %p340, %p341
      %p343 = scmp.ne.s32.totalorder %s329, %s330
      %p344 = scmp.eq.s32.totalorder %s41, 1
      %p345 = por %p343, %p344
      %p347 = scmp.ne.s32.totalorder %s330, %s346
      %p348 = scmp.eq.s32.totalorder %s41, 0
      %p349 = por %p347, %p348
      %p350 = scmp.le.s32.totalorder 1, %s35
      %p351 = scmp.lt.s32.totalorder %s35, 3
      %p352 = pnand %p350, %p351
      %p353 = pneg %p352
      // Predicated region
      $region9: #{res_tcn_driving_global_forward.4} parent=5 // pred_check
        _
      $region10: #{res_tcn_driving_global_forward.4} parent=5 // pred_check_branch
        %355 = sbr.rel (%p352) target = $region12
      $region11: #{res_tcn_driving_global_forward.4} parent=5 // pred_region
        %s356 = ssub.s32 %s35, 1
        // Predicated region
        $region13: #{res_tcn_driving_global_forward.4} parent=11 // pred_check
          %p357 = pneg %p56
        $region14: #{res_tcn_driving_global_forward.4} parent=11 // pred_check_branch
          %359 = sbr.rel (%p357) target = $region16
        $region15: #{res_tcn_driving_global_forward.4} parent=11 // pred_region
          _
        $region16: #{res_tcn_driving_global_forward.4} parent=11 // pred_fallthru
          _
      $region12: #{res_tcn_driving_global_forward.4} parent=5 // pred_fallthru
        _
      %p360 = scmp.lt.s32.totalorder %s35, 2
      // Predicated region
      $region17: #{res_tcn_driving_global_forward.4} parent=5 // pred_check
        %p361 = pneg %p360
      $region18: #{res_tcn_driving_global_forward.4} parent=5 // pred_check_branch
        %363 = sbr.rel (%p361) target = $region20
      $region19: #{res_tcn_driving_global_forward.4} parent=5 // pred_region
        // Predicated region
        $region21: #{res_tcn_driving_global_forward.4} parent=19 // pred_check
          %p364 = pneg %p76
        $region22: #{res_tcn_driving_global_forward.4} parent=19 // pred_check_branch
          %366 = sbr.rel (%p364) target = $region24
        $region23: #{res_tcn_driving_global_forward.4} parent=19 // pred_region
          %s367 = sand.u32 %s66, 1
          %s368 = scalar_lea.sflag [#allocation3], %s367
          %s369 = sand.u32 %s66, 1
          %s370 = smul.addr %s369, 768
          %s371 = scalar_lea.vmem [#allocation2], %s370
          %373 = vsyncadd %s368, 0
          %s374 = smul.addr %s35, 192
          %s375 = smul.addr %s374, 4
          %s376 = scalar_lea.hbm %s1, %s375
          %s377 = sshll.u32 %s376, 4
          %s378 = int_to_ptr.hbm [resolvable:$true] %s377
          %s379 = sshll.u32 %s371, 4
          %s380 = int_to_ptr.vmem [resolvable:$true] %s379
          %385 = dma.hbm_to_vmem [thread:$0]  %s378, 12288, %s380, %s368, 64, 64, 4
        $region24: #{res_tcn_driving_global_forward.4} parent=19 // pred_fallthru
          _
        // Predicated region
        $region25: #{res_tcn_driving_global_forward.4} parent=19 // pred_check
          %p386 = pneg %p102
        $region26: #{res_tcn_driving_global_forward.4} parent=19 // pred_check_branch
          %388 = sbr.rel (%p386) target = $region28
        $region27: #{res_tcn_driving_global_forward.4} parent=19 // pred_region
          %s389 = sand.u32 %s35, 1
          %s390 = scalar_lea.sflag [#allocation5], %s389
          %s391 = sand.u32 %s92, 1
          %s392 = scalar_lea.vmem [#allocation4], %s391
          %394 = vsyncadd %s390, 0
          %s395 = scalar_lea.hbm %s2, %s35
          %s397 = sshll.u32 %s395, 4
          %s398 = int_to_ptr.hbm [resolvable:$true] %s397
          %s399 = sshll.u32 %s392, 4
          %s400 = int_to_ptr.vmem [resolvable:$true] %s399
          %402 = dma.hbm_to_vmem [thread:$0]  %s398, 16, %s400, %s390
        $region28: #{res_tcn_driving_global_forward.4} parent=19 // pred_fallthru
          _
        // Predicated region
        $region29: #{res_tcn_driving_global_forward.4} parent=19 // pred_check
          %p403 = pneg %p128
        $region30: #{res_tcn_driving_global_forward.4} parent=19 // pred_check_branch
          %405 = sbr.rel (%p403) target = $region32
        $region31: #{res_tcn_driving_global_forward.4} parent=19 // pred_region
          %s406 = sand.u32 %s35, 1
          %s407 = scalar_lea.sflag [#allocation5], %s406
          %s408 = sand.u32 %s118, 1
          %s409 = smul.addr %s408, 192
          %s410 = scalar_lea.vmem [#allocation6], %s409
          %412 = vsyncadd %s407, 0
          %s413 = smul.addr %s35, 48
          %s414 = smul.addr %s413, 4
          %s415 = scalar_lea.hbm %s3, %s414
          %s416 = sshll.u32 %s415, 4
          %s417 = int_to_ptr.hbm [resolvable:$true] %s416
          %s418 = sshll.u32 %s410, 4
          %s419 = int_to_ptr.vmem [resolvable:$true] %s418
          %424 = dma.hbm_to_vmem [thread:$0]  %s417, 3072, %s419, %s407, 64, 64, 4
        $region32: #{res_tcn_driving_global_forward.4} parent=19 // pred_fallthru
          _
        // Predicated region
        $region33: #{res_tcn_driving_global_forward.4} parent=19 // pred_check
          %p425 = pneg %p154
        $region34: #{res_tcn_driving_global_forward.4} parent=19 // pred_check_branch
          %427 = sbr.rel (%p425) target = $region36
        $region35: #{res_tcn_driving_global_forward.4} parent=19 // pred_region
          %s428 = sand.u32 %s35, 1
          %s429 = scalar_lea.sflag [#allocation8], %s428
          %s430 = sand.u32 %s144, 1
          %s431 = scalar_lea.vmem [#allocation7], %s430
          %433 = vsyncadd %s429, 0
          %s434 = scalar_lea.hbm %s4, %s35
          %s436 = sshll.u32 %s434, 4
          %s437 = int_to_ptr.hbm [resolvable:$true] %s436
          %s438 = sshll.u32 %s431, 4
          %s439 = int_to_ptr.vmem [resolvable:$true] %s438
          %441 = dma.hbm_to_vmem [thread:$0]  %s437, 16, %s439, %s429
        $region36: #{res_tcn_driving_global_forward.4} parent=19 // pred_fallthru
          _
        // Predicated region
        $region37: #{res_tcn_driving_global_forward.4} parent=19 // pred_check
          %p442 = pneg %p180
        $region38: #{res_tcn_driving_global_forward.4} parent=19 // pred_check_branch
          %444 = sbr.rel (%p442) target = $region40
        $region39: #{res_tcn_driving_global_forward.4} parent=19 // pred_region
          %s445 = sand.u32 %s35, 1
          %s446 = scalar_lea.sflag [#allocation8], %s445
          %s447 = sand.u32 %s170, 1
          %s448 = smul.addr %s447, 256
          %s449 = scalar_lea.vmem [#allocation9], %s448
          %451 = vsyncadd %s446, 0
          %s452 = smul.addr %s35, 64
          %s453 = smul.addr %s452, 4
          %s454 = scalar_lea.hbm %s5, %s453
          %s455 = sshll.u32 %s454, 4
          %s456 = int_to_ptr.hbm [resolvable:$true] %s455
          %s457 = sshll.u32 %s449, 4
          %s458 = int_to_ptr.vmem [resolvable:$true] %s457
          %463 = dma.hbm_to_vmem [thread:$0]  %s456, 4096, %s458, %s446, 64, 64, 4
        $region40: #{res_tcn_driving_global_forward.4} parent=19 // pred_fallthru
          _
        // Predicated region
        $region41: #{res_tcn_driving_global_forward.4} parent=19 // pred_check
          %p464 = pneg %p206
        $region42: #{res_tcn_driving_global_forward.4} parent=19 // pred_check_branch
          %466 = sbr.rel (%p464) target = $region44
        $region43: #{res_tcn_driving_global_forward.4} parent=19 // pred_region
          %s467 = sand.u32 %s35, 1
          %s468 = scalar_lea.sflag [#allocation11], %s467
          %s469 = sand.u32 %s196, 1
          %s470 = scalar_lea.vmem [#allocation10], %s469
          %472 = vsyncadd %s468, 0
          %s473 = scalar_lea.hbm %s6, %s35
          %s475 = sshll.u32 %s473, 4
          %s476 = int_to_ptr.hbm [resolvable:$true] %s475
          %s477 = sshll.u32 %s470, 4
          %s478 = int_to_ptr.vmem [resolvable:$true] %s477
          %480 = dma.hbm_to_vmem [thread:$0]  %s476, 16, %s478, %s468
        $region44: #{res_tcn_driving_global_forward.4} parent=19 // pred_fallthru
          _
        // Predicated region
        $region45: #{res_tcn_driving_global_forward.4} parent=19 // pred_check
          %p481 = pneg %p232
        $region46: #{res_tcn_driving_global_forward.4} parent=19 // pred_check_branch
          %483 = sbr.rel (%p481) target = $region48
        $region47: #{res_tcn_driving_global_forward.4} parent=19 // pred_region
          %s484 = sand.u32 %s35, 1
          %s485 = scalar_lea.sflag [#allocation11], %s484
          %s486 = sand.u32 %s222, 1
          %s487 = smul.addr %s486, 192
          %s488 = scalar_lea.vmem [#allocation12], %s487
          %490 = vsyncadd %s485, 0
          %s491 = smul.addr %s35, 48
          %s492 = smul.addr %s491, 4
          %s493 = scalar_lea.hbm %s7, %s492
          %s494 = sshll.u32 %s493, 4
          %s495 = int_to_ptr.hbm [resolvable:$true] %s494
          %s496 = sshll.u32 %s488, 4
          %s497 = int_to_ptr.vmem [resolvable:$true] %s496
          %502 = dma.hbm_to_vmem [thread:$0]  %s495, 3072, %s497, %s485, 64, 64, 4
        $region48: #{res_tcn_driving_global_forward.4} parent=19 // pred_fallthru
          _
        // Predicated region
        $region49: #{res_tcn_driving_global_forward.4} parent=19 // pred_check
          %p503 = pneg %p258
        $region50: #{res_tcn_driving_global_forward.4} parent=19 // pred_check_branch
          %505 = sbr.rel (%p503) target = $region52
        $region51: #{res_tcn_driving_global_forward.4} parent=19 // pred_region
          %s506 = sand.u32 %s35, 1
          %s507 = scalar_lea.sflag [#allocation14], %s506
          %s508 = sand.u32 %s248, 1
          %s509 = scalar_lea.vmem [#allocation13], %s508
          %511 = vsyncadd %s507, 0
          %s512 = scalar_lea.hbm %s8, %s35
          %s514 = sshll.u32 %s512, 4
          %s515 = int_to_ptr.hbm [resolvable:$true] %s514
          %s516 = sshll.u32 %s509, 4
          %s517 = int_to_ptr.vmem [resolvable:$true] %s516
          %519 = dma.hbm_to_vmem [thread:$0]  %s515, 16, %s517, %s507
        $region52: #{res_tcn_driving_global_forward.4} parent=19 // pred_fallthru
          _
        // Predicated region
        $region53: #{res_tcn_driving_global_forward.4} parent=19 // pred_check
          %p520 = pneg %p284
        $region54: #{res_tcn_driving_global_forward.4} parent=19 // pred_check_branch
          %522 = sbr.rel (%p520) target = $region56
        $region55: #{res_tcn_driving_global_forward.4} parent=19 // pred_region
          %s523 = sand.u32 %s35, 1
          %s524 = scalar_lea.sflag [#allocation14], %s523
          %s525 = sand.u32 %s274, 1
          %s526 = smul.addr %s525, 192
          %s527 = scalar_lea.vmem [#allocation15], %s526
          %529 = vsyncadd %s524, 0
          %s530 = smul.addr %s35, 48
          %s531 = smul.addr %s530, 4
          %s532 = scalar_lea.hbm %s9, %s531
          %s533 = sshll.u32 %s532, 4
          %s534 = int_to_ptr.hbm [resolvable:$true] %s533
          %s535 = sshll.u32 %s527, 4
          %s536 = int_to_ptr.vmem [resolvable:$true] %s535
          %541 = dma.hbm_to_vmem [thread:$0]  %s534, 3072, %s536, %s524, 64, 64, 4
        $region56: #{res_tcn_driving_global_forward.4} parent=19 // pred_fallthru
          _
        // Predicated region
        $region57: #{res_tcn_driving_global_forward.4} parent=19 // pred_check
          %p542 = pneg %p310
        $region58: #{res_tcn_driving_global_forward.4} parent=19 // pred_check_branch
          %544 = sbr.rel (%p542) target = $region60
        $region59: #{res_tcn_driving_global_forward.4} parent=19 // pred_region
          %s545 = sand.u32 %s300, 1
          %s546 = scalar_lea.sflag [#allocation17], %s545
          %s547 = sand.u32 %s300, 1
          %s548 = scalar_lea.vmem [#allocation16], %s547
          %550 = vsyncadd %s546, 0
          %s551 = scalar_lea.hbm %s10, %s35
          %s553 = sshll.u32 %s551, 4
          %s554 = int_to_ptr.hbm [resolvable:$true] %s553
          %s555 = sshll.u32 %s548, 4
          %s556 = int_to_ptr.vmem [resolvable:$true] %s555
          %558 = dma.hbm_to_vmem [thread:$0]  %s554, 16, %s556, %s546
        $region60: #{res_tcn_driving_global_forward.4} parent=19 // pred_fallthru
          _
      $region20: #{res_tcn_driving_global_forward.4} parent=5 // pred_fallthru
        _
      %p559 = scmp.le.s32.totalorder 1, %s35
      %p560 = scmp.lt.s32.totalorder %s35, 3
      %p561 = pnand %p559, %p560
      %p562 = pneg %p561
      // Predicated region
      $region61: #{res_tcn_driving_global_forward.4} parent=5 // pred_check
        _
      $region62: #{res_tcn_driving_global_forward.4} parent=5 // pred_check_branch
        %564 = sbr.rel (%p561) target = $region64
      $region63: #{res_tcn_driving_global_forward.4} parent=5 // pred_region
        %s565 = ssub.s32 %s35, 1
        %s566 = sand.u32 %s69, 1
        %s567 = scalar_lea.sflag [#allocation3], %s566
        %s568 = sand.u32 %s69, 1
        %s569 = smul.addr %s568, 768
        %s570 = scalar_lea.vmem [#allocation2], %s569
        // Predicated region
        $region65: #{res_tcn_driving_global_forward.4} parent=63 // pred_check
          %p571 = pneg %p82
        $region66: #{res_tcn_driving_global_forward.4} parent=63 // pred_check_branch
          %573 = sbr.rel (%p571) target = $region68
        $region67: #{res_tcn_driving_global_forward.4} parent=63 // pred_region
          %575 = dma.done %s567, 12288
        $region68: #{res_tcn_driving_global_forward.4} parent=63 // pred_fallthru
          _
        %s576 = sand.u32 %s40, 1
        %s577 = scalar_lea.sflag [#allocation5], %s576
        %s578 = sand.u32 %s95, 1
        %s579 = scalar_lea.vmem [#allocation4], %s578
        // Predicated region
        $region69: #{res_tcn_driving_global_forward.4} parent=63 // pred_check
          %p580 = pneg %p108
        $region70: #{res_tcn_driving_global_forward.4} parent=63 // pred_check_branch
          %582 = sbr.rel (%p580) target = $region72
        $region71: #{res_tcn_driving_global_forward.4} parent=63 // pred_region
          %584 = dma.done %s577, 16
        $region72: #{res_tcn_driving_global_forward.4} parent=63 // pred_fallthru
          _
        %s585 = sand.u32 %s40, 1
        %s586 = scalar_lea.sflag [#allocation5], %s585
        %s587 = sand.u32 %s121, 1
        %s588 = smul.addr %s587, 192
        %s589 = scalar_lea.vmem [#allocation6], %s588
        // Predicated region
        $region73: #{res_tcn_driving_global_forward.4} parent=63 // pred_check
          %p590 = pneg %p134
        $region74: #{res_tcn_driving_global_forward.4} parent=63 // pred_check_branch
          %592 = sbr.rel (%p590) target = $region76
        $region75: #{res_tcn_driving_global_forward.4} parent=63 // pred_region
          %594 = dma.done %s586, 3072
        $region76: #{res_tcn_driving_global_forward.4} parent=63 // pred_fallthru
          _
        %s595 = sand.u32 %s40, 1
        %s596 = scalar_lea.sflag [#allocation8], %s595
        %s597 = sand.u32 %s147, 1
        %s598 = scalar_lea.vmem [#allocation7], %s597
        // Predicated region
        $region77: #{res_tcn_driving_global_forward.4} parent=63 // pred_check
          %p599 = pneg %p160
        $region78: #{res_tcn_driving_global_forward.4} parent=63 // pred_check_branch
          %601 = sbr.rel (%p599) target = $region80
        $region79: #{res_tcn_driving_global_forward.4} parent=63 // pred_region
          %603 = dma.done %s596, 16
        $region80: #{res_tcn_driving_global_forward.4} parent=63 // pred_fallthru
          _
        %s604 = sand.u32 %s40, 1
        %s605 = scalar_lea.sflag [#allocation8], %s604
        %s606 = sand.u32 %s173, 1
        %s607 = smul.addr %s606, 256
        %s608 = scalar_lea.vmem [#allocation9], %s607
        // Predicated region
        $region81: #{res_tcn_driving_global_forward.4} parent=63 // pred_check
          %p609 = pneg %p186
        $region82: #{res_tcn_driving_global_forward.4} parent=63 // pred_check_branch
          %611 = sbr.rel (%p609) target = $region84
        $region83: #{res_tcn_driving_global_forward.4} parent=63 // pred_region
          %613 = dma.done %s605, 4096
        $region84: #{res_tcn_driving_global_forward.4} parent=63 // pred_fallthru
          _
        %s614 = sand.u32 %s40, 1
        %s615 = scalar_lea.sflag [#allocation11], %s614
        %s616 = sand.u32 %s199, 1
        %s617 = scalar_lea.vmem [#allocation10], %s616
        // Predicated region
        $region85: #{res_tcn_driving_global_forward.4} parent=63 // pred_check
          %p618 = pneg %p212
        $region86: #{res_tcn_driving_global_forward.4} parent=63 // pred_check_branch
          %620 = sbr.rel (%p618) target = $region88
        $region87: #{res_tcn_driving_global_forward.4} parent=63 // pred_region
          %622 = dma.done %s615, 16
        $region88: #{res_tcn_driving_global_forward.4} parent=63 // pred_fallthru
          _
        %s623 = sand.u32 %s40, 1
        %s624 = scalar_lea.sflag [#allocation11], %s623
        %s625 = sand.u32 %s225, 1
        %s626 = smul.addr %s625, 192
        %s627 = scalar_lea.vmem [#allocation12], %s626
        // Predicated region
        $region89: #{res_tcn_driving_global_forward.4} parent=63 // pred_check
          %p628 = pneg %p238
        $region90: #{res_tcn_driving_global_forward.4} parent=63 // pred_check_branch
          %630 = sbr.rel (%p628) target = $region92
        $region91: #{res_tcn_driving_global_forward.4} parent=63 // pred_region
          %632 = dma.done %s624, 3072
        $region92: #{res_tcn_driving_global_forward.4} parent=63 // pred_fallthru
          _
        %s633 = sand.u32 %s40, 1
        %s634 = scalar_lea.sflag [#allocation14], %s633
        %s635 = sand.u32 %s251, 1
        %s636 = scalar_lea.vmem [#allocation13], %s635
        // Predicated region
        $region93: #{res_tcn_driving_global_forward.4} parent=63 // pred_check
          %p637 = pneg %p264
        $region94: #{res_tcn_driving_global_forward.4} parent=63 // pred_check_branch
          %639 = sbr.rel (%p637) target = $region96
        $region95: #{res_tcn_driving_global_forward.4} parent=63 // pred_region
          %641 = dma.done %s634, 16
        $region96: #{res_tcn_driving_global_forward.4} parent=63 // pred_fallthru
          _
        %s642 = sand.u32 %s40, 1
        %s643 = scalar_lea.sflag [#allocation14], %s642
        %s644 = sand.u32 %s277, 1
        %s645 = smul.addr %s644, 192
        %s646 = scalar_lea.vmem [#allocation15], %s645
        // Predicated region
        $region97: #{res_tcn_driving_global_forward.4} parent=63 // pred_check
          %p647 = pneg %p290
        $region98: #{res_tcn_driving_global_forward.4} parent=63 // pred_check_branch
          %649 = sbr.rel (%p647) target = $region100
        $region99: #{res_tcn_driving_global_forward.4} parent=63 // pred_region
          %651 = dma.done %s643, 3072
        $region100: #{res_tcn_driving_global_forward.4} parent=63 // pred_fallthru
          _
        %s652 = sand.u32 %s303, 1
        %s653 = scalar_lea.sflag [#allocation17], %s652
        %s654 = sand.u32 %s303, 1
        %s655 = scalar_lea.vmem [#allocation16], %s654
        // Predicated region
        $region101: #{res_tcn_driving_global_forward.4} parent=63 // pred_check
          %p656 = pneg %p316
        $region102: #{res_tcn_driving_global_forward.4} parent=63 // pred_check_branch
          %658 = sbr.rel (%p656) target = $region104
        $region103: #{res_tcn_driving_global_forward.4} parent=63 // pred_region
          %660 = dma.done %s653, 16
        $region104: #{res_tcn_driving_global_forward.4} parent=63 // pred_fallthru
          _
        %p661 = pneg %p56
        %p662 = pneg %p53
        %s663 = sand.u32 %s69, 1
        %s664 = scalar_lea.sflag [#allocation3], %s663
        %s665 = sand.u32 %s69, 1
        %s666 = smul.addr %s665, 768
        %s667 = scalar_lea.vmem [#allocation2], %s666
        %p668 = pneg %p82
        %p669 = pneg %p79
        %s670 = sand.u32 %s40, 1
        %s671 = scalar_lea.sflag [#allocation5], %s670
        %s672 = sand.u32 %s95, 1
        %s673 = scalar_lea.vmem [#allocation4], %s672
        %p674 = pneg %p108
        %p675 = pneg %p105
        %s676 = sand.u32 %s40, 1
        %s677 = scalar_lea.sflag [#allocation5], %s676
        %s678 = sand.u32 %s121, 1
        %s679 = smul.addr %s678, 192
        %s680 = scalar_lea.vmem [#allocation6], %s679
        %p681 = pneg %p134
        %p682 = pneg %p131
        %s683 = sand.u32 %s40, 1
        %s684 = scalar_lea.sflag [#allocation8], %s683
        %s685 = sand.u32 %s147, 1
        %s686 = scalar_lea.vmem [#allocation7], %s685
        %p687 = pneg %p160
        %p688 = pneg %p157
        %s689 = sand.u32 %s40, 1
        %s690 = scalar_lea.sflag [#allocation8], %s689
        %s691 = sand.u32 %s173, 1
        %s692 = smul.addr %s691, 256
        %s693 = scalar_lea.vmem [#allocation9], %s692
        %p694 = pneg %p186
        %p695 = pneg %p183
        %s696 = sand.u32 %s40, 1
        %s697 = scalar_lea.sflag [#allocation11], %s696
        %s698 = sand.u32 %s199, 1
        %s699 = scalar_lea.vmem [#allocation10], %s698
        %p700 = pneg %p212
        %p701 = pneg %p209
        %s702 = sand.u32 %s40, 1
        %s703 = scalar_lea.sflag [#allocation11], %s702
        %s704 = sand.u32 %s225, 1
        %s705 = smul.addr %s704, 192
        %s706 = scalar_lea.vmem [#allocation12], %s705
        %p707 = pneg %p238
        %p708 = pneg %p235
        %s709 = sand.u32 %s40, 1
        %s710 = scalar_lea.sflag [#allocation14], %s709
        %s711 = sand.u32 %s251, 1
        %s712 = scalar_lea.vmem [#allocation13], %s711
        %p713 = pneg %p264
        %p714 = pneg %p261
        %s715 = sand.u32 %s40, 1
        %s716 = scalar_lea.sflag [#allocation14], %s715
        %s717 = sand.u32 %s277, 1
        %s718 = smul.addr %s717, 192
        %s719 = scalar_lea.vmem [#allocation15], %s718
        %p720 = pneg %p290
        %p721 = pneg %p287
        %s722 = sand.u32 %s303, 1
        %s723 = scalar_lea.sflag [#allocation17], %s722
        %s724 = sand.u32 %s303, 1
        %s725 = scalar_lea.vmem [#allocation16], %s724
        %p726 = pneg %p316
        %p727 = pneg %p313
        %p728 = pneg %p342
        %p729 = pneg %p339
        %s730 = smul.u32 2, %s40
        %p731 = scmp.lt.s32.totalorder %s730, 3
        %s732 = scalar_select %p731, %s730, 3
        %s733 = smul.addr %s732, 16
        %s734 = smul.addr %s733, 8
        %s735 = scalar_lea.vmem %s11, %s734
        %s736 = smul.u32 2, %s40
        %p737 = scmp.lt.s32.totalorder %s736, 3
        %s738 = scalar_select %p737, %s736, 3
        %s739 = smul.addr %s738, 16
        %s740 = smul.addr %s739, 8
        %s741 = scalar_lea.vmem %s11, %s740
        %s742 = smul.u32 2, %s40
        %v743 = vld [vmem:[%s0] sm:$0xff]
        %v744 = vld [vmem:[%s0 + $0x8] sm:$0xff]
        %v745 = vld [vmem:[%s0 + $0x10] sm:$0xff]
        %v746 = vld [vmem:[%s0 + $0x18] sm:$0xff]
        %v747 = vld [vmem:[%s0 + $0x20] sm:$0xff]
        %v748 = vld [vmem:[%s0 + $0x28] sm:$0xff]
        %v749 = vld [vmem:[%s0 + $0x30] sm:$0xff]
        %v750 = vld [vmem:[%s0 + $0x38] sm:$0xff]
        %v755 = vrot.slane %v743, 6
        %v756 = vrot.slane %v744, 6
        %v757 = vrot.slane %v745, 6
        %v758 = vrot.slane %v746, 6
        %v767 = vrot.slane %v747, 6
        %v768 = vrot.slane %v748, 6
        %v769 = vrot.slane %v749, 6
        %v770 = vrot.slane %v750, 6
        %vm775 = vcmask 1041408
        %v776 = vsel %vm775, 0.0, %v755
        %v777 = vsel %vm775, 0.0, %v756
        %v778 = vsel %vm775, 0.0, %v757
        %v779 = vsel %vm775, 0.0, %v758
        %v780 = vsel %vm775, 0.0, %v767
        %v781 = vsel %vm775, 0.0, %v768
        %v782 = vsel %vm775, 0.0, %v769
        %v783 = vsel %vm775, 0.0, %v770
        %v784 = vpack.c.bf16 %v780, %v776
        %v785 = vpack.c.bf16 %v781, %v777
        %v786 = vpack.c.bf16 %v782, %v778
        %v787 = vpack.c.bf16 %v783, %v779
        %v788 = vld [vmem:[%s570] sm:$0xf]
        %v789 = vld [vmem:[%s570 + $0x4] sm:$0xf]
        %v790 = vld [vmem:[%s570 + $0x8] sm:$0xf]
        %v791 = vld [vmem:[%s570 + $0xc] sm:$0xf]
        %v792 = vld [vmem:[%s570 + $0x10] sm:$0xf]
        %v793 = vld [vmem:[%s570 + $0x14] sm:$0xf]
        %v794 = vld [vmem:[%s570 + $0x18] sm:$0xf]
        %v795 = vld [vmem:[%s570 + $0x1c] sm:$0xf]
        %v796 = vld [vmem:[%s570 + $0x20] sm:$0xf]
        %v797 = vld [vmem:[%s570 + $0x24] sm:$0xf]
        %v798 = vld [vmem:[%s570 + $0x28] sm:$0xf]
        %v799 = vld [vmem:[%s570 + $0x2c] sm:$0xf]
        %v800 = vld [vmem:[%s570 + $0x30] sm:$0xf]
        %v801 = vld [vmem:[%s570 + $0x34] sm:$0xf]
        %v802 = vld [vmem:[%s570 + $0x38] sm:$0xf]
        %v803 = vld [vmem:[%s570 + $0x3c] sm:$0xf]
        %v804 = vld [vmem:[%s570 + $0x40] sm:$0xf]
        %v805 = vld [vmem:[%s570 + $0x44] sm:$0xf]
        %v806 = vld [vmem:[%s570 + $0x48] sm:$0xf]
        %v807 = vld [vmem:[%s570 + $0x4c] sm:$0xf]
        %v808 = vld [vmem:[%s570 + $0x50] sm:$0xf]
        %v809 = vld [vmem:[%s570 + $0x54] sm:$0xf]
        %v810 = vld [vmem:[%s570 + $0x58] sm:$0xf]
        %v811 = vld [vmem:[%s570 + $0x5c] sm:$0xf]
        %v812 = vld [vmem:[%s570 + $0x60] sm:$0xf]
        %v813 = vld [vmem:[%s570 + $0x64] sm:$0xf]
        %v814 = vld [vmem:[%s570 + $0x68] sm:$0xf]
        %v815 = vld [vmem:[%s570 + $0x6c] sm:$0xf]
        %v816 = vld [vmem:[%s570 + $0x70] sm:$0xf]
        %v817 = vld [vmem:[%s570 + $0x74] sm:$0xf]
        %v818 = vld [vmem:[%s570 + $0x78] sm:$0xf]
        %v819 = vld [vmem:[%s570 + $0x7c] sm:$0xf]
        %v820 = vld [vmem:[%s570 + $0x80] sm:$0xf]
        %v821 = vld [vmem:[%s570 + $0x84] sm:$0xf]
        %v822 = vld [vmem:[%s570 + $0x88] sm:$0xf]
        %v823 = vld [vmem:[%s570 + $0x8c] sm:$0xf]
        %v824 = vld [vmem:[%s570 + $0x90] sm:$0xf]
        %v825 = vld [vmem:[%s570 + $0x94] sm:$0xf]
        %v826 = vld [vmem:[%s570 + $0x98] sm:$0xf]
        %v827 = vld [vmem:[%s570 + $0x9c] sm:$0xf]
        %v828 = vld [vmem:[%s570 + $0xa0] sm:$0xf]
        %v829 = vld [vmem:[%s570 + $0xa4] sm:$0xf]
        %v830 = vld [vmem:[%s570 + $0xa8] sm:$0xf]
        %v831 = vld [vmem:[%s570 + $0xac] sm:$0xf]
        %v832 = vld [vmem:[%s570 + $0xb0] sm:$0xf]
        %v833 = vld [vmem:[%s570 + $0xb4] sm:$0xf]
        %v834 = vld [vmem:[%s570 + $0xb8] sm:$0xf]
        %v835 = vld [vmem:[%s570 + $0xbc] sm:$0xf]
        %v836 = vld [vmem:[%s570 + $0xc0] sm:$0xf]
        %v837 = vld [vmem:[%s570 + $0xc4] sm:$0xf]
        %v838 = vld [vmem:[%s570 + $0xc8] sm:$0xf]
        %v839 = vld [vmem:[%s570 + $0xcc] sm:$0xf]
        %v840 = vld [vmem:[%s570 + $0xd0] sm:$0xf]
        %v841 = vld [vmem:[%s570 + $0xd4] sm:$0xf]
        %v842 = vld [vmem:[%s570 + $0xd8] sm:$0xf]
        %v843 = vld [vmem:[%s570 + $0xdc] sm:$0xf]
        %v844 = vld [vmem:[%s570 + $0xe0] sm:$0xf]
        %v845 = vld [vmem:[%s570 + $0xe4] sm:$0xf]
        %v846 = vld [vmem:[%s570 + $0xe8] sm:$0xf]
        %v847 = vld [vmem:[%s570 + $0xec] sm:$0xf]
        %v848 = vld [vmem:[%s570 + $0xf0] sm:$0xf]
        %v849 = vld [vmem:[%s570 + $0xf4] sm:$0xf]
        %v850 = vld [vmem:[%s570 + $0xf8] sm:$0xf]
        %v851 = vld [vmem:[%s570 + $0xfc] sm:$0xf]
        %v852 = vrot.slane %v743, 7
        %v853 = vrot.slane %v744, 7
        %v854 = vrot.slane %v745, 7
        %v855 = vrot.slane %v746, 7
        %v860 = vrot.slane %v747, 7
        %v861 = vrot.slane %v748, 7
        %v862 = vrot.slane %v749, 7
        %v863 = vrot.slane %v750, 7
        %vm868 = vcmask 1040384
        %v869 = vsel %vm868, 0.0, %v852
        %v870 = vsel %vm868, 0.0, %v853
        %v871 = vsel %vm868, 0.0, %v854
        %v872 = vsel %vm868, 0.0, %v855
        %v873 = vsel %vm868, 0.0, %v860
        %v874 = vsel %vm868, 0.0, %v861
        %v875 = vsel %vm868, 0.0, %v862
        %v876 = vsel %vm868, 0.0, %v863
        %v877 = vpack.c.bf16 %v873, %v869
        %v878 = vpack.c.bf16 %v874, %v870
        %v879 = vpack.c.bf16 %v875, %v871
        %v880 = vpack.c.bf16 %v876, %v872
        %s881 = scalar_lea.vmem %s570, 256 [#allocation2]
        %v882 = vld [vmem:[%s881] sm:$0xf]
        %v883 = vld [vmem:[%s881 + $0x4] sm:$0xf]
        %v884 = vld [vmem:[%s881 + $0x8] sm:$0xf]
        %v885 = vld [vmem:[%s881 + $0xc] sm:$0xf]
        %v886 = vld [vmem:[%s881 + $0x10] sm:$0xf]
        %v887 = vld [vmem:[%s881 + $0x14] sm:$0xf]
        %v888 = vld [vmem:[%s881 + $0x18] sm:$0xf]
        %v889 = vld [vmem:[%s881 + $0x1c] sm:$0xf]
        %v890 = vld [vmem:[%s881 + $0x20] sm:$0xf]
        %v891 = vld [vmem:[%s881 + $0x24] sm:$0xf]
        %v892 = vld [vmem:[%s881 + $0x28] sm:$0xf]
        %v893 = vld [vmem:[%s881 + $0x2c] sm:$0xf]
        %v894 = vld [vmem:[%s881 + $0x30] sm:$0xf]
        %v895 = vld [vmem:[%s881 + $0x34] sm:$0xf]
        %v896 = vld [vmem:[%s881 + $0x38] sm:$0xf]
        %v897 = vld [vmem:[%s881 + $0x3c] sm:$0xf]
        %v898 = vld [vmem:[%s881 + $0x40] sm:$0xf]
        %v899 = vld [vmem:[%s881 + $0x44] sm:$0xf]
        %v900 = vld [vmem:[%s881 + $0x48] sm:$0xf]
        %v901 = vld [vmem:[%s881 + $0x4c] sm:$0xf]
        %v902 = vld [vmem:[%s881 + $0x50] sm:$0xf]
        %v903 = vld [vmem:[%s881 + $0x54] sm:$0xf]
        %v904 = vld [vmem:[%s881 + $0x58] sm:$0xf]
        %v905 = vld [vmem:[%s881 + $0x5c] sm:$0xf]
        %v906 = vld [vmem:[%s881 + $0x60] sm:$0xf]
        %v907 = vld [vmem:[%s881 + $0x64] sm:$0xf]
        %v908 = vld [vmem:[%s881 + $0x68] sm:$0xf]
        %v909 = vld [vmem:[%s881 + $0x6c] sm:$0xf]
        %v910 = vld [vmem:[%s881 + $0x70] sm:$0xf]
        %v911 = vld [vmem:[%s881 + $0x74] sm:$0xf]
        %v912 = vld [vmem:[%s881 + $0x78] sm:$0xf]
        %v913 = vld [vmem:[%s881 + $0x7c] sm:$0xf]
        %v914 = vld [vmem:[%s881 + $0x80] sm:$0xf]
        %v915 = vld [vmem:[%s881 + $0x84] sm:$0xf]
        %v916 = vld [vmem:[%s881 + $0x88] sm:$0xf]
        %v917 = vld [vmem:[%s881 + $0x8c] sm:$0xf]
        %v918 = vld [vmem:[%s881 + $0x90] sm:$0xf]
        %v919 = vld [vmem:[%s881 + $0x94] sm:$0xf]
        %v920 = vld [vmem:[%s881 + $0x98] sm:$0xf]
        %v921 = vld [vmem:[%s881 + $0x9c] sm:$0xf]
        %v922 = vld [vmem:[%s881 + $0xa0] sm:$0xf]
        %v923 = vld [vmem:[%s881 + $0xa4] sm:$0xf]
        %v924 = vld [vmem:[%s881 + $0xa8] sm:$0xf]
        %v925 = vld [vmem:[%s881 + $0xac] sm:$0xf]
        %v926 = vld [vmem:[%s881 + $0xb0] sm:$0xf]
        %v927 = vld [vmem:[%s881 + $0xb4] sm:$0xf]
        %v928 = vld [vmem:[%s881 + $0xb8] sm:$0xf]
        %v929 = vld [vmem:[%s881 + $0xbc] sm:$0xf]
        %v930 = vld [vmem:[%s881 + $0xc0] sm:$0xf]
        %v931 = vld [vmem:[%s881 + $0xc4] sm:$0xf]
        %v932 = vld [vmem:[%s881 + $0xc8] sm:$0xf]
        %v933 = vld [vmem:[%s881 + $0xcc] sm:$0xf]
        %v934 = vld [vmem:[%s881 + $0xd0] sm:$0xf]
        %v935 = vld [vmem:[%s881 + $0xd4] sm:$0xf]
        %v936 = vld [vmem:[%s881 + $0xd8] sm:$0xf]
        %v937 = vld [vmem:[%s881 + $0xdc] sm:$0xf]
        %v938 = vld [vmem:[%s881 + $0xe0] sm:$0xf]
        %v939 = vld [vmem:[%s881 + $0xe4] sm:$0xf]
        %v940 = vld [vmem:[%s881 + $0xe8] sm:$0xf]
        %v941 = vld [vmem:[%s881 + $0xec] sm:$0xf]
        %v942 = vld [vmem:[%s881 + $0xf0] sm:$0xf]
        %v943 = vld [vmem:[%s881 + $0xf4] sm:$0xf]
        %v944 = vld [vmem:[%s881 + $0xf8] sm:$0xf]
        %v945 = vld [vmem:[%s881 + $0xfc] sm:$0xf]
        %v1010 = vunpack.c.l.b16 %v882
        %v1011 = vunpack.c.l.b16 %v883
        %v1012 = vunpack.c.l.b16 %v884
        %v1013 = vunpack.c.l.b16 %v885
        %v1014 = vunpack.c.l.b16 %v886
        %v1015 = vunpack.c.l.b16 %v887
        %v1016 = vunpack.c.l.b16 %v888
        %v1017 = vunpack.c.l.b16 %v889
        %v1018 = vunpack.c.l.b16 %v890
        %v1019 = vunpack.c.l.b16 %v891
        %v1020 = vunpack.c.l.b16 %v892
        %v1021 = vunpack.c.l.b16 %v893
        %v1022 = vunpack.c.l.b16 %v894
        %v1023 = vunpack.c.l.b16 %v895
        %v1024 = vunpack.c.l.b16 %v896
        %v1025 = vunpack.c.l.b16 %v897
        %v1026 = vunpack.c.l.b16 %v898
        %v1027 = vunpack.c.l.b16 %v899
        %v1028 = vunpack.c.l.b16 %v900
        %v1029 = vunpack.c.l.b16 %v901
        %v1030 = vunpack.c.l.b16 %v902
        %v1031 = vunpack.c.l.b16 %v903
        %v1032 = vunpack.c.l.b16 %v904
        %v1033 = vunpack.c.l.b16 %v905
        %v1034 = vunpack.c.l.b16 %v906
        %v1035 = vunpack.c.l.b16 %v907
        %v1036 = vunpack.c.l.b16 %v908
        %v1037 = vunpack.c.l.b16 %v909
        %v1038 = vunpack.c.l.b16 %v910
        %v1039 = vunpack.c.l.b16 %v911
        %v1040 = vunpack.c.l.b16 %v912
        %v1041 = vunpack.c.l.b16 %v913
        %v1042 = vunpack.c.l.b16 %v914
        %v1043 = vunpack.c.l.b16 %v915
        %v1044 = vunpack.c.l.b16 %v916
        %v1045 = vunpack.c.l.b16 %v917
        %v1046 = vunpack.c.l.b16 %v918
        %v1047 = vunpack.c.l.b16 %v919
        %v1048 = vunpack.c.l.b16 %v920
        %v1049 = vunpack.c.l.b16 %v921
        %v1050 = vunpack.c.l.b16 %v922
        %v1051 = vunpack.c.l.b16 %v923
        %v1052 = vunpack.c.l.b16 %v924
        %v1053 = vunpack.c.l.b16 %v925
        %v1054 = vunpack.c.l.b16 %v926
        %v1055 = vunpack.c.l.b16 %v927
        %v1056 = vunpack.c.l.b16 %v928
        %v1057 = vunpack.c.l.b16 %v929
        %v1058 = vunpack.c.l.b16 %v930
        %v1059 = vunpack.c.l.b16 %v931
        %v1060 = vunpack.c.l.b16 %v932
        %v1061 = vunpack.c.l.b16 %v933
        %v1062 = vunpack.c.l.b16 %v934
        %v1063 = vunpack.c.l.b16 %v935
        %v1064 = vunpack.c.l.b16 %v936
        %v1065 = vunpack.c.l.b16 %v937
        %v1066 = vunpack.c.l.b16 %v938
        %v1067 = vunpack.c.l.b16 %v939
        %v1068 = vunpack.c.l.b16 %v940
        %v1069 = vunpack.c.l.b16 %v941
        %v1070 = vunpack.c.l.b16 %v942
        %v1071 = vunpack.c.l.b16 %v943
        %v1072 = vunpack.c.l.b16 %v944
        %v1073 = vunpack.c.l.b16 %v945
        %v1074 = vpack.c.b16 %v1011, %v1010
        %v1075 = vpack.c.b16 %v1013, %v1012
        %v1076 = vpack.c.b16 %v1015, %v1014
        %v1077 = vpack.c.b16 %v1017, %v1016
        %v1078 = vpack.c.b16 %v1019, %v1018
        %v1079 = vpack.c.b16 %v1021, %v1020
        %v1080 = vpack.c.b16 %v1023, %v1022
        %v1081 = vpack.c.b16 %v1025, %v1024
        %v1082 = vpack.c.b16 %v1027, %v1026
        %v1083 = vpack.c.b16 %v1029, %v1028
        %v1084 = vpack.c.b16 %v1031, %v1030
        %v1085 = vpack.c.b16 %v1033, %v1032
        %v1086 = vpack.c.b16 %v1035, %v1034
        %v1087 = vpack.c.b16 %v1037, %v1036
        %v1088 = vpack.c.b16 %v1039, %v1038
        %v1089 = vpack.c.b16 %v1041, %v1040
        %v1090 = vpack.c.b16 %v1043, %v1042
        %v1091 = vpack.c.b16 %v1045, %v1044
        %v1092 = vpack.c.b16 %v1047, %v1046
        %v1093 = vpack.c.b16 %v1049, %v1048
        %v1094 = vpack.c.b16 %v1051, %v1050
        %v1095 = vpack.c.b16 %v1053, %v1052
        %v1096 = vpack.c.b16 %v1055, %v1054
        %v1097 = vpack.c.b16 %v1057, %v1056
        %v1098 = vpack.c.b16 %v1059, %v1058
        %v1099 = vpack.c.b16 %v1061, %v1060
        %v1100 = vpack.c.b16 %v1063, %v1062
        %v1101 = vpack.c.b16 %v1065, %v1064
        %v1102 = vpack.c.b16 %v1067, %v1066
        %v1103 = vpack.c.b16 %v1069, %v1068
        %v1104 = vpack.c.b16 %v1071, %v1070
        %v1105 = vpack.c.b16 %v1073, %v1072
        %1138 = vmatpush.bf16.msra.mxu0 %v1081
        %1139 = vmatpush.bf16.msra.mxu0 %v1080
        %1140 = vmatpush.bf16.msra.mxu0 %v1079
        %1141 = vmatpush.bf16.msra.mxu0 %v1078
        %1142 = vmatpush.bf16.msra.mxu0 %v1077
        %1143 = vmatpush.bf16.msra.mxu0 %v1076
        %1144 = vmatpush.bf16.msra.mxu0 %v1075
        %1145 = vmatpush.bf16.msra.mxu0 %v1074
        %1146 = vmatmul.bf16.gmra.mxu0 %v877
        %v1147 = vpop.f32.mrf.mxu0
        %v1148 = vadd.f32 0.0, %v1147
        %v1149 = vpop.f32.mrf.mxu0
        %v1150 = vadd.f32 0.0, %v1149
        %1151 = vdwg.mxu0
        %1152 = vmatpush.bf16.msra.mxu0 %v1089
        %1153 = vmatpush.bf16.msra.mxu0 %v1088
        %1154 = vmatpush.bf16.msra.mxu0 %v1087
        %1155 = vmatpush.bf16.msra.mxu0 %v1086
        %1156 = vmatpush.bf16.msra.mxu0 %v1085
        %1157 = vmatpush.bf16.msra.mxu0 %v1084
        %1158 = vmatpush.bf16.msra.mxu0 %v1083
        %1159 = vmatpush.bf16.msra.mxu0 %v1082
        %1160 = vmatmul.bf16.gmra.mxu0 %v878
        %v1161 = vpop.f32.mrf.mxu0
        %v1162 = vadd.f32 %v1148, %v1161
        %v1163 = vpop.f32.mrf.mxu0
        %v1164 = vadd.f32 %v1150, %v1163
        %1165 = vdwg.mxu0
        %1166 = vmatpush.bf16.msra.mxu0 %v1097
        %1167 = vmatpush.bf16.msra.mxu0 %v1096
        %1168 = vmatpush.bf16.msra.mxu0 %v1095
        %1169 = vmatpush.bf16.msra.mxu0 %v1094
        %1170 = vmatpush.bf16.msra.mxu0 %v1093
        %1171 = vmatpush.bf16.msra.mxu0 %v1092
        %1172 = vmatpush.bf16.msra.mxu0 %v1091
        %1173 = vmatpush.bf16.msra.mxu0 %v1090
        %1174 = vmatmul.bf16.gmra.mxu0 %v879
        %v1175 = vpop.f32.mrf.mxu0
        %v1176 = vadd.f32 %v1162, %v1175
        %v1177 = vpop.f32.mrf.mxu0
        %v1178 = vadd.f32 %v1164, %v1177
        %1179 = vdwg.mxu0
        %1180 = vmatpush.bf16.msra.mxu0 %v1105
        %1181 = vmatpush.bf16.msra.mxu0 %v1104
        %1182 = vmatpush.bf16.msra.mxu0 %v1103
        %1183 = vmatpush.bf16.msra.mxu0 %v1102
        %1184 = vmatpush.bf16.msra.mxu0 %v1101
        %1185 = vmatpush.bf16.msra.mxu0 %v1100
        %1186 = vmatpush.bf16.msra.mxu0 %v1099
        %1187 = vmatpush.bf16.msra.mxu0 %v1098
        %1188 = vmatmul.bf16.gmra.mxu0 %v880
        %v1189 = vpop.f32.mrf.mxu0
        %v1190 = vadd.f32 %v1176, %v1189
        %v1191 = vpop.f32.mrf.mxu0
        %v1192 = vadd.f32 %v1178, %v1191
        %1193 = vdwg.mxu0
        %v1258 = vunpack.c.l.b16 %v788
        %v1259 = vunpack.c.l.b16 %v789
        %v1260 = vunpack.c.l.b16 %v790
        %v1261 = vunpack.c.l.b16 %v791
        %v1262 = vunpack.c.l.b16 %v792
        %v1263 = vunpack.c.l.b16 %v793
        %v1264 = vunpack.c.l.b16 %v794
        %v1265 = vunpack.c.l.b16 %v795
        %v1266 = vunpack.c.l.b16 %v796
        %v1267 = vunpack.c.l.b16 %v797
        %v1268 = vunpack.c.l.b16 %v798
        %v1269 = vunpack.c.l.b16 %v799
        %v1270 = vunpack.c.l.b16 %v800
        %v1271 = vunpack.c.l.b16 %v801
        %v1272 = vunpack.c.l.b16 %v802
        %v1273 = vunpack.c.l.b16 %v803
        %v1274 = vunpack.c.l.b16 %v804
        %v1275 = vunpack.c.l.b16 %v805
        %v1276 = vunpack.c.l.b16 %v806
        %v1277 = vunpack.c.l.b16 %v807
        %v1278 = vunpack.c.l.b16 %v808
        %v1279 = vunpack.c.l.b16 %v809
        %v1280 = vunpack.c.l.b16 %v810
        %v1281 = vunpack.c.l.b16 %v811
        %v1282 = vunpack.c.l.b16 %v812
        %v1283 = vunpack.c.l.b16 %v813
        %v1284 = vunpack.c.l.b16 %v814
        %v1285 = vunpack.c.l.b16 %v815
        %v1286 = vunpack.c.l.b16 %v816
        %v1287 = vunpack.c.l.b16 %v817
        %v1288 = vunpack.c.l.b16 %v818
        %v1289 = vunpack.c.l.b16 %v819
        %v1290 = vunpack.c.l.b16 %v820
        %v1291 = vunpack.c.l.b16 %v821
        %v1292 = vunpack.c.l.b16 %v822
        %v1293 = vunpack.c.l.b16 %v823
        %v1294 = vunpack.c.l.b16 %v824
        %v1295 = vunpack.c.l.b16 %v825
        %v1296 = vunpack.c.l.b16 %v826
        %v1297 = vunpack.c.l.b16 %v827
        %v1298 = vunpack.c.l.b16 %v828
        %v1299 = vunpack.c.l.b16 %v829
        %v1300 = vunpack.c.l.b16 %v830
        %v1301 = vunpack.c.l.b16 %v831
        %v1302 = vunpack.c.l.b16 %v832
        %v1303 = vunpack.c.l.b16 %v833
        %v1304 = vunpack.c.l.b16 %v834
        %v1305 = vunpack.c.l.b16 %v835
        %v1306 = vunpack.c.l.b16 %v836
        %v1307 = vunpack.c.l.b16 %v837
        %v1308 = vunpack.c.l.b16 %v838
        %v1309 = vunpack.c.l.b16 %v839
        %v1310 = vunpack.c.l.b16 %v840
        %v1311 = vunpack.c.l.b16 %v841
        %v1312 = vunpack.c.l.b16 %v842
        %v1313 = vunpack.c.l.b16 %v843
        %v1314 = vunpack.c.l.b16 %v844
        %v1315 = vunpack.c.l.b16 %v845
        %v1316 = vunpack.c.l.b16 %v846
        %v1317 = vunpack.c.l.b16 %v847
        %v1318 = vunpack.c.l.b16 %v848
        %v1319 = vunpack.c.l.b16 %v849
        %v1320 = vunpack.c.l.b16 %v850
        %v1321 = vunpack.c.l.b16 %v851
        %v1322 = vpack.c.b16 %v1259, %v1258
        %v1323 = vpack.c.b16 %v1261, %v1260
        %v1324 = vpack.c.b16 %v1263, %v1262
        %v1325 = vpack.c.b16 %v1265, %v1264
        %v1326 = vpack.c.b16 %v1267, %v1266
        %v1327 = vpack.c.b16 %v1269, %v1268
        %v1328 = vpack.c.b16 %v1271, %v1270
        %v1329 = vpack.c.b16 %v1273, %v1272
        %v1330 = vpack.c.b16 %v1275, %v1274
        %v1331 = vpack.c.b16 %v1277, %v1276
        %v1332 = vpack.c.b16 %v1279, %v1278
        %v1333 = vpack.c.b16 %v1281, %v1280
        %v1334 = vpack.c.b16 %v1283, %v1282
        %v1335 = vpack.c.b16 %v1285, %v1284
        %v1336 = vpack.c.b16 %v1287, %v1286
        %v1337 = vpack.c.b16 %v1289, %v1288
        %v1338 = vpack.c.b16 %v1291, %v1290
        %v1339 = vpack.c.b16 %v1293, %v1292
        %v1340 = vpack.c.b16 %v1295, %v1294
        %v1341 = vpack.c.b16 %v1297, %v1296
        %v1342 = vpack.c.b16 %v1299, %v1298
        %v1343 = vpack.c.b16 %v1301, %v1300
        %v1344 = vpack.c.b16 %v1303, %v1302
        %v1345 = vpack.c.b16 %v1305, %v1304
        %v1346 = vpack.c.b16 %v1307, %v1306
        %v1347 = vpack.c.b16 %v1309, %v1308
        %v1348 = vpack.c.b16 %v1311, %v1310
        %v1349 = vpack.c.b16 %v1313, %v1312
        %v1350 = vpack.c.b16 %v1315, %v1314
        %v1351 = vpack.c.b16 %v1317, %v1316
        %v1352 = vpack.c.b16 %v1319, %v1318
        %v1353 = vpack.c.b16 %v1321, %v1320
        %1386 = vmatpush.bf16.msra.mxu0 %v1329
        %1387 = vmatpush.bf16.msra.mxu0 %v1328
        %1388 = vmatpush.bf16.msra.mxu0 %v1327
        %1389 = vmatpush.bf16.msra.mxu0 %v1326
        %1390 = vmatpush.bf16.msra.mxu0 %v1325
        %1391 = vmatpush.bf16.msra.mxu0 %v1324
        %1392 = vmatpush.bf16.msra.mxu0 %v1323
        %1393 = vmatpush.bf16.msra.mxu0 %v1322
        %1394 = vmatmul.bf16.gmra.mxu0 %v784
        %v1395 = vpop.f32.mrf.mxu0
        %v1396 = vadd.f32 %v1190, %v1395
        %v1397 = vpop.f32.mrf.mxu0
        %v1398 = vadd.f32 %v1192, %v1397
        %1399 = vdwg.mxu0
        %1400 = vmatpush.bf16.msra.mxu0 %v1337
        %1401 = vmatpush.bf16.msra.mxu0 %v1336
        %1402 = vmatpush.bf16.msra.mxu0 %v1335
        %1403 = vmatpush.bf16.msra.mxu0 %v1334
        %1404 = vmatpush.bf16.msra.mxu0 %v1333
        %1405 = vmatpush.bf16.msra.mxu0 %v1332
        %1406 = vmatpush.bf16.msra.mxu0 %v1331
        %1407 = vmatpush.bf16.msra.mxu0 %v1330
        %1408 = vmatmul.bf16.gmra.mxu0 %v785
        %v1409 = vpop.f32.mrf.mxu0
        %v1410 = vadd.f32 %v1396, %v1409
        %v1411 = vpop.f32.mrf.mxu0
        %v1412 = vadd.f32 %v1398, %v1411
        %1413 = vdwg.mxu0
        %1414 = vmatpush.bf16.msra.mxu0 %v1345
        %1415 = vmatpush.bf16.msra.mxu0 %v1344
        %1416 = vmatpush.bf16.msra.mxu0 %v1343
        %1417 = vmatpush.bf16.msra.mxu0 %v1342
        %1418 = vmatpush.bf16.msra.mxu0 %v1341
        %1419 = vmatpush.bf16.msra.mxu0 %v1340
        %1420 = vmatpush.bf16.msra.mxu0 %v1339
        %1421 = vmatpush.bf16.msra.mxu0 %v1338
        %1422 = vmatmul.bf16.gmra.mxu0 %v786
        %v1423 = vpop.f32.mrf.mxu0
        %v1424 = vadd.f32 %v1410, %v1423
        %v1425 = vpop.f32.mrf.mxu0
        %v1426 = vadd.f32 %v1412, %v1425
        %1427 = vdwg.mxu0
        %1428 = vmatpush.bf16.msra.mxu0 %v1353
        %1429 = vmatpush.bf16.msra.mxu0 %v1352
        %1430 = vmatpush.bf16.msra.mxu0 %v1351
        %1431 = vmatpush.bf16.msra.mxu0 %v1350
        %1432 = vmatpush.bf16.msra.mxu0 %v1349
        %1433 = vmatpush.bf16.msra.mxu0 %v1348
        %1434 = vmatpush.bf16.msra.mxu0 %v1347
        %1435 = vmatpush.bf16.msra.mxu0 %v1346
        %1436 = vmatmul.bf16.gmra.mxu0 %v787
        %v1437 = vpop.f32.mrf.mxu0
        %v1438 = vadd.f32 %v1424, %v1437
        %v1439 = vpop.f32.mrf.mxu0
        %v1440 = vadd.f32 %v1426, %v1439
        %1441 = vdwg.mxu0
        %v1442 = vpack.c.bf16 %v747, %v743
        %v1443 = vpack.c.bf16 %v748, %v744
        %v1444 = vpack.c.bf16 %v749, %v745
        %v1445 = vpack.c.bf16 %v750, %v746
        %s1446 = scalar_lea.vmem %s570, 512 [#allocation2]
        %v1447 = vld [vmem:[%s1446] sm:$0xf]
        %v1448 = vld [vmem:[%s1446 + $0x4] sm:$0xf]
        %v1449 = vld [vmem:[%s1446 + $0x8] sm:$0xf]
        %v1450 = vld [vmem:[%s1446 + $0xc] sm:$0xf]
        %v1451 = vld [vmem:[%s1446 + $0x10] sm:$0xf]
        %v1452 = vld [vmem:[%s1446 + $0x14] sm:$0xf]
        %v1453 = vld [vmem:[%s1446 + $0x18] sm:$0xf]
        %v1454 = vld [vmem:[%s1446 + $0x1c] sm:$0xf]
        %v1455 = vld [vmem:[%s1446 + $0x20] sm:$0xf]
        %v1456 = vld [vmem:[%s1446 + $0x24] sm:$0xf]
        %v1457 = vld [vmem:[%s1446 + $0x28] sm:$0xf]
        %v1458 = vld [vmem:[%s1446 + $0x2c] sm:$0xf]
        %v1459 = vld [vmem:[%s1446 + $0x30] sm:$0xf]
        %v1460 = vld [vmem:[%s1446 + $0x34] sm:$0xf]
        %v1461 = vld [vmem:[%s1446 + $0x38] sm:$0xf]
        %v1462 = vld [vmem:[%s1446 + $0x3c] sm:$0xf]
        %v1463 = vld [vmem:[%s1446 + $0x40] sm:$0xf]
        %v1464 = vld [vmem:[%s1446 + $0x44] sm:$0xf]
        %v1465 = vld [vmem:[%s1446 + $0x48] sm:$0xf]
        %v1466 = vld [vmem:[%s1446 + $0x4c] sm:$0xf]
        %v1467 = vld [vmem:[%s1446 + $0x50] sm:$0xf]
        %v1468 = vld [vmem:[%s1446 + $0x54] sm:$0xf]
        %v1469 = vld [vmem:[%s1446 + $0x58] sm:$0xf]
        %v1470 = vld [vmem:[%s1446 + $0x5c] sm:$0xf]
        %v1471 = vld [vmem:[%s1446 + $0x60] sm:$0xf]
        %v1472 = vld [vmem:[%s1446 + $0x64] sm:$0xf]
        %v1473 = vld [vmem:[%s1446 + $0x68] sm:$0xf]
        %v1474 = vld [vmem:[%s1446 + $0x6c] sm:$0xf]
        %v1475 = vld [vmem:[%s1446 + $0x70] sm:$0xf]
        %v1476 = vld [vmem:[%s1446 + $0x74] sm:$0xf]
        %v1477 = vld [vmem:[%s1446 + $0x78] sm:$0xf]
        %v1478 = vld [vmem:[%s1446 + $0x7c] sm:$0xf]
        %v1479 = vld [vmem:[%s1446 + $0x80] sm:$0xf]
        %v1480 = vld [vmem:[%s1446 + $0x84] sm:$0xf]
        %v1481 = vld [vmem:[%s1446 + $0x88] sm:$0xf]
        %v1482 = vld [vmem:[%s1446 + $0x8c] sm:$0xf]
        %v1483 = vld [vmem:[%s1446 + $0x90] sm:$0xf]
        %v1484 = vld [vmem:[%s1446 + $0x94] sm:$0xf]
        %v1485 = vld [vmem:[%s1446 + $0x98] sm:$0xf]
        %v1486 = vld [vmem:[%s1446 + $0x9c] sm:$0xf]
        %v1487 = vld [vmem:[%s1446 + $0xa0] sm:$0xf]
        %v1488 = vld [vmem:[%s1446 + $0xa4] sm:$0xf]
        %v1489 = vld [vmem:[%s1446 + $0xa8] sm:$0xf]
        %v1490 = vld [vmem:[%s1446 + $0xac] sm:$0xf]
        %v1491 = vld [vmem:[%s1446 + $0xb0] sm:$0xf]
        %v1492 = vld [vmem:[%s1446 + $0xb4] sm:$0xf]
        %v1493 = vld [vmem:[%s1446 + $0xb8] sm:$0xf]
        %v1494 = vld [vmem:[%s1446 + $0xbc] sm:$0xf]
        %v1495 = vld [vmem:[%s1446 + $0xc0] sm:$0xf]
        %v1496 = vld [vmem:[%s1446 + $0xc4] sm:$0xf]
        %v1497 = vld [vmem:[%s1446 + $0xc8] sm:$0xf]
        %v1498 = vld [vmem:[%s1446 + $0xcc] sm:$0xf]
        %v1499 = vld [vmem:[%s1446 + $0xd0] sm:$0xf]
        %v1500 = vld [vmem:[%s1446 + $0xd4] sm:$0xf]
        %v1501 = vld [vmem:[%s1446 + $0xd8] sm:$0xf]
        %v1502 = vld [vmem:[%s1446 + $0xdc] sm:$0xf]
        %v1503 = vld [vmem:[%s1446 + $0xe0] sm:$0xf]
        %v1504 = vld [vmem:[%s1446 + $0xe4] sm:$0xf]
        %v1505 = vld [vmem:[%s1446 + $0xe8] sm:$0xf]
        %v1506 = vld [vmem:[%s1446 + $0xec] sm:$0xf]
        %v1507 = vld [vmem:[%s1446 + $0xf0] sm:$0xf]
        %v1508 = vld [vmem:[%s1446 + $0xf4] sm:$0xf]
        %v1509 = vld [vmem:[%s1446 + $0xf8] sm:$0xf]
        %v1510 = vld [vmem:[%s1446 + $0xfc] sm:$0xf]
        %v1575 = vunpack.c.l.b16 %v1447
        %v1576 = vunpack.c.l.b16 %v1448
        %v1577 = vunpack.c.l.b16 %v1449
        %v1578 = vunpack.c.l.b16 %v1450
        %v1579 = vunpack.c.l.b16 %v1451
        %v1580 = vunpack.c.l.b16 %v1452
        %v1581 = vunpack.c.l.b16 %v1453
        %v1582 = vunpack.c.l.b16 %v1454
        %v1583 = vunpack.c.l.b16 %v1455
        %v1584 = vunpack.c.l.b16 %v1456
        %v1585 = vunpack.c.l.b16 %v1457
        %v1586 = vunpack.c.l.b16 %v1458
        %v1587 = vunpack.c.l.b16 %v1459
        %v1588 = vunpack.c.l.b16 %v1460
        %v1589 = vunpack.c.l.b16 %v1461
        %v1590 = vunpack.c.l.b16 %v1462
        %v1591 = vunpack.c.l.b16 %v1463
        %v1592 = vunpack.c.l.b16 %v1464
        %v1593 = vunpack.c.l.b16 %v1465
        %v1594 = vunpack.c.l.b16 %v1466
        %v1595 = vunpack.c.l.b16 %v1467
        %v1596 = vunpack.c.l.b16 %v1468
        %v1597 = vunpack.c.l.b16 %v1469
        %v1598 = vunpack.c.l.b16 %v1470
        %v1599 = vunpack.c.l.b16 %v1471
        %v1600 = vunpack.c.l.b16 %v1472
        %v1601 = vunpack.c.l.b16 %v1473
        %v1602 = vunpack.c.l.b16 %v1474
        %v1603 = vunpack.c.l.b16 %v1475
        %v1604 = vunpack.c.l.b16 %v1476
        %v1605 = vunpack.c.l.b16 %v1477
        %v1606 = vunpack.c.l.b16 %v1478
        %v1607 = vunpack.c.l.b16 %v1479
        %v1608 = vunpack.c.l.b16 %v1480
        %v1609 = vunpack.c.l.b16 %v1481
        %v1610 = vunpack.c.l.b16 %v1482
        %v1611 = vunpack.c.l.b16 %v1483
        %v1612 = vunpack.c.l.b16 %v1484
        %v1613 = vunpack.c.l.b16 %v1485
        %v1614 = vunpack.c.l.b16 %v1486
        %v1615 = vunpack.c.l.b16 %v1487
        %v1616 = vunpack.c.l.b16 %v1488
        %v1617 = vunpack.c.l.b16 %v1489
        %v1618 = vunpack.c.l.b16 %v1490
        %v1619 = vunpack.c.l.b16 %v1491
        %v1620 = vunpack.c.l.b16 %v1492
        %v1621 = vunpack.c.l.b16 %v1493
        %v1622 = vunpack.c.l.b16 %v1494
        %v1623 = vunpack.c.l.b16 %v1495
        %v1624 = vunpack.c.l.b16 %v1496
        %v1625 = vunpack.c.l.b16 %v1497
        %v1626 = vunpack.c.l.b16 %v1498
        %v1627 = vunpack.c.l.b16 %v1499
        %v1628 = vunpack.c.l.b16 %v1500
        %v1629 = vunpack.c.l.b16 %v1501
        %v1630 = vunpack.c.l.b16 %v1502
        %v1631 = vunpack.c.l.b16 %v1503
        %v1632 = vunpack.c.l.b16 %v1504
        %v1633 = vunpack.c.l.b16 %v1505
        %v1634 = vunpack.c.l.b16 %v1506
        %v1635 = vunpack.c.l.b16 %v1507
        %v1636 = vunpack.c.l.b16 %v1508
        %v1637 = vunpack.c.l.b16 %v1509
        %v1638 = vunpack.c.l.b16 %v1510
        %v1639 = vpack.c.b16 %v1576, %v1575
        %v1640 = vpack.c.b16 %v1578, %v1577
        %v1641 = vpack.c.b16 %v1580, %v1579
        %v1642 = vpack.c.b16 %v1582, %v1581
        %v1643 = vpack.c.b16 %v1584, %v1583
        %v1644 = vpack.c.b16 %v1586, %v1585
        %v1645 = vpack.c.b16 %v1588, %v1587
        %v1646 = vpack.c.b16 %v1590, %v1589
        %v1647 = vpack.c.b16 %v1592, %v1591
        %v1648 = vpack.c.b16 %v1594, %v1593
        %v1649 = vpack.c.b16 %v1596, %v1595
        %v1650 = vpack.c.b16 %v1598, %v1597
        %v1651 = vpack.c.b16 %v1600, %v1599
        %v1652 = vpack.c.b16 %v1602, %v1601
        %v1653 = vpack.c.b16 %v1604, %v1603
        %v1654 = vpack.c.b16 %v1606, %v1605
        %v1655 = vpack.c.b16 %v1608, %v1607
        %v1656 = vpack.c.b16 %v1610, %v1609
        %v1657 = vpack.c.b16 %v1612, %v1611
        %v1658 = vpack.c.b16 %v1614, %v1613
        %v1659 = vpack.c.b16 %v1616, %v1615
        %v1660 = vpack.c.b16 %v1618, %v1617
        %v1661 = vpack.c.b16 %v1620, %v1619
        %v1662 = vpack.c.b16 %v1622, %v1621
        %v1663 = vpack.c.b16 %v1624, %v1623
        %v1664 = vpack.c.b16 %v1626, %v1625
        %v1665 = vpack.c.b16 %v1628, %v1627
        %v1666 = vpack.c.b16 %v1630, %v1629
        %v1667 = vpack.c.b16 %v1632, %v1631
        %v1668 = vpack.c.b16 %v1634, %v1633
        %v1669 = vpack.c.b16 %v1636, %v1635
        %v1670 = vpack.c.b16 %v1638, %v1637
        %1703 = vmatpush.bf16.msra.mxu0 %v1646
        %1704 = vmatpush.bf16.msra.mxu0 %v1645
        %1705 = vmatpush.bf16.msra.mxu0 %v1644
        %1706 = vmatpush.bf16.msra.mxu0 %v1643
        %1707 = vmatpush.bf16.msra.mxu0 %v1642
        %1708 = vmatpush.bf16.msra.mxu0 %v1641
        %1709 = vmatpush.bf16.msra.mxu0 %v1640
        %1710 = vmatpush.bf16.msra.mxu0 %v1639
        %1711 = vmatmul.bf16.gmra.mxu0 %v1442
        %v1712 = vpop.f32.mrf.mxu0
        %v1713 = vadd.f32 0.0, %v1712
        %v1714 = vpop.f32.mrf.mxu0
        %v1715 = vadd.f32 0.0, %v1714
        %1716 = vdwg.mxu0
        %1717 = vmatpush.bf16.msra.mxu0 %v1654
        %1718 = vmatpush.bf16.msra.mxu0 %v1653
        %1719 = vmatpush.bf16.msra.mxu0 %v1652
        %1720 = vmatpush.bf16.msra.mxu0 %v1651
        %1721 = vmatpush.bf16.msra.mxu0 %v1650
        %1722 = vmatpush.bf16.msra.mxu0 %v1649
        %1723 = vmatpush.bf16.msra.mxu0 %v1648
        %1724 = vmatpush.bf16.msra.mxu0 %v1647
        %1725 = vmatmul.bf16.gmra.mxu0 %v1443
        %v1726 = vpop.f32.mrf.mxu0
        %v1727 = vadd.f32 %v1713, %v1726
        %v1728 = vpop.f32.mrf.mxu0
        %v1729 = vadd.f32 %v1715, %v1728
        %1730 = vdwg.mxu0
        %1731 = vmatpush.bf16.msra.mxu0 %v1662
        %1732 = vmatpush.bf16.msra.mxu0 %v1661
        %1733 = vmatpush.bf16.msra.mxu0 %v1660
        %1734 = vmatpush.bf16.msra.mxu0 %v1659
        %1735 = vmatpush.bf16.msra.mxu0 %v1658
        %1736 = vmatpush.bf16.msra.mxu0 %v1657
        %1737 = vmatpush.bf16.msra.mxu0 %v1656
        %1738 = vmatpush.bf16.msra.mxu0 %v1655
        %1739 = vmatmul.bf16.gmra.mxu0 %v1444
        %v1740 = vpop.f32.mrf.mxu0
        %v1741 = vadd.f32 %v1727, %v1740
        %v1742 = vpop.f32.mrf.mxu0
        %v1743 = vadd.f32 %v1729, %v1742
        %1744 = vdwg.mxu0
        %1745 = vmatpush.bf16.msra.mxu0 %v1670
        %1746 = vmatpush.bf16.msra.mxu0 %v1669
        %1747 = vmatpush.bf16.msra.mxu0 %v1668
        %1748 = vmatpush.bf16.msra.mxu0 %v1667
        %1749 = vmatpush.bf16.msra.mxu0 %v1666
        %1750 = vmatpush.bf16.msra.mxu0 %v1665
        %1751 = vmatpush.bf16.msra.mxu0 %v1664
        %1752 = vmatpush.bf16.msra.mxu0 %v1663
        %1753 = vmatmul.bf16.gmra.mxu0 %v1445
        %v1754 = vpop.f32.mrf.mxu0
        %v1755 = vadd.f32 %v1741, %v1754
        %v1756 = vpop.f32.mrf.mxu0
        %v1757 = vadd.f32 %v1743, %v1756
        %1758 = vdwg.mxu0
        %v1759 = vadd.f32 %v1438, %v1755
        %v1760 = vadd.f32 %v1440, %v1757
        %v1761 = vld [vmem:[%s579] sm:$0x1]
        %v1763 = vperm.slane %v1761, 0
        %v1765 = vadd.f32 %v1759, %v1763
        %v1766 = vadd.f32 %v1760, %v1763
        %v1767 = vmax.f32 %v1765, 0.0
        %v1768 = vmax.f32 %v1766, 0.0
        %v1770 = vrot.slane %v1767, 6
        %v1773 = vrot.slane %v1768, 6
        %v1775 = vsel %vm775, 0.0, %v1770
        %v1776 = vsel %vm775, 0.0, %v1773
        %v1777 = vpack.c.bf16 %v1776, %v1775
        %v1778 = vld [vmem:[%s589] sm:$0xf]
        %v1779 = vld [vmem:[%s589 + $0x4] sm:$0xf]
        %v1780 = vld [vmem:[%s589 + $0x8] sm:$0xf]
        %v1781 = vld [vmem:[%s589 + $0xc] sm:$0xf]
        %v1782 = vld [vmem:[%s589 + $0x10] sm:$0xf]
        %v1783 = vld [vmem:[%s589 + $0x14] sm:$0xf]
        %v1784 = vld [vmem:[%s589 + $0x18] sm:$0xf]
        %v1785 = vld [vmem:[%s589 + $0x1c] sm:$0xf]
        %v1786 = vld [vmem:[%s589 + $0x20] sm:$0xf]
        %v1787 = vld [vmem:[%s589 + $0x24] sm:$0xf]
        %v1788 = vld [vmem:[%s589 + $0x28] sm:$0xf]
        %v1789 = vld [vmem:[%s589 + $0x2c] sm:$0xf]
        %v1790 = vld [vmem:[%s589 + $0x30] sm:$0xf]
        %v1791 = vld [vmem:[%s589 + $0x34] sm:$0xf]
        %v1792 = vld [vmem:[%s589 + $0x38] sm:$0xf]
        %v1793 = vld [vmem:[%s589 + $0x3c] sm:$0xf]
        %v1794 = vrot.slane %v1767, 7
        %v1796 = vrot.slane %v1768, 7
        %v1798 = vsel %vm868, 0.0, %v1794
        %v1799 = vsel %vm868, 0.0, %v1796
        %v1800 = vpack.c.bf16 %v1799, %v1798
        %s1801 = scalar_lea.vmem %s589, 64 [#allocation6]
        %v1802 = vld [vmem:[%s1801] sm:$0xf]
        %v1803 = vld [vmem:[%s1801 + $0x4] sm:$0xf]
        %v1804 = vld [vmem:[%s1801 + $0x8] sm:$0xf]
        %v1805 = vld [vmem:[%s1801 + $0xc] sm:$0xf]
        %v1806 = vld [vmem:[%s1801 + $0x10] sm:$0xf]
        %v1807 = vld [vmem:[%s1801 + $0x14] sm:$0xf]
        %v1808 = vld [vmem:[%s1801 + $0x18] sm:$0xf]
        %v1809 = vld [vmem:[%s1801 + $0x1c] sm:$0xf]
        %v1810 = vld [vmem:[%s1801 + $0x20] sm:$0xf]
        %v1811 = vld [vmem:[%s1801 + $0x24] sm:$0xf]
        %v1812 = vld [vmem:[%s1801 + $0x28] sm:$0xf]
        %v1813 = vld [vmem:[%s1801 + $0x2c] sm:$0xf]
        %v1814 = vld [vmem:[%s1801 + $0x30] sm:$0xf]
        %v1815 = vld [vmem:[%s1801 + $0x34] sm:$0xf]
        %v1816 = vld [vmem:[%s1801 + $0x38] sm:$0xf]
        %v1817 = vld [vmem:[%s1801 + $0x3c] sm:$0xf]
        %v1834 = vunpack.c.l.b16 %v1802
        %v1835 = vunpack.c.l.b16 %v1803
        %v1836 = vunpack.c.l.b16 %v1804
        %v1837 = vunpack.c.l.b16 %v1805
        %v1838 = vunpack.c.l.b16 %v1806
        %v1839 = vunpack.c.l.b16 %v1807
        %v1840 = vunpack.c.l.b16 %v1808
        %v1841 = vunpack.c.l.b16 %v1809
        %v1842 = vunpack.c.l.b16 %v1810
        %v1843 = vunpack.c.l.b16 %v1811
        %v1844 = vunpack.c.l.b16 %v1812
        %v1845 = vunpack.c.l.b16 %v1813
        %v1846 = vunpack.c.l.b16 %v1814
        %v1847 = vunpack.c.l.b16 %v1815
        %v1848 = vunpack.c.l.b16 %v1816
        %v1849 = vunpack.c.l.b16 %v1817
        %v1850 = vpack.c.b16 %v1835, %v1834
        %v1851 = vpack.c.b16 %v1837, %v1836
        %v1852 = vpack.c.b16 %v1839, %v1838
        %v1853 = vpack.c.b16 %v1841, %v1840
        %v1854 = vpack.c.b16 %v1843, %v1842
        %v1855 = vpack.c.b16 %v1845, %v1844
        %v1856 = vpack.c.b16 %v1847, %v1846
        %v1857 = vpack.c.b16 %v1849, %v1848
        %1866 = vmatpush.bf16.msra.mxu0 %v1857
        %1867 = vmatpush.bf16.msra.mxu0 %v1856
        %1868 = vmatpush.bf16.msra.mxu0 %v1855
        %1869 = vmatpush.bf16.msra.mxu0 %v1854
        %1870 = vmatpush.bf16.msra.mxu0 %v1853
        %1871 = vmatpush.bf16.msra.mxu0 %v1852
        %1872 = vmatpush.bf16.msra.mxu0 %v1851
        %1873 = vmatpush.bf16.msra.mxu0 %v1850
        %1874 = vmatmul.bf16.gmra.mxu0 %v1800
        %v1875 = vpop.f32.mrf.mxu0
        %v1876 = vadd.f32 0.0, %v1875
        %v1877 = vpop.f32.mrf.mxu0
        %v1878 = vadd.f32 0.0, %v1877
        %1879 = vdwg.mxu0
        %v1896 = vunpack.c.l.b16 %v1778
        %v1897 = vunpack.c.l.b16 %v1779
        %v1898 = vunpack.c.l.b16 %v1780
        %v1899 = vunpack.c.l.b16 %v1781
        %v1900 = vunpack.c.l.b16 %v1782
        %v1901 = vunpack.c.l.b16 %v1783
        %v1902 = vunpack.c.l.b16 %v1784
        %v1903 = vunpack.c.l.b16 %v1785
        %v1904 = vunpack.c.l.b16 %v1786
        %v1905 = vunpack.c.l.b16 %v1787
        %v1906 = vunpack.c.l.b16 %v1788
        %v1907 = vunpack.c.l.b16 %v1789
        %v1908 = vunpack.c.l.b16 %v1790
        %v1909 = vunpack.c.l.b16 %v1791
        %v1910 = vunpack.c.l.b16 %v1792
        %v1911 = vunpack.c.l.b16 %v1793
        %v1912 = vpack.c.b16 %v1897, %v1896
        %v1913 = vpack.c.b16 %v1899, %v1898
        %v1914 = vpack.c.b16 %v1901, %v1900
        %v1915 = vpack.c.b16 %v1903, %v1902
        %v1916 = vpack.c.b16 %v1905, %v1904
        %v1917 = vpack.c.b16 %v1907, %v1906
        %v1918 = vpack.c.b16 %v1909, %v1908
        %v1919 = vpack.c.b16 %v1911, %v1910
        %1928 = vmatpush.bf16.msra.mxu0 %v1919
        %1929 = vmatpush.bf16.msra.mxu0 %v1918
        %1930 = vmatpush.bf16.msra.mxu0 %v1917
        %1931 = vmatpush.bf16.msra.mxu0 %v1916
        %1932 = vmatpush.bf16.msra.mxu0 %v1915
        %1933 = vmatpush.bf16.msra.mxu0 %v1914
        %1934 = vmatpush.bf16.msra.mxu0 %v1913
        %1935 = vmatpush.bf16.msra.mxu0 %v1912
        %1936 = vmatmul.bf16.gmra.mxu0 %v1777
        %v1937 = vpop.f32.mrf.mxu0
        %v1938 = vadd.f32 %v1876, %v1937
        %v1939 = vpop.f32.mrf.mxu0
        %v1940 = vadd.f32 %v1878, %v1939
        %1941 = vdwg.mxu0
        %v1942 = vpack.c.bf16 %v1768, %v1767
        %s1943 = scalar_lea.vmem %s589, 128 [#allocation6]
        %v1944 = vld [vmem:[%s1943] sm:$0xf]
        %v1945 = vld [vmem:[%s1943 + $0x4] sm:$0xf]
        %v1946 = vld [vmem:[%s1943 + $0x8] sm:$0xf]
        %v1947 = vld [vmem:[%s1943 + $0xc] sm:$0xf]
        %v1948 = vld [vmem:[%s1943 + $0x10] sm:$0xf]
        %v1949 = vld [vmem:[%s1943 + $0x14] sm:$0xf]
        %v1950 = vld [vmem:[%s1943 + $0x18] sm:$0xf]
        %v1951 = vld [vmem:[%s1943 + $0x1c] sm:$0xf]
        %v1952 = vld [vmem:[%s1943 + $0x20] sm:$0xf]
        %v1953 = vld [vmem:[%s1943 + $0x24] sm:$0xf]
        %v1954 = vld [vmem:[%s1943 + $0x28] sm:$0xf]
        %v1955 = vld [vmem:[%s1943 + $0x2c] sm:$0xf]
        %v1956 = vld [vmem:[%s1943 + $0x30] sm:$0xf]
        %v1957 = vld [vmem:[%s1943 + $0x34] sm:$0xf]
        %v1958 = vld [vmem:[%s1943 + $0x38] sm:$0xf]
        %v1959 = vld [vmem:[%s1943 + $0x3c] sm:$0xf]
        %v1976 = vunpack.c.l.b16 %v1944
        %v1977 = vunpack.c.l.b16 %v1945
        %v1978 = vunpack.c.l.b16 %v1946
        %v1979 = vunpack.c.l.b16 %v1947
        %v1980 = vunpack.c.l.b16 %v1948
        %v1981 = vunpack.c.l.b16 %v1949
        %v1982 = vunpack.c.l.b16 %v1950
        %v1983 = vunpack.c.l.b16 %v1951
        %v1984 = vunpack.c.l.b16 %v1952
        %v1985 = vunpack.c.l.b16 %v1953
        %v1986 = vunpack.c.l.b16 %v1954
        %v1987 = vunpack.c.l.b16 %v1955
        %v1988 = vunpack.c.l.b16 %v1956
        %v1989 = vunpack.c.l.b16 %v1957
        %v1990 = vunpack.c.l.b16 %v1958
        %v1991 = vunpack.c.l.b16 %v1959
        %v1992 = vpack.c.b16 %v1977, %v1976
        %v1993 = vpack.c.b16 %v1979, %v1978
        %v1994 = vpack.c.b16 %v1981, %v1980
        %v1995 = vpack.c.b16 %v1983, %v1982
        %v1996 = vpack.c.b16 %v1985, %v1984
        %v1997 = vpack.c.b16 %v1987, %v1986
        %v1998 = vpack.c.b16 %v1989, %v1988
        %v1999 = vpack.c.b16 %v1991, %v1990
        %2008 = vmatpush.bf16.msra.mxu0 %v1999
        %2009 = vmatpush.bf16.msra.mxu0 %v1998
        %2010 = vmatpush.bf16.msra.mxu0 %v1997
        %2011 = vmatpush.bf16.msra.mxu0 %v1996
        %2012 = vmatpush.bf16.msra.mxu0 %v1995
        %2013 = vmatpush.bf16.msra.mxu0 %v1994
        %2014 = vmatpush.bf16.msra.mxu0 %v1993
        %2015 = vmatpush.bf16.msra.mxu0 %v1992
        %2016 = vmatmul.bf16.gmra.mxu0 %v1942
        %v2017 = vpop.f32.mrf.mxu0
        %v2018 = vadd.f32 0.0, %v2017
        %v2019 = vpop.f32.mrf.mxu0
        %v2020 = vadd.f32 0.0, %v2019
        %2021 = vdwg.mxu0
        %v2022 = vadd.f32 %v1938, %v2018
        %v2023 = vadd.f32 %v1940, %v2020
        %v2024 = vld [vmem:[%s598] sm:$0x1]
        %v2026 = vperm.slane %v2024, 0
        %v2028 = vadd.f32 %v2022, %v2026
        %v2029 = vadd.f32 %v2023, %v2026
        %v2030 = vmax.f32 %v2028, 0.0
        %v2031 = vmax.f32 %v2029, 0.0
        %v2032 = vld [vmem:[%s608] sm:$0xf]
        %v2033 = vld [vmem:[%s608 + $0x4] sm:$0xf]
        %v2034 = vld [vmem:[%s608 + $0x8] sm:$0xf]
        %v2035 = vld [vmem:[%s608 + $0xc] sm:$0xf]
        %v2036 = vld [vmem:[%s608 + $0x10] sm:$0xf]
        %v2037 = vld [vmem:[%s608 + $0x14] sm:$0xf]
        %v2038 = vld [vmem:[%s608 + $0x18] sm:$0xf]
        %v2039 = vld [vmem:[%s608 + $0x1c] sm:$0xf]
        %v2040 = vld [vmem:[%s608 + $0x20] sm:$0xf]
        %v2041 = vld [vmem:[%s608 + $0x24] sm:$0xf]
        %v2042 = vld [vmem:[%s608 + $0x28] sm:$0xf]
        %v2043 = vld [vmem:[%s608 + $0x2c] sm:$0xf]
        %v2044 = vld [vmem:[%s608 + $0x30] sm:$0xf]
        %v2045 = vld [vmem:[%s608 + $0x34] sm:$0xf]
        %v2046 = vld [vmem:[%s608 + $0x38] sm:$0xf]
        %v2047 = vld [vmem:[%s608 + $0x3c] sm:$0xf]
        %v2048 = vld [vmem:[%s608 + $0x40] sm:$0xf]
        %v2049 = vld [vmem:[%s608 + $0x44] sm:$0xf]
        %v2050 = vld [vmem:[%s608 + $0x48] sm:$0xf]
        %v2051 = vld [vmem:[%s608 + $0x4c] sm:$0xf]
        %v2052 = vld [vmem:[%s608 + $0x50] sm:$0xf]
        %v2053 = vld [vmem:[%s608 + $0x54] sm:$0xf]
        %v2054 = vld [vmem:[%s608 + $0x58] sm:$0xf]
        %v2055 = vld [vmem:[%s608 + $0x5c] sm:$0xf]
        %v2056 = vld [vmem:[%s608 + $0x60] sm:$0xf]
        %v2057 = vld [vmem:[%s608 + $0x64] sm:$0xf]
        %v2058 = vld [vmem:[%s608 + $0x68] sm:$0xf]
        %v2059 = vld [vmem:[%s608 + $0x6c] sm:$0xf]
        %v2060 = vld [vmem:[%s608 + $0x70] sm:$0xf]
        %v2061 = vld [vmem:[%s608 + $0x74] sm:$0xf]
        %v2062 = vld [vmem:[%s608 + $0x78] sm:$0xf]
        %v2063 = vld [vmem:[%s608 + $0x7c] sm:$0xf]
        %v2064 = vld [vmem:[%s608 + $0x80] sm:$0xf]
        %v2065 = vld [vmem:[%s608 + $0x84] sm:$0xf]
        %v2066 = vld [vmem:[%s608 + $0x88] sm:$0xf]
        %v2067 = vld [vmem:[%s608 + $0x8c] sm:$0xf]
        %v2068 = vld [vmem:[%s608 + $0x90] sm:$0xf]
        %v2069 = vld [vmem:[%s608 + $0x94] sm:$0xf]
        %v2070 = vld [vmem:[%s608 + $0x98] sm:$0xf]
        %v2071 = vld [vmem:[%s608 + $0x9c] sm:$0xf]
        %v2072 = vld [vmem:[%s608 + $0xa0] sm:$0xf]
        %v2073 = vld [vmem:[%s608 + $0xa4] sm:$0xf]
        %v2074 = vld [vmem:[%s608 + $0xa8] sm:$0xf]
        %v2075 = vld [vmem:[%s608 + $0xac] sm:$0xf]
        %v2076 = vld [vmem:[%s608 + $0xb0] sm:$0xf]
        %v2077 = vld [vmem:[%s608 + $0xb4] sm:$0xf]
        %v2078 = vld [vmem:[%s608 + $0xb8] sm:$0xf]
        %v2079 = vld [vmem:[%s608 + $0xbc] sm:$0xf]
        %v2080 = vld [vmem:[%s608 + $0xc0] sm:$0xf]
        %v2081 = vld [vmem:[%s608 + $0xc4] sm:$0xf]
        %v2082 = vld [vmem:[%s608 + $0xc8] sm:$0xf]
        %v2083 = vld [vmem:[%s608 + $0xcc] sm:$0xf]
        %v2084 = vld [vmem:[%s608 + $0xd0] sm:$0xf]
        %v2085 = vld [vmem:[%s608 + $0xd4] sm:$0xf]
        %v2086 = vld [vmem:[%s608 + $0xd8] sm:$0xf]
        %v2087 = vld [vmem:[%s608 + $0xdc] sm:$0xf]
        %v2088 = vld [vmem:[%s608 + $0xe0] sm:$0xf]
        %v2089 = vld [vmem:[%s608 + $0xe4] sm:$0xf]
        %v2090 = vld [vmem:[%s608 + $0xe8] sm:$0xf]
        %v2091 = vld [vmem:[%s608 + $0xec] sm:$0xf]
        %v2092 = vld [vmem:[%s608 + $0xf0] sm:$0xf]
        %v2093 = vld [vmem:[%s608 + $0xf4] sm:$0xf]
        %v2094 = vld [vmem:[%s608 + $0xf8] sm:$0xf]
        %v2095 = vld [vmem:[%s608 + $0xfc] sm:$0xf]
        %v2096 = vld [vmem:[%s617] sm:$0x1]
        %v2098 = vperm.slane %v2096, 0
        %v2164 = vunpack.c.l.b16 %v2032
        %v2165 = vunpack.c.l.b16 %v2033
        %v2166 = vunpack.c.l.b16 %v2034
        %v2167 = vunpack.c.l.b16 %v2035
        %v2168 = vunpack.c.l.b16 %v2036
        %v2169 = vunpack.c.l.b16 %v2037
        %v2170 = vunpack.c.l.b16 %v2038
        %v2171 = vunpack.c.l.b16 %v2039
        %v2172 = vunpack.c.l.b16 %v2040
        %v2173 = vunpack.c.l.b16 %v2041
        %v2174 = vunpack.c.l.b16 %v2042
        %v2175 = vunpack.c.l.b16 %v2043
        %v2176 = vunpack.c.l.b16 %v2044
        %v2177 = vunpack.c.l.b16 %v2045
        %v2178 = vunpack.c.l.b16 %v2046
        %v2179 = vunpack.c.l.b16 %v2047
        %v2180 = vunpack.c.l.b16 %v2048
        %v2181 = vunpack.c.l.b16 %v2049
        %v2182 = vunpack.c.l.b16 %v2050
        %v2183 = vunpack.c.l.b16 %v2051
        %v2184 = vunpack.c.l.b16 %v2052
        %v2185 = vunpack.c.l.b16 %v2053
        %v2186 = vunpack.c.l.b16 %v2054
        %v2187 = vunpack.c.l.b16 %v2055
        %v2188 = vunpack.c.l.b16 %v2056
        %v2189 = vunpack.c.l.b16 %v2057
        %v2190 = vunpack.c.l.b16 %v2058
        %v2191 = vunpack.c.l.b16 %v2059
        %v2192 = vunpack.c.l.b16 %v2060
        %v2193 = vunpack.c.l.b16 %v2061
        %v2194 = vunpack.c.l.b16 %v2062
        %v2195 = vunpack.c.l.b16 %v2063
        %v2196 = vunpack.c.l.b16 %v2064
        %v2197 = vunpack.c.l.b16 %v2065
        %v2198 = vunpack.c.l.b16 %v2066
        %v2199 = vunpack.c.l.b16 %v2067
        %v2200 = vunpack.c.l.b16 %v2068
        %v2201 = vunpack.c.l.b16 %v2069
        %v2202 = vunpack.c.l.b16 %v2070
        %v2203 = vunpack.c.l.b16 %v2071
        %v2204 = vunpack.c.l.b16 %v2072
        %v2205 = vunpack.c.l.b16 %v2073
        %v2206 = vunpack.c.l.b16 %v2074
        %v2207 = vunpack.c.l.b16 %v2075
        %v2208 = vunpack.c.l.b16 %v2076
        %v2209 = vunpack.c.l.b16 %v2077
        %v2210 = vunpack.c.l.b16 %v2078
        %v2211 = vunpack.c.l.b16 %v2079
        %v2212 = vunpack.c.l.b16 %v2080
        %v2213 = vunpack.c.l.b16 %v2081
        %v2214 = vunpack.c.l.b16 %v2082
        %v2215 = vunpack.c.l.b16 %v2083
        %v2216 = vunpack.c.l.b16 %v2084
        %v2217 = vunpack.c.l.b16 %v2085
        %v2218 = vunpack.c.l.b16 %v2086
        %v2219 = vunpack.c.l.b16 %v2087
        %v2220 = vunpack.c.l.b16 %v2088
        %v2221 = vunpack.c.l.b16 %v2089
        %v2222 = vunpack.c.l.b16 %v2090
        %v2223 = vunpack.c.l.b16 %v2091
        %v2224 = vunpack.c.l.b16 %v2092
        %v2225 = vunpack.c.l.b16 %v2093
        %v2226 = vunpack.c.l.b16 %v2094
        %v2227 = vunpack.c.l.b16 %v2095
        %v2228 = vpack.c.b16 %v2165, %v2164
        %v2229 = vpack.c.b16 %v2167, %v2166
        %v2230 = vpack.c.b16 %v2169, %v2168
        %v2231 = vpack.c.b16 %v2171, %v2170
        %v2232 = vpack.c.b16 %v2173, %v2172
        %v2233 = vpack.c.b16 %v2175, %v2174
        %v2234 = vpack.c.b16 %v2177, %v2176
        %v2235 = vpack.c.b16 %v2179, %v2178
        %v2236 = vpack.c.b16 %v2181, %v2180
        %v2237 = vpack.c.b16 %v2183, %v2182
        %v2238 = vpack.c.b16 %v2185, %v2184
        %v2239 = vpack.c.b16 %v2187, %v2186
        %v2240 = vpack.c.b16 %v2189, %v2188
        %v2241 = vpack.c.b16 %v2191, %v2190
        %v2242 = vpack.c.b16 %v2193, %v2192
        %v2243 = vpack.c.b16 %v2195, %v2194
        %v2244 = vpack.c.b16 %v2197, %v2196
        %v2245 = vpack.c.b16 %v2199, %v2198
        %v2246 = vpack.c.b16 %v2201, %v2200
        %v2247 = vpack.c.b16 %v2203, %v2202
        %v2248 = vpack.c.b16 %v2205, %v2204
        %v2249 = vpack.c.b16 %v2207, %v2206
        %v2250 = vpack.c.b16 %v2209, %v2208
        %v2251 = vpack.c.b16 %v2211, %v2210
        %v2252 = vpack.c.b16 %v2213, %v2212
        %v2253 = vpack.c.b16 %v2215, %v2214
        %v2254 = vpack.c.b16 %v2217, %v2216
        %v2255 = vpack.c.b16 %v2219, %v2218
        %v2256 = vpack.c.b16 %v2221, %v2220
        %v2257 = vpack.c.b16 %v2223, %v2222
        %v2258 = vpack.c.b16 %v2225, %v2224
        %v2259 = vpack.c.b16 %v2227, %v2226
        %2292 = vmatpush.bf16.msra.mxu0 %v2235
        %2293 = vmatpush.bf16.msra.mxu0 %v2234
        %2294 = vmatpush.bf16.msra.mxu0 %v2233
        %2295 = vmatpush.bf16.msra.mxu0 %v2232
        %2296 = vmatpush.bf16.msra.mxu0 %v2231
        %2297 = vmatpush.bf16.msra.mxu0 %v2230
        %2298 = vmatpush.bf16.msra.mxu0 %v2229
        %2299 = vmatpush.bf16.msra.mxu0 %v2228
        %2300 = vmatmul.bf16.gmra.mxu0 %v1442
        %v2301 = vpop.f32.mrf.mxu0
        %v2302 = vadd.f32 %v2098, %v2301
        %v2303 = vpop.f32.mrf.mxu0
        %v2304 = vadd.f32 %v2098, %v2303
        %2305 = vdwg.mxu0
        %2306 = vmatpush.bf16.msra.mxu0 %v2243
        %2307 = vmatpush.bf16.msra.mxu0 %v2242
        %2308 = vmatpush.bf16.msra.mxu0 %v2241
        %2309 = vmatpush.bf16.msra.mxu0 %v2240
        %2310 = vmatpush.bf16.msra.mxu0 %v2239
        %2311 = vmatpush.bf16.msra.mxu0 %v2238
        %2312 = vmatpush.bf16.msra.mxu0 %v2237
        %2313 = vmatpush.bf16.msra.mxu0 %v2236
        %2314 = vmatmul.bf16.gmra.mxu0 %v1443
        %v2315 = vpop.f32.mrf.mxu0
        %v2316 = vadd.f32 %v2302, %v2315
        %v2317 = vpop.f32.mrf.mxu0
        %v2318 = vadd.f32 %v2304, %v2317
        %2319 = vdwg.mxu0
        %2320 = vmatpush.bf16.msra.mxu0 %v2251
        %2321 = vmatpush.bf16.msra.mxu0 %v2250
        %2322 = vmatpush.bf16.msra.mxu0 %v2249
        %2323 = vmatpush.bf16.msra.mxu0 %v2248
        %2324 = vmatpush.bf16.msra.mxu0 %v2247
        %2325 = vmatpush.bf16.msra.mxu0 %v2246
        %2326 = vmatpush.bf16.msra.mxu0 %v2245
        %2327 = vmatpush.bf16.msra.mxu0 %v2244
        %2328 = vmatmul.bf16.gmra.mxu0 %v1444
        %v2329 = vpop.f32.mrf.mxu0
        %v2330 = vadd.f32 %v2316, %v2329
        %v2331 = vpop.f32.mrf.mxu0
        %v2332 = vadd.f32 %v2318, %v2331
        %2333 = vdwg.mxu0
        %2334 = vmatpush.bf16.msra.mxu0 %v2259
        %2335 = vmatpush.bf16.msra.mxu0 %v2258
        %2336 = vmatpush.bf16.msra.mxu0 %v2257
        %2337 = vmatpush.bf16.msra.mxu0 %v2256
        %2338 = vmatpush.bf16.msra.mxu0 %v2255
        %2339 = vmatpush.bf16.msra.mxu0 %v2254
        %2340 = vmatpush.bf16.msra.mxu0 %v2253
        %2341 = vmatpush.bf16.msra.mxu0 %v2252
        %2342 = vmatmul.bf16.gmra.mxu0 %v1445
        %v2343 = vpop.f32.mrf.mxu0
        %v2344 = vadd.f32 %v2330, %v2343
        %v2345 = vpop.f32.mrf.mxu0
        %v2346 = vadd.f32 %v2332, %v2345
        %2347 = vdwg.mxu0
        %v2348 = vadd.f32 %v2030, %v2344
        %v2349 = vadd.f32 %v2031, %v2346
        %v2350 = vmax.f32 %v2348, 0.0
        %v2351 = vmax.f32 %v2349, 0.0
        %v2353 = vrot.slane %v2350, 4
        %v2356 = vrot.slane %v2351, 4
        %vm2358 = vcmask 1043456
        %v2359 = vsel %vm2358, 0.0, %v2353
        %v2360 = vsel %vm2358, 0.0, %v2356
        %v2361 = vpack.c.bf16 %v2360, %v2359
        %v2362 = vld [vmem:[%s627] sm:$0xf]
        %v2363 = vld [vmem:[%s627 + $0x4] sm:$0xf]
        %v2364 = vld [vmem:[%s627 + $0x8] sm:$0xf]
        %v2365 = vld [vmem:[%s627 + $0xc] sm:$0xf]
        %v2366 = vld [vmem:[%s627 + $0x10] sm:$0xf]
        %v2367 = vld [vmem:[%s627 + $0x14] sm:$0xf]
        %v2368 = vld [vmem:[%s627 + $0x18] sm:$0xf]
        %v2369 = vld [vmem:[%s627 + $0x1c] sm:$0xf]
        %v2370 = vld [vmem:[%s627 + $0x20] sm:$0xf]
        %v2371 = vld [vmem:[%s627 + $0x24] sm:$0xf]
        %v2372 = vld [vmem:[%s627 + $0x28] sm:$0xf]
        %v2373 = vld [vmem:[%s627 + $0x2c] sm:$0xf]
        %v2374 = vld [vmem:[%s627 + $0x30] sm:$0xf]
        %v2375 = vld [vmem:[%s627 + $0x34] sm:$0xf]
        %v2376 = vld [vmem:[%s627 + $0x38] sm:$0xf]
        %v2377 = vld [vmem:[%s627 + $0x3c] sm:$0xf]
        %v2378 = vrot.slane %v2350, 6
        %v2380 = vrot.slane %v2351, 6
        %v2382 = vsel %vm775, 0.0, %v2378
        %v2383 = vsel %vm775, 0.0, %v2380
        %v2384 = vpack.c.bf16 %v2383, %v2382
        %s2385 = scalar_lea.vmem %s627, 64 [#allocation12]
        %v2386 = vld [vmem:[%s2385] sm:$0xf]
        %v2387 = vld [vmem:[%s2385 + $0x4] sm:$0xf]
        %v2388 = vld [vmem:[%s2385 + $0x8] sm:$0xf]
        %v2389 = vld [vmem:[%s2385 + $0xc] sm:$0xf]
        %v2390 = vld [vmem:[%s2385 + $0x10] sm:$0xf]
        %v2391 = vld [vmem:[%s2385 + $0x14] sm:$0xf]
        %v2392 = vld [vmem:[%s2385 + $0x18] sm:$0xf]
        %v2393 = vld [vmem:[%s2385 + $0x1c] sm:$0xf]
        %v2394 = vld [vmem:[%s2385 + $0x20] sm:$0xf]
        %v2395 = vld [vmem:[%s2385 + $0x24] sm:$0xf]
        %v2396 = vld [vmem:[%s2385 + $0x28] sm:$0xf]
        %v2397 = vld [vmem:[%s2385 + $0x2c] sm:$0xf]
        %v2398 = vld [vmem:[%s2385 + $0x30] sm:$0xf]
        %v2399 = vld [vmem:[%s2385 + $0x34] sm:$0xf]
        %v2400 = vld [vmem:[%s2385 + $0x38] sm:$0xf]
        %v2401 = vld [vmem:[%s2385 + $0x3c] sm:$0xf]
        %v2418 = vunpack.c.l.b16 %v2386
        %v2419 = vunpack.c.l.b16 %v2387
        %v2420 = vunpack.c.l.b16 %v2388
        %v2421 = vunpack.c.l.b16 %v2389
        %v2422 = vunpack.c.l.b16 %v2390
        %v2423 = vunpack.c.l.b16 %v2391
        %v2424 = vunpack.c.l.b16 %v2392
        %v2425 = vunpack.c.l.b16 %v2393
        %v2426 = vunpack.c.l.b16 %v2394
        %v2427 = vunpack.c.l.b16 %v2395
        %v2428 = vunpack.c.l.b16 %v2396
        %v2429 = vunpack.c.l.b16 %v2397
        %v2430 = vunpack.c.l.b16 %v2398
        %v2431 = vunpack.c.l.b16 %v2399
        %v2432 = vunpack.c.l.b16 %v2400
        %v2433 = vunpack.c.l.b16 %v2401
        %v2434 = vpack.c.b16 %v2419, %v2418
        %v2435 = vpack.c.b16 %v2421, %v2420
        %v2436 = vpack.c.b16 %v2423, %v2422
        %v2437 = vpack.c.b16 %v2425, %v2424
        %v2438 = vpack.c.b16 %v2427, %v2426
        %v2439 = vpack.c.b16 %v2429, %v2428
        %v2440 = vpack.c.b16 %v2431, %v2430
        %v2441 = vpack.c.b16 %v2433, %v2432
        %2450 = vmatpush.bf16.msra.mxu0 %v2441
        %2451 = vmatpush.bf16.msra.mxu0 %v2440
        %2452 = vmatpush.bf16.msra.mxu0 %v2439
        %2453 = vmatpush.bf16.msra.mxu0 %v2438
        %2454 = vmatpush.bf16.msra.mxu0 %v2437
        %2455 = vmatpush.bf16.msra.mxu0 %v2436
        %2456 = vmatpush.bf16.msra.mxu0 %v2435
        %2457 = vmatpush.bf16.msra.mxu0 %v2434
        %2458 = vmatmul.bf16.gmra.mxu0 %v2384
        %v2459 = vpop.f32.mrf.mxu0
        %v2460 = vadd.f32 0.0, %v2459
        %v2461 = vpop.f32.mrf.mxu0
        %v2462 = vadd.f32 0.0, %v2461
        %2463 = vdwg.mxu0
        %v2480 = vunpack.c.l.b16 %v2362
        %v2481 = vunpack.c.l.b16 %v2363
        %v2482 = vunpack.c.l.b16 %v2364
        %v2483 = vunpack.c.l.b16 %v2365
        %v2484 = vunpack.c.l.b16 %v2366
        %v2485 = vunpack.c.l.b16 %v2367
        %v2486 = vunpack.c.l.b16 %v2368
        %v2487 = vunpack.c.l.b16 %v2369
        %v2488 = vunpack.c.l.b16 %v2370
        %v2489 = vunpack.c.l.b16 %v2371
        %v2490 = vunpack.c.l.b16 %v2372
        %v2491 = vunpack.c.l.b16 %v2373
        %v2492 = vunpack.c.l.b16 %v2374
        %v2493 = vunpack.c.l.b16 %v2375
        %v2494 = vunpack.c.l.b16 %v2376
        %v2495 = vunpack.c.l.b16 %v2377
        %v2496 = vpack.c.b16 %v2481, %v2480
        %v2497 = vpack.c.b16 %v2483, %v2482
        %v2498 = vpack.c.b16 %v2485, %v2484
        %v2499 = vpack.c.b16 %v2487, %v2486
        %v2500 = vpack.c.b16 %v2489, %v2488
        %v2501 = vpack.c.b16 %v2491, %v2490
        %v2502 = vpack.c.b16 %v2493, %v2492
        %v2503 = vpack.c.b16 %v2495, %v2494
        %2512 = vmatpush.bf16.msra.mxu0 %v2503
        %2513 = vmatpush.bf16.msra.mxu0 %v2502
        %2514 = vmatpush.bf16.msra.mxu0 %v2501
        %2515 = vmatpush.bf16.msra.mxu0 %v2500
        %2516 = vmatpush.bf16.msra.mxu0 %v2499
        %2517 = vmatpush.bf16.msra.mxu0 %v2498
        %2518 = vmatpush.bf16.msra.mxu0 %v2497
        %2519 = vmatpush.bf16.msra.mxu0 %v2496
        %2520 = vmatmul.bf16.gmra.mxu0 %v2361
        %v2521 = vpop.f32.mrf.mxu0
        %v2522 = vadd.f32 %v2460, %v2521
        %v2523 = vpop.f32.mrf.mxu0
        %v2524 = vadd.f32 %v2462, %v2523
        %2525 = vdwg.mxu0
        %v2526 = vpack.c.bf16 %v2351, %v2350
        %s2527 = scalar_lea.vmem %s627, 128 [#allocation12]
        %v2528 = vld [vmem:[%s2527] sm:$0xf]
        %v2529 = vld [vmem:[%s2527 + $0x4] sm:$0xf]
        %v2530 = vld [vmem:[%s2527 + $0x8] sm:$0xf]
        %v2531 = vld [vmem:[%s2527 + $0xc] sm:$0xf]
        %v2532 = vld [vmem:[%s2527 + $0x10] sm:$0xf]
        %v2533 = vld [vmem:[%s2527 + $0x14] sm:$0xf]
        %v2534 = vld [vmem:[%s2527 + $0x18] sm:$0xf]
        %v2535 = vld [vmem:[%s2527 + $0x1c] sm:$0xf]
        %v2536 = vld [vmem:[%s2527 + $0x20] sm:$0xf]
        %v2537 = vld [vmem:[%s2527 + $0x24] sm:$0xf]
        %v2538 = vld [vmem:[%s2527 + $0x28] sm:$0xf]
        %v2539 = vld [vmem:[%s2527 + $0x2c] sm:$0xf]
        %v2540 = vld [vmem:[%s2527 + $0x30] sm:$0xf]
        %v2541 = vld [vmem:[%s2527 + $0x34] sm:$0xf]
        %v2542 = vld [vmem:[%s2527 + $0x38] sm:$0xf]
        %v2543 = vld [vmem:[%s2527 + $0x3c] sm:$0xf]
        %v2560 = vunpack.c.l.b16 %v2528
        %v2561 = vunpack.c.l.b16 %v2529
        %v2562 = vunpack.c.l.b16 %v2530
        %v2563 = vunpack.c.l.b16 %v2531
        %v2564 = vunpack.c.l.b16 %v2532
        %v2565 = vunpack.c.l.b16 %v2533
        %v2566 = vunpack.c.l.b16 %v2534
        %v2567 = vunpack.c.l.b16 %v2535
        %v2568 = vunpack.c.l.b16 %v2536
        %v2569 = vunpack.c.l.b16 %v2537
        %v2570 = vunpack.c.l.b16 %v2538
        %v2571 = vunpack.c.l.b16 %v2539
        %v2572 = vunpack.c.l.b16 %v2540
        %v2573 = vunpack.c.l.b16 %v2541
        %v2574 = vunpack.c.l.b16 %v2542
        %v2575 = vunpack.c.l.b16 %v2543
        %v2576 = vpack.c.b16 %v2561, %v2560
        %v2577 = vpack.c.b16 %v2563, %v2562
        %v2578 = vpack.c.b16 %v2565, %v2564
        %v2579 = vpack.c.b16 %v2567, %v2566
        %v2580 = vpack.c.b16 %v2569, %v2568
        %v2581 = vpack.c.b16 %v2571, %v2570
        %v2582 = vpack.c.b16 %v2573, %v2572
        %v2583 = vpack.c.b16 %v2575, %v2574
        %2592 = vmatpush.bf16.msra.mxu0 %v2583
        %2593 = vmatpush.bf16.msra.mxu0 %v2582
        %2594 = vmatpush.bf16.msra.mxu0 %v2581
        %2595 = vmatpush.bf16.msra.mxu0 %v2580
        %2596 = vmatpush.bf16.msra.mxu0 %v2579
        %2597 = vmatpush.bf16.msra.mxu0 %v2578
        %2598 = vmatpush.bf16.msra.mxu0 %v2577
        %2599 = vmatpush.bf16.msra.mxu0 %v2576
        %2600 = vmatmul.bf16.gmra.mxu0 %v2526
        %v2601 = vpop.f32.mrf.mxu0
        %v2602 = vadd.f32 0.0, %v2601
        %v2603 = vpop.f32.mrf.mxu0
        %v2604 = vadd.f32 0.0, %v2603
        %2605 = vdwg.mxu0
        %v2606 = vadd.f32 %v2522, %v2602
        %v2607 = vadd.f32 %v2524, %v2604
        %v2608 = vld [vmem:[%s636] sm:$0x1]
        %v2610 = vperm.slane %v2608, 0
        %v2612 = vadd.f32 %v2606, %v2610
        %v2613 = vadd.f32 %v2607, %v2610
        %v2614 = vmax.f32 %v2612, 0.0
        %v2615 = vmax.f32 %v2613, 0.0
        %v2617 = vrot.slane %v2614, 4
        %v2620 = vrot.slane %v2615, 4
        %v2622 = vsel %vm2358, 0.0, %v2617
        %v2623 = vsel %vm2358, 0.0, %v2620
        %v2624 = vpack.c.bf16 %v2623, %v2622
        %v2625 = vld [vmem:[%s646] sm:$0xf]
        %v2626 = vld [vmem:[%s646 + $0x4] sm:$0xf]
        %v2627 = vld [vmem:[%s646 + $0x8] sm:$0xf]
        %v2628 = vld [vmem:[%s646 + $0xc] sm:$0xf]
        %v2629 = vld [vmem:[%s646 + $0x10] sm:$0xf]
        %v2630 = vld [vmem:[%s646 + $0x14] sm:$0xf]
        %v2631 = vld [vmem:[%s646 + $0x18] sm:$0xf]
        %v2632 = vld [vmem:[%s646 + $0x1c] sm:$0xf]
        %v2633 = vld [vmem:[%s646 + $0x20] sm:$0xf]
        %v2634 = vld [vmem:[%s646 + $0x24] sm:$0xf]
        %v2635 = vld [vmem:[%s646 + $0x28] sm:$0xf]
        %v2636 = vld [vmem:[%s646 + $0x2c] sm:$0xf]
        %v2637 = vld [vmem:[%s646 + $0x30] sm:$0xf]
        %v2638 = vld [vmem:[%s646 + $0x34] sm:$0xf]
        %v2639 = vld [vmem:[%s646 + $0x38] sm:$0xf]
        %v2640 = vld [vmem:[%s646 + $0x3c] sm:$0xf]
        %v2641 = vrot.slane %v2614, 6
        %v2643 = vrot.slane %v2615, 6
        %v2645 = vsel %vm775, 0.0, %v2641
        %v2646 = vsel %vm775, 0.0, %v2643
        %v2647 = vpack.c.bf16 %v2646, %v2645
        %s2648 = scalar_lea.vmem %s646, 64 [#allocation15]
        %v2649 = vld [vmem:[%s2648] sm:$0xf]
        %v2650 = vld [vmem:[%s2648 + $0x4] sm:$0xf]
        %v2651 = vld [vmem:[%s2648 + $0x8] sm:$0xf]
        %v2652 = vld [vmem:[%s2648 + $0xc] sm:$0xf]
        %v2653 = vld [vmem:[%s2648 + $0x10] sm:$0xf]
        %v2654 = vld [vmem:[%s2648 + $0x14] sm:$0xf]
        %v2655 = vld [vmem:[%s2648 + $0x18] sm:$0xf]
        %v2656 = vld [vmem:[%s2648 + $0x1c] sm:$0xf]
        %v2657 = vld [vmem:[%s2648 + $0x20] sm:$0xf]
        %v2658 = vld [vmem:[%s2648 + $0x24] sm:$0xf]
        %v2659 = vld [vmem:[%s2648 + $0x28] sm:$0xf]
        %v2660 = vld [vmem:[%s2648 + $0x2c] sm:$0xf]
        %v2661 = vld [vmem:[%s2648 + $0x30] sm:$0xf]
        %v2662 = vld [vmem:[%s2648 + $0x34] sm:$0xf]
        %v2663 = vld [vmem:[%s2648 + $0x38] sm:$0xf]
        %v2664 = vld [vmem:[%s2648 + $0x3c] sm:$0xf]
        %v2681 = vunpack.c.l.b16 %v2649
        %v2682 = vunpack.c.l.b16 %v2650
        %v2683 = vunpack.c.l.b16 %v2651
        %v2684 = vunpack.c.l.b16 %v2652
        %v2685 = vunpack.c.l.b16 %v2653
        %v2686 = vunpack.c.l.b16 %v2654
        %v2687 = vunpack.c.l.b16 %v2655
        %v2688 = vunpack.c.l.b16 %v2656
        %v2689 = vunpack.c.l.b16 %v2657
        %v2690 = vunpack.c.l.b16 %v2658
        %v2691 = vunpack.c.l.b16 %v2659
        %v2692 = vunpack.c.l.b16 %v2660
        %v2693 = vunpack.c.l.b16 %v2661
        %v2694 = vunpack.c.l.b16 %v2662
        %v2695 = vunpack.c.l.b16 %v2663
        %v2696 = vunpack.c.l.b16 %v2664
        %v2697 = vpack.c.b16 %v2682, %v2681
        %v2698 = vpack.c.b16 %v2684, %v2683
        %v2699 = vpack.c.b16 %v2686, %v2685
        %v2700 = vpack.c.b16 %v2688, %v2687
        %v2701 = vpack.c.b16 %v2690, %v2689
        %v2702 = vpack.c.b16 %v2692, %v2691
        %v2703 = vpack.c.b16 %v2694, %v2693
        %v2704 = vpack.c.b16 %v2696, %v2695
        %2713 = vmatpush.bf16.msra.mxu0 %v2704
        %2714 = vmatpush.bf16.msra.mxu0 %v2703
        %2715 = vmatpush.bf16.msra.mxu0 %v2702
        %2716 = vmatpush.bf16.msra.mxu0 %v2701
        %2717 = vmatpush.bf16.msra.mxu0 %v2700
        %2718 = vmatpush.bf16.msra.mxu0 %v2699
        %2719 = vmatpush.bf16.msra.mxu0 %v2698
        %2720 = vmatpush.bf16.msra.mxu0 %v2697
        %2721 = vmatmul.bf16.gmra.mxu0 %v2647
        %v2722 = vpop.f32.mrf.mxu0
        %v2723 = vadd.f32 0.0, %v2722
        %v2724 = vpop.f32.mrf.mxu0
        %v2725 = vadd.f32 0.0, %v2724
        %2726 = vdwg.mxu0
        %v2743 = vunpack.c.l.b16 %v2625
        %v2744 = vunpack.c.l.b16 %v2626
        %v2745 = vunpack.c.l.b16 %v2627
        %v2746 = vunpack.c.l.b16 %v2628
        %v2747 = vunpack.c.l.b16 %v2629
        %v2748 = vunpack.c.l.b16 %v2630
        %v2749 = vunpack.c.l.b16 %v2631
        %v2750 = vunpack.c.l.b16 %v2632
        %v2751 = vunpack.c.l.b16 %v2633
        %v2752 = vunpack.c.l.b16 %v2634
        %v2753 = vunpack.c.l.b16 %v2635
        %v2754 = vunpack.c.l.b16 %v2636
        %v2755 = vunpack.c.l.b16 %v2637
        %v2756 = vunpack.c.l.b16 %v2638
        %v2757 = vunpack.c.l.b16 %v2639
        %v2758 = vunpack.c.l.b16 %v2640
        %v2759 = vpack.c.b16 %v2744, %v2743
        %v2760 = vpack.c.b16 %v2746, %v2745
        %v2761 = vpack.c.b16 %v2748, %v2747
        %v2762 = vpack.c.b16 %v2750, %v2749
        %v2763 = vpack.c.b16 %v2752, %v2751
        %v2764 = vpack.c.b16 %v2754, %v2753
        %v2765 = vpack.c.b16 %v2756, %v2755
        %v2766 = vpack.c.b16 %v2758, %v2757
        %2775 = vmatpush.bf16.msra.mxu0 %v2766
        %2776 = vmatpush.bf16.msra.mxu0 %v2765
        %2777 = vmatpush.bf16.msra.mxu0 %v2764
        %2778 = vmatpush.bf16.msra.mxu0 %v2763
        %2779 = vmatpush.bf16.msra.mxu0 %v2762
        %2780 = vmatpush.bf16.msra.mxu0 %v2761
        %2781 = vmatpush.bf16.msra.mxu0 %v2760
        %2782 = vmatpush.bf16.msra.mxu0 %v2759
        %2783 = vmatmul.bf16.gmra.mxu0 %v2624
        %v2784 = vpop.f32.mrf.mxu0
        %v2785 = vadd.f32 %v2723, %v2784
        %v2786 = vpop.f32.mrf.mxu0
        %v2787 = vadd.f32 %v2725, %v2786
        %2788 = vdwg.mxu0
        %v2789 = vpack.c.bf16 %v2615, %v2614
        %s2790 = scalar_lea.vmem %s646, 128 [#allocation15]
        %v2791 = vld [vmem:[%s2790] sm:$0xf]
        %v2792 = vld [vmem:[%s2790 + $0x4] sm:$0xf]
        %v2793 = vld [vmem:[%s2790 + $0x8] sm:$0xf]
        %v2794 = vld [vmem:[%s2790 + $0xc] sm:$0xf]
        %v2795 = vld [vmem:[%s2790 + $0x10] sm:$0xf]
        %v2796 = vld [vmem:[%s2790 + $0x14] sm:$0xf]
        %v2797 = vld [vmem:[%s2790 + $0x18] sm:$0xf]
        %v2798 = vld [vmem:[%s2790 + $0x1c] sm:$0xf]
        %v2799 = vld [vmem:[%s2790 + $0x20] sm:$0xf]
        %v2800 = vld [vmem:[%s2790 + $0x24] sm:$0xf]
        %v2801 = vld [vmem:[%s2790 + $0x28] sm:$0xf]
        %v2802 = vld [vmem:[%s2790 + $0x2c] sm:$0xf]
        %v2803 = vld [vmem:[%s2790 + $0x30] sm:$0xf]
        %v2804 = vld [vmem:[%s2790 + $0x34] sm:$0xf]
        %v2805 = vld [vmem:[%s2790 + $0x38] sm:$0xf]
        %v2806 = vld [vmem:[%s2790 + $0x3c] sm:$0xf]
        %v2823 = vunpack.c.l.b16 %v2791
        %v2824 = vunpack.c.l.b16 %v2792
        %v2825 = vunpack.c.l.b16 %v2793
        %v2826 = vunpack.c.l.b16 %v2794
        %v2827 = vunpack.c.l.b16 %v2795
        %v2828 = vunpack.c.l.b16 %v2796
        %v2829 = vunpack.c.l.b16 %v2797
        %v2830 = vunpack.c.l.b16 %v2798
        %v2831 = vunpack.c.l.b16 %v2799
        %v2832 = vunpack.c.l.b16 %v2800
        %v2833 = vunpack.c.l.b16 %v2801
        %v2834 = vunpack.c.l.b16 %v2802
        %v2835 = vunpack.c.l.b16 %v2803
        %v2836 = vunpack.c.l.b16 %v2804
        %v2837 = vunpack.c.l.b16 %v2805
        %v2838 = vunpack.c.l.b16 %v2806
        %v2839 = vpack.c.b16 %v2824, %v2823
        %v2840 = vpack.c.b16 %v2826, %v2825
        %v2841 = vpack.c.b16 %v2828, %v2827
        %v2842 = vpack.c.b16 %v2830, %v2829
        %v2843 = vpack.c.b16 %v2832, %v2831
        %v2844 = vpack.c.b16 %v2834, %v2833
        %v2845 = vpack.c.b16 %v2836, %v2835
        %v2846 = vpack.c.b16 %v2838, %v2837
        %2855 = vmatpush.bf16.msra.mxu0 %v2846
        %2856 = vmatpush.bf16.msra.mxu0 %v2845
        %2857 = vmatpush.bf16.msra.mxu0 %v2844
        %2858 = vmatpush.bf16.msra.mxu0 %v2843
        %2859 = vmatpush.bf16.msra.mxu0 %v2842
        %2860 = vmatpush.bf16.msra.mxu0 %v2841
        %2861 = vmatpush.bf16.msra.mxu0 %v2840
        %2862 = vmatpush.bf16.msra.mxu0 %v2839
        %2863 = vmatmul.bf16.gmra.mxu0 %v2789
        %v2864 = vpop.f32.mrf.mxu0
        %v2865 = vadd.f32 0.0, %v2864
        %v2866 = vpop.f32.mrf.mxu0
        %v2867 = vadd.f32 0.0, %v2866
        %2868 = vdwg.mxu0
        %v2869 = vadd.f32 %v2785, %v2865
        %v2870 = vadd.f32 %v2787, %v2867
        %v2871 = vld [vmem:[%s655] sm:$0x1]
        %v2873 = vperm.slane %v2871, 0
        %v2875 = vadd.f32 %v2869, %v2873
        %v2876 = vadd.f32 %v2870, %v2873
        %v2877 = vmax.f32 %v2875, 0.0
        %v2878 = vmax.f32 %v2876, 0.0
        %v2879 = vadd.f32 %v2877, %v2350
        %v2880 = vadd.f32 %v2878, %v2351
        %v2881 = vmax.f32 %v2879, 0.0
        %v2882 = vmax.f32 %v2880, 0.0
        %2883 = vxpose.xlu0.b32.start [1/16] %v2881, 128
        %2884 = vxpose.xlu0.b32.cont [2/16] 0.0, 128
        %2885 = vxpose.xlu0.b32.cont [3/16] 0.0, 128
        %2886 = vxpose.xlu0.b32.cont [4/16] 0.0, 128
        %2887 = vxpose.xlu0.b32.cont [5/16] 0.0, 128
        %2888 = vxpose.xlu0.b32.cont [6/16] 0.0, 128
        %2889 = vxpose.xlu0.b32.cont [7/16] 0.0, 128
        %2890 = vxpose.xlu0.b32.cont [8/16] 0.0, 128
        %2891 = vxpose.xlu0.b32.cont [9/16] 0.0, 128
        %2892 = vxpose.xlu0.b32.cont [10/16] 0.0, 128
        %2893 = vxpose.xlu0.b32.cont [11/16] 0.0, 128
        %2894 = vxpose.xlu0.b32.cont [12/16] 0.0, 128
        %2895 = vxpose.xlu0.b32.cont [13/16] 0.0, 128
        %2896 = vxpose.xlu0.b32.cont [14/16] 0.0, 128
        %2897 = vxpose.xlu0.b32.cont [15/16] 0.0, 128
        %2898 = vxpose.xlu0.b32.end [16/16] 0.0, 128
        %v2899 = vpop.trf.xlu0
        %v2900 = vpop.trf.xlu0
        %v2901 = vpop.trf.xlu0
        %v2902 = vpop.trf.xlu0
        %v2903 = vpop.trf.xlu0
        %v2904 = vpop.trf.xlu0
        %v2905 = vpop.trf.xlu0
        %v2906 = vpop.trf.xlu0
        %v2907 = vpop.trf.xlu0
        %v2908 = vpop.trf.xlu0
        %v2909 = vpop.trf.xlu0
        %v2910 = vpop.trf.xlu0
        %v2911 = vpop.trf.xlu0
        %v2912 = vpop.trf.xlu0
        %v2913 = vpop.trf.xlu0
        %v2914 = vpop.trf.xlu0
        %vm2915 = vcmask 64512
        %2916 = vst.msk [vmem:[%s741] sm:$0xff] %vm2915, %v2899
        %2917 = vst.msk [vmem:[%s741 + $0x8] sm:$0xff] %vm2915, %v2900
        %2918 = vst.msk [vmem:[%s741 + $0x10] sm:$0xff] %vm2915, %v2901
        %2919 = vst.msk [vmem:[%s741 + $0x18] sm:$0xff] %vm2915, %v2902
        %2920 = vst.msk [vmem:[%s741 + $0x20] sm:$0xff] %vm2915, %v2903
        %2921 = vst.msk [vmem:[%s741 + $0x28] sm:$0xff] %vm2915, %v2904
        %2922 = vst.msk [vmem:[%s741 + $0x30] sm:$0xff] %vm2915, %v2905
        %2923 = vst.msk [vmem:[%s741 + $0x38] sm:$0xff] %vm2915, %v2906
        %2924 = vst.msk [vmem:[%s741 + $0x40] sm:$0xff] %vm2915, %v2907
        %2925 = vst.msk [vmem:[%s741 + $0x48] sm:$0xff] %vm2915, %v2908
        %2926 = vst.msk [vmem:[%s741 + $0x50] sm:$0xff] %vm2915, %v2909
        %2927 = vst.msk [vmem:[%s741 + $0x58] sm:$0xff] %vm2915, %v2910
        %2928 = vst.msk [vmem:[%s741 + $0x60] sm:$0xff] %vm2915, %v2911
        %2929 = vst.msk [vmem:[%s741 + $0x68] sm:$0xff] %vm2915, %v2912
        %2930 = vst.msk [vmem:[%s741 + $0x70] sm:$0xff] %vm2915, %v2913
        %2931 = vst.msk [vmem:[%s741 + $0x78] sm:$0xff] %vm2915, %v2914
        %2932 = vxpose.xlu0.b32.start [1/16] %v2882, 128
        %2933 = vxpose.xlu0.b32.cont [2/16] 0.0, 128
        %2934 = vxpose.xlu0.b32.cont [3/16] 0.0, 128
        %2935 = vxpose.xlu0.b32.cont [4/16] 0.0, 128
        %2936 = vxpose.xlu0.b32.cont [5/16] 0.0, 128
        %2937 = vxpose.xlu0.b32.cont [6/16] 0.0, 128
        %2938 = vxpose.xlu0.b32.cont [7/16] 0.0, 128
        %2939 = vxpose.xlu0.b32.cont [8/16] 0.0, 128
        %2940 = vxpose.xlu0.b32.cont [9/16] 0.0, 128
        %2941 = vxpose.xlu0.b32.cont [10/16] 0.0, 128
        %2942 = vxpose.xlu0.b32.cont [11/16] 0.0, 128
        %2943 = vxpose.xlu0.b32.cont [12/16] 0.0, 128
        %2944 = vxpose.xlu0.b32.cont [13/16] 0.0, 128
        %2945 = vxpose.xlu0.b32.cont [14/16] 0.0, 128
        %2946 = vxpose.xlu0.b32.cont [15/16] 0.0, 128
        %2947 = vxpose.xlu0.b32.end [16/16] 0.0, 128
        %v2948 = vpop.trf.xlu0
        %v2949 = vpop.trf.xlu0
        %v2950 = vpop.trf.xlu0
        %v2951 = vpop.trf.xlu0
        %v2952 = vpop.trf.xlu0
        %v2953 = vpop.trf.xlu0
        %v2954 = vpop.trf.xlu0
        %v2955 = vpop.trf.xlu0
        %v2956 = vpop.trf.xlu0
        %v2957 = vpop.trf.xlu0
        %v2958 = vpop.trf.xlu0
        %v2959 = vpop.trf.xlu0
        %v2960 = vpop.trf.xlu0
        %v2961 = vpop.trf.xlu0
        %v2962 = vpop.trf.xlu0
        %v2963 = vpop.trf.xlu0
        %s2964 = scalar_lea.vmem %s741, 128
        %2965 = vst.msk [vmem:[%s2964] sm:$0xff] %vm2915, %v2948
        %2966 = vst.msk [vmem:[%s2964 + $0x8] sm:$0xff] %vm2915, %v2949
        %2967 = vst.msk [vmem:[%s2964 + $0x10] sm:$0xff] %vm2915, %v2950
        %2968 = vst.msk [vmem:[%s2964 + $0x18] sm:$0xff] %vm2915, %v2951
        %2969 = vst.msk [vmem:[%s2964 + $0x20] sm:$0xff] %vm2915, %v2952
        %2970 = vst.msk [vmem:[%s2964 + $0x28] sm:$0xff] %vm2915, %v2953
        %2971 = vst.msk [vmem:[%s2964 + $0x30] sm:$0xff] %vm2915, %v2954
        %2972 = vst.msk [vmem:[%s2964 + $0x38] sm:$0xff] %vm2915, %v2955
        %2973 = vst.msk [vmem:[%s2964 + $0x40] sm:$0xff] %vm2915, %v2956
        %2974 = vst.msk [vmem:[%s2964 + $0x48] sm:$0xff] %vm2915, %v2957
        %2975 = vst.msk [vmem:[%s2964 + $0x50] sm:$0xff] %vm2915, %v2958
        %2976 = vst.msk [vmem:[%s2964 + $0x58] sm:$0xff] %vm2915, %v2959
        %2977 = vst.msk [vmem:[%s2964 + $0x60] sm:$0xff] %vm2915, %v2960
        %2978 = vst.msk [vmem:[%s2964 + $0x68] sm:$0xff] %vm2915, %v2961
        %2979 = vst.msk [vmem:[%s2964 + $0x70] sm:$0xff] %vm2915, %v2962
        %2980 = vst.msk [vmem:[%s2964 + $0x78] sm:$0xff] %vm2915, %v2963
        %s2981 = smul.u32 2, %s40
        %p2982 = scmp.lt.s32.totalorder %s2981, 3
        %s2983 = scalar_select %p2982, %s2981, 3
        %s2984 = smul.addr %s2983, 16
        %s2985 = smul.addr %s2984, 8
        %s2986 = scalar_lea.vmem %s11, %s2985
        // Predicated region
        $region105: #{res_tcn_driving_global_forward.4} parent=63 // pred_check
          %p2987 = pneg %p339
        $region106: #{res_tcn_driving_global_forward.4} parent=63 // pred_check_branch
          %2989 = sbr.rel (%p2987) target = $region108
        $region107: #{res_tcn_driving_global_forward.4} parent=63 // pred_region
          %s2990 = smul.u32 2, %s40
        $region108: #{res_tcn_driving_global_forward.4} parent=63 // pred_fallthru
          _
      $region64: #{res_tcn_driving_global_forward.4} parent=5 // pred_fallthru
        _
      %p2991 = scmp.le.s32.totalorder 2, %s35
      // Predicated region
      $region109: #{res_tcn_driving_global_forward.4} parent=5 // pred_check
        %p2992 = pneg %p2991
      $region110: #{res_tcn_driving_global_forward.4} parent=5 // pred_check_branch
        %2994 = sbr.rel (%p2992) target = $region112
      $region111: #{res_tcn_driving_global_forward.4} parent=5 // pred_region
        %s2995 = ssub.s32 %s35, 2
        // Predicated region
        $region113: #{res_tcn_driving_global_forward.4} parent=111 // pred_check
          %p2996 = pneg %p345
        $region114: #{res_tcn_driving_global_forward.4} parent=111 // pred_check_branch
          %2998 = sbr.rel (%p2996) target = $region116
        $region115: #{res_tcn_driving_global_forward.4} parent=111 // pred_region
          %s2999 = smul.u32 2, %s41
          %p3000 = scmp.lt.s32.totalorder %s2999, 3
          %s3001 = scalar_select %p3000, %s2999, 3
          %s3002 = smul.addr %s3001, 16
          %s3003 = smul.addr %s3002, 8
          %s3004 = scalar_lea.vmem %s11, %s3003
        $region116: #{res_tcn_driving_global_forward.4} parent=111 // pred_fallthru
          _
      $region112: #{res_tcn_driving_global_forward.4} parent=5 // pred_fallthru
        _
    $region6: #{res_tcn_driving_global_forward.4} parent=1 // loop_footer
      %s39 = sadd.s32 1, %s35
    $region7: #{res_tcn_driving_global_forward.4} parent=1 // loop_footer_branch
      %34 = sbr.rel target = $region3
    $region8: #{res_tcn_driving_global_forward.4} parent=1 // loop_exit
      _
    %3005 = vsyncpa [#allocation3], 1
    %s3006 = scalar_lea.sflag [#allocation3], 1
    %3007 = vsyncpa %s3006, 1
    %3008 = vsyncpa [#allocation5], 1
    %s3009 = scalar_lea.sflag [#allocation5], 1
    %3010 = vsyncpa %s3009, 1
    %3011 = vsyncpa [#allocation8], 1
    %s3012 = scalar_lea.sflag [#allocation8], 1
    %3013 = vsyncpa %s3012, 1
    %3014 = vsyncpa [#allocation11], 1
    %s3015 = scalar_lea.sflag [#allocation11], 1
    %3016 = vsyncpa %s3015, 1
    %3017 = vsyncpa [#allocation14], 1
    %s3018 = scalar_lea.sflag [#allocation14], 1
    %3019 = vsyncpa %s3018, 1
    %3020 = vsyncpa [#allocation17], 1
    %s3021 = scalar_lea.sflag [#allocation17], 1
    %3022 = vsyncpa %s3021, 1

// kernel: res_tcn_driving_global_forward.5
$region0: #{res_tcn_driving_global_forward.5}
  #allocation0 [shape = 'u32[]', space=smem, size = 0x4, offset = 0x4, fixed_abs, tag = 'smem constant byte address 0x4 - core index']
  #allocation1 [shape = 'u32[72,128]{1,0:T(1,128)}', space=vmem, size = 0x9000, scoped, tag = 'internal scratch']
  %s0 = inlined_call_operand.vmem [shape: f32[4,1024], index: 0, kind: input, shape index: {}]
  %s1 = inlined_call_operand.vmem [shape: bf16[1024,64], index: 1, kind: input, shape index: {}]
  %s2 = inlined_call_operand.hbm [shape: f32[1,64], index: 2, kind: input, shape index: {}]
  %s3 = inlined_call_operand.hbm [shape: bf16[64,64], index: 3, kind: input, shape index: {}]
  %s4 = inlined_call_operand.hbm [shape: f32[1,64], index: 4, kind: input, shape index: {}]
  %s5 = inlined_call_operand.vmem [shape: bf16[64,4], index: 5, kind: input, shape index: {}]
  %s6 = inlined_call_operand.hbm [shape: f32[1,4], index: 6, kind: input, shape index: {}]
  %s7 = inlined_call_operand.hbm [shape: f32[4,4], index: 7, kind: output, shape index: {}]
  %s8 = sld [smem:[#allocation0]]
  $region54: #{res_tcn_driving_global_forward.5} parent=0
    _
  %s10 = ssub.s32 1, %s8
  %s11 = scalar_select 0, %s10, %s8
  $region1: #{res_tcn_driving_global_forward.5} parent=0
    #allocation2 [shape = 'u8[512]{0}', space=vmem, size = 0x400, scoped, tag = 'input window, operand 2, single buffered']
    #allocation3 [shape = 's32[1]{0}', space=sflag, size = 0x4, scoped, tag = 'scoped memory for res_tcn_driving_global_forward.5']
    #allocation4 [shape = 's32[1]{0}', space=sflag, size = 0x4, scoped, tag = 'scoped memory for res_tcn_driving_global_forward.5']
    #allocation5 [shape = 'u8[16384]{0}', space=vmem, size = 0x4000, scoped, tag = 'input window, operand 3, single buffered']
    #allocation6 [shape = 's32[1]{0}', space=sflag, size = 0x4, scoped, tag = 'scoped memory for res_tcn_driving_global_forward.5']
    #allocation7 [shape = 'u8[512]{0}', space=vmem, size = 0x400, scoped, tag = 'input window, operand 4, single buffered']
    #allocation8 [shape = 'u8[512]{0}', space=vmem, size = 0x400, scoped, tag = 'input window, operand 6, single buffered']
    #allocation9 [shape = 's32[1]{0}', space=sflag, size = 0x4, scoped, tag = 'scoped memory for res_tcn_driving_global_forward.5']
    #allocation10 [shape = 'u8[2048]{0}', space=vmem, size = 0x800, scoped, tag = 'output window, operand 0, single buffered']
    %12 = vsyncpa [#allocation3], 0
    %13 = vsyncpa [#allocation6], 0
    %14 = vsyncpa [#allocation9], 0
    %15 = vsyncpa [#allocation4], 0
    // Predicated region
    $region2: #{res_tcn_driving_global_forward.5} parent=1 // pred_check
      _
    $region3: #{res_tcn_driving_global_forward.5} parent=1 // pred_check_branch
      %17 = sbr.rel (0) target = $region5
    $region4: #{res_tcn_driving_global_forward.5} parent=1 // pred_region
      _
    $region5: #{res_tcn_driving_global_forward.5} parent=1 // pred_fallthru
      _
    // Predicated region
    $region6: #{res_tcn_driving_global_forward.5} parent=1 // pred_check
      _
    $region7: #{res_tcn_driving_global_forward.5} parent=1 // pred_check_branch
      %19 = sbr.rel (0) target = $region9
    $region8: #{res_tcn_driving_global_forward.5} parent=1 // pred_region
      _
    $region9: #{res_tcn_driving_global_forward.5} parent=1 // pred_fallthru
      _
    // Predicated region
    $region10: #{res_tcn_driving_global_forward.5} parent=1 // pred_check
      _
    $region11: #{res_tcn_driving_global_forward.5} parent=1 // pred_check_branch
      %21 = sbr.rel (0) target = $region13
    $region12: #{res_tcn_driving_global_forward.5} parent=1 // pred_region
      %23 = vsyncadd [#allocation3], 0
      %s25 = sshll.u32 %s2, 4
      %s26 = int_to_ptr.hbm [resolvable:$true] %s25
      %s27 = sshll.u32 [#allocation2], 4
      %s28 = int_to_ptr.vmem [resolvable:$true] %s27
      %30 = dma.hbm_to_vmem [thread:$0]  %s26, 16, %s28, [#allocation3]
    $region13: #{res_tcn_driving_global_forward.5} parent=1 // pred_fallthru
      _
    // Predicated region
    $region14: #{res_tcn_driving_global_forward.5} parent=1 // pred_check
      _
    $region15: #{res_tcn_driving_global_forward.5} parent=1 // pred_check_branch
      %32 = sbr.rel (0) target = $region17
    $region16: #{res_tcn_driving_global_forward.5} parent=1 // pred_region
      %34 = vsyncadd [#allocation6], 0
      %s35 = sshll.u32 %s3, 4
      %s36 = int_to_ptr.hbm [resolvable:$true] %s35
      %s37 = sshll.u32 [#allocation5], 4
      %s38 = int_to_ptr.vmem [resolvable:$true] %s37
      %43 = dma.hbm_to_vmem [thread:$0]  %s36, 512, %s38, [#allocation6], 64, 64, 4
    $region17: #{res_tcn_driving_global_forward.5} parent=1 // pred_fallthru
      _
    // Predicated region
    $region18: #{res_tcn_driving_global_forward.5} parent=1 // pred_check
      _
    $region19: #{res_tcn_driving_global_forward.5} parent=1 // pred_check_branch
      %45 = sbr.rel (0) target = $region21
    $region20: #{res_tcn_driving_global_forward.5} parent=1 // pred_region
      %47 = vsyncadd [#allocation6], 0
      %s49 = sshll.u32 %s4, 4
      %s50 = int_to_ptr.hbm [resolvable:$true] %s49
      %s51 = sshll.u32 [#allocation7], 4
      %s52 = int_to_ptr.vmem [resolvable:$true] %s51
      %54 = dma.hbm_to_vmem [thread:$0]  %s50, 16, %s52, [#allocation6]
    $region21: #{res_tcn_driving_global_forward.5} parent=1 // pred_fallthru
      _
    // Predicated region
    $region22: #{res_tcn_driving_global_forward.5} parent=1 // pred_check
      _
    $region23: #{res_tcn_driving_global_forward.5} parent=1 // pred_check_branch
      %56 = sbr.rel (0) target = $region25
    $region24: #{res_tcn_driving_global_forward.5} parent=1 // pred_region
      _
    $region25: #{res_tcn_driving_global_forward.5} parent=1 // pred_fallthru
      _
    // Predicated region
    $region26: #{res_tcn_driving_global_forward.5} parent=1 // pred_check
      _
    $region27: #{res_tcn_driving_global_forward.5} parent=1 // pred_check_branch
      %58 = sbr.rel (0) target = $region29
    $region28: #{res_tcn_driving_global_forward.5} parent=1 // pred_region
      %60 = vsyncadd [#allocation9], 0
      %s62 = sshll.u32 %s6, 4
      %s63 = int_to_ptr.hbm [resolvable:$true] %s62
      %s64 = sshll.u32 [#allocation8], 4
      %s65 = int_to_ptr.vmem [resolvable:$true] %s64
      %67 = dma.hbm_to_vmem [thread:$0]  %s63, 16, %s65, [#allocation9]
    $region29: #{res_tcn_driving_global_forward.5} parent=1 // pred_fallthru
      _
    // Predicated region
    $region30: #{res_tcn_driving_global_forward.5} parent=1 // pred_check
      _
    $region31: #{res_tcn_driving_global_forward.5} parent=1 // pred_check_branch
      %69 = sbr.rel (0) target = $region33
    $region32: #{res_tcn_driving_global_forward.5} parent=1 // pred_region
      %71 = dma.done [#allocation3], 16
    $region33: #{res_tcn_driving_global_forward.5} parent=1 // pred_fallthru
      _
    // Predicated region
    $region34: #{res_tcn_driving_global_forward.5} parent=1 // pred_check
      _
    $region35: #{res_tcn_driving_global_forward.5} parent=1 // pred_check_branch
      %73 = sbr.rel (0) target = $region37
    $region36: #{res_tcn_driving_global_forward.5} parent=1 // pred_region
      %75 = dma.done [#allocation6], 512
    $region37: #{res_tcn_driving_global_forward.5} parent=1 // pred_fallthru
      _
    // Predicated region
    $region38: #{res_tcn_driving_global_forward.5} parent=1 // pred_check
      _
    $region39: #{res_tcn_driving_global_forward.5} parent=1 // pred_check_branch
      %77 = sbr.rel (0) target = $region41
    $region40: #{res_tcn_driving_global_forward.5} parent=1 // pred_region
      %79 = dma.done [#allocation6], 16
    $region41: #{res_tcn_driving_global_forward.5} parent=1 // pred_fallthru
      _
    // Predicated region
    $region42: #{res_tcn_driving_global_forward.5} parent=1 // pred_check
      _
    $region43: #{res_tcn_driving_global_forward.5} parent=1 // pred_check_branch
      %81 = sbr.rel (0) target = $region45
    $region44: #{res_tcn_driving_global_forward.5} parent=1 // pred_region
      %83 = dma.done [#allocation9], 16
    $region45: #{res_tcn_driving_global_forward.5} parent=1 // pred_fallthru
      _
    %v85 = vld [vmem:[%s0] sm:$0xff]
    %v86 = vld [vmem:[%s0 + $0x8] sm:$0xff]
    %v87 = vld [vmem:[%s0 + $0x10] sm:$0xff]
    %v88 = vld [vmem:[%s0 + $0x18] sm:$0xff]
    %93 = vst [vmem:[#allocation1] ss:$2 sm:$0xff] %v85
    %s94 = scalar_lea.vmem [#allocation1], 16
    %95 = vst [vmem:[%s94] ss:$2 sm:$0xff] %v86
    %s96 = scalar_lea.vmem [#allocation1], 32
    %97 = vst [vmem:[%s96] ss:$2 sm:$0xff] %v87
    %s98 = scalar_lea.vmem [#allocation1], 48
    %99 = vst [vmem:[%s98] ss:$2 sm:$0xff] %v88
    %v100 = vld.sshfl [vmem:[#allocation1] sm:$0xff pattern:$0x75316420]
    %v101 = vld.sshfl [vmem:[#allocation1 + $0x8] sm:$0xff pattern:$0x75316420]
    %v102 = vld.sshfl [vmem:[#allocation1 + $0x10] sm:$0xff pattern:$0x75316420]
    %v103 = vld.sshfl [vmem:[#allocation1 + $0x18] sm:$0xff pattern:$0x75316420]
    %v104 = vld.sshfl [vmem:[#allocation1 + $0x20] sm:$0xff pattern:$0x75316420]
    %v105 = vld.sshfl [vmem:[#allocation1 + $0x28] sm:$0xff pattern:$0x75316420]
    %v106 = vld.sshfl [vmem:[#allocation1 + $0x30] sm:$0xff pattern:$0x75316420]
    %v107 = vld.sshfl [vmem:[#allocation1 + $0x38] sm:$0xff pattern:$0x75316420]
    %v116 = vpack.c.bf16 %v100, %v100
    %v117 = vpack.c.bf16 %v101, %v101
    %v118 = vpack.c.bf16 %v102, %v102
    %v119 = vpack.c.bf16 %v103, %v103
    %v120 = vpack.c.bf16 %v104, %v104
    %v121 = vpack.c.bf16 %v105, %v105
    %v122 = vpack.c.bf16 %v106, %v106
    %v123 = vpack.c.bf16 %v107, %v107
    %v124 = vld [vmem:[%s1] sm:$0xf]
    %v125 = vld [vmem:[%s1 + $0x4] sm:$0xf]
    %v126 = vld [vmem:[%s1 + $0x8] sm:$0xf]
    %v127 = vld [vmem:[%s1 + $0xc] sm:$0xf]
    %v128 = vld [vmem:[%s1 + $0x10] sm:$0xf]
    %v129 = vld [vmem:[%s1 + $0x14] sm:$0xf]
    %v130 = vld [vmem:[%s1 + $0x18] sm:$0xf]
    %v131 = vld [vmem:[%s1 + $0x1c] sm:$0xf]
    %v132 = vld [vmem:[%s1 + $0x20] sm:$0xf]
    %v133 = vld [vmem:[%s1 + $0x24] sm:$0xf]
    %v134 = vld [vmem:[%s1 + $0x28] sm:$0xf]
    %v135 = vld [vmem:[%s1 + $0x2c] sm:$0xf]
    %v136 = vld [vmem:[%s1 + $0x30] sm:$0xf]
    %v137 = vld [vmem:[%s1 + $0x34] sm:$0xf]
    %v138 = vld [vmem:[%s1 + $0x38] sm:$0xf]
    %v139 = vld [vmem:[%s1 + $0x3c] sm:$0xf]
    %v140 = vld [vmem:[%s1 + $0x40] sm:$0xf]
    %v141 = vld [vmem:[%s1 + $0x44] sm:$0xf]
    %v142 = vld [vmem:[%s1 + $0x48] sm:$0xf]
    %v143 = vld [vmem:[%s1 + $0x4c] sm:$0xf]
    %v144 = vld [vmem:[%s1 + $0x50] sm:$0xf]
    %v145 = vld [vmem:[%s1 + $0x54] sm:$0xf]
    %v146 = vld [vmem:[%s1 + $0x58] sm:$0xf]
    %v147 = vld [vmem:[%s1 + $0x5c] sm:$0xf]
    %v148 = vld [vmem:[%s1 + $0x60] sm:$0xf]
    %v149 = vld [vmem:[%s1 + $0x64] sm:$0xf]
    %v150 = vld [vmem:[%s1 + $0x68] sm:$0xf]
    %v151 = vld [vmem:[%s1 + $0x6c] sm:$0xf]
    %v152 = vld [vmem:[%s1 + $0x70] sm:$0xf]
    %v153 = vld [vmem:[%s1 + $0x74] sm:$0xf]
    %v154 = vld [vmem:[%s1 + $0x78] sm:$0xf]
    %v155 = vld [vmem:[%s1 + $0x7c] sm:$0xf]
    %v156 = vld [vmem:[%s1 + $0x80] sm:$0xf]
    %v157 = vld [vmem:[%s1 + $0x84] sm:$0xf]
    %v158 = vld [vmem:[%s1 + $0x88] sm:$0xf]
    %v159 = vld [vmem:[%s1 + $0x8c] sm:$0xf]
    %v160 = vld [vmem:[%s1 + $0x90] sm:$0xf]
    %v161 = vld [vmem:[%s1 + $0x94] sm:$0xf]
    %v162 = vld [vmem:[%s1 + $0x98] sm:$0xf]
    %v163 = vld [vmem:[%s1 + $0x9c] sm:$0xf]
    %v164 = vld [vmem:[%s1 + $0xa0] sm:$0xf]
    %v165 = vld [vmem:[%s1 + $0xa4] sm:$0xf]
    %v166 = vld [vmem:[%s1 + $0xa8] sm:$0xf]
    %v167 = vld [vmem:[%s1 + $0xac] sm:$0xf]
    %v168 = vld [vmem:[%s1 + $0xb0] sm:$0xf]
    %v169 = vld [vmem:[%s1 + $0xb4] sm:$0xf]
    %v170 = vld [vmem:[%s1 + $0xb8] sm:$0xf]
    %v171 = vld [vmem:[%s1 + $0xbc] sm:$0xf]
    %v172 = vld [vmem:[%s1 + $0xc0] sm:$0xf]
    %v173 = vld [vmem:[%s1 + $0xc4] sm:$0xf]
    %v174 = vld [vmem:[%s1 + $0xc8] sm:$0xf]
    %v175 = vld [vmem:[%s1 + $0xcc] sm:$0xf]
    %v176 = vld [vmem:[%s1 + $0xd0] sm:$0xf]
    %v177 = vld [vmem:[%s1 + $0xd4] sm:$0xf]
    %v178 = vld [vmem:[%s1 + $0xd8] sm:$0xf]
    %v179 = vld [vmem:[%s1 + $0xdc] sm:$0xf]
    %v180 = vld [vmem:[%s1 + $0xe0] sm:$0xf]
    %v181 = vld [vmem:[%s1 + $0xe4] sm:$0xf]
    %v182 = vld [vmem:[%s1 + $0xe8] sm:$0xf]
    %v183 = vld [vmem:[%s1 + $0xec] sm:$0xf]
    %v184 = vld [vmem:[%s1 + $0xf0] sm:$0xf]
    %v185 = vld [vmem:[%s1 + $0xf4] sm:$0xf]
    %v186 = vld [vmem:[%s1 + $0xf8] sm:$0xf]
    %v187 = vld [vmem:[%s1 + $0xfc] sm:$0xf]
    %v188 = vld [vmem:[%s1 + $0x100] sm:$0xf]
    %v189 = vld [vmem:[%s1 + $0x104] sm:$0xf]
    %v190 = vld [vmem:[%s1 + $0x108] sm:$0xf]
    %v191 = vld [vmem:[%s1 + $0x10c] sm:$0xf]
    %v192 = vld [vmem:[%s1 + $0x110] sm:$0xf]
    %v193 = vld [vmem:[%s1 + $0x114] sm:$0xf]
    %v194 = vld [vmem:[%s1 + $0x118] sm:$0xf]
    %v195 = vld [vmem:[%s1 + $0x11c] sm:$0xf]
    %v196 = vld [vmem:[%s1 + $0x120] sm:$0xf]
    %v197 = vld [vmem:[%s1 + $0x124] sm:$0xf]
    %v198 = vld [vmem:[%s1 + $0x128] sm:$0xf]
    %v199 = vld [vmem:[%s1 + $0x12c] sm:$0xf]
    %v200 = vld [vmem:[%s1 + $0x130] sm:$0xf]
    %v201 = vld [vmem:[%s1 + $0x134] sm:$0xf]
    %v202 = vld [vmem:[%s1 + $0x138] sm:$0xf]
    %v203 = vld [vmem:[%s1 + $0x13c] sm:$0xf]
    %v204 = vld [vmem:[%s1 + $0x140] sm:$0xf]
    %v205 = vld [vmem:[%s1 + $0x144] sm:$0xf]
    %v206 = vld [vmem:[%s1 + $0x148] sm:$0xf]
    %v207 = vld [vmem:[%s1 + $0x14c] sm:$0xf]
    %v208 = vld [vmem:[%s1 + $0x150] sm:$0xf]
    %v209 = vld [vmem:[%s1 + $0x154] sm:$0xf]
    %v210 = vld [vmem:[%s1 + $0x158] sm:$0xf]
    %v211 = vld [vmem:[%s1 + $0x15c] sm:$0xf]
    %v212 = vld [vmem:[%s1 + $0x160] sm:$0xf]
    %v213 = vld [vmem:[%s1 + $0x164] sm:$0xf]
    %v214 = vld [vmem:[%s1 + $0x168] sm:$0xf]
    %v215 = vld [vmem:[%s1 + $0x16c] sm:$0xf]
    %v216 = vld [vmem:[%s1 + $0x170] sm:$0xf]
    %v217 = vld [vmem:[%s1 + $0x174] sm:$0xf]
    %v218 = vld [vmem:[%s1 + $0x178] sm:$0xf]
    %v219 = vld [vmem:[%s1 + $0x17c] sm:$0xf]
    %v220 = vld [vmem:[%s1 + $0x180] sm:$0xf]
    %v221 = vld [vmem:[%s1 + $0x184] sm:$0xf]
    %v222 = vld [vmem:[%s1 + $0x188] sm:$0xf]
    %v223 = vld [vmem:[%s1 + $0x18c] sm:$0xf]
    %v224 = vld [vmem:[%s1 + $0x190] sm:$0xf]
    %v225 = vld [vmem:[%s1 + $0x194] sm:$0xf]
    %v226 = vld [vmem:[%s1 + $0x198] sm:$0xf]
    %v227 = vld [vmem:[%s1 + $0x19c] sm:$0xf]
    %v228 = vld [vmem:[%s1 + $0x1a0] sm:$0xf]
    %v229 = vld [vmem:[%s1 + $0x1a4] sm:$0xf]
    %v230 = vld [vmem:[%s1 + $0x1a8] sm:$0xf]
    %v231 = vld [vmem:[%s1 + $0x1ac] sm:$0xf]
    %v232 = vld [vmem:[%s1 + $0x1b0] sm:$0xf]
    %v233 = vld [vmem:[%s1 + $0x1b4] sm:$0xf]
    %v234 = vld [vmem:[%s1 + $0x1b8] sm:$0xf]
    %v235 = vld [vmem:[%s1 + $0x1bc] sm:$0xf]
    %v236 = vld [vmem:[%s1 + $0x1c0] sm:$0xf]
    %v237 = vld [vmem:[%s1 + $0x1c4] sm:$0xf]
    %v238 = vld [vmem:[%s1 + $0x1c8] sm:$0xf]
    %v239 = vld [vmem:[%s1 + $0x1cc] sm:$0xf]
    %v240 = vld [vmem:[%s1 + $0x1d0] sm:$0xf]
    %v241 = vld [vmem:[%s1 + $0x1d4] sm:$0xf]
    %v242 = vld [vmem:[%s1 + $0x1d8] sm:$0xf]
    %v243 = vld [vmem:[%s1 + $0x1dc] sm:$0xf]
    %v244 = vld [vmem:[%s1 + $0x1e0] sm:$0xf]
    %v245 = vld [vmem:[%s1 + $0x1e4] sm:$0xf]
    %v246 = vld [vmem:[%s1 + $0x1e8] sm:$0xf]
    %v247 = vld [vmem:[%s1 + $0x1ec] sm:$0xf]
    %v248 = vld [vmem:[%s1 + $0x1f0] sm:$0xf]
    %v249 = vld [vmem:[%s1 + $0x1f4] sm:$0xf]
    %v250 = vld [vmem:[%s1 + $0x1f8] sm:$0xf]
    %v251 = vld [vmem:[%s1 + $0x1fc] sm:$0xf]
    %v252 = vld [vmem:[#allocation2] sm:$0x1]
    %v254 = vperm.slane %v252, 0
    %v384 = vunpack.c.l.b16 %v124
    %v385 = vunpack.c.l.b16 %v125
    %v386 = vunpack.c.l.b16 %v126
    %v387 = vunpack.c.l.b16 %v127
    %v388 = vunpack.c.l.b16 %v128
    %v389 = vunpack.c.l.b16 %v129
    %v390 = vunpack.c.l.b16 %v130
    %v391 = vunpack.c.l.b16 %v131
    %v392 = vunpack.c.l.b16 %v132
    %v393 = vunpack.c.l.b16 %v133
    %v394 = vunpack.c.l.b16 %v134
    %v395 = vunpack.c.l.b16 %v135
    %v396 = vunpack.c.l.b16 %v136
    %v397 = vunpack.c.l.b16 %v137
    %v398 = vunpack.c.l.b16 %v138
    %v399 = vunpack.c.l.b16 %v139
    %v400 = vunpack.c.l.b16 %v140
    %v401 = vunpack.c.l.b16 %v141
    %v402 = vunpack.c.l.b16 %v142
    %v403 = vunpack.c.l.b16 %v143
    %v404 = vunpack.c.l.b16 %v144
    %v405 = vunpack.c.l.b16 %v145
    %v406 = vunpack.c.l.b16 %v146
    %v407 = vunpack.c.l.b16 %v147
    %v408 = vunpack.c.l.b16 %v148
    %v409 = vunpack.c.l.b16 %v149
    %v410 = vunpack.c.l.b16 %v150
    %v411 = vunpack.c.l.b16 %v151
    %v412 = vunpack.c.l.b16 %v152
    %v413 = vunpack.c.l.b16 %v153
    %v414 = vunpack.c.l.b16 %v154
    %v415 = vunpack.c.l.b16 %v155
    %v416 = vunpack.c.l.b16 %v156
    %v417 = vunpack.c.l.b16 %v157
    %v418 = vunpack.c.l.b16 %v158
    %v419 = vunpack.c.l.b16 %v159
    %v420 = vunpack.c.l.b16 %v160
    %v421 = vunpack.c.l.b16 %v161
    %v422 = vunpack.c.l.b16 %v162
    %v423 = vunpack.c.l.b16 %v163
    %v424 = vunpack.c.l.b16 %v164
    %v425 = vunpack.c.l.b16 %v165
    %v426 = vunpack.c.l.b16 %v166
    %v427 = vunpack.c.l.b16 %v167
    %v428 = vunpack.c.l.b16 %v168
    %v429 = vunpack.c.l.b16 %v169
    %v430 = vunpack.c.l.b16 %v170
    %v431 = vunpack.c.l.b16 %v171
    %v432 = vunpack.c.l.b16 %v172
    %v433 = vunpack.c.l.b16 %v173
    %v434 = vunpack.c.l.b16 %v174
    %v435 = vunpack.c.l.b16 %v175
    %v436 = vunpack.c.l.b16 %v176
    %v437 = vunpack.c.l.b16 %v177
    %v438 = vunpack.c.l.b16 %v178
    %v439 = vunpack.c.l.b16 %v179
    %v440 = vunpack.c.l.b16 %v180
    %v441 = vunpack.c.l.b16 %v181
    %v442 = vunpack.c.l.b16 %v182
    %v443 = vunpack.c.l.b16 %v183
    %v444 = vunpack.c.l.b16 %v184
    %v445 = vunpack.c.l.b16 %v185
    %v446 = vunpack.c.l.b16 %v186
    %v447 = vunpack.c.l.b16 %v187
    %v448 = vunpack.c.l.b16 %v188
    %v449 = vunpack.c.l.b16 %v189
    %v450 = vunpack.c.l.b16 %v190
    %v451 = vunpack.c.l.b16 %v191
    %v452 = vunpack.c.l.b16 %v192
    %v453 = vunpack.c.l.b16 %v193
    %v454 = vunpack.c.l.b16 %v194
    %v455 = vunpack.c.l.b16 %v195
    %v456 = vunpack.c.l.b16 %v196
    %v457 = vunpack.c.l.b16 %v197
    %v458 = vunpack.c.l.b16 %v198
    %v459 = vunpack.c.l.b16 %v199
    %v460 = vunpack.c.l.b16 %v200
    %v461 = vunpack.c.l.b16 %v201
    %v462 = vunpack.c.l.b16 %v202
    %v463 = vunpack.c.l.b16 %v203
    %v464 = vunpack.c.l.b16 %v204
    %v465 = vunpack.c.l.b16 %v205
    %v466 = vunpack.c.l.b16 %v206
    %v467 = vunpack.c.l.b16 %v207
    %v468 = vunpack.c.l.b16 %v208
    %v469 = vunpack.c.l.b16 %v209
    %v470 = vunpack.c.l.b16 %v210
    %v471 = vunpack.c.l.b16 %v211
    %v472 = vunpack.c.l.b16 %v212
    %v473 = vunpack.c.l.b16 %v213
    %v474 = vunpack.c.l.b16 %v214
    %v475 = vunpack.c.l.b16 %v215
    %v476 = vunpack.c.l.b16 %v216
    %v477 = vunpack.c.l.b16 %v217
    %v478 = vunpack.c.l.b16 %v218
    %v479 = vunpack.c.l.b16 %v219
    %v480 = vunpack.c.l.b16 %v220
    %v481 = vunpack.c.l.b16 %v221
    %v482 = vunpack.c.l.b16 %v222
    %v483 = vunpack.c.l.b16 %v223
    %v484 = vunpack.c.l.b16 %v224
    %v485 = vunpack.c.l.b16 %v225
    %v486 = vunpack.c.l.b16 %v226
    %v487 = vunpack.c.l.b16 %v227
    %v488 = vunpack.c.l.b16 %v228
    %v489 = vunpack.c.l.b16 %v229
    %v490 = vunpack.c.l.b16 %v230
    %v491 = vunpack.c.l.b16 %v231
    %v492 = vunpack.c.l.b16 %v232
    %v493 = vunpack.c.l.b16 %v233
    %v494 = vunpack.c.l.b16 %v234
    %v495 = vunpack.c.l.b16 %v235
    %v496 = vunpack.c.l.b16 %v236
    %v497 = vunpack.c.l.b16 %v237
    %v498 = vunpack.c.l.b16 %v238
    %v499 = vunpack.c.l.b16 %v239
    %v500 = vunpack.c.l.b16 %v240
    %v501 = vunpack.c.l.b16 %v241
    %v502 = vunpack.c.l.b16 %v242
    %v503 = vunpack.c.l.b16 %v243
    %v504 = vunpack.c.l.b16 %v244
    %v505 = vunpack.c.l.b16 %v245
    %v506 = vunpack.c.l.b16 %v246
    %v507 = vunpack.c.l.b16 %v247
    %v508 = vunpack.c.l.b16 %v248
    %v509 = vunpack.c.l.b16 %v249
    %v510 = vunpack.c.l.b16 %v250
    %v511 = vunpack.c.l.b16 %v251
    %v512 = vpack.c.b16 %v385, %v384
    %v513 = vpack.c.b16 %v387, %v386
    %v514 = vpack.c.b16 %v389, %v388
    %v515 = vpack.c.b16 %v391, %v390
    %v516 = vpack.c.b16 %v393, %v392
    %v517 = vpack.c.b16 %v395, %v394
    %v518 = vpack.c.b16 %v397, %v396
    %v519 = vpack.c.b16 %v399, %v398
    %v520 = vpack.c.b16 %v401, %v400
    %v521 = vpack.c.b16 %v403, %v402
    %v522 = vpack.c.b16 %v405, %v404
    %v523 = vpack.c.b16 %v407, %v406
    %v524 = vpack.c.b16 %v409, %v408
    %v525 = vpack.c.b16 %v411, %v410
    %v526 = vpack.c.b16 %v413, %v412
    %v527 = vpack.c.b16 %v415, %v414
    %v528 = vpack.c.b16 %v417, %v416
    %v529 = vpack.c.b16 %v419, %v418
    %v530 = vpack.c.b16 %v421, %v420
    %v531 = vpack.c.b16 %v423, %v422
    %v532 = vpack.c.b16 %v425, %v424
    %v533 = vpack.c.b16 %v427, %v426
    %v534 = vpack.c.b16 %v429, %v428
    %v535 = vpack.c.b16 %v431, %v430
    %v536 = vpack.c.b16 %v433, %v432
    %v537 = vpack.c.b16 %v435, %v434
    %v538 = vpack.c.b16 %v437, %v436
    %v539 = vpack.c.b16 %v439, %v438
    %v540 = vpack.c.b16 %v441, %v440
    %v541 = vpack.c.b16 %v443, %v442
    %v542 = vpack.c.b16 %v445, %v444
    %v543 = vpack.c.b16 %v447, %v446
    %v544 = vpack.c.b16 %v449, %v448
    %v545 = vpack.c.b16 %v451, %v450
    %v546 = vpack.c.b16 %v453, %v452
    %v547 = vpack.c.b16 %v455, %v454
    %v548 = vpack.c.b16 %v457, %v456
    %v549 = vpack.c.b16 %v459, %v458
    %v550 = vpack.c.b16 %v461, %v460
    %v551 = vpack.c.b16 %v463, %v462
    %v552 = vpack.c.b16 %v465, %v464
    %v553 = vpack.c.b16 %v467, %v466
    %v554 = vpack.c.b16 %v469, %v468
    %v555 = vpack.c.b16 %v471, %v470
    %v556 = vpack.c.b16 %v473, %v472
    %v557 = vpack.c.b16 %v475, %v474
    %v558 = vpack.c.b16 %v477, %v476
    %v559 = vpack.c.b16 %v479, %v478
    %v560 = vpack.c.b16 %v481, %v480
    %v561 = vpack.c.b16 %v483, %v482
    %v562 = vpack.c.b16 %v485, %v484
    %v563 = vpack.c.b16 %v487, %v486
    %v564 = vpack.c.b16 %v489, %v488
    %v565 = vpack.c.b16 %v491, %v490
    %v566 = vpack.c.b16 %v493, %v492
    %v567 = vpack.c.b16 %v495, %v494
    %v568 = vpack.c.b16 %v497, %v496
    %v569 = vpack.c.b16 %v499, %v498
    %v570 = vpack.c.b16 %v501, %v500
    %v571 = vpack.c.b16 %v503, %v502
    %v572 = vpack.c.b16 %v505, %v504
    %v573 = vpack.c.b16 %v507, %v506
    %v574 = vpack.c.b16 %v509, %v508
    %v575 = vpack.c.b16 %v511, %v510
    %640 = vmatpush.bf16.msra.mxu0 %v519
    %641 = vmatpush.bf16.msra.mxu0 %v518
    %642 = vmatpush.bf16.msra.mxu0 %v517
    %643 = vmatpush.bf16.msra.mxu0 %v516
    %644 = vmatpush.bf16.msra.mxu0 %v515
    %645 = vmatpush.bf16.msra.mxu0 %v514
    %646 = vmatpush.bf16.msra.mxu0 %v513
    %647 = vmatpush.bf16.msra.mxu0 %v512
    %648 = vmatmul.bf16.gmra.mxu0 %v116
    %v649 = vpop.f32.mrf.mxu0
    %v650 = vadd.f32 %v254, %v649
    %v651 = vpop.f32.mrf.mxu0
    %652 = vdwg.mxu0
    %653 = vmatpush.bf16.msra.mxu0 %v527
    %654 = vmatpush.bf16.msra.mxu0 %v526
    %655 = vmatpush.bf16.msra.mxu0 %v525
    %656 = vmatpush.bf16.msra.mxu0 %v524
    %657 = vmatpush.bf16.msra.mxu0 %v523
    %658 = vmatpush.bf16.msra.mxu0 %v522
    %659 = vmatpush.bf16.msra.mxu0 %v521
    %660 = vmatpush.bf16.msra.mxu0 %v520
    %661 = vmatmul.bf16.gmra.mxu0 %v117
    %v662 = vpop.f32.mrf.mxu0
    %v663 = vadd.f32 %v650, %v662
    %v664 = vpop.f32.mrf.mxu0
    %665 = vdwg.mxu0
    %666 = vmatpush.bf16.msra.mxu0 %v535
    %667 = vmatpush.bf16.msra.mxu0 %v534
    %668 = vmatpush.bf16.msra.mxu0 %v533
    %669 = vmatpush.bf16.msra.mxu0 %v532
    %670 = vmatpush.bf16.msra.mxu0 %v531
    %671 = vmatpush.bf16.msra.mxu0 %v530
    %672 = vmatpush.bf16.msra.mxu0 %v529
    %673 = vmatpush.bf16.msra.mxu0 %v528
    %674 = vmatmul.bf16.gmra.mxu0 %v118
    %v675 = vpop.f32.mrf.mxu0
    %v676 = vadd.f32 %v663, %v675
    %v677 = vpop.f32.mrf.mxu0
    %678 = vdwg.mxu0
    %679 = vmatpush.bf16.msra.mxu0 %v543
    %680 = vmatpush.bf16.msra.mxu0 %v542
    %681 = vmatpush.bf16.msra.mxu0 %v541
    %682 = vmatpush.bf16.msra.mxu0 %v540
    %683 = vmatpush.bf16.msra.mxu0 %v539
    %684 = vmatpush.bf16.msra.mxu0 %v538
    %685 = vmatpush.bf16.msra.mxu0 %v537
    %686 = vmatpush.bf16.msra.mxu0 %v536
    %687 = vmatmul.bf16.gmra.mxu0 %v119
    %v688 = vpop.f32.mrf.mxu0
    %v689 = vadd.f32 %v676, %v688
    %v690 = vpop.f32.mrf.mxu0
    %691 = vdwg.mxu0
    %692 = vmatpush.bf16.msra.mxu0 %v551
    %693 = vmatpush.bf16.msra.mxu0 %v550
    %694 = vmatpush.bf16.msra.mxu0 %v549
    %695 = vmatpush.bf16.msra.mxu0 %v548
    %696 = vmatpush.bf16.msra.mxu0 %v547
    %697 = vmatpush.bf16.msra.mxu0 %v546
    %698 = vmatpush.bf16.msra.mxu0 %v545
    %699 = vmatpush.bf16.msra.mxu0 %v544
    %700 = vmatmul.bf16.gmra.mxu0 %v120
    %v701 = vpop.f32.mrf.mxu0
    %v702 = vadd.f32 %v689, %v701
    %v703 = vpop.f32.mrf.mxu0
    %704 = vdwg.mxu0
    %705 = vmatpush.bf16.msra.mxu0 %v559
    %706 = vmatpush.bf16.msra.mxu0 %v558
    %707 = vmatpush.bf16.msra.mxu0 %v557
    %708 = vmatpush.bf16.msra.mxu0 %v556
    %709 = vmatpush.bf16.msra.mxu0 %v555
    %710 = vmatpush.bf16.msra.mxu0 %v554
    %711 = vmatpush.bf16.msra.mxu0 %v553
    %712 = vmatpush.bf16.msra.mxu0 %v552
    %713 = vmatmul.bf16.gmra.mxu0 %v121
    %v714 = vpop.f32.mrf.mxu0
    %v715 = vadd.f32 %v702, %v714
    %v716 = vpop.f32.mrf.mxu0
    %717 = vdwg.mxu0
    %718 = vmatpush.bf16.msra.mxu0 %v567
    %719 = vmatpush.bf16.msra.mxu0 %v566
    %720 = vmatpush.bf16.msra.mxu0 %v565
    %721 = vmatpush.bf16.msra.mxu0 %v564
    %722 = vmatpush.bf16.msra.mxu0 %v563
    %723 = vmatpush.bf16.msra.mxu0 %v562
    %724 = vmatpush.bf16.msra.mxu0 %v561
    %725 = vmatpush.bf16.msra.mxu0 %v560
    %726 = vmatmul.bf16.gmra.mxu0 %v122
    %v727 = vpop.f32.mrf.mxu0
    %v728 = vadd.f32 %v715, %v727
    %v729 = vpop.f32.mrf.mxu0
    %730 = vdwg.mxu0
    %731 = vmatpush.bf16.msra.mxu0 %v575
    %732 = vmatpush.bf16.msra.mxu0 %v574
    %733 = vmatpush.bf16.msra.mxu0 %v573
    %734 = vmatpush.bf16.msra.mxu0 %v572
    %735 = vmatpush.bf16.msra.mxu0 %v571
    %736 = vmatpush.bf16.msra.mxu0 %v570
    %737 = vmatpush.bf16.msra.mxu0 %v569
    %738 = vmatpush.bf16.msra.mxu0 %v568
    %739 = vmatmul.bf16.gmra.mxu0 %v123
    %v740 = vpop.f32.mrf.mxu0
    %v741 = vadd.f32 %v728, %v740
    %v742 = vpop.f32.mrf.mxu0
    %743 = vdwg.mxu0
    %v744 = vand.u32 2147483647, %v741
    %v745 = vsub.f32 0.0, %v744
    %v746 = vmul.f32 %v745, 1.442695
    %v747 = vpow.pop %v746
    %v748 = vadd.f32 %v747, 1.0
    %v749 = vlog2.pop %v748
    %v750 = vmul.f32 %v749, 0.6931472
    %v751 = vmul.f32 -0.5, %v747
    %v752 = vadd.f32 %v751, 1.0
    %v753 = vmul.f32 %v752, %v747
    %v754 = vand.u32 2147483647, %v747
    %vm755 = vcmp.lt.f32.partialorder %v754, 0.0004427343
    %v756 = vsel %vm755, %v753, %v750
    %v757 = vmax.f32 %v741, 0.0
    %v758 = vadd.f32 %v756, %v757
    %v759 = vtanh.pop %v758
    %v760 = vmul.f32 %v741, %v759
    %v761 = vpack.c.bf16 %v760, %v760
    %v762 = vld [vmem:[#allocation5] sm:$0xf]
    %v763 = vld [vmem:[#allocation5 + $0x4] sm:$0xf]
    %v764 = vld [vmem:[#allocation5 + $0x8] sm:$0xf]
    %v765 = vld [vmem:[#allocation5 + $0xc] sm:$0xf]
    %v766 = vld [vmem:[#allocation5 + $0x10] sm:$0xf]
    %v767 = vld [vmem:[#allocation5 + $0x14] sm:$0xf]
    %v768 = vld [vmem:[#allocation5 + $0x18] sm:$0xf]
    %v769 = vld [vmem:[#allocation5 + $0x1c] sm:$0xf]
    %v770 = vld [vmem:[#allocation7] sm:$0x1]
    %v772 = vperm.slane %v770, 0
    %v782 = vunpack.c.l.b16 %v762
    %v783 = vunpack.c.l.b16 %v763
    %v784 = vunpack.c.l.b16 %v764
    %v785 = vunpack.c.l.b16 %v765
    %v786 = vunpack.c.l.b16 %v766
    %v787 = vunpack.c.l.b16 %v767
    %v788 = vunpack.c.l.b16 %v768
    %v789 = vunpack.c.l.b16 %v769
    %v790 = vpack.c.b16 %v783, %v782
    %v791 = vpack.c.b16 %v785, %v784
    %v792 = vpack.c.b16 %v787, %v786
    %v793 = vpack.c.b16 %v789, %v788
    %vm798 = vcmask 523264
    %v800 = vsel %vm798, %v761, 0
    %802 = vmatpush.bf16.msra.mxu0 0
    %803 = vmatpush.bf16.msra.mxu0 0
    %804 = vmatpush.bf16.msra.mxu0 0
    %805 = vmatpush.bf16.msra.mxu0 0
    %806 = vmatpush.bf16.msra.mxu0 %v793
    %807 = vmatpush.bf16.msra.mxu0 %v792
    %808 = vmatpush.bf16.msra.mxu0 %v791
    %809 = vmatpush.bf16.msra.mxu0 %v790
    %810 = vmatmul.bf16.gmra.mxu0 %v800
    %v811 = vpop.f32.mrf.mxu0
    %v812 = vadd.f32 %v772, %v811
    %v813 = vpop.f32.mrf.mxu0
    %814 = vdwg.mxu0
    %v815 = vand.u32 2147483647, %v812
    %v816 = vsub.f32 0.0, %v815
    %v817 = vmul.f32 %v816, 1.442695
    %v818 = vpow.pop %v817
    %v819 = vadd.f32 %v818, 1.0
    %v820 = vlog2.pop %v819
    %v821 = vmul.f32 %v820, 0.6931472
    %v822 = vmul.f32 -0.5, %v818
    %v823 = vadd.f32 %v822, 1.0
    %v824 = vmul.f32 %v823, %v818
    %v825 = vand.u32 2147483647, %v818
    %vm826 = vcmp.lt.f32.partialorder %v825, 0.0004427343
    %v827 = vsel %vm826, %v824, %v821
    %v828 = vmax.f32 %v812, 0.0
    %v829 = vadd.f32 %v827, %v828
    %v830 = vtanh.pop %v829
    %v831 = vmul.f32 %v812, %v830
    %v832 = vpack.c.bf16 %v831, %v831
    %v833 = vld [vmem:[%s5] sm:$0xf]
    %v834 = vld [vmem:[%s5 + $0x4] sm:$0xf]
    %v835 = vld [vmem:[%s5 + $0x8] sm:$0xf]
    %v836 = vld [vmem:[%s5 + $0xc] sm:$0xf]
    %v837 = vld [vmem:[%s5 + $0x10] sm:$0xf]
    %v838 = vld [vmem:[%s5 + $0x14] sm:$0xf]
    %v839 = vld [vmem:[%s5 + $0x18] sm:$0xf]
    %v840 = vld [vmem:[%s5 + $0x1c] sm:$0xf]
    %v841 = vld [vmem:[#allocation8] sm:$0x1]
    %v843 = vperm.slane %v841, 0
    %v853 = vunpack.c.l.b16 %v833
    %v854 = vunpack.c.l.b16 %v834
    %v855 = vunpack.c.l.b16 %v835
    %v856 = vunpack.c.l.b16 %v836
    %v857 = vunpack.c.l.b16 %v837
    %v858 = vunpack.c.l.b16 %v838
    %v859 = vunpack.c.l.b16 %v839
    %v860 = vunpack.c.l.b16 %v840
    %v861 = vpack.c.b16 %v854, %v853
    %v862 = vpack.c.b16 %v856, %v855
    %v863 = vpack.c.b16 %v858, %v857
    %v864 = vpack.c.b16 %v860, %v859
    %v870 = vsel %vm798, %v832, 0
    %872 = vmatpush.bf16.msra.mxu0 0
    %873 = vmatpush.bf16.msra.mxu0 0
    %874 = vmatpush.bf16.msra.mxu0 0
    %875 = vmatpush.bf16.msra.mxu0 0
    %876 = vmatpush.bf16.msra.mxu0 %v864
    %877 = vmatpush.bf16.msra.mxu0 %v863
    %878 = vmatpush.bf16.msra.mxu0 %v862
    %879 = vmatpush.bf16.msra.mxu0 %v861
    %880 = vmatmul.bf16.gmra.mxu0 %v870
    %v881 = vpop.f32.mrf.mxu0
    %v882 = vadd.f32 %v843, %v881
    %v883 = vpop.f32.mrf.mxu0
    %884 = vdwg.mxu0
    %vm885 = vcmask 27648
    %886 = vst.msk [vmem:[#allocation10] sm:$0xf] %vm885, %v882
    // Predicated region
    $region46: #{res_tcn_driving_global_forward.5} parent=1 // pred_check
      _
    $region47: #{res_tcn_driving_global_forward.5} parent=1 // pred_check_branch
      %888 = sbr.rel (0) target = $region49
    $region48: #{res_tcn_driving_global_forward.5} parent=1 // pred_region
      %890 = vsyncadd [#allocation4], 0
      %s892 = sshll.u32 [#allocation10], 4
      %s893 = int_to_ptr.vmem [resolvable:$true] %s892
      %s894 = sshll.u32 %s7, 4
      %s895 = int_to_ptr.hbm [resolvable:$true] %s894
      %897 = dma.vmem_to_hbm [thread:$0]  %s893, 64, %s895, [#allocation4]
    $region49: #{res_tcn_driving_global_forward.5} parent=1 // pred_fallthru
      _
    // Predicated region
    $region50: #{res_tcn_driving_global_forward.5} parent=1 // pred_check
      _
    $region51: #{res_tcn_driving_global_forward.5} parent=1 // pred_check_branch
      %899 = sbr.rel (0) target = $region53
    $region52: #{res_tcn_driving_global_forward.5} parent=1 // pred_region
      %901 = dma.done [#allocation4], 64
    $region53: #{res_tcn_driving_global_forward.5} parent=1 // pred_fallthru
      _
    %902 = vsyncpa [#allocation3], 1
    %903 = vsyncpa [#allocation6], 1
    %904 = vsyncpa [#allocation9], 1
    %905 = vsyncpa [#allocation4], 1

// kernel: res_tcn_driving_global_forward.3
$region0: #{res_tcn_driving_global_forward.3}
  #allocation0 [shape = 'u32[]', space=smem, size = 0x4, offset = 0x4, fixed_abs, tag = 'smem constant byte address 0x4 - core index']
  #allocation1 [shape = 'u32[72,128]{1,0:T(1,128)}', space=vmem, size = 0x9000, scoped, tag = 'internal scratch']
  %s0 = inlined_call_operand.vmem [shape: f32[16,64], index: 0, kind: input, shape index: {}]
  %s1 = inlined_call_operand.hbm [shape: bf16[64,1024], index: 1, kind: input, shape index: {}]
  %s2 = inlined_call_operand.hbm [shape: f32[1,1024], index: 2, kind: input, shape index: {}]
  %s3 = inlined_call_operand.hbm [shape: bf16[1024,768], index: 3, kind: input, shape index: {}]
  %s4 = inlined_call_operand.hbm [shape: f32[1,768], index: 4, kind: input, shape index: {}]
  %s5 = inlined_call_operand.hbm [shape: bf16[768,512], index: 5, kind: input, shape index: {}]
  %s6 = inlined_call_operand.hbm [shape: f32[1,512], index: 6, kind: input, shape index: {}]
  %s7 = inlined_call_operand.vmem [shape: f32[16,512], index: 7, kind: output, shape index: {}]
  %s8 = sld [smem:[#allocation0]]
  $region62: #{res_tcn_driving_global_forward.3} parent=0
    _
  %s10 = ssub.s32 1, %s8
  %s11 = scalar_select 0, %s10, %s8
  $region1: #{res_tcn_driving_global_forward.3} parent=0
    #allocation2 [shape = 'u8[131072]{0}', space=vmem, size = 0x20000, scoped, tag = 'input window, operand 1, single buffered']
    #allocation3 [shape = 's32[1]{0}', space=sflag, size = 0x4, scoped, tag = 'scoped memory for res_tcn_driving_global_forward.3']
    #allocation4 [shape = 'u8[4096]{0}', space=vmem, size = 0x1000, scoped, tag = 'input window, operand 2, single buffered']
    #allocation5 [shape = 's32[1]{0}', space=sflag, size = 0x4, scoped, tag = 'scoped memory for res_tcn_driving_global_forward.3']
    #allocation6 [shape = 'u8[1572864]{0}', space=vmem, size = 0x180000, scoped, tag = 'input window, operand 3, single buffered']
    #allocation7 [shape = 'u8[3072]{0}', space=vmem, size = 0xc00, scoped, tag = 'input window, operand 4, single buffered']
    #allocation8 [shape = 's32[1]{0}', space=sflag, size = 0x4, scoped, tag = 'scoped memory for res_tcn_driving_global_forward.3']
    #allocation9 [shape = 'u8[786432]{0}', space=vmem, size = 0xc0000, scoped, tag = 'input window, operand 5, single buffered']
    #allocation10 [shape = 'u8[2048]{0}', space=vmem, size = 0x800, scoped, tag = 'input window, operand 6, single buffered']
    #allocation11 [shape = 's32[1]{0}', space=sflag, size = 0x4, scoped, tag = 'scoped memory for res_tcn_driving_global_forward.3']
    %12 = vsyncpa [#allocation3], 0
    %13 = vsyncpa [#allocation5], 0
    %14 = vsyncpa [#allocation8], 0
    %15 = vsyncpa [#allocation11], 0
    // Predicated region
    $region2: #{res_tcn_driving_global_forward.3} parent=1 // pred_check
      _
    $region3: #{res_tcn_driving_global_forward.3} parent=1 // pred_check_branch
      %17 = sbr.rel (0) target = $region5
    $region4: #{res_tcn_driving_global_forward.3} parent=1 // pred_region
      _
    $region5: #{res_tcn_driving_global_forward.3} parent=1 // pred_fallthru
      _
    // Predicated region
    $region6: #{res_tcn_driving_global_forward.3} parent=1 // pred_check
      _
    $region7: #{res_tcn_driving_global_forward.3} parent=1 // pred_check_branch
      %19 = sbr.rel (0) target = $region9
    $region8: #{res_tcn_driving_global_forward.3} parent=1 // pred_region
      %21 = vsyncadd [#allocation3], 0
      %s22 = sshll.u32 %s1, 4
      %s23 = int_to_ptr.hbm [resolvable:$true] %s22
      %s24 = sshll.u32 [#allocation2], 4
      %s25 = int_to_ptr.vmem [resolvable:$true] %s24
      %30 = dma.hbm_to_vmem [thread:$0]  %s23, 4096, %s25, [#allocation3], 512, 512, 32
    $region9: #{res_tcn_driving_global_forward.3} parent=1 // pred_fallthru
      _
    // Predicated region
    $region10: #{res_tcn_driving_global_forward.3} parent=1 // pred_check
      _
    $region11: #{res_tcn_driving_global_forward.3} parent=1 // pred_check_branch
      %32 = sbr.rel (0) target = $region13
    $region12: #{res_tcn_driving_global_forward.3} parent=1 // pred_region
      %34 = vsyncadd [#allocation5], 0
      %s36 = sshll.u32 %s2, 4
      %s37 = int_to_ptr.hbm [resolvable:$true] %s36
      %s38 = sshll.u32 [#allocation4], 4
      %s39 = int_to_ptr.vmem [resolvable:$true] %s38
      %41 = dma.hbm_to_vmem [thread:$0]  %s37, 128, %s39, [#allocation5]
    $region13: #{res_tcn_driving_global_forward.3} parent=1 // pred_fallthru
      _
    // Predicated region
    $region14: #{res_tcn_driving_global_forward.3} parent=1 // pred_check
      _
    $region15: #{res_tcn_driving_global_forward.3} parent=1 // pred_check_branch
      %43 = sbr.rel (0) target = $region17
    $region16: #{res_tcn_driving_global_forward.3} parent=1 // pred_region
      %45 = vsyncadd [#allocation5], 0
      %s46 = sshll.u32 %s3, 4
      %s47 = int_to_ptr.hbm [resolvable:$true] %s46
      %s48 = sshll.u32 [#allocation6], 4
      %s49 = int_to_ptr.vmem [resolvable:$true] %s48
      %54 = dma.hbm_to_vmem [thread:$0]  %s47, 49152, %s49, [#allocation5], 384, 384, 24
    $region17: #{res_tcn_driving_global_forward.3} parent=1 // pred_fallthru
      _
    // Predicated region
    $region18: #{res_tcn_driving_global_forward.3} parent=1 // pred_check
      _
    $region19: #{res_tcn_driving_global_forward.3} parent=1 // pred_check_branch
      %56 = sbr.rel (0) target = $region21
    $region20: #{res_tcn_driving_global_forward.3} parent=1 // pred_region
      %58 = vsyncadd [#allocation8], 0
      %s60 = sshll.u32 %s4, 4
      %s61 = int_to_ptr.hbm [resolvable:$true] %s60
      %s62 = sshll.u32 [#allocation7], 4
      %s63 = int_to_ptr.vmem [resolvable:$true] %s62
      %65 = dma.hbm_to_vmem [thread:$0]  %s61, 96, %s63, [#allocation8]
    $region21: #{res_tcn_driving_global_forward.3} parent=1 // pred_fallthru
      _
    // Predicated region
    $region22: #{res_tcn_driving_global_forward.3} parent=1 // pred_check
      _
    $region23: #{res_tcn_driving_global_forward.3} parent=1 // pred_check_branch
      %67 = sbr.rel (0) target = $region25
    $region24: #{res_tcn_driving_global_forward.3} parent=1 // pred_region
      %69 = vsyncadd [#allocation8], 0
      %s70 = sshll.u32 %s5, 4
      %s71 = int_to_ptr.hbm [resolvable:$true] %s70
      %s72 = sshll.u32 [#allocation9], 4
      %s73 = int_to_ptr.vmem [resolvable:$true] %s72
      %78 = dma.hbm_to_vmem [thread:$0]  %s71, 24576, %s73, [#allocation8], 256, 256, 16
    $region25: #{res_tcn_driving_global_forward.3} parent=1 // pred_fallthru
      _
    // Predicated region
    $region26: #{res_tcn_driving_global_forward.3} parent=1 // pred_check
      _
    $region27: #{res_tcn_driving_global_forward.3} parent=1 // pred_check_branch
      %80 = sbr.rel (0) target = $region29
    $region28: #{res_tcn_driving_global_forward.3} parent=1 // pred_region
      %82 = vsyncadd [#allocation11], 0
      %s84 = sshll.u32 %s6, 4
      %s85 = int_to_ptr.hbm [resolvable:$true] %s84
      %s86 = sshll.u32 [#allocation10], 4
      %s87 = int_to_ptr.vmem [resolvable:$true] %s86
      %89 = dma.hbm_to_vmem [thread:$0]  %s85, 64, %s87, [#allocation11]
    $region29: #{res_tcn_driving_global_forward.3} parent=1 // pred_fallthru
      _
    // Predicated region
    $region30: #{res_tcn_driving_global_forward.3} parent=1 // pred_check
      _
    $region31: #{res_tcn_driving_global_forward.3} parent=1 // pred_check_branch
      %91 = sbr.rel (0) target = $region33
    $region32: #{res_tcn_driving_global_forward.3} parent=1 // pred_region
      %93 = dma.done [#allocation3], 4096
    $region33: #{res_tcn_driving_global_forward.3} parent=1 // pred_fallthru
      _
    // Predicated region
    $region34: #{res_tcn_driving_global_forward.3} parent=1 // pred_check
      _
    $region35: #{res_tcn_driving_global_forward.3} parent=1 // pred_check_branch
      %95 = sbr.rel (0) target = $region37
    $region36: #{res_tcn_driving_global_forward.3} parent=1 // pred_region
      %97 = dma.done [#allocation5], 128
    $region37: #{res_tcn_driving_global_forward.3} parent=1 // pred_fallthru
      _
    // Predicated region
    $region38: #{res_tcn_driving_global_forward.3} parent=1 // pred_check
      _
    $region39: #{res_tcn_driving_global_forward.3} parent=1 // pred_check_branch
      %99 = sbr.rel (0) target = $region41
    $region40: #{res_tcn_driving_global_forward.3} parent=1 // pred_region
      %101 = dma.done [#allocation5], 49152
    $region41: #{res_tcn_driving_global_forward.3} parent=1 // pred_fallthru
      _
    // Predicated region
    $region42: #{res_tcn_driving_global_forward.3} parent=1 // pred_check
      _
    $region43: #{res_tcn_driving_global_forward.3} parent=1 // pred_check_branch
      %103 = sbr.rel (0) target = $region45
    $region44: #{res_tcn_driving_global_forward.3} parent=1 // pred_region
      %105 = dma.done [#allocation8], 96
    $region45: #{res_tcn_driving_global_forward.3} parent=1 // pred_fallthru
      _
    // Predicated region
    $region46: #{res_tcn_driving_global_forward.3} parent=1 // pred_check
      _
    $region47: #{res_tcn_driving_global_forward.3} parent=1 // pred_check_branch
      %107 = sbr.rel (0) target = $region49
    $region48: #{res_tcn_driving_global_forward.3} parent=1 // pred_region
      %109 = dma.done [#allocation8], 24576
    $region49: #{res_tcn_driving_global_forward.3} parent=1 // pred_fallthru
      _
    // Predicated region
    $region50: #{res_tcn_driving_global_forward.3} parent=1 // pred_check
      _
    $region51: #{res_tcn_driving_global_forward.3} parent=1 // pred_check_branch
      %111 = sbr.rel (0) target = $region53
    $region52: #{res_tcn_driving_global_forward.3} parent=1 // pred_region
      %113 = dma.done [#allocation11], 64
    $region53: #{res_tcn_driving_global_forward.3} parent=1 // pred_fallthru
      _
    %v115 = vld [vmem:[%s0] sm:$0xff]
    %v116 = vld [vmem:[%s0 + $0x8] sm:$0xff]
    %v117 = vpack.c.bf16 %v116, %v115
    %v118 = vld [vmem:[#allocation2] sm:$0xff]
    %v119 = vld [vmem:[#allocation2 + $0x8] sm:$0xff]
    %v120 = vld [vmem:[#allocation2 + $0x10] sm:$0xff]
    %v121 = vld [vmem:[#allocation2 + $0x18] sm:$0xff]
    %v122 = vld [vmem:[#allocation2 + $0x20] sm:$0xff]
    %v123 = vld [vmem:[#allocation2 + $0x28] sm:$0xff]
    %v124 = vld [vmem:[#allocation2 + $0x30] sm:$0xff]
    %v125 = vld [vmem:[#allocation2 + $0x38] sm:$0xff]
    %v126 = vld [vmem:[#allocation2 + $0x40] sm:$0xff]
    %v127 = vld [vmem:[#allocation2 + $0x48] sm:$0xff]
    %v128 = vld [vmem:[#allocation2 + $0x50] sm:$0xff]
    %v129 = vld [vmem:[#allocation2 + $0x58] sm:$0xff]
    %v130 = vld [vmem:[#allocation2 + $0x60] sm:$0xff]
    %v131 = vld [vmem:[#allocation2 + $0x68] sm:$0xff]
    %v132 = vld [vmem:[#allocation2 + $0x70] sm:$0xff]
    %v133 = vld [vmem:[#allocation2 + $0x78] sm:$0xff]
    %v134 = vld [vmem:[#allocation2 + $0x80] sm:$0xff]
    %v135 = vld [vmem:[#allocation2 + $0x88] sm:$0xff]
    %v136 = vld [vmem:[#allocation2 + $0x90] sm:$0xff]
    %v137 = vld [vmem:[#allocation2 + $0x98] sm:$0xff]
    %v138 = vld [vmem:[#allocation2 + $0xa0] sm:$0xff]
    %v139 = vld [vmem:[#allocation2 + $0xa8] sm:$0xff]
    %v140 = vld [vmem:[#allocation2 + $0xb0] sm:$0xff]
    %v141 = vld [vmem:[#allocation2 + $0xb8] sm:$0xff]
    %v142 = vld [vmem:[#allocation2 + $0xc0] sm:$0xff]
    %v143 = vld [vmem:[#allocation2 + $0xc8] sm:$0xff]
    %v144 = vld [vmem:[#allocation2 + $0xd0] sm:$0xff]
    %v145 = vld [vmem:[#allocation2 + $0xd8] sm:$0xff]
    %v146 = vld [vmem:[#allocation2 + $0xe0] sm:$0xff]
    %v147 = vld [vmem:[#allocation2 + $0xe8] sm:$0xff]
    %v148 = vld [vmem:[#allocation2 + $0xf0] sm:$0xff]
    %v149 = vld [vmem:[#allocation2 + $0xf8] sm:$0xff]
    %v150 = vld [vmem:[#allocation4] sm:$0xff]
    %v152 = vperm.slane %v150, 0
    %v153 = vperm.slane %v150, 1
    %v154 = vperm.slane %v150, 2
    %v155 = vperm.slane %v150, 3
    %v156 = vperm.slane %v150, 4
    %v157 = vperm.slane %v150, 5
    %v158 = vperm.slane %v150, 6
    %v159 = vperm.slane %v150, 7
    %v200 = vunpack.c.l.b16 %v118
    %v201 = vunpack.c.h.b16 %v118
    %v202 = vunpack.c.l.b16 %v119
    %v203 = vunpack.c.h.b16 %v119
    %v204 = vunpack.c.l.b16 %v120
    %v205 = vunpack.c.h.b16 %v120
    %v206 = vunpack.c.l.b16 %v121
    %v207 = vunpack.c.h.b16 %v121
    %v208 = vunpack.c.l.b16 %v122
    %v209 = vunpack.c.h.b16 %v122
    %v210 = vunpack.c.l.b16 %v123
    %v211 = vunpack.c.h.b16 %v123
    %v212 = vunpack.c.l.b16 %v124
    %v213 = vunpack.c.h.b16 %v124
    %v214 = vunpack.c.l.b16 %v125
    %v215 = vunpack.c.h.b16 %v125
    %v216 = vunpack.c.l.b16 %v126
    %v217 = vunpack.c.h.b16 %v126
    %v218 = vunpack.c.l.b16 %v127
    %v219 = vunpack.c.h.b16 %v127
    %v220 = vunpack.c.l.b16 %v128
    %v221 = vunpack.c.h.b16 %v128
    %v222 = vunpack.c.l.b16 %v129
    %v223 = vunpack.c.h.b16 %v129
    %v224 = vunpack.c.l.b16 %v130
    %v225 = vunpack.c.h.b16 %v130
    %v226 = vunpack.c.l.b16 %v131
    %v227 = vunpack.c.h.b16 %v131
    %v228 = vunpack.c.l.b16 %v132
    %v229 = vunpack.c.h.b16 %v132
    %v230 = vunpack.c.l.b16 %v133
    %v231 = vunpack.c.h.b16 %v133
    %v232 = vunpack.c.l.b16 %v134
    %v233 = vunpack.c.h.b16 %v134
    %v234 = vunpack.c.l.b16 %v135
    %v235 = vunpack.c.h.b16 %v135
    %v236 = vunpack.c.l.b16 %v136
    %v237 = vunpack.c.h.b16 %v136
    %v238 = vunpack.c.l.b16 %v137
    %v239 = vunpack.c.h.b16 %v137
    %v240 = vunpack.c.l.b16 %v138
    %v241 = vunpack.c.h.b16 %v138
    %v242 = vunpack.c.l.b16 %v139
    %v243 = vunpack.c.h.b16 %v139
    %v244 = vunpack.c.l.b16 %v140
    %v245 = vunpack.c.h.b16 %v140
    %v246 = vunpack.c.l.b16 %v141
    %v247 = vunpack.c.h.b16 %v141
    %v248 = vunpack.c.l.b16 %v142
    %v249 = vunpack.c.h.b16 %v142
    %v250 = vunpack.c.l.b16 %v143
    %v251 = vunpack.c.h.b16 %v143
    %v252 = vunpack.c.l.b16 %v144
    %v253 = vunpack.c.h.b16 %v144
    %v254 = vunpack.c.l.b16 %v145
    %v255 = vunpack.c.h.b16 %v145
    %v256 = vunpack.c.l.b16 %v146
    %v257 = vunpack.c.h.b16 %v146
    %v258 = vunpack.c.l.b16 %v147
    %v259 = vunpack.c.h.b16 %v147
    %v260 = vunpack.c.l.b16 %v148
    %v261 = vunpack.c.h.b16 %v148
    %v262 = vunpack.c.l.b16 %v149
    %v263 = vunpack.c.h.b16 %v149
    %v264 = vpack.c.b16 %v208, %v200
    %v265 = vpack.c.b16 %v209, %v201
    %v266 = vpack.c.b16 %v210, %v202
    %v267 = vpack.c.b16 %v211, %v203
    %v268 = vpack.c.b16 %v212, %v204
    %v269 = vpack.c.b16 %v213, %v205
    %v270 = vpack.c.b16 %v214, %v206
    %v271 = vpack.c.b16 %v215, %v207
    %v272 = vpack.c.b16 %v224, %v216
    %v273 = vpack.c.b16 %v225, %v217
    %v274 = vpack.c.b16 %v226, %v218
    %v275 = vpack.c.b16 %v227, %v219
    %v276 = vpack.c.b16 %v228, %v220
    %v277 = vpack.c.b16 %v229, %v221
    %v278 = vpack.c.b16 %v230, %v222
    %v279 = vpack.c.b16 %v231, %v223
    %v280 = vpack.c.b16 %v240, %v232
    %v281 = vpack.c.b16 %v241, %v233
    %v282 = vpack.c.b16 %v242, %v234
    %v283 = vpack.c.b16 %v243, %v235
    %v284 = vpack.c.b16 %v244, %v236
    %v285 = vpack.c.b16 %v245, %v237
    %v286 = vpack.c.b16 %v246, %v238
    %v287 = vpack.c.b16 %v247, %v239
    %v288 = vpack.c.b16 %v256, %v248
    %v289 = vpack.c.b16 %v257, %v249
    %v290 = vpack.c.b16 %v258, %v250
    %v291 = vpack.c.b16 %v259, %v251
    %v292 = vpack.c.b16 %v260, %v252
    %v293 = vpack.c.b16 %v261, %v253
    %v294 = vpack.c.b16 %v262, %v254
    %v295 = vpack.c.b16 %v263, %v255
    %vm328 = vcmask 523264
    %v330 = vsel %vm328, %v117, 0
    %332 = vmatpush.bf16.msra.mxu0 0
    %333 = vmatpush.bf16.msra.mxu0 0
    %334 = vmatpush.bf16.msra.mxu0 0
    %335 = vmatpush.bf16.msra.mxu0 0
    %336 = vmatpush.bf16.msra.mxu0 %v288
    %337 = vmatpush.bf16.msra.mxu0 %v280
    %338 = vmatpush.bf16.msra.mxu0 %v272
    %339 = vmatpush.bf16.msra.mxu0 %v264
    %340 = vmatmul.bf16.gmra.mxu0 %v330
    %v341 = vpop.f32.mrf.mxu0
    %v342 = vadd.f32 %v152, %v341
    %v343 = vpop.f32.mrf.mxu0
    %v344 = vadd.f32 %v152, %v343
    %345 = vdwg.mxu0
    %346 = vmatpush.bf16.msra.mxu0 0
    %347 = vmatpush.bf16.msra.mxu0 0
    %348 = vmatpush.bf16.msra.mxu0 0
    %349 = vmatpush.bf16.msra.mxu0 0
    %350 = vmatpush.bf16.msra.mxu0 %v289
    %351 = vmatpush.bf16.msra.mxu0 %v281
    %352 = vmatpush.bf16.msra.mxu0 %v273
    %353 = vmatpush.bf16.msra.mxu0 %v265
    %354 = vmatmul.bf16.gmra.mxu0 %v330
    %v355 = vpop.f32.mrf.mxu0
    %v356 = vadd.f32 %v153, %v355
    %v357 = vpop.f32.mrf.mxu0
    %v358 = vadd.f32 %v153, %v357
    %359 = vdwg.mxu0
    %360 = vmatpush.bf16.msra.mxu0 0
    %361 = vmatpush.bf16.msra.mxu0 0
    %362 = vmatpush.bf16.msra.mxu0 0
    %363 = vmatpush.bf16.msra.mxu0 0
    %364 = vmatpush.bf16.msra.mxu0 %v290
    %365 = vmatpush.bf16.msra.mxu0 %v282
    %366 = vmatpush.bf16.msra.mxu0 %v274
    %367 = vmatpush.bf16.msra.mxu0 %v266
    %368 = vmatmul.bf16.gmra.mxu0 %v330
    %v369 = vpop.f32.mrf.mxu0
    %v370 = vadd.f32 %v154, %v369
    %v371 = vpop.f32.mrf.mxu0
    %v372 = vadd.f32 %v154, %v371
    %373 = vdwg.mxu0
    %374 = vmatpush.bf16.msra.mxu0 0
    %375 = vmatpush.bf16.msra.mxu0 0
    %376 = vmatpush.bf16.msra.mxu0 0
    %377 = vmatpush.bf16.msra.mxu0 0
    %378 = vmatpush.bf16.msra.mxu0 %v291
    %379 = vmatpush.bf16.msra.mxu0 %v283
    %380 = vmatpush.bf16.msra.mxu0 %v275
    %381 = vmatpush.bf16.msra.mxu0 %v267
    %382 = vmatmul.bf16.gmra.mxu0 %v330
    %v383 = vpop.f32.mrf.mxu0
    %v384 = vadd.f32 %v155, %v383
    %v385 = vpop.f32.mrf.mxu0
    %v386 = vadd.f32 %v155, %v385
    %387 = vdwg.mxu0
    %388 = vmatpush.bf16.msra.mxu0 0
    %389 = vmatpush.bf16.msra.mxu0 0
    %390 = vmatpush.bf16.msra.mxu0 0
    %391 = vmatpush.bf16.msra.mxu0 0
    %392 = vmatpush.bf16.msra.mxu0 %v292
    %393 = vmatpush.bf16.msra.mxu0 %v284
    %394 = vmatpush.bf16.msra.mxu0 %v276
    %395 = vmatpush.bf16.msra.mxu0 %v268
    %396 = vmatmul.bf16.gmra.mxu0 %v330
    %v397 = vpop.f32.mrf.mxu0
    %v398 = vadd.f32 %v156, %v397
    %v399 = vpop.f32.mrf.mxu0
    %v400 = vadd.f32 %v156, %v399
    %401 = vdwg.mxu0
    %402 = vmatpush.bf16.msra.mxu0 0
    %403 = vmatpush.bf16.msra.mxu0 0
    %404 = vmatpush.bf16.msra.mxu0 0
    %405 = vmatpush.bf16.msra.mxu0 0
    %406 = vmatpush.bf16.msra.mxu0 %v293
    %407 = vmatpush.bf16.msra.mxu0 %v285
    %408 = vmatpush.bf16.msra.mxu0 %v277
    %409 = vmatpush.bf16.msra.mxu0 %v269
    %410 = vmatmul.bf16.gmra.mxu0 %v330
    %v411 = vpop.f32.mrf.mxu0
    %v412 = vadd.f32 %v157, %v411
    %v413 = vpop.f32.mrf.mxu0
    %v414 = vadd.f32 %v157, %v413
    %415 = vdwg.mxu0
    %416 = vmatpush.bf16.msra.mxu0 0
    %417 = vmatpush.bf16.msra.mxu0 0
    %418 = vmatpush.bf16.msra.mxu0 0
    %419 = vmatpush.bf16.msra.mxu0 0
    %420 = vmatpush.bf16.msra.mxu0 %v294
    %421 = vmatpush.bf16.msra.mxu0 %v286
    %422 = vmatpush.bf16.msra.mxu0 %v278
    %423 = vmatpush.bf16.msra.mxu0 %v270
    %424 = vmatmul.bf16.gmra.mxu0 %v330
    %v425 = vpop.f32.mrf.mxu0
    %v426 = vadd.f32 %v158, %v425
    %v427 = vpop.f32.mrf.mxu0
    %v428 = vadd.f32 %v158, %v427
    %429 = vdwg.mxu0
    %430 = vmatpush.bf16.msra.mxu0 0
    %431 = vmatpush.bf16.msra.mxu0 0
    %432 = vmatpush.bf16.msra.mxu0 0
    %433 = vmatpush.bf16.msra.mxu0 0
    %434 = vmatpush.bf16.msra.mxu0 %v295
    %435 = vmatpush.bf16.msra.mxu0 %v287
    %436 = vmatpush.bf16.msra.mxu0 %v279
    %437 = vmatpush.bf16.msra.mxu0 %v271
    %438 = vmatmul.bf16.gmra.mxu0 %v330
    %v439 = vpop.f32.mrf.mxu0
    %v440 = vadd.f32 %v159, %v439
    %v441 = vpop.f32.mrf.mxu0
    %v442 = vadd.f32 %v159, %v441
    %443 = vdwg.mxu0
    %v444 = vmax.f32 %v342, 0.0
    %v445 = vmax.f32 %v356, 0.0
    %v446 = vmax.f32 %v370, 0.0
    %v447 = vmax.f32 %v384, 0.0
    %v448 = vmax.f32 %v398, 0.0
    %v449 = vmax.f32 %v412, 0.0
    %v450 = vmax.f32 %v426, 0.0
    %v451 = vmax.f32 %v440, 0.0
    %v452 = vmax.f32 %v344, 0.0
    %v453 = vmax.f32 %v358, 0.0
    %v454 = vmax.f32 %v372, 0.0
    %v455 = vmax.f32 %v386, 0.0
    %v456 = vmax.f32 %v400, 0.0
    %v457 = vmax.f32 %v414, 0.0
    %v458 = vmax.f32 %v428, 0.0
    %v459 = vmax.f32 %v442, 0.0
    %v460 = vpack.c.bf16 %v452, %v444
    %v461 = vpack.c.bf16 %v453, %v445
    %v462 = vpack.c.bf16 %v454, %v446
    %v463 = vpack.c.bf16 %v455, %v447
    %v464 = vpack.c.bf16 %v456, %v448
    %v465 = vpack.c.bf16 %v457, %v449
    %v466 = vpack.c.bf16 %v458, %v450
    %v467 = vpack.c.bf16 %v459, %v451
    %v468 = vld [vmem:[#allocation6] sm:$0xff]
    %v469 = vld [vmem:[#allocation6 + $0x8] sm:$0xff]
    %v470 = vld [vmem:[#allocation6 + $0x10] sm:$0xff]
    %v471 = vld [vmem:[#allocation6 + $0x18] sm:$0xff]
    %v472 = vld [vmem:[#allocation6 + $0x20] sm:$0xff]
    %v473 = vld [vmem:[#allocation6 + $0x28] sm:$0xff]
    %v474 = vld [vmem:[#allocation6 + $0x30] sm:$0xff]
    %v475 = vld [vmem:[#allocation6 + $0x38] sm:$0xff]
    %v476 = vld [vmem:[#allocation6 + $0x40] sm:$0xff]
    %v477 = vld [vmem:[#allocation6 + $0x48] sm:$0xff]
    %v478 = vld [vmem:[#allocation6 + $0x50] sm:$0xff]
    %v479 = vld [vmem:[#allocation6 + $0x58] sm:$0xff]
    %v480 = vld [vmem:[#allocation6 + $0x60] sm:$0xff]
    %v481 = vld [vmem:[#allocation6 + $0x68] sm:$0xff]
    %v482 = vld [vmem:[#allocation6 + $0x70] sm:$0xff]
    %v483 = vld [vmem:[#allocation6 + $0x78] sm:$0xff]
    %v484 = vld [vmem:[#allocation6 + $0x80] sm:$0xff]
    %v485 = vld [vmem:[#allocation6 + $0x88] sm:$0xff]
    %v486 = vld [vmem:[#allocation6 + $0x90] sm:$0xff]
    %v487 = vld [vmem:[#allocation6 + $0x98] sm:$0xff]
    %v488 = vld [vmem:[#allocation6 + $0xa0] sm:$0xff]
    %v489 = vld [vmem:[#allocation6 + $0xa8] sm:$0xff]
    %v490 = vld [vmem:[#allocation6 + $0xb0] sm:$0xff]
    %v491 = vld [vmem:[#allocation6 + $0xb8] sm:$0xff]
    %v492 = vld [vmem:[#allocation6 + $0xc0] sm:$0xff]
    %v493 = vld [vmem:[#allocation6 + $0xc8] sm:$0xff]
    %v494 = vld [vmem:[#allocation6 + $0xd0] sm:$0xff]
    %v495 = vld [vmem:[#allocation6 + $0xd8] sm:$0xff]
    %v496 = vld [vmem:[#allocation6 + $0xe0] sm:$0xff]
    %v497 = vld [vmem:[#allocation6 + $0xe8] sm:$0xff]
    %v498 = vld [vmem:[#allocation6 + $0xf0] sm:$0xff]
    %v499 = vld [vmem:[#allocation6 + $0xf8] sm:$0xff]
    %v500 = vld [vmem:[#allocation6 + $0x100] sm:$0xff]
    %v501 = vld [vmem:[#allocation6 + $0x108] sm:$0xff]
    %v502 = vld [vmem:[#allocation6 + $0x110] sm:$0xff]
    %v503 = vld [vmem:[#allocation6 + $0x118] sm:$0xff]
    %v504 = vld [vmem:[#allocation6 + $0x120] sm:$0xff]
    %v505 = vld [vmem:[#allocation6 + $0x128] sm:$0xff]
    %v506 = vld [vmem:[#allocation6 + $0x130] sm:$0xff]
    %v507 = vld [vmem:[#allocation6 + $0x138] sm:$0xff]
    %v508 = vld [vmem:[#allocation6 + $0x140] sm:$0xff]
    %v509 = vld [vmem:[#allocation6 + $0x148] sm:$0xff]
    %v510 = vld [vmem:[#allocation6 + $0x150] sm:$0xff]
    %v511 = vld [vmem:[#allocation6 + $0x158] sm:$0xff]
    %v512 = vld [vmem:[#allocation6 + $0x160] sm:$0xff]
    %v513 = vld [vmem:[#allocation6 + $0x168] sm:$0xff]
    %v514 = vld [vmem:[#allocation6 + $0x170] sm:$0xff]
    %v515 = vld [vmem:[#allocation6 + $0x178] sm:$0xff]
    %v516 = vld [vmem:[#allocation6 + $0x180] sm:$0xff]
    %v517 = vld [vmem:[#allocation6 + $0x188] sm:$0xff]
    %v518 = vld [vmem:[#allocation6 + $0x190] sm:$0xff]
    %v519 = vld [vmem:[#allocation6 + $0x198] sm:$0xff]
    %v520 = vld [vmem:[#allocation6 + $0x1a0] sm:$0xff]
    %v521 = vld [vmem:[#allocation6 + $0x1a8] sm:$0xff]
    %v522 = vld [vmem:[#allocation6 + $0x1b0] sm:$0xff]
    %v523 = vld [vmem:[#allocation6 + $0x1b8] sm:$0xff]
    %v524 = vld [vmem:[#allocation6 + $0x1c0] sm:$0xff]
    %v525 = vld [vmem:[#allocation6 + $0x1c8] sm:$0xff]
    %v526 = vld [vmem:[#allocation6 + $0x1d0] sm:$0xff]
    %v527 = vld [vmem:[#allocation6 + $0x1d8] sm:$0xff]
    %v528 = vld [vmem:[#allocation6 + $0x1e0] sm:$0xff]
    %v529 = vld [vmem:[#allocation6 + $0x1e8] sm:$0xff]
    %v530 = vld [vmem:[#allocation6 + $0x1f0] sm:$0xff]
    %v531 = vld [vmem:[#allocation6 + $0x1f8] sm:$0xff]
    %v532 = vld [vmem:[#allocation6 + $0x200] sm:$0xff]
    %v533 = vld [vmem:[#allocation6 + $0x208] sm:$0xff]
    %v534 = vld [vmem:[#allocation6 + $0x210] sm:$0xff]
    %v535 = vld [vmem:[#allocation6 + $0x218] sm:$0xff]
    %v536 = vld [vmem:[#allocation6 + $0x220] sm:$0xff]
    %v537 = vld [vmem:[#allocation6 + $0x228] sm:$0xff]
    %v538 = vld [vmem:[#allocation6 + $0x230] sm:$0xff]
    %v539 = vld [vmem:[#allocation6 + $0x238] sm:$0xff]
    %v540 = vld [vmem:[#allocation6 + $0x240] sm:$0xff]
    %v541 = vld [vmem:[#allocation6 + $0x248] sm:$0xff]
    %v542 = vld [vmem:[#allocation6 + $0x250] sm:$0xff]
    %v543 = vld [vmem:[#allocation6 + $0x258] sm:$0xff]
    %v544 = vld [vmem:[#allocation6 + $0x260] sm:$0xff]
    %v545 = vld [vmem:[#allocation6 + $0x268] sm:$0xff]
    %v546 = vld [vmem:[#allocation6 + $0x270] sm:$0xff]
    %v547 = vld [vmem:[#allocation6 + $0x278] sm:$0xff]
    %v548 = vld [vmem:[#allocation6 + $0x280] sm:$0xff]
    %v549 = vld [vmem:[#allocation6 + $0x288] sm:$0xff]
    %v550 = vld [vmem:[#allocation6 + $0x290] sm:$0xff]
    %v551 = vld [vmem:[#allocation6 + $0x298] sm:$0xff]
    %v552 = vld [vmem:[#allocation6 + $0x2a0] sm:$0xff]
    %v553 = vld [vmem:[#allocation6 + $0x2a8] sm:$0xff]
    %v554 = vld [vmem:[#allocation6 + $0x2b0] sm:$0xff]
    %v555 = vld [vmem:[#allocation6 + $0x2b8] sm:$0xff]
    %v556 = vld [vmem:[#allocation6 + $0x2c0] sm:$0xff]
    %v557 = vld [vmem:[#allocation6 + $0x2c8] sm:$0xff]
    %v558 = vld [vmem:[#allocation6 + $0x2d0] sm:$0xff]
    %v559 = vld [vmem:[#allocation6 + $0x2d8] sm:$0xff]
    %v560 = vld [vmem:[#allocation6 + $0x2e0] sm:$0xff]
    %v561 = vld [vmem:[#allocation6 + $0x2e8] sm:$0xff]
    %v562 = vld [vmem:[#allocation6 + $0x2f0] sm:$0xff]
    %v563 = vld [vmem:[#allocation6 + $0x2f8] sm:$0xff]
    %v564 = vld [vmem:[#allocation6 + $0x300] sm:$0xff]
    %v565 = vld [vmem:[#allocation6 + $0x308] sm:$0xff]
    %v566 = vld [vmem:[#allocation6 + $0x310] sm:$0xff]
    %v567 = vld [vmem:[#allocation6 + $0x318] sm:$0xff]
    %v568 = vld [vmem:[#allocation6 + $0x320] sm:$0xff]
    %v569 = vld [vmem:[#allocation6 + $0x328] sm:$0xff]
    %v570 = vld [vmem:[#allocation6 + $0x330] sm:$0xff]
    %v571 = vld [vmem:[#allocation6 + $0x338] sm:$0xff]
    %v572 = vld [vmem:[#allocation6 + $0x340] sm:$0xff]
    %v573 = vld [vmem:[#allocation6 + $0x348] sm:$0xff]
    %v574 = vld [vmem:[#allocation6 + $0x350] sm:$0xff]
    %v575 = vld [vmem:[#allocation6 + $0x358] sm:$0xff]
    %v576 = vld [vmem:[#allocation6 + $0x360] sm:$0xff]
    %v577 = vld [vmem:[#allocation6 + $0x368] sm:$0xff]
    %v578 = vld [vmem:[#allocation6 + $0x370] sm:$0xff]
    %v579 = vld [vmem:[#allocation6 + $0x378] sm:$0xff]
    %v580 = vld [vmem:[#allocation6 + $0x380] sm:$0xff]
    %v581 = vld [vmem:[#allocation6 + $0x388] sm:$0xff]
    %v582 = vld [vmem:[#allocation6 + $0x390] sm:$0xff]
    %v583 = vld [vmem:[#allocation6 + $0x398] sm:$0xff]
    %v584 = vld [vmem:[#allocation6 + $0x3a0] sm:$0xff]
    %v585 = vld [vmem:[#allocation6 + $0x3a8] sm:$0xff]
    %v586 = vld [vmem:[#allocation6 + $0x3b0] sm:$0xff]
    %v587 = vld [vmem:[#allocation6 + $0x3b8] sm:$0xff]
    %v588 = vld [vmem:[#allocation6 + $0x3c0] sm:$0xff]
    %v589 = vld [vmem:[#allocation6 + $0x3c8] sm:$0xff]
    %v590 = vld [vmem:[#allocation6 + $0x3d0] sm:$0xff]
    %v591 = vld [vmem:[#allocation6 + $0x3d8] sm:$0xff]
    %v592 = vld [vmem:[#allocation6 + $0x3e0] sm:$0xff]
    %v593 = vld [vmem:[#allocation6 + $0x3e8] sm:$0xff]
    %v594 = vld [vmem:[#allocation6 + $0x3f0] sm:$0xff]
    %v595 = vld [vmem:[#allocation6 + $0x3f8] sm:$0xff]
    %v596 = vld [vmem:[#allocation6 + $0x400] sm:$0xff]
    %v597 = vld [vmem:[#allocation6 + $0x408] sm:$0xff]
    %v598 = vld [vmem:[#allocation6 + $0x410] sm:$0xff]
    %v599 = vld [vmem:[#allocation6 + $0x418] sm:$0xff]
    %v600 = vld [vmem:[#allocation6 + $0x420] sm:$0xff]
    %v601 = vld [vmem:[#allocation6 + $0x428] sm:$0xff]
    %v602 = vld [vmem:[#allocation6 + $0x430] sm:$0xff]
    %v603 = vld [vmem:[#allocation6 + $0x438] sm:$0xff]
    %v604 = vld [vmem:[#allocation6 + $0x440] sm:$0xff]
    %v605 = vld [vmem:[#allocation6 + $0x448] sm:$0xff]
    %v606 = vld [vmem:[#allocation6 + $0x450] sm:$0xff]
    %v607 = vld [vmem:[#allocation6 + $0x458] sm:$0xff]
    %v608 = vld [vmem:[#allocation6 + $0x460] sm:$0xff]
    %v609 = vld [vmem:[#allocation6 + $0x468] sm:$0xff]
    %v610 = vld [vmem:[#allocation6 + $0x470] sm:$0xff]
    %v611 = vld [vmem:[#allocation6 + $0x478] sm:$0xff]
    %v612 = vld [vmem:[#allocation6 + $0x480] sm:$0xff]
    %v613 = vld [vmem:[#allocation6 + $0x488] sm:$0xff]
    %v614 = vld [vmem:[#allocation6 + $0x490] sm:$0xff]
    %v615 = vld [vmem:[#allocation6 + $0x498] sm:$0xff]
    %v616 = vld [vmem:[#allocation6 + $0x4a0] sm:$0xff]
    %v617 = vld [vmem:[#allocation6 + $0x4a8] sm:$0xff]
    %v618 = vld [vmem:[#allocation6 + $0x4b0] sm:$0xff]
    %v619 = vld [vmem:[#allocation6 + $0x4b8] sm:$0xff]
    %v620 = vld [vmem:[#allocation6 + $0x4c0] sm:$0xff]
    %v621 = vld [vmem:[#allocation6 + $0x4c8] sm:$0xff]
    %v622 = vld [vmem:[#allocation6 + $0x4d0] sm:$0xff]
    %v623 = vld [vmem:[#allocation6 + $0x4d8] sm:$0xff]
    %v624 = vld [vmem:[#allocation6 + $0x4e0] sm:$0xff]
    %v625 = vld [vmem:[#allocation6 + $0x4e8] sm:$0xff]
    %v626 = vld [vmem:[#allocation6 + $0x4f0] sm:$0xff]
    %v627 = vld [vmem:[#allocation6 + $0x4f8] sm:$0xff]
    %v628 = vld [vmem:[#allocation6 + $0x500] sm:$0xff]
    %v629 = vld [vmem:[#allocation6 + $0x508] sm:$0xff]
    %v630 = vld [vmem:[#allocation6 + $0x510] sm:$0xff]
    %v631 = vld [vmem:[#allocation6 + $0x518] sm:$0xff]
    %v632 = vld [vmem:[#allocation6 + $0x520] sm:$0xff]
    %v633 = vld [vmem:[#allocation6 + $0x528] sm:$0xff]
    %v634 = vld [vmem:[#allocation6 + $0x530] sm:$0xff]
    %v635 = vld [vmem:[#allocation6 + $0x538] sm:$0xff]
    %v636 = vld [vmem:[#allocation6 + $0x540] sm:$0xff]
    %v637 = vld [vmem:[#allocation6 + $0x548] sm:$0xff]
    %v638 = vld [vmem:[#allocation6 + $0x550] sm:$0xff]
    %v639 = vld [vmem:[#allocation6 + $0x558] sm:$0xff]
    %v640 = vld [vmem:[#allocation6 + $0x560] sm:$0xff]
    %v641 = vld [vmem:[#allocation6 + $0x568] sm:$0xff]
    %v642 = vld [vmem:[#allocation6 + $0x570] sm:$0xff]
    %v643 = vld [vmem:[#allocation6 + $0x578] sm:$0xff]
    %v644 = vld [vmem:[#allocation6 + $0x580] sm:$0xff]
    %v645 = vld [vmem:[#allocation6 + $0x588] sm:$0xff]
    %v646 = vld [vmem:[#allocation6 + $0x590] sm:$0xff]
    %v647 = vld [vmem:[#allocation6 + $0x598] sm:$0xff]
    %v648 = vld [vmem:[#allocation6 + $0x5a0] sm:$0xff]
    %v649 = vld [vmem:[#allocation6 + $0x5a8] sm:$0xff]
    %v650 = vld [vmem:[#allocation6 + $0x5b0] sm:$0xff]
    %v651 = vld [vmem:[#allocation6 + $0x5b8] sm:$0xff]
    %v652 = vld [vmem:[#allocation6 + $0x5c0] sm:$0xff]
    %v653 = vld [vmem:[#allocation6 + $0x5c8] sm:$0xff]
    %v654 = vld [vmem:[#allocation6 + $0x5d0] sm:$0xff]
    %v655 = vld [vmem:[#allocation6 + $0x5d8] sm:$0xff]
    %v656 = vld [vmem:[#allocation6 + $0x5e0] sm:$0xff]
    %v657 = vld [vmem:[#allocation6 + $0x5e8] sm:$0xff]
    %v658 = vld [vmem:[#allocation6 + $0x5f0] sm:$0xff]
    %v659 = vld [vmem:[#allocation6 + $0x5f8] sm:$0xff]
    %v660 = vld [vmem:[#allocation6 + $0x600] sm:$0xff]
    %v661 = vld [vmem:[#allocation6 + $0x608] sm:$0xff]
    %v662 = vld [vmem:[#allocation6 + $0x610] sm:$0xff]
    %v663 = vld [vmem:[#allocation6 + $0x618] sm:$0xff]
    %v664 = vld [vmem:[#allocation6 + $0x620] sm:$0xff]
    %v665 = vld [vmem:[#allocation6 + $0x628] sm:$0xff]
    %v666 = vld [vmem:[#allocation6 + $0x630] sm:$0xff]
    %v667 = vld [vmem:[#allocation6 + $0x638] sm:$0xff]
    %v668 = vld [vmem:[#allocation6 + $0x640] sm:$0xff]
    %v669 = vld [vmem:[#allocation6 + $0x648] sm:$0xff]
    %v670 = vld [vmem:[#allocation6 + $0x650] sm:$0xff]
    %v671 = vld [vmem:[#allocation6 + $0x658] sm:$0xff]
    %v672 = vld [vmem:[#allocation6 + $0x660] sm:$0xff]
    %v673 = vld [vmem:[#allocation6 + $0x668] sm:$0xff]
    %v674 = vld [vmem:[#allocation6 + $0x670] sm:$0xff]
    %v675 = vld [vmem:[#allocation6 + $0x678] sm:$0xff]
    %v676 = vld [vmem:[#allocation6 + $0x680] sm:$0xff]
    %v677 = vld [vmem:[#allocation6 + $0x688] sm:$0xff]
    %v678 = vld [vmem:[#allocation6 + $0x690] sm:$0xff]
    %v679 = vld [vmem:[#allocation6 + $0x698] sm:$0xff]
    %v680 = vld [vmem:[#allocation6 + $0x6a0] sm:$0xff]
    %v681 = vld [vmem:[#allocation6 + $0x6a8] sm:$0xff]
    %v682 = vld [vmem:[#allocation6 + $0x6b0] sm:$0xff]
    %v683 = vld [vmem:[#allocation6 + $0x6b8] sm:$0xff]
    %v684 = vld [vmem:[#allocation6 + $0x6c0] sm:$0xff]
    %v685 = vld [vmem:[#allocation6 + $0x6c8] sm:$0xff]
    %v686 = vld [vmem:[#allocation6 + $0x6d0] sm:$0xff]
    %v687 = vld [vmem:[#allocation6 + $0x6d8] sm:$0xff]
    %v688 = vld [vmem:[#allocation6 + $0x6e0] sm:$0xff]
    %v689 = vld [vmem:[#allocation6 + $0x6e8] sm:$0xff]
    %v690 = vld [vmem:[#allocation6 + $0x6f0] sm:$0xff]
    %v691 = vld [vmem:[#allocation6 + $0x6f8] sm:$0xff]
    %v692 = vld [vmem:[#allocation6 + $0x700] sm:$0xff]
    %v693 = vld [vmem:[#allocation6 + $0x708] sm:$0xff]
    %v694 = vld [vmem:[#allocation6 + $0x710] sm:$0xff]
    %v695 = vld [vmem:[#allocation6 + $0x718] sm:$0xff]
    %v696 = vld [vmem:[#allocation6 + $0x720] sm:$0xff]
    %v697 = vld [vmem:[#allocation6 + $0x728] sm:$0xff]
    %v698 = vld [vmem:[#allocation6 + $0x730] sm:$0xff]
    %v699 = vld [vmem:[#allocation6 + $0x738] sm:$0xff]
    %v700 = vld [vmem:[#allocation6 + $0x740] sm:$0xff]
    %v701 = vld [vmem:[#allocation6 + $0x748] sm:$0xff]
    %v702 = vld [vmem:[#allocation6 + $0x750] sm:$0xff]
    %v703 = vld [vmem:[#allocation6 + $0x758] sm:$0xff]
    %v704 = vld [vmem:[#allocation6 + $0x760] sm:$0xff]
    %v705 = vld [vmem:[#allocation6 + $0x768] sm:$0xff]
    %v706 = vld [vmem:[#allocation6 + $0x770] sm:$0xff]
    %v707 = vld [vmem:[#allocation6 + $0x778] sm:$0xff]
    %v708 = vld [vmem:[#allocation6 + $0x780] sm:$0xff]
    %v709 = vld [vmem:[#allocation6 + $0x788] sm:$0xff]
    %v710 = vld [vmem:[#allocation6 + $0x790] sm:$0xff]
    %v711 = vld [vmem:[#allocation6 + $0x798] sm:$0xff]
    %v712 = vld [vmem:[#allocation6 + $0x7a0] sm:$0xff]
    %v713 = vld [vmem:[#allocation6 + $0x7a8] sm:$0xff]
    %v714 = vld [vmem:[#allocation6 + $0x7b0] sm:$0xff]
    %v715 = vld [vmem:[#allocation6 + $0x7b8] sm:$0xff]
    %v716 = vld [vmem:[#allocation6 + $0x7c0] sm:$0xff]
    %v717 = vld [vmem:[#allocation6 + $0x7c8] sm:$0xff]
    %v718 = vld [vmem:[#allocation6 + $0x7d0] sm:$0xff]
    %v719 = vld [vmem:[#allocation6 + $0x7d8] sm:$0xff]
    %v720 = vld [vmem:[#allocation6 + $0x7e0] sm:$0xff]
    %v721 = vld [vmem:[#allocation6 + $0x7e8] sm:$0xff]
    %v722 = vld [vmem:[#allocation6 + $0x7f0] sm:$0xff]
    %v723 = vld [vmem:[#allocation6 + $0x7f8] sm:$0xff]
    %v724 = vld [vmem:[#allocation6 + $0x800] sm:$0xff]
    %v725 = vld [vmem:[#allocation6 + $0x808] sm:$0xff]
    %v726 = vld [vmem:[#allocation6 + $0x810] sm:$0xff]
    %v727 = vld [vmem:[#allocation6 + $0x818] sm:$0xff]
    %v728 = vld [vmem:[#allocation6 + $0x820] sm:$0xff]
    %v729 = vld [vmem:[#allocation6 + $0x828] sm:$0xff]
    %v730 = vld [vmem:[#allocation6 + $0x830] sm:$0xff]
    %v731 = vld [vmem:[#allocation6 + $0x838] sm:$0xff]
    %v732 = vld [vmem:[#allocation6 + $0x840] sm:$0xff]
    %v733 = vld [vmem:[#allocation6 + $0x848] sm:$0xff]
    %v734 = vld [vmem:[#allocation6 + $0x850] sm:$0xff]
    %v735 = vld [vmem:[#allocation6 + $0x858] sm:$0xff]
    %v736 = vld [vmem:[#allocation6 + $0x860] sm:$0xff]
    %v737 = vld [vmem:[#allocation6 + $0x868] sm:$0xff]
    %v738 = vld [vmem:[#allocation6 + $0x870] sm:$0xff]
    %v739 = vld [vmem:[#allocation6 + $0x878] sm:$0xff]
    %v740 = vld [vmem:[#allocation6 + $0x880] sm:$0xff]
    %v741 = vld [vmem:[#allocation6 + $0x888] sm:$0xff]
    %v742 = vld [vmem:[#allocation6 + $0x890] sm:$0xff]
    %v743 = vld [vmem:[#allocation6 + $0x898] sm:$0xff]
    %v744 = vld [vmem:[#allocation6 + $0x8a0] sm:$0xff]
    %v745 = vld [vmem:[#allocation6 + $0x8a8] sm:$0xff]
    %v746 = vld [vmem:[#allocation6 + $0x8b0] sm:$0xff]
    %v747 = vld [vmem:[#allocation6 + $0x8b8] sm:$0xff]
    %v748 = vld [vmem:[#allocation6 + $0x8c0] sm:$0xff]
    %v749 = vld [vmem:[#allocation6 + $0x8c8] sm:$0xff]
    %v750 = vld [vmem:[#allocation6 + $0x8d0] sm:$0xff]
    %v751 = vld [vmem:[#allocation6 + $0x8d8] sm:$0xff]
    %v752 = vld [vmem:[#allocation6 + $0x8e0] sm:$0xff]
    %v753 = vld [vmem:[#allocation6 + $0x8e8] sm:$0xff]
    %v754 = vld [vmem:[#allocation6 + $0x8f0] sm:$0xff]
    %v755 = vld [vmem:[#allocation6 + $0x8f8] sm:$0xff]
    %v756 = vld [vmem:[#allocation6 + $0x900] sm:$0xff]
    %v757 = vld [vmem:[#allocation6 + $0x908] sm:$0xff]
    %v758 = vld [vmem:[#allocation6 + $0x910] sm:$0xff]
    %v759 = vld [vmem:[#allocation6 + $0x918] sm:$0xff]
    %v760 = vld [vmem:[#allocation6 + $0x920] sm:$0xff]
    %v761 = vld [vmem:[#allocation6 + $0x928] sm:$0xff]
    %v762 = vld [vmem:[#allocation6 + $0x930] sm:$0xff]
    %v763 = vld [vmem:[#allocation6 + $0x938] sm:$0xff]
    %v764 = vld [vmem:[#allocation6 + $0x940] sm:$0xff]
    %v765 = vld [vmem:[#allocation6 + $0x948] sm:$0xff]
    %v766 = vld [vmem:[#allocation6 + $0x950] sm:$0xff]
    %v767 = vld [vmem:[#allocation6 + $0x958] sm:$0xff]
    %v768 = vld [vmem:[#allocation6 + $0x960] sm:$0xff]
    %v769 = vld [vmem:[#allocation6 + $0x968] sm:$0xff]
    %v770 = vld [vmem:[#allocation6 + $0x970] sm:$0xff]
    %v771 = vld [vmem:[#allocation6 + $0x978] sm:$0xff]
    %v772 = vld [vmem:[#allocation6 + $0x980] sm:$0xff]
    %v773 = vld [vmem:[#allocation6 + $0x988] sm:$0xff]
    %v774 = vld [vmem:[#allocation6 + $0x990] sm:$0xff]
    %v775 = vld [vmem:[#allocation6 + $0x998] sm:$0xff]
    %v776 = vld [vmem:[#allocation6 + $0x9a0] sm:$0xff]
    %v777 = vld [vmem:[#allocation6 + $0x9a8] sm:$0xff]
    %v778 = vld [vmem:[#allocation6 + $0x9b0] sm:$0xff]
    %v779 = vld [vmem:[#allocation6 + $0x9b8] sm:$0xff]
    %v780 = vld [vmem:[#allocation6 + $0x9c0] sm:$0xff]
    %v781 = vld [vmem:[#allocation6 + $0x9c8] sm:$0xff]
    %v782 = vld [vmem:[#allocation6 + $0x9d0] sm:$0xff]
    %v783 = vld [vmem:[#allocation6 + $0x9d8] sm:$0xff]
    %v784 = vld [vmem:[#allocation6 + $0x9e0] sm:$0xff]
    %v785 = vld [vmem:[#allocation6 + $0x9e8] sm:$0xff]
    %v786 = vld [vmem:[#allocation6 + $0x9f0] sm:$0xff]
    %v787 = vld [vmem:[#allocation6 + $0x9f8] sm:$0xff]
    %v788 = vld [vmem:[#allocation6 + $0xa00] sm:$0xff]
    %v789 = vld [vmem:[#allocation6 + $0xa08] sm:$0xff]
    %v790 = vld [vmem:[#allocation6 + $0xa10] sm:$0xff]
    %v791 = vld [vmem:[#allocation6 + $0xa18] sm:$0xff]
    %v792 = vld [vmem:[#allocation6 + $0xa20] sm:$0xff]
    %v793 = vld [vmem:[#allocation6 + $0xa28] sm:$0xff]
    %v794 = vld [vmem:[#allocation6 + $0xa30] sm:$0xff]
    %v795 = vld [vmem:[#allocation6 + $0xa38] sm:$0xff]
    %v796 = vld [vmem:[#allocation6 + $0xa40] sm:$0xff]
    %v797 = vld [vmem:[#allocation6 + $0xa48] sm:$0xff]
    %v798 = vld [vmem:[#allocation6 + $0xa50] sm:$0xff]
    %v799 = vld [vmem:[#allocation6 + $0xa58] sm:$0xff]
    %v800 = vld [vmem:[#allocation6 + $0xa60] sm:$0xff]
    %v801 = vld [vmem:[#allocation6 + $0xa68] sm:$0xff]
    %v802 = vld [vmem:[#allocation6 + $0xa70] sm:$0xff]
    %v803 = vld [vmem:[#allocation6 + $0xa78] sm:$0xff]
    %v804 = vld [vmem:[#allocation6 + $0xa80] sm:$0xff]
    %v805 = vld [vmem:[#allocation6 + $0xa88] sm:$0xff]
    %v806 = vld [vmem:[#allocation6 + $0xa90] sm:$0xff]
    %v807 = vld [vmem:[#allocation6 + $0xa98] sm:$0xff]
    %v808 = vld [vmem:[#allocation6 + $0xaa0] sm:$0xff]
    %v809 = vld [vmem:[#allocation6 + $0xaa8] sm:$0xff]
    %v810 = vld [vmem:[#allocation6 + $0xab0] sm:$0xff]
    %v811 = vld [vmem:[#allocation6 + $0xab8] sm:$0xff]
    %v812 = vld [vmem:[#allocation6 + $0xac0] sm:$0xff]
    %v813 = vld [vmem:[#allocation6 + $0xac8] sm:$0xff]
    %v814 = vld [vmem:[#allocation6 + $0xad0] sm:$0xff]
    %v815 = vld [vmem:[#allocation6 + $0xad8] sm:$0xff]
    %v816 = vld [vmem:[#allocation6 + $0xae0] sm:$0xff]
    %v817 = vld [vmem:[#allocation6 + $0xae8] sm:$0xff]
    %v818 = vld [vmem:[#allocation6 + $0xaf0] sm:$0xff]
    %v819 = vld [vmem:[#allocation6 + $0xaf8] sm:$0xff]
    %v820 = vld [vmem:[#allocation6 + $0xb00] sm:$0xff]
    %v821 = vld [vmem:[#allocation6 + $0xb08] sm:$0xff]
    %v822 = vld [vmem:[#allocation6 + $0xb10] sm:$0xff]
    %v823 = vld [vmem:[#allocation6 + $0xb18] sm:$0xff]
    %v824 = vld [vmem:[#allocation6 + $0xb20] sm:$0xff]
    %v825 = vld [vmem:[#allocation6 + $0xb28] sm:$0xff]
    %v826 = vld [vmem:[#allocation6 + $0xb30] sm:$0xff]
    %v827 = vld [vmem:[#allocation6 + $0xb38] sm:$0xff]
    %v828 = vld [vmem:[#allocation6 + $0xb40] sm:$0xff]
    %v829 = vld [vmem:[#allocation6 + $0xb48] sm:$0xff]
    %v830 = vld [vmem:[#allocation6 + $0xb50] sm:$0xff]
    %v831 = vld [vmem:[#allocation6 + $0xb58] sm:$0xff]
    %v832 = vld [vmem:[#allocation6 + $0xb60] sm:$0xff]
    %v833 = vld [vmem:[#allocation6 + $0xb68] sm:$0xff]
    %v834 = vld [vmem:[#allocation6 + $0xb70] sm:$0xff]
    %v835 = vld [vmem:[#allocation6 + $0xb78] sm:$0xff]
    %v836 = vld [vmem:[#allocation6 + $0xb80] sm:$0xff]
    %v837 = vld [vmem:[#allocation6 + $0xb88] sm:$0xff]
    %v838 = vld [vmem:[#allocation6 + $0xb90] sm:$0xff]
    %v839 = vld [vmem:[#allocation6 + $0xb98] sm:$0xff]
    %v840 = vld [vmem:[#allocation6 + $0xba0] sm:$0xff]
    %v841 = vld [vmem:[#allocation6 + $0xba8] sm:$0xff]
    %v842 = vld [vmem:[#allocation6 + $0xbb0] sm:$0xff]
    %v843 = vld [vmem:[#allocation6 + $0xbb8] sm:$0xff]
    %v844 = vld [vmem:[#allocation6 + $0xbc0] sm:$0xff]
    %v845 = vld [vmem:[#allocation6 + $0xbc8] sm:$0xff]
    %v846 = vld [vmem:[#allocation6 + $0xbd0] sm:$0xff]
    %v847 = vld [vmem:[#allocation6 + $0xbd8] sm:$0xff]
    %v848 = vld [vmem:[#allocation6 + $0xbe0] sm:$0xff]
    %v849 = vld [vmem:[#allocation6 + $0xbe8] sm:$0xff]
    %v850 = vld [vmem:[#allocation6 + $0xbf0] sm:$0xff]
    %v851 = vld [vmem:[#allocation6 + $0xbf8] sm:$0xff]
    %v852 = vld [vmem:[#allocation7] sm:$0x3f]
    %v854 = vperm.slane %v852, 0
    %v855 = vperm.slane %v852, 1
    %v856 = vperm.slane %v852, 2
    %v857 = vperm.slane %v852, 3
    %v858 = vperm.slane %v852, 4
    %v859 = vperm.slane %v852, 5
    %v1250 = vunpack.c.l.b16 %v468
    %v1251 = vunpack.c.h.b16 %v468
    %v1252 = vunpack.c.l.b16 %v469
    %v1253 = vunpack.c.h.b16 %v469
    %v1254 = vunpack.c.l.b16 %v470
    %v1255 = vunpack.c.h.b16 %v470
    %v1256 = vunpack.c.l.b16 %v471
    %v1257 = vunpack.c.h.b16 %v471
    %v1258 = vunpack.c.l.b16 %v472
    %v1259 = vunpack.c.h.b16 %v472
    %v1260 = vunpack.c.l.b16 %v473
    %v1261 = vunpack.c.h.b16 %v473
    %v1262 = vunpack.c.l.b16 %v474
    %v1263 = vunpack.c.h.b16 %v474
    %v1264 = vunpack.c.l.b16 %v475
    %v1265 = vunpack.c.h.b16 %v475
    %v1266 = vunpack.c.l.b16 %v476
    %v1267 = vunpack.c.h.b16 %v476
    %v1268 = vunpack.c.l.b16 %v477
    %v1269 = vunpack.c.h.b16 %v477
    %v1270 = vunpack.c.l.b16 %v478
    %v1271 = vunpack.c.h.b16 %v478
    %v1272 = vunpack.c.l.b16 %v479
    %v1273 = vunpack.c.h.b16 %v479
    %v1274 = vunpack.c.l.b16 %v480
    %v1275 = vunpack.c.h.b16 %v480
    %v1276 = vunpack.c.l.b16 %v481
    %v1277 = vunpack.c.h.b16 %v481
    %v1278 = vunpack.c.l.b16 %v482
    %v1279 = vunpack.c.h.b16 %v482
    %v1280 = vunpack.c.l.b16 %v483
    %v1281 = vunpack.c.h.b16 %v483
    %v1282 = vunpack.c.l.b16 %v484
    %v1283 = vunpack.c.h.b16 %v484
    %v1284 = vunpack.c.l.b16 %v485
    %v1285 = vunpack.c.h.b16 %v485
    %v1286 = vunpack.c.l.b16 %v486
    %v1287 = vunpack.c.h.b16 %v486
    %v1288 = vunpack.c.l.b16 %v487
    %v1289 = vunpack.c.h.b16 %v487
    %v1290 = vunpack.c.l.b16 %v488
    %v1291 = vunpack.c.h.b16 %v488
    %v1292 = vunpack.c.l.b16 %v489
    %v1293 = vunpack.c.h.b16 %v489
    %v1294 = vunpack.c.l.b16 %v490
    %v1295 = vunpack.c.h.b16 %v490
    %v1296 = vunpack.c.l.b16 %v491
    %v1297 = vunpack.c.h.b16 %v491
    %v1298 = vunpack.c.l.b16 %v492
    %v1299 = vunpack.c.h.b16 %v492
    %v1300 = vunpack.c.l.b16 %v493
    %v1301 = vunpack.c.h.b16 %v493
    %v1302 = vunpack.c.l.b16 %v494
    %v1303 = vunpack.c.h.b16 %v494
    %v1304 = vunpack.c.l.b16 %v495
    %v1305 = vunpack.c.h.b16 %v495
    %v1306 = vunpack.c.l.b16 %v496
    %v1307 = vunpack.c.h.b16 %v496
    %v1308 = vunpack.c.l.b16 %v497
    %v1309 = vunpack.c.h.b16 %v497
    %v1310 = vunpack.c.l.b16 %v498
    %v1311 = vunpack.c.h.b16 %v498
    %v1312 = vunpack.c.l.b16 %v499
    %v1313 = vunpack.c.h.b16 %v499
    %v1314 = vunpack.c.l.b16 %v500
    %v1315 = vunpack.c.h.b16 %v500
    %v1316 = vunpack.c.l.b16 %v501
    %v1317 = vunpack.c.h.b16 %v501
    %v1318 = vunpack.c.l.b16 %v502
    %v1319 = vunpack.c.h.b16 %v502
    %v1320 = vunpack.c.l.b16 %v503
    %v1321 = vunpack.c.h.b16 %v503
    %v1322 = vunpack.c.l.b16 %v504
    %v1323 = vunpack.c.h.b16 %v504
    %v1324 = vunpack.c.l.b16 %v505
    %v1325 = vunpack.c.h.b16 %v505
    %v1326 = vunpack.c.l.b16 %v506
    %v1327 = vunpack.c.h.b16 %v506
    %v1328 = vunpack.c.l.b16 %v507
    %v1329 = vunpack.c.h.b16 %v507
    %v1330 = vunpack.c.l.b16 %v508
    %v1331 = vunpack.c.h.b16 %v508
    %v1332 = vunpack.c.l.b16 %v509
    %v1333 = vunpack.c.h.b16 %v509
    %v1334 = vunpack.c.l.b16 %v510
    %v1335 = vunpack.c.h.b16 %v510
    %v1336 = vunpack.c.l.b16 %v511
    %v1337 = vunpack.c.h.b16 %v511
    %v1338 = vunpack.c.l.b16 %v512
    %v1339 = vunpack.c.h.b16 %v512
    %v1340 = vunpack.c.l.b16 %v513
    %v1341 = vunpack.c.h.b16 %v513
    %v1342 = vunpack.c.l.b16 %v514
    %v1343 = vunpack.c.h.b16 %v514
    %v1344 = vunpack.c.l.b16 %v515
    %v1345 = vunpack.c.h.b16 %v515
    %v1346 = vunpack.c.l.b16 %v516
    %v1347 = vunpack.c.h.b16 %v516
    %v1348 = vunpack.c.l.b16 %v517
    %v1349 = vunpack.c.h.b16 %v517
    %v1350 = vunpack.c.l.b16 %v518
    %v1351 = vunpack.c.h.b16 %v518
    %v1352 = vunpack.c.l.b16 %v519
    %v1353 = vunpack.c.h.b16 %v519
    %v1354 = vunpack.c.l.b16 %v520
    %v1355 = vunpack.c.h.b16 %v520
    %v1356 = vunpack.c.l.b16 %v521
    %v1357 = vunpack.c.h.b16 %v521
    %v1358 = vunpack.c.l.b16 %v522
    %v1359 = vunpack.c.h.b16 %v522
    %v1360 = vunpack.c.l.b16 %v523
    %v1361 = vunpack.c.h.b16 %v523
    %v1362 = vunpack.c.l.b16 %v524
    %v1363 = vunpack.c.h.b16 %v524
    %v1364 = vunpack.c.l.b16 %v525
    %v1365 = vunpack.c.h.b16 %v525
    %v1366 = vunpack.c.l.b16 %v526
    %v1367 = vunpack.c.h.b16 %v526
    %v1368 = vunpack.c.l.b16 %v527
    %v1369 = vunpack.c.h.b16 %v527
    %v1370 = vunpack.c.l.b16 %v528
    %v1371 = vunpack.c.h.b16 %v528
    %v1372 = vunpack.c.l.b16 %v529
    %v1373 = vunpack.c.h.b16 %v529
    %v1374 = vunpack.c.l.b16 %v530
    %v1375 = vunpack.c.h.b16 %v530
    %v1376 = vunpack.c.l.b16 %v531
    %v1377 = vunpack.c.h.b16 %v531
    %v1378 = vunpack.c.l.b16 %v532
    %v1379 = vunpack.c.h.b16 %v532
    %v1380 = vunpack.c.l.b16 %v533
    %v1381 = vunpack.c.h.b16 %v533
    %v1382 = vunpack.c.l.b16 %v534
    %v1383 = vunpack.c.h.b16 %v534
    %v1384 = vunpack.c.l.b16 %v535
    %v1385 = vunpack.c.h.b16 %v535
    %v1386 = vunpack.c.l.b16 %v536
    %v1387 = vunpack.c.h.b16 %v536
    %v1388 = vunpack.c.l.b16 %v537
    %v1389 = vunpack.c.h.b16 %v537
    %v1390 = vunpack.c.l.b16 %v538
    %v1391 = vunpack.c.h.b16 %v538
    %v1392 = vunpack.c.l.b16 %v539
    %v1393 = vunpack.c.h.b16 %v539
    %v1394 = vunpack.c.l.b16 %v540
    %v1395 = vunpack.c.h.b16 %v540
    %v1396 = vunpack.c.l.b16 %v541
    %v1397 = vunpack.c.h.b16 %v541
    %v1398 = vunpack.c.l.b16 %v542
    %v1399 = vunpack.c.h.b16 %v542
    %v1400 = vunpack.c.l.b16 %v543
    %v1401 = vunpack.c.h.b16 %v543
    %v1402 = vunpack.c.l.b16 %v544
    %v1403 = vunpack.c.h.b16 %v544
    %v1404 = vunpack.c.l.b16 %v545
    %v1405 = vunpack.c.h.b16 %v545
    %v1406 = vunpack.c.l.b16 %v546
    %v1407 = vunpack.c.h.b16 %v546
    %v1408 = vunpack.c.l.b16 %v547
    %v1409 = vunpack.c.h.b16 %v547
    %v1410 = vunpack.c.l.b16 %v548
    %v1411 = vunpack.c.h.b16 %v548
    %v1412 = vunpack.c.l.b16 %v549
    %v1413 = vunpack.c.h.b16 %v549
    %v1414 = vunpack.c.l.b16 %v550
    %v1415 = vunpack.c.h.b16 %v550
    %v1416 = vunpack.c.l.b16 %v551
    %v1417 = vunpack.c.h.b16 %v551
    %v1418 = vunpack.c.l.b16 %v552
    %v1419 = vunpack.c.h.b16 %v552
    %v1420 = vunpack.c.l.b16 %v553
    %v1421 = vunpack.c.h.b16 %v553
    %v1422 = vunpack.c.l.b16 %v554
    %v1423 = vunpack.c.h.b16 %v554
    %v1424 = vunpack.c.l.b16 %v555
    %v1425 = vunpack.c.h.b16 %v555
    %v1426 = vunpack.c.l.b16 %v556
    %v1427 = vunpack.c.h.b16 %v556
    %v1428 = vunpack.c.l.b16 %v557
    %v1429 = vunpack.c.h.b16 %v557
    %v1430 = vunpack.c.l.b16 %v558
    %v1431 = vunpack.c.h.b16 %v558
    %v1432 = vunpack.c.l.b16 %v559
    %v1433 = vunpack.c.h.b16 %v559
    %v1434 = vunpack.c.l.b16 %v560
    %v1435 = vunpack.c.h.b16 %v560
    %v1436 = vunpack.c.l.b16 %v561
    %v1437 = vunpack.c.h.b16 %v561
    %v1438 = vunpack.c.l.b16 %v562
    %v1439 = vunpack.c.h.b16 %v562
    %v1440 = vunpack.c.l.b16 %v563
    %v1441 = vunpack.c.h.b16 %v563
    %v1442 = vunpack.c.l.b16 %v564
    %v1443 = vunpack.c.h.b16 %v564
    %v1444 = vunpack.c.l.b16 %v565
    %v1445 = vunpack.c.h.b16 %v565
    %v1446 = vunpack.c.l.b16 %v566
    %v1447 = vunpack.c.h.b16 %v566
    %v1448 = vunpack.c.l.b16 %v567
    %v1449 = vunpack.c.h.b16 %v567
    %v1450 = vunpack.c.l.b16 %v568
    %v1451 = vunpack.c.h.b16 %v568
    %v1452 = vunpack.c.l.b16 %v569
    %v1453 = vunpack.c.h.b16 %v569
    %v1454 = vunpack.c.l.b16 %v570
    %v1455 = vunpack.c.h.b16 %v570
    %v1456 = vunpack.c.l.b16 %v571
    %v1457 = vunpack.c.h.b16 %v571
    %v1458 = vunpack.c.l.b16 %v572
    %v1459 = vunpack.c.h.b16 %v572
    %v1460 = vunpack.c.l.b16 %v573
    %v1461 = vunpack.c.h.b16 %v573
    %v1462 = vunpack.c.l.b16 %v574
    %v1463 = vunpack.c.h.b16 %v574
    %v1464 = vunpack.c.l.b16 %v575
    %v1465 = vunpack.c.h.b16 %v575
    %v1466 = vunpack.c.l.b16 %v576
    %v1467 = vunpack.c.h.b16 %v576
    %v1468 = vunpack.c.l.b16 %v577
    %v1469 = vunpack.c.h.b16 %v577
    %v1470 = vunpack.c.l.b16 %v578
    %v1471 = vunpack.c.h.b16 %v578
    %v1472 = vunpack.c.l.b16 %v579
    %v1473 = vunpack.c.h.b16 %v579
    %v1474 = vunpack.c.l.b16 %v580
    %v1475 = vunpack.c.h.b16 %v580
    %v1476 = vunpack.c.l.b16 %v581
    %v1477 = vunpack.c.h.b16 %v581
    %v1478 = vunpack.c.l.b16 %v582
    %v1479 = vunpack.c.h.b16 %v582
    %v1480 = vunpack.c.l.b16 %v583
    %v1481 = vunpack.c.h.b16 %v583
    %v1482 = vunpack.c.l.b16 %v584
    %v1483 = vunpack.c.h.b16 %v584
    %v1484 = vunpack.c.l.b16 %v585
    %v1485 = vunpack.c.h.b16 %v585
    %v1486 = vunpack.c.l.b16 %v586
    %v1487 = vunpack.c.h.b16 %v586
    %v1488 = vunpack.c.l.b16 %v587
    %v1489 = vunpack.c.h.b16 %v587
    %v1490 = vunpack.c.l.b16 %v588
    %v1491 = vunpack.c.h.b16 %v588
    %v1492 = vunpack.c.l.b16 %v589
    %v1493 = vunpack.c.h.b16 %v589
    %v1494 = vunpack.c.l.b16 %v590
    %v1495 = vunpack.c.h.b16 %v590
    %v1496 = vunpack.c.l.b16 %v591
    %v1497 = vunpack.c.h.b16 %v591
    %v1498 = vunpack.c.l.b16 %v592
    %v1499 = vunpack.c.h.b16 %v592
    %v1500 = vunpack.c.l.b16 %v593
    %v1501 = vunpack.c.h.b16 %v593
    %v1502 = vunpack.c.l.b16 %v594
    %v1503 = vunpack.c.h.b16 %v594
    %v1504 = vunpack.c.l.b16 %v595
    %v1505 = vunpack.c.h.b16 %v595
    %v1506 = vunpack.c.l.b16 %v596
    %v1507 = vunpack.c.h.b16 %v596
    %v1508 = vunpack.c.l.b16 %v597
    %v1509 = vunpack.c.h.b16 %v597
    %v1510 = vunpack.c.l.b16 %v598
    %v1511 = vunpack.c.h.b16 %v598
    %v1512 = vunpack.c.l.b16 %v599
    %v1513 = vunpack.c.h.b16 %v599
    %v1514 = vunpack.c.l.b16 %v600
    %v1515 = vunpack.c.h.b16 %v600
    %v1516 = vunpack.c.l.b16 %v601
    %v1517 = vunpack.c.h.b16 %v601
    %v1518 = vunpack.c.l.b16 %v602
    %v1519 = vunpack.c.h.b16 %v602
    %v1520 = vunpack.c.l.b16 %v603
    %v1521 = vunpack.c.h.b16 %v603
    %v1522 = vunpack.c.l.b16 %v604
    %v1523 = vunpack.c.h.b16 %v604
    %v1524 = vunpack.c.l.b16 %v605
    %v1525 = vunpack.c.h.b16 %v605
    %v1526 = vunpack.c.l.b16 %v606
    %v1527 = vunpack.c.h.b16 %v606
    %v1528 = vunpack.c.l.b16 %v607
    %v1529 = vunpack.c.h.b16 %v607
    %v1530 = vunpack.c.l.b16 %v608
    %v1531 = vunpack.c.h.b16 %v608
    %v1532 = vunpack.c.l.b16 %v609
    %v1533 = vunpack.c.h.b16 %v609
    %v1534 = vunpack.c.l.b16 %v610
    %v1535 = vunpack.c.h.b16 %v610
    %v1536 = vunpack.c.l.b16 %v611
    %v1537 = vunpack.c.h.b16 %v611
    %v1538 = vunpack.c.l.b16 %v612
    %v1539 = vunpack.c.h.b16 %v612
    %v1540 = vunpack.c.l.b16 %v613
    %v1541 = vunpack.c.h.b16 %v613
    %v1542 = vunpack.c.l.b16 %v614
    %v1543 = vunpack.c.h.b16 %v614
    %v1544 = vunpack.c.l.b16 %v615
    %v1545 = vunpack.c.h.b16 %v615
    %v1546 = vunpack.c.l.b16 %v616
    %v1547 = vunpack.c.h.b16 %v616
    %v1548 = vunpack.c.l.b16 %v617
    %v1549 = vunpack.c.h.b16 %v617
    %v1550 = vunpack.c.l.b16 %v618
    %v1551 = vunpack.c.h.b16 %v618
    %v1552 = vunpack.c.l.b16 %v619
    %v1553 = vunpack.c.h.b16 %v619
    %v1554 = vunpack.c.l.b16 %v620
    %v1555 = vunpack.c.h.b16 %v620
    %v1556 = vunpack.c.l.b16 %v621
    %v1557 = vunpack.c.h.b16 %v621
    %v1558 = vunpack.c.l.b16 %v622
    %v1559 = vunpack.c.h.b16 %v622
    %v1560 = vunpack.c.l.b16 %v623
    %v1561 = vunpack.c.h.b16 %v623
    %v1562 = vunpack.c.l.b16 %v624
    %v1563 = vunpack.c.h.b16 %v624
    %v1564 = vunpack.c.l.b16 %v625
    %v1565 = vunpack.c.h.b16 %v625
    %v1566 = vunpack.c.l.b16 %v626
    %v1567 = vunpack.c.h.b16 %v626
    %v1568 = vunpack.c.l.b16 %v627
    %v1569 = vunpack.c.h.b16 %v627
    %v1570 = vunpack.c.l.b16 %v628
    %v1571 = vunpack.c.h.b16 %v628
    %v1572 = vunpack.c.l.b16 %v629
    %v1573 = vunpack.c.h.b16 %v629
    %v1574 = vunpack.c.l.b16 %v630
    %v1575 = vunpack.c.h.b16 %v630
    %v1576 = vunpack.c.l.b16 %v631
    %v1577 = vunpack.c.h.b16 %v631
    %v1578 = vunpack.c.l.b16 %v632
    %v1579 = vunpack.c.h.b16 %v632
    %v1580 = vunpack.c.l.b16 %v633
    %v1581 = vunpack.c.h.b16 %v633
    %v1582 = vunpack.c.l.b16 %v634
    %v1583 = vunpack.c.h.b16 %v634
    %v1584 = vunpack.c.l.b16 %v635
    %v1585 = vunpack.c.h.b16 %v635
    %v1586 = vunpack.c.l.b16 %v636
    %v1587 = vunpack.c.h.b16 %v636
    %v1588 = vunpack.c.l.b16 %v637
    %v1589 = vunpack.c.h.b16 %v637
    %v1590 = vunpack.c.l.b16 %v638
    %v1591 = vunpack.c.h.b16 %v638
    %v1592 = vunpack.c.l.b16 %v639
    %v1593 = vunpack.c.h.b16 %v639
    %v1594 = vunpack.c.l.b16 %v640
    %v1595 = vunpack.c.h.b16 %v640
    %v1596 = vunpack.c.l.b16 %v641
    %v1597 = vunpack.c.h.b16 %v641
    %v1598 = vunpack.c.l.b16 %v642
    %v1599 = vunpack.c.h.b16 %v642
    %v1600 = vunpack.c.l.b16 %v643
    %v1601 = vunpack.c.h.b16 %v643
    %v1602 = vunpack.c.l.b16 %v644
    %v1603 = vunpack.c.h.b16 %v644
    %v1604 = vunpack.c.l.b16 %v645
    %v1605 = vunpack.c.h.b16 %v645
    %v1606 = vunpack.c.l.b16 %v646
    %v1607 = vunpack.c.h.b16 %v646
    %v1608 = vunpack.c.l.b16 %v647
    %v1609 = vunpack.c.h.b16 %v647
    %v1610 = vunpack.c.l.b16 %v648
    %v1611 = vunpack.c.h.b16 %v648
    %v1612 = vunpack.c.l.b16 %v649
    %v1613 = vunpack.c.h.b16 %v649
    %v1614 = vunpack.c.l.b16 %v650
    %v1615 = vunpack.c.h.b16 %v650
    %v1616 = vunpack.c.l.b16 %v651
    %v1617 = vunpack.c.h.b16 %v651
    %v1618 = vunpack.c.l.b16 %v652
    %v1619 = vunpack.c.h.b16 %v652
    %v1620 = vunpack.c.l.b16 %v653
    %v1621 = vunpack.c.h.b16 %v653
    %v1622 = vunpack.c.l.b16 %v654
    %v1623 = vunpack.c.h.b16 %v654
    %v1624 = vunpack.c.l.b16 %v655
    %v1625 = vunpack.c.h.b16 %v655
    %v1626 = vunpack.c.l.b16 %v656
    %v1627 = vunpack.c.h.b16 %v656
    %v1628 = vunpack.c.l.b16 %v657
    %v1629 = vunpack.c.h.b16 %v657
    %v1630 = vunpack.c.l.b16 %v658
    %v1631 = vunpack.c.h.b16 %v658
    %v1632 = vunpack.c.l.b16 %v659
    %v1633 = vunpack.c.h.b16 %v659
    %v1634 = vunpack.c.l.b16 %v660
    %v1635 = vunpack.c.h.b16 %v660
    %v1636 = vunpack.c.l.b16 %v661
    %v1637 = vunpack.c.h.b16 %v661
    %v1638 = vunpack.c.l.b16 %v662
    %v1639 = vunpack.c.h.b16 %v662
    %v1640 = vunpack.c.l.b16 %v663
    %v1641 = vunpack.c.h.b16 %v663
    %v1642 = vunpack.c.l.b16 %v664
    %v1643 = vunpack.c.h.b16 %v664
    %v1644 = vunpack.c.l.b16 %v665
    %v1645 = vunpack.c.h.b16 %v665
    %v1646 = vunpack.c.l.b16 %v666
    %v1647 = vunpack.c.h.b16 %v666
    %v1648 = vunpack.c.l.b16 %v667
    %v1649 = vunpack.c.h.b16 %v667
    %v1650 = vunpack.c.l.b16 %v668
    %v1651 = vunpack.c.h.b16 %v668
    %v1652 = vunpack.c.l.b16 %v669
    %v1653 = vunpack.c.h.b16 %v669
    %v1654 = vunpack.c.l.b16 %v670
    %v1655 = vunpack.c.h.b16 %v670
    %v1656 = vunpack.c.l.b16 %v671
    %v1657 = vunpack.c.h.b16 %v671
    %v1658 = vunpack.c.l.b16 %v672
    %v1659 = vunpack.c.h.b16 %v672
    %v1660 = vunpack.c.l.b16 %v673
    %v1661 = vunpack.c.h.b16 %v673
    %v1662 = vunpack.c.l.b16 %v674
    %v1663 = vunpack.c.h.b16 %v674
    %v1664 = vunpack.c.l.b16 %v675
    %v1665 = vunpack.c.h.b16 %v675
    %v1666 = vunpack.c.l.b16 %v676
    %v1667 = vunpack.c.h.b16 %v676
    %v1668 = vunpack.c.l.b16 %v677
    %v1669 = vunpack.c.h.b16 %v677
    %v1670 = vunpack.c.l.b16 %v678
    %v1671 = vunpack.c.h.b16 %v678
    %v1672 = vunpack.c.l.b16 %v679
    %v1673 = vunpack.c.h.b16 %v679
    %v1674 = vunpack.c.l.b16 %v680
    %v1675 = vunpack.c.h.b16 %v680
    %v1676 = vunpack.c.l.b16 %v681
    %v1677 = vunpack.c.h.b16 %v681
    %v1678 = vunpack.c.l.b16 %v682
    %v1679 = vunpack.c.h.b16 %v682
    %v1680 = vunpack.c.l.b16 %v683
    %v1681 = vunpack.c.h.b16 %v683
    %v1682 = vunpack.c.l.b16 %v684
    %v1683 = vunpack.c.h.b16 %v684
    %v1684 = vunpack.c.l.b16 %v685
    %v1685 = vunpack.c.h.b16 %v685
    %v1686 = vunpack.c.l.b16 %v686
    %v1687 = vunpack.c.h.b16 %v686
    %v1688 = vunpack.c.l.b16 %v687
    %v1689 = vunpack.c.h.b16 %v687
    %v1690 = vunpack.c.l.b16 %v688
    %v1691 = vunpack.c.h.b16 %v688
    %v1692 = vunpack.c.l.b16 %v689
    %v1693 = vunpack.c.h.b16 %v689
    %v1694 = vunpack.c.l.b16 %v690
    %v1695 = vunpack.c.h.b16 %v690
    %v1696 = vunpack.c.l.b16 %v691
    %v1697 = vunpack.c.h.b16 %v691
    %v1698 = vunpack.c.l.b16 %v692
    %v1699 = vunpack.c.h.b16 %v692
    %v1700 = vunpack.c.l.b16 %v693
    %v1701 = vunpack.c.h.b16 %v693
    %v1702 = vunpack.c.l.b16 %v694
    %v1703 = vunpack.c.h.b16 %v694
    %v1704 = vunpack.c.l.b16 %v695
    %v1705 = vunpack.c.h.b16 %v695
    %v1706 = vunpack.c.l.b16 %v696
    %v1707 = vunpack.c.h.b16 %v696
    %v1708 = vunpack.c.l.b16 %v697
    %v1709 = vunpack.c.h.b16 %v697
    %v1710 = vunpack.c.l.b16 %v698
    %v1711 = vunpack.c.h.b16 %v698
    %v1712 = vunpack.c.l.b16 %v699
    %v1713 = vunpack.c.h.b16 %v699
    %v1714 = vunpack.c.l.b16 %v700
    %v1715 = vunpack.c.h.b16 %v700
    %v1716 = vunpack.c.l.b16 %v701
    %v1717 = vunpack.c.h.b16 %v701
    %v1718 = vunpack.c.l.b16 %v702
    %v1719 = vunpack.c.h.b16 %v702
    %v1720 = vunpack.c.l.b16 %v703
    %v1721 = vunpack.c.h.b16 %v703
    %v1722 = vunpack.c.l.b16 %v704
    %v1723 = vunpack.c.h.b16 %v704
    %v1724 = vunpack.c.l.b16 %v705
    %v1725 = vunpack.c.h.b16 %v705
    %v1726 = vunpack.c.l.b16 %v706
    %v1727 = vunpack.c.h.b16 %v706
    %v1728 = vunpack.c.l.b16 %v707
    %v1729 = vunpack.c.h.b16 %v707
    %v1730 = vunpack.c.l.b16 %v708
    %v1731 = vunpack.c.h.b16 %v708
    %v1732 = vunpack.c.l.b16 %v709
    %v1733 = vunpack.c.h.b16 %v709
    %v1734 = vunpack.c.l.b16 %v710
    %v1735 = vunpack.c.h.b16 %v710
    %v1736 = vunpack.c.l.b16 %v711
    %v1737 = vunpack.c.h.b16 %v711
    %v1738 = vunpack.c.l.b16 %v712
    %v1739 = vunpack.c.h.b16 %v712
    %v1740 = vunpack.c.l.b16 %v713
    %v1741 = vunpack.c.h.b16 %v713
    %v1742 = vunpack.c.l.b16 %v714
    %v1743 = vunpack.c.h.b16 %v714
    %v1744 = vunpack.c.l.b16 %v715
    %v1745 = vunpack.c.h.b16 %v715
    %v1746 = vunpack.c.l.b16 %v716
    %v1747 = vunpack.c.h.b16 %v716
    %v1748 = vunpack.c.l.b16 %v717
    %v1749 = vunpack.c.h.b16 %v717
    %v1750 = vunpack.c.l.b16 %v718
    %v1751 = vunpack.c.h.b16 %v718
    %v1752 = vunpack.c.l.b16 %v719
    %v1753 = vunpack.c.h.b16 %v719
    %v1754 = vunpack.c.l.b16 %v720
    %v1755 = vunpack.c.h.b16 %v720
    %v1756 = vunpack.c.l.b16 %v721
    %v1757 = vunpack.c.h.b16 %v721
    %v1758 = vunpack.c.l.b16 %v722
    %v1759 = vunpack.c.h.b16 %v722
    %v1760 = vunpack.c.l.b16 %v723
    %v1761 = vunpack.c.h.b16 %v723
    %v1762 = vunpack.c.l.b16 %v724
    %v1763 = vunpack.c.h.b16 %v724
    %v1764 = vunpack.c.l.b16 %v725
    %v1765 = vunpack.c.h.b16 %v725
    %v1766 = vunpack.c.l.b16 %v726
    %v1767 = vunpack.c.h.b16 %v726
    %v1768 = vunpack.c.l.b16 %v727
    %v1769 = vunpack.c.h.b16 %v727
    %v1770 = vunpack.c.l.b16 %v728
    %v1771 = vunpack.c.h.b16 %v728
    %v1772 = vunpack.c.l.b16 %v729
    %v1773 = vunpack.c.h.b16 %v729
    %v1774 = vunpack.c.l.b16 %v730
    %v1775 = vunpack.c.h.b16 %v730
    %v1776 = vunpack.c.l.b16 %v731
    %v1777 = vunpack.c.h.b16 %v731
    %v1778 = vunpack.c.l.b16 %v732
    %v1779 = vunpack.c.h.b16 %v732
    %v1780 = vunpack.c.l.b16 %v733
    %v1781 = vunpack.c.h.b16 %v733
    %v1782 = vunpack.c.l.b16 %v734
    %v1783 = vunpack.c.h.b16 %v734
    %v1784 = vunpack.c.l.b16 %v735
    %v1785 = vunpack.c.h.b16 %v735
    %v1786 = vunpack.c.l.b16 %v736
    %v1787 = vunpack.c.h.b16 %v736
    %v1788 = vunpack.c.l.b16 %v737
    %v1789 = vunpack.c.h.b16 %v737
    %v1790 = vunpack.c.l.b16 %v738
    %v1791 = vunpack.c.h.b16 %v738
    %v1792 = vunpack.c.l.b16 %v739
    %v1793 = vunpack.c.h.b16 %v739
    %v1794 = vunpack.c.l.b16 %v740
    %v1795 = vunpack.c.h.b16 %v740
    %v1796 = vunpack.c.l.b16 %v741
    %v1797 = vunpack.c.h.b16 %v741
    %v1798 = vunpack.c.l.b16 %v742
    %v1799 = vunpack.c.h.b16 %v742
    %v1800 = vunpack.c.l.b16 %v743
    %v1801 = vunpack.c.h.b16 %v743
    %v1802 = vunpack.c.l.b16 %v744
    %v1803 = vunpack.c.h.b16 %v744
    %v1804 = vunpack.c.l.b16 %v745
    %v1805 = vunpack.c.h.b16 %v745
    %v1806 = vunpack.c.l.b16 %v746
    %v1807 = vunpack.c.h.b16 %v746
    %v1808 = vunpack.c.l.b16 %v747
    %v1809 = vunpack.c.h.b16 %v747
    %v1810 = vunpack.c.l.b16 %v748
    %v1811 = vunpack.c.h.b16 %v748
    %v1812 = vunpack.c.l.b16 %v749
    %v1813 = vunpack.c.h.b16 %v749
    %v1814 = vunpack.c.l.b16 %v750
    %v1815 = vunpack.c.h.b16 %v750
    %v1816 = vunpack.c.l.b16 %v751
    %v1817 = vunpack.c.h.b16 %v751
    %v1818 = vunpack.c.l.b16 %v752
    %v1819 = vunpack.c.h.b16 %v752
    %v1820 = vunpack.c.l.b16 %v753
    %v1821 = vunpack.c.h.b16 %v753
    %v1822 = vunpack.c.l.b16 %v754
    %v1823 = vunpack.c.h.b16 %v754
    %v1824 = vunpack.c.l.b16 %v755
    %v1825 = vunpack.c.h.b16 %v755
    %v1826 = vunpack.c.l.b16 %v756
    %v1827 = vunpack.c.h.b16 %v756
    %v1828 = vunpack.c.l.b16 %v757
    %v1829 = vunpack.c.h.b16 %v757
    %v1830 = vunpack.c.l.b16 %v758
    %v1831 = vunpack.c.h.b16 %v758
    %v1832 = vunpack.c.l.b16 %v759
    %v1833 = vunpack.c.h.b16 %v759
    %v1834 = vunpack.c.l.b16 %v760
    %v1835 = vunpack.c.h.b16 %v760
    %v1836 = vunpack.c.l.b16 %v761
    %v1837 = vunpack.c.h.b16 %v761
    %v1838 = vunpack.c.l.b16 %v762
    %v1839 = vunpack.c.h.b16 %v762
    %v1840 = vunpack.c.l.b16 %v763
    %v1841 = vunpack.c.h.b16 %v763
    %v1842 = vunpack.c.l.b16 %v764
    %v1843 = vunpack.c.h.b16 %v764
    %v1844 = vunpack.c.l.b16 %v765
    %v1845 = vunpack.c.h.b16 %v765
    %v1846 = vunpack.c.l.b16 %v766
    %v1847 = vunpack.c.h.b16 %v766
    %v1848 = vunpack.c.l.b16 %v767
    %v1849 = vunpack.c.h.b16 %v767
    %v1850 = vunpack.c.l.b16 %v768
    %v1851 = vunpack.c.h.b16 %v768
    %v1852 = vunpack.c.l.b16 %v769
    %v1853 = vunpack.c.h.b16 %v769
    %v1854 = vunpack.c.l.b16 %v770
    %v1855 = vunpack.c.h.b16 %v770
    %v1856 = vunpack.c.l.b16 %v771
    %v1857 = vunpack.c.h.b16 %v771
    %v1858 = vunpack.c.l.b16 %v772
    %v1859 = vunpack.c.h.b16 %v772
    %v1860 = vunpack.c.l.b16 %v773
    %v1861 = vunpack.c.h.b16 %v773
    %v1862 = vunpack.c.l.b16 %v774
    %v1863 = vunpack.c.h.b16 %v774
    %v1864 = vunpack.c.l.b16 %v775
    %v1865 = vunpack.c.h.b16 %v775
    %v1866 = vunpack.c.l.b16 %v776
    %v1867 = vunpack.c.h.b16 %v776
    %v1868 = vunpack.c.l.b16 %v777
    %v1869 = vunpack.c.h.b16 %v777
    %v1870 = vunpack.c.l.b16 %v778
    %v1871 = vunpack.c.h.b16 %v778
    %v1872 = vunpack.c.l.b16 %v779
    %v1873 = vunpack.c.h.b16 %v779
    %v1874 = vunpack.c.l.b16 %v780
    %v1875 = vunpack.c.h.b16 %v780
    %v1876 = vunpack.c.l.b16 %v781
    %v1877 = vunpack.c.h.b16 %v781
    %v1878 = vunpack.c.l.b16 %v782
    %v1879 = vunpack.c.h.b16 %v782
    %v1880 = vunpack.c.l.b16 %v783
    %v1881 = vunpack.c.h.b16 %v783
    %v1882 = vunpack.c.l.b16 %v784
    %v1883 = vunpack.c.h.b16 %v784
    %v1884 = vunpack.c.l.b16 %v785
    %v1885 = vunpack.c.h.b16 %v785
    %v1886 = vunpack.c.l.b16 %v786
    %v1887 = vunpack.c.h.b16 %v786
    %v1888 = vunpack.c.l.b16 %v787
    %v1889 = vunpack.c.h.b16 %v787
    %v1890 = vunpack.c.l.b16 %v788
    %v1891 = vunpack.c.h.b16 %v788
    %v1892 = vunpack.c.l.b16 %v789
    %v1893 = vunpack.c.h.b16 %v789
    %v1894 = vunpack.c.l.b16 %v790
    %v1895 = vunpack.c.h.b16 %v790
    %v1896 = vunpack.c.l.b16 %v791
    %v1897 = vunpack.c.h.b16 %v791
    %v1898 = vunpack.c.l.b16 %v792
    %v1899 = vunpack.c.h.b16 %v792
    %v1900 = vunpack.c.l.b16 %v793
    %v1901 = vunpack.c.h.b16 %v793
    %v1902 = vunpack.c.l.b16 %v794
    %v1903 = vunpack.c.h.b16 %v794
    %v1904 = vunpack.c.l.b16 %v795
    %v1905 = vunpack.c.h.b16 %v795
    %v1906 = vunpack.c.l.b16 %v796
    %v1907 = vunpack.c.h.b16 %v796
    %v1908 = vunpack.c.l.b16 %v797
    %v1909 = vunpack.c.h.b16 %v797
    %v1910 = vunpack.c.l.b16 %v798
    %v1911 = vunpack.c.h.b16 %v798
    %v1912 = vunpack.c.l.b16 %v799
    %v1913 = vunpack.c.h.b16 %v799
    %v1914 = vunpack.c.l.b16 %v800
    %v1915 = vunpack.c.h.b16 %v800
    %v1916 = vunpack.c.l.b16 %v801
    %v1917 = vunpack.c.h.b16 %v801
    %v1918 = vunpack.c.l.b16 %v802
    %v1919 = vunpack.c.h.b16 %v802
    %v1920 = vunpack.c.l.b16 %v803
    %v1921 = vunpack.c.h.b16 %v803
    %v1922 = vunpack.c.l.b16 %v804
    %v1923 = vunpack.c.h.b16 %v804
    %v1924 = vunpack.c.l.b16 %v805
    %v1925 = vunpack.c.h.b16 %v805
    %v1926 = vunpack.c.l.b16 %v806
    %v1927 = vunpack.c.h.b16 %v806
    %v1928 = vunpack.c.l.b16 %v807
    %v1929 = vunpack.c.h.b16 %v807
    %v1930 = vunpack.c.l.b16 %v808
    %v1931 = vunpack.c.h.b16 %v808
    %v1932 = vunpack.c.l.b16 %v809
    %v1933 = vunpack.c.h.b16 %v809
    %v1934 = vunpack.c.l.b16 %v810
    %v1935 = vunpack.c.h.b16 %v810
    %v1936 = vunpack.c.l.b16 %v811
    %v1937 = vunpack.c.h.b16 %v811
    %v1938 = vunpack.c.l.b16 %v812
    %v1939 = vunpack.c.h.b16 %v812
    %v1940 = vunpack.c.l.b16 %v813
    %v1941 = vunpack.c.h.b16 %v813
    %v1942 = vunpack.c.l.b16 %v814
    %v1943 = vunpack.c.h.b16 %v814
    %v1944 = vunpack.c.l.b16 %v815
    %v1945 = vunpack.c.h.b16 %v815
    %v1946 = vunpack.c.l.b16 %v816
    %v1947 = vunpack.c.h.b16 %v816
    %v1948 = vunpack.c.l.b16 %v817
    %v1949 = vunpack.c.h.b16 %v817
    %v1950 = vunpack.c.l.b16 %v818
    %v1951 = vunpack.c.h.b16 %v818
    %v1952 = vunpack.c.l.b16 %v819
    %v1953 = vunpack.c.h.b16 %v819
    %v1954 = vunpack.c.l.b16 %v820
    %v1955 = vunpack.c.h.b16 %v820
    %v1956 = vunpack.c.l.b16 %v821
    %v1957 = vunpack.c.h.b16 %v821
    %v1958 = vunpack.c.l.b16 %v822
    %v1959 = vunpack.c.h.b16 %v822
    %v1960 = vunpack.c.l.b16 %v823
    %v1961 = vunpack.c.h.b16 %v823
    %v1962 = vunpack.c.l.b16 %v824
    %v1963 = vunpack.c.h.b16 %v824
    %v1964 = vunpack.c.l.b16 %v825
    %v1965 = vunpack.c.h.b16 %v825
    %v1966 = vunpack.c.l.b16 %v826
    %v1967 = vunpack.c.h.b16 %v826
    %v1968 = vunpack.c.l.b16 %v827
    %v1969 = vunpack.c.h.b16 %v827
    %v1970 = vunpack.c.l.b16 %v828
    %v1971 = vunpack.c.h.b16 %v828
    %v1972 = vunpack.c.l.b16 %v829
    %v1973 = vunpack.c.h.b16 %v829
    %v1974 = vunpack.c.l.b16 %v830
    %v1975 = vunpack.c.h.b16 %v830
    %v1976 = vunpack.c.l.b16 %v831
    %v1977 = vunpack.c.h.b16 %v831
    %v1978 = vunpack.c.l.b16 %v832
    %v1979 = vunpack.c.h.b16 %v832
    %v1980 = vunpack.c.l.b16 %v833
    %v1981 = vunpack.c.h.b16 %v833
    %v1982 = vunpack.c.l.b16 %v834
    %v1983 = vunpack.c.h.b16 %v834
    %v1984 = vunpack.c.l.b16 %v835
    %v1985 = vunpack.c.h.b16 %v835
    %v1986 = vunpack.c.l.b16 %v836
    %v1987 = vunpack.c.h.b16 %v836
    %v1988 = vunpack.c.l.b16 %v837
    %v1989 = vunpack.c.h.b16 %v837
    %v1990 = vunpack.c.l.b16 %v838
    %v1991 = vunpack.c.h.b16 %v838
    %v1992 = vunpack.c.l.b16 %v839
    %v1993 = vunpack.c.h.b16 %v839
    %v1994 = vunpack.c.l.b16 %v840
    %v1995 = vunpack.c.h.b16 %v840
    %v1996 = vunpack.c.l.b16 %v841
    %v1997 = vunpack.c.h.b16 %v841
    %v1998 = vunpack.c.l.b16 %v842
    %v1999 = vunpack.c.h.b16 %v842
    %v2000 = vunpack.c.l.b16 %v843
    %v2001 = vunpack.c.h.b16 %v843
    %v2002 = vunpack.c.l.b16 %v844
    %v2003 = vunpack.c.h.b16 %v844
    %v2004 = vunpack.c.l.b16 %v845
    %v2005 = vunpack.c.h.b16 %v845
    %v2006 = vunpack.c.l.b16 %v846
    %v2007 = vunpack.c.h.b16 %v846
    %v2008 = vunpack.c.l.b16 %v847
    %v2009 = vunpack.c.h.b16 %v847
    %v2010 = vunpack.c.l.b16 %v848
    %v2011 = vunpack.c.h.b16 %v848
    %v2012 = vunpack.c.l.b16 %v849
    %v2013 = vunpack.c.h.b16 %v849
    %v2014 = vunpack.c.l.b16 %v850
    %v2015 = vunpack.c.h.b16 %v850
    %v2016 = vunpack.c.l.b16 %v851
    %v2017 = vunpack.c.h.b16 %v851
    %v2018 = vpack.c.b16 %v1256, %v1250
    %v2019 = vpack.c.b16 %v1257, %v1251
    %v2020 = vpack.c.b16 %v1258, %v1252
    %v2021 = vpack.c.b16 %v1259, %v1253
    %v2022 = vpack.c.b16 %v1260, %v1254
    %v2023 = vpack.c.b16 %v1261, %v1255
    %v2024 = vpack.c.b16 %v1268, %v1262
    %v2025 = vpack.c.b16 %v1269, %v1263
    %v2026 = vpack.c.b16 %v1270, %v1264
    %v2027 = vpack.c.b16 %v1271, %v1265
    %v2028 = vpack.c.b16 %v1272, %v1266
    %v2029 = vpack.c.b16 %v1273, %v1267
    %v2030 = vpack.c.b16 %v1280, %v1274
    %v2031 = vpack.c.b16 %v1281, %v1275
    %v2032 = vpack.c.b16 %v1282, %v1276
    %v2033 = vpack.c.b16 %v1283, %v1277
    %v2034 = vpack.c.b16 %v1284, %v1278
    %v2035 = vpack.c.b16 %v1285, %v1279
    %v2036 = vpack.c.b16 %v1292, %v1286
    %v2037 = vpack.c.b16 %v1293, %v1287
    %v2038 = vpack.c.b16 %v1294, %v1288
    %v2039 = vpack.c.b16 %v1295, %v1289
    %v2040 = vpack.c.b16 %v1296, %v1290
    %v2041 = vpack.c.b16 %v1297, %v1291
    %v2042 = vpack.c.b16 %v1304, %v1298
    %v2043 = vpack.c.b16 %v1305, %v1299
    %v2044 = vpack.c.b16 %v1306, %v1300
    %v2045 = vpack.c.b16 %v1307, %v1301
    %v2046 = vpack.c.b16 %v1308, %v1302
    %v2047 = vpack.c.b16 %v1309, %v1303
    %v2048 = vpack.c.b16 %v1316, %v1310
    %v2049 = vpack.c.b16 %v1317, %v1311
    %v2050 = vpack.c.b16 %v1318, %v1312
    %v2051 = vpack.c.b16 %v1319, %v1313
    %v2052 = vpack.c.b16 %v1320, %v1314
    %v2053 = vpack.c.b16 %v1321, %v1315
    %v2054 = vpack.c.b16 %v1328, %v1322
    %v2055 = vpack.c.b16 %v1329, %v1323
    %v2056 = vpack.c.b16 %v1330, %v1324
    %v2057 = vpack.c.b16 %v1331, %v1325
    %v2058 = vpack.c.b16 %v1332, %v1326
    %v2059 = vpack.c.b16 %v1333, %v1327
    %v2060 = vpack.c.b16 %v1340, %v1334
    %v2061 = vpack.c.b16 %v1341, %v1335
    %v2062 = vpack.c.b16 %v1342, %v1336
    %v2063 = vpack.c.b16 %v1343, %v1337
    %v2064 = vpack.c.b16 %v1344, %v1338
    %v2065 = vpack.c.b16 %v1345, %v1339
    %v2066 = vpack.c.b16 %v1352, %v1346
    %v2067 = vpack.c.b16 %v1353, %v1347
    %v2068 = vpack.c.b16 %v1354, %v1348
    %v2069 = vpack.c.b16 %v1355, %v1349
    %v2070 = vpack.c.b16 %v1356, %v1350
    %v2071 = vpack.c.b16 %v1357, %v1351
    %v2072 = vpack.c.b16 %v1364, %v1358
    %v2073 = vpack.c.b16 %v1365, %v1359
    %v2074 = vpack.c.b16 %v1366, %v1360
    %v2075 = vpack.c.b16 %v1367, %v1361
    %v2076 = vpack.c.b16 %v1368, %v1362
    %v2077 = vpack.c.b16 %v1369, %v1363
    %v2078 = vpack.c.b16 %v1376, %v1370
    %v2079 = vpack.c.b16 %v1377, %v1371
    %v2080 = vpack.c.b16 %v1378, %v1372
    %v2081 = vpack.c.b16 %v1379, %v1373
    %v2082 = vpack.c.b16 %v1380, %v1374
    %v2083 = vpack.c.b16 %v1381, %v1375
    %v2084 = vpack.c.b16 %v1388, %v1382
    %v2085 = vpack.c.b16 %v1389, %v1383
    %v2086 = vpack.c.b16 %v1390, %v1384
    %v2087 = vpack.c.b16 %v1391, %v1385
    %v2088 = vpack.c.b16 %v1392, %v1386
    %v2089 = vpack.c.b16 %v1393, %v1387
    %v2090 = vpack.c.b16 %v1400, %v1394
    %v2091 = vpack.c.b16 %v1401, %v1395
    %v2092 = vpack.c.b16 %v1402, %v1396
    %v2093 = vpack.c.b16 %v1403, %v1397
    %v2094 = vpack.c.b16 %v1404, %v1398
    %v2095 = vpack.c.b16 %v1405, %v1399
    %v2096 = vpack.c.b16 %v1412, %v1406
    %v2097 = vpack.c.b16 %v1413, %v1407
    %v2098 = vpack.c.b16 %v1414, %v1408
    %v2099 = vpack.c.b16 %v1415, %v1409
    %v2100 = vpack.c.b16 %v1416, %v1410
    %v2101 = vpack.c.b16 %v1417, %v1411
    %v2102 = vpack.c.b16 %v1424, %v1418
    %v2103 = vpack.c.b16 %v1425, %v1419
    %v2104 = vpack.c.b16 %v1426, %v1420
    %v2105 = vpack.c.b16 %v1427, %v1421
    %v2106 = vpack.c.b16 %v1428, %v1422
    %v2107 = vpack.c.b16 %v1429, %v1423
    %v2108 = vpack.c.b16 %v1436, %v1430
    %v2109 = vpack.c.b16 %v1437, %v1431
    %v2110 = vpack.c.b16 %v1438, %v1432
    %v2111 = vpack.c.b16 %v1439, %v1433
    %v2112 = vpack.c.b16 %v1440, %v1434
    %v2113 = vpack.c.b16 %v1441, %v1435
    %v2114 = vpack.c.b16 %v1448, %v1442
    %v2115 = vpack.c.b16 %v1449, %v1443
    %v2116 = vpack.c.b16 %v1450, %v1444
    %v2117 = vpack.c.b16 %v1451, %v1445
    %v2118 = vpack.c.b16 %v1452, %v1446
    %v2119 = vpack.c.b16 %v1453, %v1447
    %v2120 = vpack.c.b16 %v1460, %v1454
    %v2121 = vpack.c.b16 %v1461, %v1455
    %v2122 = vpack.c.b16 %v1462, %v1456
    %v2123 = vpack.c.b16 %v1463, %v1457
    %v2124 = vpack.c.b16 %v1464, %v1458
    %v2125 = vpack.c.b16 %v1465, %v1459
    %v2126 = vpack.c.b16 %v1472, %v1466
    %v2127 = vpack.c.b16 %v1473, %v1467
    %v2128 = vpack.c.b16 %v1474, %v1468
    %v2129 = vpack.c.b16 %v1475, %v1469
    %v2130 = vpack.c.b16 %v1476, %v1470
    %v2131 = vpack.c.b16 %v1477, %v1471
    %v2132 = vpack.c.b16 %v1484, %v1478
    %v2133 = vpack.c.b16 %v1485, %v1479
    %v2134 = vpack.c.b16 %v1486, %v1480
    %v2135 = vpack.c.b16 %v1487, %v1481
    %v2136 = vpack.c.b16 %v1488, %v1482
    %v2137 = vpack.c.b16 %v1489, %v1483
    %v2138 = vpack.c.b16 %v1496, %v1490
    %v2139 = vpack.c.b16 %v1497, %v1491
    %v2140 = vpack.c.b16 %v1498, %v1492
    %v2141 = vpack.c.b16 %v1499, %v1493
    %v2142 = vpack.c.b16 %v1500, %v1494
    %v2143 = vpack.c.b16 %v1501, %v1495
    %v2144 = vpack.c.b16 %v1508, %v1502
    %v2145 = vpack.c.b16 %v1509, %v1503
    %v2146 = vpack.c.b16 %v1510, %v1504
    %v2147 = vpack.c.b16 %v1511, %v1505
    %v2148 = vpack.c.b16 %v1512, %v1506
    %v2149 = vpack.c.b16 %v1513, %v1507
    %v2150 = vpack.c.b16 %v1520, %v1514
    %v2151 = vpack.c.b16 %v1521, %v1515
    %v2152 = vpack.c.b16 %v1522, %v1516
    %v2153 = vpack.c.b16 %v1523, %v1517
    %v2154 = vpack.c.b16 %v1524, %v1518
    %v2155 = vpack.c.b16 %v1525, %v1519
    %v2156 = vpack.c.b16 %v1532, %v1526
    %v2157 = vpack.c.b16 %v1533, %v1527
    %v2158 = vpack.c.b16 %v1534, %v1528
    %v2159 = vpack.c.b16 %v1535, %v1529
    %v2160 = vpack.c.b16 %v1536, %v1530
    %v2161 = vpack.c.b16 %v1537, %v1531
    %v2162 = vpack.c.b16 %v1544, %v1538
    %v2163 = vpack.c.b16 %v1545, %v1539
    %v2164 = vpack.c.b16 %v1546, %v1540
    %v2165 = vpack.c.b16 %v1547, %v1541
    %v2166 = vpack.c.b16 %v1548, %v1542
    %v2167 = vpack.c.b16 %v1549, %v1543
    %v2168 = vpack.c.b16 %v1556, %v1550
    %v2169 = vpack.c.b16 %v1557, %v1551
    %v2170 = vpack.c.b16 %v1558, %v1552
    %v2171 = vpack.c.b16 %v1559, %v1553
    %v2172 = vpack.c.b16 %v1560, %v1554
    %v2173 = vpack.c.b16 %v1561, %v1555
    %v2174 = vpack.c.b16 %v1568, %v1562
    %v2175 = vpack.c.b16 %v1569, %v1563
    %v2176 = vpack.c.b16 %v1570, %v1564
    %v2177 = vpack.c.b16 %v1571, %v1565
    %v2178 = vpack.c.b16 %v1572, %v1566
    %v2179 = vpack.c.b16 %v1573, %v1567
    %v2180 = vpack.c.b16 %v1580, %v1574
    %v2181 = vpack.c.b16 %v1581, %v1575
    %v2182 = vpack.c.b16 %v1582, %v1576
    %v2183 = vpack.c.b16 %v1583, %v1577
    %v2184 = vpack.c.b16 %v1584, %v1578
    %v2185 = vpack.c.b16 %v1585, %v1579
    %v2186 = vpack.c.b16 %v1592, %v1586
    %v2187 = vpack.c.b16 %v1593, %v1587
    %v2188 = vpack.c.b16 %v1594, %v1588
    %v2189 = vpack.c.b16 %v1595, %v1589
    %v2190 = vpack.c.b16 %v1596, %v1590
    %v2191 = vpack.c.b16 %v1597, %v1591
    %v2192 = vpack.c.b16 %v1604, %v1598
    %v2193 = vpack.c.b16 %v1605, %v1599
    %v2194 = vpack.c.b16 %v1606, %v1600
    %v2195 = vpack.c.b16 %v1607, %v1601
    %v2196 = vpack.c.b16 %v1608, %v1602
    %v2197 = vpack.c.b16 %v1609, %v1603
    %v2198 = vpack.c.b16 %v1616, %v1610
    %v2199 = vpack.c.b16 %v1617, %v1611
    %v2200 = vpack.c.b16 %v1618, %v1612
    %v2201 = vpack.c.b16 %v1619, %v1613
    %v2202 = vpack.c.b16 %v1620, %v1614
    %v2203 = vpack.c.b16 %v1621, %v1615
    %v2204 = vpack.c.b16 %v1628, %v1622
    %v2205 = vpack.c.b16 %v1629, %v1623
    %v2206 = vpack.c.b16 %v1630, %v1624
    %v2207 = vpack.c.b16 %v1631, %v1625
    %v2208 = vpack.c.b16 %v1632, %v1626
    %v2209 = vpack.c.b16 %v1633, %v1627
    %v2210 = vpack.c.b16 %v1640, %v1634
    %v2211 = vpack.c.b16 %v1641, %v1635
    %v2212 = vpack.c.b16 %v1642, %v1636
    %v2213 = vpack.c.b16 %v1643, %v1637
    %v2214 = vpack.c.b16 %v1644, %v1638
    %v2215 = vpack.c.b16 %v1645, %v1639
    %v2216 = vpack.c.b16 %v1652, %v1646
    %v2217 = vpack.c.b16 %v1653, %v1647
    %v2218 = vpack.c.b16 %v1654, %v1648
    %v2219 = vpack.c.b16 %v1655, %v1649
    %v2220 = vpack.c.b16 %v1656, %v1650
    %v2221 = vpack.c.b16 %v1657, %v1651
    %v2222 = vpack.c.b16 %v1664, %v1658
    %v2223 = vpack.c.b16 %v1665, %v1659
    %v2224 = vpack.c.b16 %v1666, %v1660
    %v2225 = vpack.c.b16 %v1667, %v1661
    %v2226 = vpack.c.b16 %v1668, %v1662
    %v2227 = vpack.c.b16 %v1669, %v1663
    %v2228 = vpack.c.b16 %v1676, %v1670
    %v2229 = vpack.c.b16 %v1677, %v1671
    %v2230 = vpack.c.b16 %v1678, %v1672
    %v2231 = vpack.c.b16 %v1679, %v1673
    %v2232 = vpack.c.b16 %v1680, %v1674
    %v2233 = vpack.c.b16 %v1681, %v1675
    %v2234 = vpack.c.b16 %v1688, %v1682
    %v2235 = vpack.c.b16 %v1689, %v1683
    %v2236 = vpack.c.b16 %v1690, %v1684
    %v2237 = vpack.c.b16 %v1691, %v1685
    %v2238 = vpack.c.b16 %v1692, %v1686
    %v2239 = vpack.c.b16 %v1693, %v1687
    %v2240 = vpack.c.b16 %v1700, %v1694
    %v2241 = vpack.c.b16 %v1701, %v1695
    %v2242 = vpack.c.b16 %v1702, %v1696
    %v2243 = vpack.c.b16 %v1703, %v1697
    %v2244 = vpack.c.b16 %v1704, %v1698
    %v2245 = vpack.c.b16 %v1705, %v1699
    %v2246 = vpack.c.b16 %v1712, %v1706
    %v2247 = vpack.c.b16 %v1713, %v1707
    %v2248 = vpack.c.b16 %v1714, %v1708
    %v2249 = vpack.c.b16 %v1715, %v1709
    %v2250 = vpack.c.b16 %v1716, %v1710
    %v2251 = vpack.c.b16 %v1717, %v1711
    %v2252 = vpack.c.b16 %v1724, %v1718
    %v2253 = vpack.c.b16 %v1725, %v1719
    %v2254 = vpack.c.b16 %v1726, %v1720
    %v2255 = vpack.c.b16 %v1727, %v1721
    %v2256 = vpack.c.b16 %v1728, %v1722
    %v2257 = vpack.c.b16 %v1729, %v1723
    %v2258 = vpack.c.b16 %v1736, %v1730
    %v2259 = vpack.c.b16 %v1737, %v1731
    %v2260 = vpack.c.b16 %v1738, %v1732
    %v2261 = vpack.c.b16 %v1739, %v1733
    %v2262 = vpack.c.b16 %v1740, %v1734
    %v2263 = vpack.c.b16 %v1741, %v1735
    %v2264 = vpack.c.b16 %v1748, %v1742
    %v2265 = vpack.c.b16 %v1749, %v1743
    %v2266 = vpack.c.b16 %v1750, %v1744
    %v2267 = vpack.c.b16 %v1751, %v1745
    %v2268 = vpack.c.b16 %v1752, %v1746
    %v2269 = vpack.c.b16 %v1753, %v1747
    %v2270 = vpack.c.b16 %v1760, %v1754
    %v2271 = vpack.c.b16 %v1761, %v1755
    %v2272 = vpack.c.b16 %v1762, %v1756
    %v2273 = vpack.c.b16 %v1763, %v1757
    %v2274 = vpack.c.b16 %v1764, %v1758
    %v2275 = vpack.c.b16 %v1765, %v1759
    %v2276 = vpack.c.b16 %v1772, %v1766
    %v2277 = vpack.c.b16 %v1773, %v1767
    %v2278 = vpack.c.b16 %v1774, %v1768
    %v2279 = vpack.c.b16 %v1775, %v1769
    %v2280 = vpack.c.b16 %v1776, %v1770
    %v2281 = vpack.c.b16 %v1777, %v1771
    %v2282 = vpack.c.b16 %v1784, %v1778
    %v2283 = vpack.c.b16 %v1785, %v1779
    %v2284 = vpack.c.b16 %v1786, %v1780
    %v2285 = vpack.c.b16 %v1787, %v1781
    %v2286 = vpack.c.b16 %v1788, %v1782
    %v2287 = vpack.c.b16 %v1789, %v1783
    %v2288 = vpack.c.b16 %v1796, %v1790
    %v2289 = vpack.c.b16 %v1797, %v1791
    %v2290 = vpack.c.b16 %v1798, %v1792
    %v2291 = vpack.c.b16 %v1799, %v1793
    %v2292 = vpack.c.b16 %v1800, %v1794
    %v2293 = vpack.c.b16 %v1801, %v1795
    %v2294 = vpack.c.b16 %v1808, %v1802
    %v2295 = vpack.c.b16 %v1809, %v1803
    %v2296 = vpack.c.b16 %v1810, %v1804
    %v2297 = vpack.c.b16 %v1811, %v1805
    %v2298 = vpack.c.b16 %v1812, %v1806
    %v2299 = vpack.c.b16 %v1813, %v1807
    %v2300 = vpack.c.b16 %v1820, %v1814
    %v2301 = vpack.c.b16 %v1821, %v1815
    %v2302 = vpack.c.b16 %v1822, %v1816
    %v2303 = vpack.c.b16 %v1823, %v1817
    %v2304 = vpack.c.b16 %v1824, %v1818
    %v2305 = vpack.c.b16 %v1825, %v1819
    %v2306 = vpack.c.b16 %v1832, %v1826
    %v2307 = vpack.c.b16 %v1833, %v1827
    %v2308 = vpack.c.b16 %v1834, %v1828
    %v2309 = vpack.c.b16 %v1835, %v1829
    %v2310 = vpack.c.b16 %v1836, %v1830
    %v2311 = vpack.c.b16 %v1837, %v1831
    %v2312 = vpack.c.b16 %v1844, %v1838
    %v2313 = vpack.c.b16 %v1845, %v1839
    %v2314 = vpack.c.b16 %v1846, %v1840
    %v2315 = vpack.c.b16 %v1847, %v1841
    %v2316 = vpack.c.b16 %v1848, %v1842
    %v2317 = vpack.c.b16 %v1849, %v1843
    %v2318 = vpack.c.b16 %v1856, %v1850
    %v2319 = vpack.c.b16 %v1857, %v1851
    %v2320 = vpack.c.b16 %v1858, %v1852
    %v2321 = vpack.c.b16 %v1859, %v1853
    %v2322 = vpack.c.b16 %v1860, %v1854
    %v2323 = vpack.c.b16 %v1861, %v1855
    %v2324 = vpack.c.b16 %v1868, %v1862
    %v2325 = vpack.c.b16 %v1869, %v1863
    %v2326 = vpack.c.b16 %v1870, %v1864
    %v2327 = vpack.c.b16 %v1871, %v1865
    %v2328 = vpack.c.b16 %v1872, %v1866
    %v2329 = vpack.c.b16 %v1873, %v1867
    %v2330 = vpack.c.b16 %v1880, %v1874
    %v2331 = vpack.c.b16 %v1881, %v1875
    %v2332 = vpack.c.b16 %v1882, %v1876
    %v2333 = vpack.c.b16 %v1883, %v1877
    %v2334 = vpack.c.b16 %v1884, %v1878
    %v2335 = vpack.c.b16 %v1885, %v1879
    %v2336 = vpack.c.b16 %v1892, %v1886
    %v2337 = vpack.c.b16 %v1893, %v1887
    %v2338 = vpack.c.b16 %v1894, %v1888
    %v2339 = vpack.c.b16 %v1895, %v1889
    %v2340 = vpack.c.b16 %v1896, %v1890
    %v2341 = vpack.c.b16 %v1897, %v1891
    %v2342 = vpack.c.b16 %v1904, %v1898
    %v2343 = vpack.c.b16 %v1905, %v1899
    %v2344 = vpack.c.b16 %v1906, %v1900
    %v2345 = vpack.c.b16 %v1907, %v1901
    %v2346 = vpack.c.b16 %v1908, %v1902
    %v2347 = vpack.c.b16 %v1909, %v1903
    %v2348 = vpack.c.b16 %v1916, %v1910
    %v2349 = vpack.c.b16 %v1917, %v1911
    %v2350 = vpack.c.b16 %v1918, %v1912
    %v2351 = vpack.c.b16 %v1919, %v1913
    %v2352 = vpack.c.b16 %v1920, %v1914
    %v2353 = vpack.c.b16 %v1921, %v1915
    %v2354 = vpack.c.b16 %v1928, %v1922
    %v2355 = vpack.c.b16 %v1929, %v1923
    %v2356 = vpack.c.b16 %v1930, %v1924
    %v2357 = vpack.c.b16 %v1931, %v1925
    %v2358 = vpack.c.b16 %v1932, %v1926
    %v2359 = vpack.c.b16 %v1933, %v1927
    %v2360 = vpack.c.b16 %v1940, %v1934
    %v2361 = vpack.c.b16 %v1941, %v1935
    %v2362 = vpack.c.b16 %v1942, %v1936
    %v2363 = vpack.c.b16 %v1943, %v1937
    %v2364 = vpack.c.b16 %v1944, %v1938
    %v2365 = vpack.c.b16 %v1945, %v1939
    %v2366 = vpack.c.b16 %v1952, %v1946
    %v2367 = vpack.c.b16 %v1953, %v1947
    %v2368 = vpack.c.b16 %v1954, %v1948
    %v2369 = vpack.c.b16 %v1955, %v1949
    %v2370 = vpack.c.b16 %v1956, %v1950
    %v2371 = vpack.c.b16 %v1957, %v1951
    %v2372 = vpack.c.b16 %v1964, %v1958
    %v2373 = vpack.c.b16 %v1965, %v1959
    %v2374 = vpack.c.b16 %v1966, %v1960
    %v2375 = vpack.c.b16 %v1967, %v1961
    %v2376 = vpack.c.b16 %v1968, %v1962
    %v2377 = vpack.c.b16 %v1969, %v1963
    %v2378 = vpack.c.b16 %v1976, %v1970
    %v2379 = vpack.c.b16 %v1977, %v1971
    %v2380 = vpack.c.b16 %v1978, %v1972
    %v2381 = vpack.c.b16 %v1979, %v1973
    %v2382 = vpack.c.b16 %v1980, %v1974
    %v2383 = vpack.c.b16 %v1981, %v1975
    %v2384 = vpack.c.b16 %v1988, %v1982
    %v2385 = vpack.c.b16 %v1989, %v1983
    %v2386 = vpack.c.b16 %v1990, %v1984
    %v2387 = vpack.c.b16 %v1991, %v1985
    %v2388 = vpack.c.b16 %v1992, %v1986
    %v2389 = vpack.c.b16 %v1993, %v1987
    %v2390 = vpack.c.b16 %v2000, %v1994
    %v2391 = vpack.c.b16 %v2001, %v1995
    %v2392 = vpack.c.b16 %v2002, %v1996
    %v2393 = vpack.c.b16 %v2003, %v1997
    %v2394 = vpack.c.b16 %v2004, %v1998
    %v2395 = vpack.c.b16 %v2005, %v1999
    %v2396 = vpack.c.b16 %v2012, %v2006
    %v2397 = vpack.c.b16 %v2013, %v2007
    %v2398 = vpack.c.b16 %v2014, %v2008
    %v2399 = vpack.c.b16 %v2015, %v2009
    %v2400 = vpack.c.b16 %v2016, %v2010
    %v2401 = vpack.c.b16 %v2017, %v2011
    %2786 = vmatpush.bf16.msra.mxu0 %v2060
    %2787 = vmatpush.bf16.msra.mxu0 %v2054
    %2788 = vmatpush.bf16.msra.mxu0 %v2048
    %2789 = vmatpush.bf16.msra.mxu0 %v2042
    %2790 = vmatpush.bf16.msra.mxu0 %v2036
    %2791 = vmatpush.bf16.msra.mxu0 %v2030
    %2792 = vmatpush.bf16.msra.mxu0 %v2024
    %2793 = vmatpush.bf16.msra.mxu0 %v2018
    %2794 = vmatmul.bf16.gmra.mxu0 %v460
    %v2795 = vpop.f32.mrf.mxu0
    %v2796 = vadd.f32 %v854, %v2795
    %v2797 = vpop.f32.mrf.mxu0
    %v2798 = vadd.f32 %v854, %v2797
    %2799 = vdwg.mxu0
    %2800 = vmatpush.bf16.msra.mxu0 %v2108
    %2801 = vmatpush.bf16.msra.mxu0 %v2102
    %2802 = vmatpush.bf16.msra.mxu0 %v2096
    %2803 = vmatpush.bf16.msra.mxu0 %v2090
    %2804 = vmatpush.bf16.msra.mxu0 %v2084
    %2805 = vmatpush.bf16.msra.mxu0 %v2078
    %2806 = vmatpush.bf16.msra.mxu0 %v2072
    %2807 = vmatpush.bf16.msra.mxu0 %v2066
    %2808 = vmatmul.bf16.gmra.mxu0 %v461
    %v2809 = vpop.f32.mrf.mxu0
    %v2810 = vadd.f32 %v2796, %v2809
    %v2811 = vpop.f32.mrf.mxu0
    %v2812 = vadd.f32 %v2798, %v2811
    %2813 = vdwg.mxu0
    %2814 = vmatpush.bf16.msra.mxu0 %v2156
    %2815 = vmatpush.bf16.msra.mxu0 %v2150
    %2816 = vmatpush.bf16.msra.mxu0 %v2144
    %2817 = vmatpush.bf16.msra.mxu0 %v2138
    %2818 = vmatpush.bf16.msra.mxu0 %v2132
    %2819 = vmatpush.bf16.msra.mxu0 %v2126
    %2820 = vmatpush.bf16.msra.mxu0 %v2120
    %2821 = vmatpush.bf16.msra.mxu0 %v2114
    %2822 = vmatmul.bf16.gmra.mxu0 %v462
    %v2823 = vpop.f32.mrf.mxu0
    %v2824 = vadd.f32 %v2810, %v2823
    %v2825 = vpop.f32.mrf.mxu0
    %v2826 = vadd.f32 %v2812, %v2825
    %2827 = vdwg.mxu0
    %2828 = vmatpush.bf16.msra.mxu0 %v2204
    %2829 = vmatpush.bf16.msra.mxu0 %v2198
    %2830 = vmatpush.bf16.msra.mxu0 %v2192
    %2831 = vmatpush.bf16.msra.mxu0 %v2186
    %2832 = vmatpush.bf16.msra.mxu0 %v2180
    %2833 = vmatpush.bf16.msra.mxu0 %v2174
    %2834 = vmatpush.bf16.msra.mxu0 %v2168
    %2835 = vmatpush.bf16.msra.mxu0 %v2162
    %2836 = vmatmul.bf16.gmra.mxu0 %v463
    %v2837 = vpop.f32.mrf.mxu0
    %v2838 = vadd.f32 %v2824, %v2837
    %v2839 = vpop.f32.mrf.mxu0
    %v2840 = vadd.f32 %v2826, %v2839
    %2841 = vdwg.mxu0
    %2842 = vmatpush.bf16.msra.mxu0 %v2252
    %2843 = vmatpush.bf16.msra.mxu0 %v2246
    %2844 = vmatpush.bf16.msra.mxu0 %v2240
    %2845 = vmatpush.bf16.msra.mxu0 %v2234
    %2846 = vmatpush.bf16.msra.mxu0 %v2228
    %2847 = vmatpush.bf16.msra.mxu0 %v2222
    %2848 = vmatpush.bf16.msra.mxu0 %v2216
    %2849 = vmatpush.bf16.msra.mxu0 %v2210
    %2850 = vmatmul.bf16.gmra.mxu0 %v464
    %v2851 = vpop.f32.mrf.mxu0
    %v2852 = vadd.f32 %v2838, %v2851
    %v2853 = vpop.f32.mrf.mxu0
    %v2854 = vadd.f32 %v2840, %v2853
    %2855 = vdwg.mxu0
    %2856 = vmatpush.bf16.msra.mxu0 %v2300
    %2857 = vmatpush.bf16.msra.mxu0 %v2294
    %2858 = vmatpush.bf16.msra.mxu0 %v2288
    %2859 = vmatpush.bf16.msra.mxu0 %v2282
    %2860 = vmatpush.bf16.msra.mxu0 %v2276
    %2861 = vmatpush.bf16.msra.mxu0 %v2270
    %2862 = vmatpush.bf16.msra.mxu0 %v2264
    %2863 = vmatpush.bf16.msra.mxu0 %v2258
    %2864 = vmatmul.bf16.gmra.mxu0 %v465
    %v2865 = vpop.f32.mrf.mxu0
    %v2866 = vadd.f32 %v2852, %v2865
    %v2867 = vpop.f32.mrf.mxu0
    %v2868 = vadd.f32 %v2854, %v2867
    %2869 = vdwg.mxu0
    %2870 = vmatpush.bf16.msra.mxu0 %v2348
    %2871 = vmatpush.bf16.msra.mxu0 %v2342
    %2872 = vmatpush.bf16.msra.mxu0 %v2336
    %2873 = vmatpush.bf16.msra.mxu0 %v2330
    %2874 = vmatpush.bf16.msra.mxu0 %v2324
    %2875 = vmatpush.bf16.msra.mxu0 %v2318
    %2876 = vmatpush.bf16.msra.mxu0 %v2312
    %2877 = vmatpush.bf16.msra.mxu0 %v2306
    %2878 = vmatmul.bf16.gmra.mxu0 %v466
    %v2879 = vpop.f32.mrf.mxu0
    %v2880 = vadd.f32 %v2866, %v2879
    %v2881 = vpop.f32.mrf.mxu0
    %v2882 = vadd.f32 %v2868, %v2881
    %2883 = vdwg.mxu0
    %2884 = vmatpush.bf16.msra.mxu0 %v2396
    %2885 = vmatpush.bf16.msra.mxu0 %v2390
    %2886 = vmatpush.bf16.msra.mxu0 %v2384
    %2887 = vmatpush.bf16.msra.mxu0 %v2378
    %2888 = vmatpush.bf16.msra.mxu0 %v2372
    %2889 = vmatpush.bf16.msra.mxu0 %v2366
    %2890 = vmatpush.bf16.msra.mxu0 %v2360
    %2891 = vmatpush.bf16.msra.mxu0 %v2354
    %2892 = vmatmul.bf16.gmra.mxu0 %v467
    %v2893 = vpop.f32.mrf.mxu0
    %v2894 = vadd.f32 %v2880, %v2893
    %v2895 = vpop.f32.mrf.mxu0
    %v2896 = vadd.f32 %v2882, %v2895
    %2897 = vdwg.mxu0
    %2898 = vmatpush.bf16.msra.mxu0 %v2061
    %2899 = vmatpush.bf16.msra.mxu0 %v2055
    %2900 = vmatpush.bf16.msra.mxu0 %v2049
    %2901 = vmatpush.bf16.msra.mxu0 %v2043
    %2902 = vmatpush.bf16.msra.mxu0 %v2037
    %2903 = vmatpush.bf16.msra.mxu0 %v2031
    %2904 = vmatpush.bf16.msra.mxu0 %v2025
    %2905 = vmatpush.bf16.msra.mxu0 %v2019
    %2906 = vmatmul.bf16.gmra.mxu0 %v460
    %v2907 = vpop.f32.mrf.mxu0
    %v2908 = vadd.f32 %v855, %v2907
    %v2909 = vpop.f32.mrf.mxu0
    %v2910 = vadd.f32 %v855, %v2909
    %2911 = vdwg.mxu0
    %2912 = vmatpush.bf16.msra.mxu0 %v2109
    %2913 = vmatpush.bf16.msra.mxu0 %v2103
    %2914 = vmatpush.bf16.msra.mxu0 %v2097
    %2915 = vmatpush.bf16.msra.mxu0 %v2091
    %2916 = vmatpush.bf16.msra.mxu0 %v2085
    %2917 = vmatpush.bf16.msra.mxu0 %v2079
    %2918 = vmatpush.bf16.msra.mxu0 %v2073
    %2919 = vmatpush.bf16.msra.mxu0 %v2067
    %2920 = vmatmul.bf16.gmra.mxu0 %v461
    %v2921 = vpop.f32.mrf.mxu0
    %v2922 = vadd.f32 %v2908, %v2921
    %v2923 = vpop.f32.mrf.mxu0
    %v2924 = vadd.f32 %v2910, %v2923
    %2925 = vdwg.mxu0
    %2926 = vmatpush.bf16.msra.mxu0 %v2157
    %2927 = vmatpush.bf16.msra.mxu0 %v2151
    %2928 = vmatpush.bf16.msra.mxu0 %v2145
    %2929 = vmatpush.bf16.msra.mxu0 %v2139
    %2930 = vmatpush.bf16.msra.mxu0 %v2133
    %2931 = vmatpush.bf16.msra.mxu0 %v2127
    %2932 = vmatpush.bf16.msra.mxu0 %v2121
    %2933 = vmatpush.bf16.msra.mxu0 %v2115
    %2934 = vmatmul.bf16.gmra.mxu0 %v462
    %v2935 = vpop.f32.mrf.mxu0
    %v2936 = vadd.f32 %v2922, %v2935
    %v2937 = vpop.f32.mrf.mxu0
    %v2938 = vadd.f32 %v2924, %v2937
    %2939 = vdwg.mxu0
    %2940 = vmatpush.bf16.msra.mxu0 %v2205
    %2941 = vmatpush.bf16.msra.mxu0 %v2199
    %2942 = vmatpush.bf16.msra.mxu0 %v2193
    %2943 = vmatpush.bf16.msra.mxu0 %v2187
    %2944 = vmatpush.bf16.msra.mxu0 %v2181
    %2945 = vmatpush.bf16.msra.mxu0 %v2175
    %2946 = vmatpush.bf16.msra.mxu0 %v2169
    %2947 = vmatpush.bf16.msra.mxu0 %v2163
    %2948 = vmatmul.bf16.gmra.mxu0 %v463
    %v2949 = vpop.f32.mrf.mxu0
    %v2950 = vadd.f32 %v2936, %v2949
    %v2951 = vpop.f32.mrf.mxu0
    %v2952 = vadd.f32 %v2938, %v2951
    %2953 = vdwg.mxu0
    %2954 = vmatpush.bf16.msra.mxu0 %v2253
    %2955 = vmatpush.bf16.msra.mxu0 %v2247
    %2956 = vmatpush.bf16.msra.mxu0 %v2241
    %2957 = vmatpush.bf16.msra.mxu0 %v2235
    %2958 = vmatpush.bf16.msra.mxu0 %v2229
    %2959 = vmatpush.bf16.msra.mxu0 %v2223
    %2960 = vmatpush.bf16.msra.mxu0 %v2217
    %2961 = vmatpush.bf16.msra.mxu0 %v2211
    %2962 = vmatmul.bf16.gmra.mxu0 %v464
    %v2963 = vpop.f32.mrf.mxu0
    %v2964 = vadd.f32 %v2950, %v2963
    %v2965 = vpop.f32.mrf.mxu0
    %v2966 = vadd.f32 %v2952, %v2965
    %2967 = vdwg.mxu0
    %2968 = vmatpush.bf16.msra.mxu0 %v2301
    %2969 = vmatpush.bf16.msra.mxu0 %v2295
    %2970 = vmatpush.bf16.msra.mxu0 %v2289
    %2971 = vmatpush.bf16.msra.mxu0 %v2283
    %2972 = vmatpush.bf16.msra.mxu0 %v2277
    %2973 = vmatpush.bf16.msra.mxu0 %v2271
    %2974 = vmatpush.bf16.msra.mxu0 %v2265
    %2975 = vmatpush.bf16.msra.mxu0 %v2259
    %2976 = vmatmul.bf16.gmra.mxu0 %v465
    %v2977 = vpop.f32.mrf.mxu0
    %v2978 = vadd.f32 %v2964, %v2977
    %v2979 = vpop.f32.mrf.mxu0
    %v2980 = vadd.f32 %v2966, %v2979
    %2981 = vdwg.mxu0
    %2982 = vmatpush.bf16.msra.mxu0 %v2349
    %2983 = vmatpush.bf16.msra.mxu0 %v2343
    %2984 = vmatpush.bf16.msra.mxu0 %v2337
    %2985 = vmatpush.bf16.msra.mxu0 %v2331
    %2986 = vmatpush.bf16.msra.mxu0 %v2325
    %2987 = vmatpush.bf16.msra.mxu0 %v2319
    %2988 = vmatpush.bf16.msra.mxu0 %v2313
    %2989 = vmatpush.bf16.msra.mxu0 %v2307
    %2990 = vmatmul.bf16.gmra.mxu0 %v466
    %v2991 = vpop.f32.mrf.mxu0
    %v2992 = vadd.f32 %v2978, %v2991
    %v2993 = vpop.f32.mrf.mxu0
    %v2994 = vadd.f32 %v2980, %v2993
    %2995 = vdwg.mxu0
    %2996 = vmatpush.bf16.msra.mxu0 %v2397
    %2997 = vmatpush.bf16.msra.mxu0 %v2391
    %2998 = vmatpush.bf16.msra.mxu0 %v2385
    %2999 = vmatpush.bf16.msra.mxu0 %v2379
    %3000 = vmatpush.bf16.msra.mxu0 %v2373
    %3001 = vmatpush.bf16.msra.mxu0 %v2367
    %3002 = vmatpush.bf16.msra.mxu0 %v2361
    %3003 = vmatpush.bf16.msra.mxu0 %v2355
    %3004 = vmatmul.bf16.gmra.mxu0 %v467
    %v3005 = vpop.f32.mrf.mxu0
    %v3006 = vadd.f32 %v2992, %v3005
    %v3007 = vpop.f32.mrf.mxu0
    %v3008 = vadd.f32 %v2994, %v3007
    %3009 = vdwg.mxu0
    %3010 = vmatpush.bf16.msra.mxu0 %v2062
    %3011 = vmatpush.bf16.msra.mxu0 %v2056
    %3012 = vmatpush.bf16.msra.mxu0 %v2050
    %3013 = vmatpush.bf16.msra.mxu0 %v2044
    %3014 = vmatpush.bf16.msra.mxu0 %v2038
    %3015 = vmatpush.bf16.msra.mxu0 %v2032
    %3016 = vmatpush.bf16.msra.mxu0 %v2026
    %3017 = vmatpush.bf16.msra.mxu0 %v2020
    %3018 = vmatmul.bf16.gmra.mxu0 %v460
    %v3019 = vpop.f32.mrf.mxu0
    %v3020 = vadd.f32 %v856, %v3019
    %v3021 = vpop.f32.mrf.mxu0
    %v3022 = vadd.f32 %v856, %v3021
    %3023 = vdwg.mxu0
    %3024 = vmatpush.bf16.msra.mxu0 %v2110
    %3025 = vmatpush.bf16.msra.mxu0 %v2104
    %3026 = vmatpush.bf16.msra.mxu0 %v2098
    %3027 = vmatpush.bf16.msra.mxu0 %v2092
    %3028 = vmatpush.bf16.msra.mxu0 %v2086
    %3029 = vmatpush.bf16.msra.mxu0 %v2080
    %3030 = vmatpush.bf16.msra.mxu0 %v2074
    %3031 = vmatpush.bf16.msra.mxu0 %v2068
    %3032 = vmatmul.bf16.gmra.mxu0 %v461
    %v3033 = vpop.f32.mrf.mxu0
    %v3034 = vadd.f32 %v3020, %v3033
    %v3035 = vpop.f32.mrf.mxu0
    %v3036 = vadd.f32 %v3022, %v3035
    %3037 = vdwg.mxu0
    %3038 = vmatpush.bf16.msra.mxu0 %v2158
    %3039 = vmatpush.bf16.msra.mxu0 %v2152
    %3040 = vmatpush.bf16.msra.mxu0 %v2146
    %3041 = vmatpush.bf16.msra.mxu0 %v2140
    %3042 = vmatpush.bf16.msra.mxu0 %v2134
    %3043 = vmatpush.bf16.msra.mxu0 %v2128
    %3044 = vmatpush.bf16.msra.mxu0 %v2122
    %3045 = vmatpush.bf16.msra.mxu0 %v2116
    %3046 = vmatmul.bf16.gmra.mxu0 %v462
    %v3047 = vpop.f32.mrf.mxu0
    %v3048 = vadd.f32 %v3034, %v3047
    %v3049 = vpop.f32.mrf.mxu0
    %v3050 = vadd.f32 %v3036, %v3049
    %3051 = vdwg.mxu0
    %3052 = vmatpush.bf16.msra.mxu0 %v2206
    %3053 = vmatpush.bf16.msra.mxu0 %v2200
    %3054 = vmatpush.bf16.msra.mxu0 %v2194
    %3055 = vmatpush.bf16.msra.mxu0 %v2188
    %3056 = vmatpush.bf16.msra.mxu0 %v2182
    %3057 = vmatpush.bf16.msra.mxu0 %v2176
    %3058 = vmatpush.bf16.msra.mxu0 %v2170
    %3059 = vmatpush.bf16.msra.mxu0 %v2164
    %3060 = vmatmul.bf16.gmra.mxu0 %v463
    %v3061 = vpop.f32.mrf.mxu0
    %v3062 = vadd.f32 %v3048, %v3061
    %v3063 = vpop.f32.mrf.mxu0
    %v3064 = vadd.f32 %v3050, %v3063
    %3065 = vdwg.mxu0
    %3066 = vmatpush.bf16.msra.mxu0 %v2254
    %3067 = vmatpush.bf16.msra.mxu0 %v2248
    %3068 = vmatpush.bf16.msra.mxu0 %v2242
    %3069 = vmatpush.bf16.msra.mxu0 %v2236
    %3070 = vmatpush.bf16.msra.mxu0 %v2230
    %3071 = vmatpush.bf16.msra.mxu0 %v2224
    %3072 = vmatpush.bf16.msra.mxu0 %v2218
    %3073 = vmatpush.bf16.msra.mxu0 %v2212
    %3074 = vmatmul.bf16.gmra.mxu0 %v464
    %v3075 = vpop.f32.mrf.mxu0
    %v3076 = vadd.f32 %v3062, %v3075
    %v3077 = vpop.f32.mrf.mxu0
    %v3078 = vadd.f32 %v3064, %v3077
    %3079 = vdwg.mxu0
    %3080 = vmatpush.bf16.msra.mxu0 %v2302
    %3081 = vmatpush.bf16.msra.mxu0 %v2296
    %3082 = vmatpush.bf16.msra.mxu0 %v2290
    %3083 = vmatpush.bf16.msra.mxu0 %v2284
    %3084 = vmatpush.bf16.msra.mxu0 %v2278
    %3085 = vmatpush.bf16.msra.mxu0 %v2272
    %3086 = vmatpush.bf16.msra.mxu0 %v2266
    %3087 = vmatpush.bf16.msra.mxu0 %v2260
    %3088 = vmatmul.bf16.gmra.mxu0 %v465
    %v3089 = vpop.f32.mrf.mxu0
    %v3090 = vadd.f32 %v3076, %v3089
    %v3091 = vpop.f32.mrf.mxu0
    %v3092 = vadd.f32 %v3078, %v3091
    %3093 = vdwg.mxu0
    %3094 = vmatpush.bf16.msra.mxu0 %v2350
    %3095 = vmatpush.bf16.msra.mxu0 %v2344
    %3096 = vmatpush.bf16.msra.mxu0 %v2338
    %3097 = vmatpush.bf16.msra.mxu0 %v2332
    %3098 = vmatpush.bf16.msra.mxu0 %v2326
    %3099 = vmatpush.bf16.msra.mxu0 %v2320
    %3100 = vmatpush.bf16.msra.mxu0 %v2314
    %3101 = vmatpush.bf16.msra.mxu0 %v2308
    %3102 = vmatmul.bf16.gmra.mxu0 %v466
    %v3103 = vpop.f32.mrf.mxu0
    %v3104 = vadd.f32 %v3090, %v3103
    %v3105 = vpop.f32.mrf.mxu0
    %v3106 = vadd.f32 %v3092, %v3105
    %3107 = vdwg.mxu0
    %3108 = vmatpush.bf16.msra.mxu0 %v2398
    %3109 = vmatpush.bf16.msra.mxu0 %v2392
    %3110 = vmatpush.bf16.msra.mxu0 %v2386
    %3111 = vmatpush.bf16.msra.mxu0 %v2380
    %3112 = vmatpush.bf16.msra.mxu0 %v2374
    %3113 = vmatpush.bf16.msra.mxu0 %v2368
    %3114 = vmatpush.bf16.msra.mxu0 %v2362
    %3115 = vmatpush.bf16.msra.mxu0 %v2356
    %3116 = vmatmul.bf16.gmra.mxu0 %v467
    %v3117 = vpop.f32.mrf.mxu0
    %v3118 = vadd.f32 %v3104, %v3117
    %v3119 = vpop.f32.mrf.mxu0
    %v3120 = vadd.f32 %v3106, %v3119
    %3121 = vdwg.mxu0
    %3122 = vmatpush.bf16.msra.mxu0 %v2063
    %3123 = vmatpush.bf16.msra.mxu0 %v2057
    %3124 = vmatpush.bf16.msra.mxu0 %v2051
    %3125 = vmatpush.bf16.msra.mxu0 %v2045
    %3126 = vmatpush.bf16.msra.mxu0 %v2039
    %3127 = vmatpush.bf16.msra.mxu0 %v2033
    %3128 = vmatpush.bf16.msra.mxu0 %v2027
    %3129 = vmatpush.bf16.msra.mxu0 %v2021
    %3130 = vmatmul.bf16.gmra.mxu0 %v460
    %v3131 = vpop.f32.mrf.mxu0
    %v3132 = vadd.f32 %v857, %v3131
    %v3133 = vpop.f32.mrf.mxu0
    %v3134 = vadd.f32 %v857, %v3133
    %3135 = vdwg.mxu0
    %3136 = vmatpush.bf16.msra.mxu0 %v2111
    %3137 = vmatpush.bf16.msra.mxu0 %v2105
    %3138 = vmatpush.bf16.msra.mxu0 %v2099
    %3139 = vmatpush.bf16.msra.mxu0 %v2093
    %3140 = vmatpush.bf16.msra.mxu0 %v2087
    %3141 = vmatpush.bf16.msra.mxu0 %v2081
    %3142 = vmatpush.bf16.msra.mxu0 %v2075
    %3143 = vmatpush.bf16.msra.mxu0 %v2069
    %3144 = vmatmul.bf16.gmra.mxu0 %v461
    %v3145 = vpop.f32.mrf.mxu0
    %v3146 = vadd.f32 %v3132, %v3145
    %v3147 = vpop.f32.mrf.mxu0
    %v3148 = vadd.f32 %v3134, %v3147
    %3149 = vdwg.mxu0
    %3150 = vmatpush.bf16.msra.mxu0 %v2159
    %3151 = vmatpush.bf16.msra.mxu0 %v2153
    %3152 = vmatpush.bf16.msra.mxu0 %v2147
    %3153 = vmatpush.bf16.msra.mxu0 %v2141
    %3154 = vmatpush.bf16.msra.mxu0 %v2135
    %3155 = vmatpush.bf16.msra.mxu0 %v2129
    %3156 = vmatpush.bf16.msra.mxu0 %v2123
    %3157 = vmatpush.bf16.msra.mxu0 %v2117
    %3158 = vmatmul.bf16.gmra.mxu0 %v462
    %v3159 = vpop.f32.mrf.mxu0
    %v3160 = vadd.f32 %v3146, %v3159
    %v3161 = vpop.f32.mrf.mxu0
    %v3162 = vadd.f32 %v3148, %v3161
    %3163 = vdwg.mxu0
    %3164 = vmatpush.bf16.msra.mxu0 %v2207
    %3165 = vmatpush.bf16.msra.mxu0 %v2201
    %3166 = vmatpush.bf16.msra.mxu0 %v2195
    %3167 = vmatpush.bf16.msra.mxu0 %v2189
    %3168 = vmatpush.bf16.msra.mxu0 %v2183
    %3169 = vmatpush.bf16.msra.mxu0 %v2177
    %3170 = vmatpush.bf16.msra.mxu0 %v2171
    %3171 = vmatpush.bf16.msra.mxu0 %v2165
    %3172 = vmatmul.bf16.gmra.mxu0 %v463
    %v3173 = vpop.f32.mrf.mxu0
    %v3174 = vadd.f32 %v3160, %v3173
    %v3175 = vpop.f32.mrf.mxu0
    %v3176 = vadd.f32 %v3162, %v3175
    %3177 = vdwg.mxu0
    %3178 = vmatpush.bf16.msra.mxu0 %v2255
    %3179 = vmatpush.bf16.msra.mxu0 %v2249
    %3180 = vmatpush.bf16.msra.mxu0 %v2243
    %3181 = vmatpush.bf16.msra.mxu0 %v2237
    %3182 = vmatpush.bf16.msra.mxu0 %v2231
    %3183 = vmatpush.bf16.msra.mxu0 %v2225
    %3184 = vmatpush.bf16.msra.mxu0 %v2219
    %3185 = vmatpush.bf16.msra.mxu0 %v2213
    %3186 = vmatmul.bf16.gmra.mxu0 %v464
    %v3187 = vpop.f32.mrf.mxu0
    %v3188 = vadd.f32 %v3174, %v3187
    %v3189 = vpop.f32.mrf.mxu0
    %v3190 = vadd.f32 %v3176, %v3189
    %3191 = vdwg.mxu0
    %3192 = vmatpush.bf16.msra.mxu0 %v2303
    %3193 = vmatpush.bf16.msra.mxu0 %v2297
    %3194 = vmatpush.bf16.msra.mxu0 %v2291
    %3195 = vmatpush.bf16.msra.mxu0 %v2285
    %3196 = vmatpush.bf16.msra.mxu0 %v2279
    %3197 = vmatpush.bf16.msra.mxu0 %v2273
    %3198 = vmatpush.bf16.msra.mxu0 %v2267
    %3199 = vmatpush.bf16.msra.mxu0 %v2261
    %3200 = vmatmul.bf16.gmra.mxu0 %v465
    %v3201 = vpop.f32.mrf.mxu0
    %v3202 = vadd.f32 %v3188, %v3201
    %v3203 = vpop.f32.mrf.mxu0
    %v3204 = vadd.f32 %v3190, %v3203
    %3205 = vdwg.mxu0
    %3206 = vmatpush.bf16.msra.mxu0 %v2351
    %3207 = vmatpush.bf16.msra.mxu0 %v2345
    %3208 = vmatpush.bf16.msra.mxu0 %v2339
    %3209 = vmatpush.bf16.msra.mxu0 %v2333
    %3210 = vmatpush.bf16.msra.mxu0 %v2327
    %3211 = vmatpush.bf16.msra.mxu0 %v2321
    %3212 = vmatpush.bf16.msra.mxu0 %v2315
    %3213 = vmatpush.bf16.msra.mxu0 %v2309
    %3214 = vmatmul.bf16.gmra.mxu0 %v466
    %v3215 = vpop.f32.mrf.mxu0
    %v3216 = vadd.f32 %v3202, %v3215
    %v3217 = vpop.f32.mrf.mxu0
    %v3218 = vadd.f32 %v3204, %v3217
    %3219 = vdwg.mxu0
    %3220 = vmatpush.bf16.msra.mxu0 %v2399
    %3221 = vmatpush.bf16.msra.mxu0 %v2393
    %3222 = vmatpush.bf16.msra.mxu0 %v2387
    %3223 = vmatpush.bf16.msra.mxu0 %v2381
    %3224 = vmatpush.bf16.msra.mxu0 %v2375
    %3225 = vmatpush.bf16.msra.mxu0 %v2369
    %3226 = vmatpush.bf16.msra.mxu0 %v2363
    %3227 = vmatpush.bf16.msra.mxu0 %v2357
    %3228 = vmatmul.bf16.gmra.mxu0 %v467
    %v3229 = vpop.f32.mrf.mxu0
    %v3230 = vadd.f32 %v3216, %v3229
    %v3231 = vpop.f32.mrf.mxu0
    %v3232 = vadd.f32 %v3218, %v3231
    %3233 = vdwg.mxu0
    %3234 = vmatpush.bf16.msra.mxu0 %v2064
    %3235 = vmatpush.bf16.msra.mxu0 %v2058
    %3236 = vmatpush.bf16.msra.mxu0 %v2052
    %3237 = vmatpush.bf16.msra.mxu0 %v2046
    %3238 = vmatpush.bf16.msra.mxu0 %v2040
    %3239 = vmatpush.bf16.msra.mxu0 %v2034
    %3240 = vmatpush.bf16.msra.mxu0 %v2028
    %3241 = vmatpush.bf16.msra.mxu0 %v2022
    %3242 = vmatmul.bf16.gmra.mxu0 %v460
    %v3243 = vpop.f32.mrf.mxu0
    %v3244 = vadd.f32 %v858, %v3243
    %v3245 = vpop.f32.mrf.mxu0
    %v3246 = vadd.f32 %v858, %v3245
    %3247 = vdwg.mxu0
    %3248 = vmatpush.bf16.msra.mxu0 %v2112
    %3249 = vmatpush.bf16.msra.mxu0 %v2106
    %3250 = vmatpush.bf16.msra.mxu0 %v2100
    %3251 = vmatpush.bf16.msra.mxu0 %v2094
    %3252 = vmatpush.bf16.msra.mxu0 %v2088
    %3253 = vmatpush.bf16.msra.mxu0 %v2082
    %3254 = vmatpush.bf16.msra.mxu0 %v2076
    %3255 = vmatpush.bf16.msra.mxu0 %v2070
    %3256 = vmatmul.bf16.gmra.mxu0 %v461
    %v3257 = vpop.f32.mrf.mxu0
    %v3258 = vadd.f32 %v3244, %v3257
    %v3259 = vpop.f32.mrf.mxu0
    %v3260 = vadd.f32 %v3246, %v3259
    %3261 = vdwg.mxu0
    %3262 = vmatpush.bf16.msra.mxu0 %v2160
    %3263 = vmatpush.bf16.msra.mxu0 %v2154
    %3264 = vmatpush.bf16.msra.mxu0 %v2148
    %3265 = vmatpush.bf16.msra.mxu0 %v2142
    %3266 = vmatpush.bf16.msra.mxu0 %v2136
    %3267 = vmatpush.bf16.msra.mxu0 %v2130
    %3268 = vmatpush.bf16.msra.mxu0 %v2124
    %3269 = vmatpush.bf16.msra.mxu0 %v2118
    %3270 = vmatmul.bf16.gmra.mxu0 %v462
    %v3271 = vpop.f32.mrf.mxu0
    %v3272 = vadd.f32 %v3258, %v3271
    %v3273 = vpop.f32.mrf.mxu0
    %v3274 = vadd.f32 %v3260, %v3273
    %3275 = vdwg.mxu0
    %3276 = vmatpush.bf16.msra.mxu0 %v2208
    %3277 = vmatpush.bf16.msra.mxu0 %v2202
    %3278 = vmatpush.bf16.msra.mxu0 %v2196
    %3279 = vmatpush.bf16.msra.mxu0 %v2190
    %3280 = vmatpush.bf16.msra.mxu0 %v2184
    %3281 = vmatpush.bf16.msra.mxu0 %v2178
    %3282 = vmatpush.bf16.msra.mxu0 %v2172
    %3283 = vmatpush.bf16.msra.mxu0 %v2166
    %3284 = vmatmul.bf16.gmra.mxu0 %v463
    %v3285 = vpop.f32.mrf.mxu0
    %v3286 = vadd.f32 %v3272, %v3285
    %v3287 = vpop.f32.mrf.mxu0
    %v3288 = vadd.f32 %v3274, %v3287
    %3289 = vdwg.mxu0
    %3290 = vmatpush.bf16.msra.mxu0 %v2256
    %3291 = vmatpush.bf16.msra.mxu0 %v2250
    %3292 = vmatpush.bf16.msra.mxu0 %v2244
    %3293 = vmatpush.bf16.msra.mxu0 %v2238
    %3294 = vmatpush.bf16.msra.mxu0 %v2232
    %3295 = vmatpush.bf16.msra.mxu0 %v2226
    %3296 = vmatpush.bf16.msra.mxu0 %v2220
    %3297 = vmatpush.bf16.msra.mxu0 %v2214
    %3298 = vmatmul.bf16.gmra.mxu0 %v464
    %v3299 = vpop.f32.mrf.mxu0
    %v3300 = vadd.f32 %v3286, %v3299
    %v3301 = vpop.f32.mrf.mxu0
    %v3302 = vadd.f32 %v3288, %v3301
    %3303 = vdwg.mxu0
    %3304 = vmatpush.bf16.msra.mxu0 %v2304
    %3305 = vmatpush.bf16.msra.mxu0 %v2298
    %3306 = vmatpush.bf16.msra.mxu0 %v2292
    %3307 = vmatpush.bf16.msra.mxu0 %v2286
    %3308 = vmatpush.bf16.msra.mxu0 %v2280
    %3309 = vmatpush.bf16.msra.mxu0 %v2274
    %3310 = vmatpush.bf16.msra.mxu0 %v2268
    %3311 = vmatpush.bf16.msra.mxu0 %v2262
    %3312 = vmatmul.bf16.gmra.mxu0 %v465
    %v3313 = vpop.f32.mrf.mxu0
    %v3314 = vadd.f32 %v3300, %v3313
    %v3315 = vpop.f32.mrf.mxu0
    %v3316 = vadd.f32 %v3302, %v3315
    %3317 = vdwg.mxu0
    %3318 = vmatpush.bf16.msra.mxu0 %v2352
    %3319 = vmatpush.bf16.msra.mxu0 %v2346
    %3320 = vmatpush.bf16.msra.mxu0 %v2340
    %3321 = vmatpush.bf16.msra.mxu0 %v2334
    %3322 = vmatpush.bf16.msra.mxu0 %v2328
    %3323 = vmatpush.bf16.msra.mxu0 %v2322
    %3324 = vmatpush.bf16.msra.mxu0 %v2316
    %3325 = vmatpush.bf16.msra.mxu0 %v2310
    %3326 = vmatmul.bf16.gmra.mxu0 %v466
    %v3327 = vpop.f32.mrf.mxu0
    %v3328 = vadd.f32 %v3314, %v3327
    %v3329 = vpop.f32.mrf.mxu0
    %v3330 = vadd.f32 %v3316, %v3329
    %3331 = vdwg.mxu0
    %3332 = vmatpush.bf16.msra.mxu0 %v2400
    %3333 = vmatpush.bf16.msra.mxu0 %v2394
    %3334 = vmatpush.bf16.msra.mxu0 %v2388
    %3335 = vmatpush.bf16.msra.mxu0 %v2382
    %3336 = vmatpush.bf16.msra.mxu0 %v2376
    %3337 = vmatpush.bf16.msra.mxu0 %v2370
    %3338 = vmatpush.bf16.msra.mxu0 %v2364
    %3339 = vmatpush.bf16.msra.mxu0 %v2358
    %3340 = vmatmul.bf16.gmra.mxu0 %v467
    %v3341 = vpop.f32.mrf.mxu0
    %v3342 = vadd.f32 %v3328, %v3341
    %v3343 = vpop.f32.mrf.mxu0
    %v3344 = vadd.f32 %v3330, %v3343
    %3345 = vdwg.mxu0
    %3346 = vmatpush.bf16.msra.mxu0 %v2065
    %3347 = vmatpush.bf16.msra.mxu0 %v2059
    %3348 = vmatpush.bf16.msra.mxu0 %v2053
    %3349 = vmatpush.bf16.msra.mxu0 %v2047
    %3350 = vmatpush.bf16.msra.mxu0 %v2041
    %3351 = vmatpush.bf16.msra.mxu0 %v2035
    %3352 = vmatpush.bf16.msra.mxu0 %v2029
    %3353 = vmatpush.bf16.msra.mxu0 %v2023
    %3354 = vmatmul.bf16.gmra.mxu0 %v460
    %v3355 = vpop.f32.mrf.mxu0
    %v3356 = vadd.f32 %v859, %v3355
    %v3357 = vpop.f32.mrf.mxu0
    %v3358 = vadd.f32 %v859, %v3357
    %3359 = vdwg.mxu0
    %3360 = vmatpush.bf16.msra.mxu0 %v2113
    %3361 = vmatpush.bf16.msra.mxu0 %v2107
    %3362 = vmatpush.bf16.msra.mxu0 %v2101
    %3363 = vmatpush.bf16.msra.mxu0 %v2095
    %3364 = vmatpush.bf16.msra.mxu0 %v2089
    %3365 = vmatpush.bf16.msra.mxu0 %v2083
    %3366 = vmatpush.bf16.msra.mxu0 %v2077
    %3367 = vmatpush.bf16.msra.mxu0 %v2071
    %3368 = vmatmul.bf16.gmra.mxu0 %v461
    %v3369 = vpop.f32.mrf.mxu0
    %v3370 = vadd.f32 %v3356, %v3369
    %v3371 = vpop.f32.mrf.mxu0
    %v3372 = vadd.f32 %v3358, %v3371
    %3373 = vdwg.mxu0
    %3374 = vmatpush.bf16.msra.mxu0 %v2161
    %3375 = vmatpush.bf16.msra.mxu0 %v2155
    %3376 = vmatpush.bf16.msra.mxu0 %v2149
    %3377 = vmatpush.bf16.msra.mxu0 %v2143
    %3378 = vmatpush.bf16.msra.mxu0 %v2137
    %3379 = vmatpush.bf16.msra.mxu0 %v2131
    %3380 = vmatpush.bf16.msra.mxu0 %v2125
    %3381 = vmatpush.bf16.msra.mxu0 %v2119
    %3382 = vmatmul.bf16.gmra.mxu0 %v462
    %v3383 = vpop.f32.mrf.mxu0
    %v3384 = vadd.f32 %v3370, %v3383
    %v3385 = vpop.f32.mrf.mxu0
    %v3386 = vadd.f32 %v3372, %v3385
    %3387 = vdwg.mxu0
    %3388 = vmatpush.bf16.msra.mxu0 %v2209
    %3389 = vmatpush.bf16.msra.mxu0 %v2203
    %3390 = vmatpush.bf16.msra.mxu0 %v2197
    %3391 = vmatpush.bf16.msra.mxu0 %v2191
    %3392 = vmatpush.bf16.msra.mxu0 %v2185
    %3393 = vmatpush.bf16.msra.mxu0 %v2179
    %3394 = vmatpush.bf16.msra.mxu0 %v2173
    %3395 = vmatpush.bf16.msra.mxu0 %v2167
    %3396 = vmatmul.bf16.gmra.mxu0 %v463
    %v3397 = vpop.f32.mrf.mxu0
    %v3398 = vadd.f32 %v3384, %v3397
    %v3399 = vpop.f32.mrf.mxu0
    %v3400 = vadd.f32 %v3386, %v3399
    %3401 = vdwg.mxu0
    %3402 = vmatpush.bf16.msra.mxu0 %v2257
    %3403 = vmatpush.bf16.msra.mxu0 %v2251
    %3404 = vmatpush.bf16.msra.mxu0 %v2245
    %3405 = vmatpush.bf16.msra.mxu0 %v2239
    %3406 = vmatpush.bf16.msra.mxu0 %v2233
    %3407 = vmatpush.bf16.msra.mxu0 %v2227
    %3408 = vmatpush.bf16.msra.mxu0 %v2221
    %3409 = vmatpush.bf16.msra.mxu0 %v2215
    %3410 = vmatmul.bf16.gmra.mxu0 %v464
    %v3411 = vpop.f32.mrf.mxu0
    %v3412 = vadd.f32 %v3398, %v3411
    %v3413 = vpop.f32.mrf.mxu0
    %v3414 = vadd.f32 %v3400, %v3413
    %3415 = vdwg.mxu0
    %3416 = vmatpush.bf16.msra.mxu0 %v2305
    %3417 = vmatpush.bf16.msra.mxu0 %v2299
    %3418 = vmatpush.bf16.msra.mxu0 %v2293
    %3419 = vmatpush.bf16.msra.mxu0 %v2287
    %3420 = vmatpush.bf16.msra.mxu0 %v2281
    %3421 = vmatpush.bf16.msra.mxu0 %v2275
    %3422 = vmatpush.bf16.msra.mxu0 %v2269
    %3423 = vmatpush.bf16.msra.mxu0 %v2263
    %3424 = vmatmul.bf16.gmra.mxu0 %v465
    %v3425 = vpop.f32.mrf.mxu0
    %v3426 = vadd.f32 %v3412, %v3425
    %v3427 = vpop.f32.mrf.mxu0
    %v3428 = vadd.f32 %v3414, %v3427
    %3429 = vdwg.mxu0
    %3430 = vmatpush.bf16.msra.mxu0 %v2353
    %3431 = vmatpush.bf16.msra.mxu0 %v2347
    %3432 = vmatpush.bf16.msra.mxu0 %v2341
    %3433 = vmatpush.bf16.msra.mxu0 %v2335
    %3434 = vmatpush.bf16.msra.mxu0 %v2329
    %3435 = vmatpush.bf16.msra.mxu0 %v2323
    %3436 = vmatpush.bf16.msra.mxu0 %v2317
    %3437 = vmatpush.bf16.msra.mxu0 %v2311
    %3438 = vmatmul.bf16.gmra.mxu0 %v466
    %v3439 = vpop.f32.mrf.mxu0
    %v3440 = vadd.f32 %v3426, %v3439
    %v3441 = vpop.f32.mrf.mxu0
    %v3442 = vadd.f32 %v3428, %v3441
    %3443 = vdwg.mxu0
    %3444 = vmatpush.bf16.msra.mxu0 %v2401
    %3445 = vmatpush.bf16.msra.mxu0 %v2395
    %3446 = vmatpush.bf16.msra.mxu0 %v2389
    %3447 = vmatpush.bf16.msra.mxu0 %v2383
    %3448 = vmatpush.bf16.msra.mxu0 %v2377
    %3449 = vmatpush.bf16.msra.mxu0 %v2371
    %3450 = vmatpush.bf16.msra.mxu0 %v2365
    %3451 = vmatpush.bf16.msra.mxu0 %v2359
    %3452 = vmatmul.bf16.gmra.mxu0 %v467
    %v3453 = vpop.f32.mrf.mxu0
    %v3454 = vadd.f32 %v3440, %v3453
    %v3455 = vpop.f32.mrf.mxu0
    %v3456 = vadd.f32 %v3442, %v3455
    %3457 = vdwg.mxu0
    %v3458 = vmax.f32 %v2894, 0.0
    %v3459 = vmax.f32 %v3006, 0.0
    %v3460 = vmax.f32 %v3118, 0.0
    %v3461 = vmax.f32 %v3230, 0.0
    %v3462 = vmax.f32 %v3342, 0.0
    %v3463 = vmax.f32 %v3454, 0.0
    %v3464 = vmax.f32 %v2896, 0.0
    %v3465 = vmax.f32 %v3008, 0.0
    %v3466 = vmax.f32 %v3120, 0.0
    %v3467 = vmax.f32 %v3232, 0.0
    %v3468 = vmax.f32 %v3344, 0.0
    %v3469 = vmax.f32 %v3456, 0.0
    %v3470 = vpack.c.bf16 %v3464, %v3458
    %v3471 = vpack.c.bf16 %v3465, %v3459
    %v3472 = vpack.c.bf16 %v3466, %v3460
    %v3473 = vpack.c.bf16 %v3467, %v3461
    %v3474 = vpack.c.bf16 %v3468, %v3462
    %v3475 = vpack.c.bf16 %v3469, %v3463
    %v3476 = vld [vmem:[#allocation9] sm:$0xff]
    %v3477 = vld [vmem:[#allocation9 + $0x8] sm:$0xff]
    %v3478 = vld [vmem:[#allocation9 + $0x10] sm:$0xff]
    %v3479 = vld [vmem:[#allocation9 + $0x18] sm:$0xff]
    %v3480 = vld [vmem:[#allocation9 + $0x20] sm:$0xff]
    %v3481 = vld [vmem:[#allocation9 + $0x28] sm:$0xff]
    %v3482 = vld [vmem:[#allocation9 + $0x30] sm:$0xff]
    %v3483 = vld [vmem:[#allocation9 + $0x38] sm:$0xff]
    %v3484 = vld [vmem:[#allocation9 + $0x40] sm:$0xff]
    %v3485 = vld [vmem:[#allocation9 + $0x48] sm:$0xff]
    %v3486 = vld [vmem:[#allocation9 + $0x50] sm:$0xff]
    %v3487 = vld [vmem:[#allocation9 + $0x58] sm:$0xff]
    %v3488 = vld [vmem:[#allocation9 + $0x60] sm:$0xff]
    %v3489 = vld [vmem:[#allocation9 + $0x68] sm:$0xff]
    %v3490 = vld [vmem:[#allocation9 + $0x70] sm:$0xff]
    %v3491 = vld [vmem:[#allocation9 + $0x78] sm:$0xff]
    %v3492 = vld [vmem:[#allocation9 + $0x80] sm:$0xff]
    %v3493 = vld [vmem:[#allocation9 + $0x88] sm:$0xff]
    %v3494 = vld [vmem:[#allocation9 + $0x90] sm:$0xff]
    %v3495 = vld [vmem:[#allocation9 + $0x98] sm:$0xff]
    %v3496 = vld [vmem:[#allocation9 + $0xa0] sm:$0xff]
    %v3497 = vld [vmem:[#allocation9 + $0xa8] sm:$0xff]
    %v3498 = vld [vmem:[#allocation9 + $0xb0] sm:$0xff]
    %v3499 = vld [vmem:[#allocation9 + $0xb8] sm:$0xff]
    %v3500 = vld [vmem:[#allocation9 + $0xc0] sm:$0xff]
    %v3501 = vld [vmem:[#allocation9 + $0xc8] sm:$0xff]
    %v3502 = vld [vmem:[#allocation9 + $0xd0] sm:$0xff]
    %v3503 = vld [vmem:[#allocation9 + $0xd8] sm:$0xff]
    %v3504 = vld [vmem:[#allocation9 + $0xe0] sm:$0xff]
    %v3505 = vld [vmem:[#allocation9 + $0xe8] sm:$0xff]
    %v3506 = vld [vmem:[#allocation9 + $0xf0] sm:$0xff]
    %v3507 = vld [vmem:[#allocation9 + $0xf8] sm:$0xff]
    %v3508 = vld [vmem:[#allocation9 + $0x100] sm:$0xff]
    %v3509 = vld [vmem:[#allocation9 + $0x108] sm:$0xff]
    %v3510 = vld [vmem:[#allocation9 + $0x110] sm:$0xff]
    %v3511 = vld [vmem:[#allocation9 + $0x118] sm:$0xff]
    %v3512 = vld [vmem:[#allocation9 + $0x120] sm:$0xff]
    %v3513 = vld [vmem:[#allocation9 + $0x128] sm:$0xff]
    %v3514 = vld [vmem:[#allocation9 + $0x130] sm:$0xff]
    %v3515 = vld [vmem:[#allocation9 + $0x138] sm:$0xff]
    %v3516 = vld [vmem:[#allocation9 + $0x140] sm:$0xff]
    %v3517 = vld [vmem:[#allocation9 + $0x148] sm:$0xff]
    %v3518 = vld [vmem:[#allocation9 + $0x150] sm:$0xff]
    %v3519 = vld [vmem:[#allocation9 + $0x158] sm:$0xff]
    %v3520 = vld [vmem:[#allocation9 + $0x160] sm:$0xff]
    %v3521 = vld [vmem:[#allocation9 + $0x168] sm:$0xff]
    %v3522 = vld [vmem:[#allocation9 + $0x170] sm:$0xff]
    %v3523 = vld [vmem:[#allocation9 + $0x178] sm:$0xff]
    %v3524 = vld [vmem:[#allocation9 + $0x180] sm:$0xff]
    %v3525 = vld [vmem:[#allocation9 + $0x188] sm:$0xff]
    %v3526 = vld [vmem:[#allocation9 + $0x190] sm:$0xff]
    %v3527 = vld [vmem:[#allocation9 + $0x198] sm:$0xff]
    %v3528 = vld [vmem:[#allocation9 + $0x1a0] sm:$0xff]
    %v3529 = vld [vmem:[#allocation9 + $0x1a8] sm:$0xff]
    %v3530 = vld [vmem:[#allocation9 + $0x1b0] sm:$0xff]
    %v3531 = vld [vmem:[#allocation9 + $0x1b8] sm:$0xff]
    %v3532 = vld [vmem:[#allocation9 + $0x1c0] sm:$0xff]
    %v3533 = vld [vmem:[#allocation9 + $0x1c8] sm:$0xff]
    %v3534 = vld [vmem:[#allocation9 + $0x1d0] sm:$0xff]
    %v3535 = vld [vmem:[#allocation9 + $0x1d8] sm:$0xff]
    %v3536 = vld [vmem:[#allocation9 + $0x1e0] sm:$0xff]
    %v3537 = vld [vmem:[#allocation9 + $0x1e8] sm:$0xff]
    %v3538 = vld [vmem:[#allocation9 + $0x1f0] sm:$0xff]
    %v3539 = vld [vmem:[#allocation9 + $0x1f8] sm:$0xff]
    %v3540 = vld [vmem:[#allocation9 + $0x200] sm:$0xff]
    %v3541 = vld [vmem:[#allocation9 + $0x208] sm:$0xff]
    %v3542 = vld [vmem:[#allocation9 + $0x210] sm:$0xff]
    %v3543 = vld [vmem:[#allocation9 + $0x218] sm:$0xff]
    %v3544 = vld [vmem:[#allocation9 + $0x220] sm:$0xff]
    %v3545 = vld [vmem:[#allocation9 + $0x228] sm:$0xff]
    %v3546 = vld [vmem:[#allocation9 + $0x230] sm:$0xff]
    %v3547 = vld [vmem:[#allocation9 + $0x238] sm:$0xff]
    %v3548 = vld [vmem:[#allocation9 + $0x240] sm:$0xff]
    %v3549 = vld [vmem:[#allocation9 + $0x248] sm:$0xff]
    %v3550 = vld [vmem:[#allocation9 + $0x250] sm:$0xff]
    %v3551 = vld [vmem:[#allocation9 + $0x258] sm:$0xff]
    %v3552 = vld [vmem:[#allocation9 + $0x260] sm:$0xff]
    %v3553 = vld [vmem:[#allocation9 + $0x268] sm:$0xff]
    %v3554 = vld [vmem:[#allocation9 + $0x270] sm:$0xff]
    %v3555 = vld [vmem:[#allocation9 + $0x278] sm:$0xff]
    %v3556 = vld [vmem:[#allocation9 + $0x280] sm:$0xff]
    %v3557 = vld [vmem:[#allocation9 + $0x288] sm:$0xff]
    %v3558 = vld [vmem:[#allocation9 + $0x290] sm:$0xff]
    %v3559 = vld [vmem:[#allocation9 + $0x298] sm:$0xff]
    %v3560 = vld [vmem:[#allocation9 + $0x2a0] sm:$0xff]
    %v3561 = vld [vmem:[#allocation9 + $0x2a8] sm:$0xff]
    %v3562 = vld [vmem:[#allocation9 + $0x2b0] sm:$0xff]
    %v3563 = vld [vmem:[#allocation9 + $0x2b8] sm:$0xff]
    %v3564 = vld [vmem:[#allocation9 + $0x2c0] sm:$0xff]
    %v3565 = vld [vmem:[#allocation9 + $0x2c8] sm:$0xff]
    %v3566 = vld [vmem:[#allocation9 + $0x2d0] sm:$0xff]
    %v3567 = vld [vmem:[#allocation9 + $0x2d8] sm:$0xff]
    %v3568 = vld [vmem:[#allocation9 + $0x2e0] sm:$0xff]
    %v3569 = vld [vmem:[#allocation9 + $0x2e8] sm:$0xff]
    %v3570 = vld [vmem:[#allocation9 + $0x2f0] sm:$0xff]
    %v3571 = vld [vmem:[#allocation9 + $0x2f8] sm:$0xff]
    %v3572 = vld [vmem:[#allocation9 + $0x300] sm:$0xff]
    %v3573 = vld [vmem:[#allocation9 + $0x308] sm:$0xff]
    %v3574 = vld [vmem:[#allocation9 + $0x310] sm:$0xff]
    %v3575 = vld [vmem:[#allocation9 + $0x318] sm:$0xff]
    %v3576 = vld [vmem:[#allocation9 + $0x320] sm:$0xff]
    %v3577 = vld [vmem:[#allocation9 + $0x328] sm:$0xff]
    %v3578 = vld [vmem:[#allocation9 + $0x330] sm:$0xff]
    %v3579 = vld [vmem:[#allocation9 + $0x338] sm:$0xff]
    %v3580 = vld [vmem:[#allocation9 + $0x340] sm:$0xff]
    %v3581 = vld [vmem:[#allocation9 + $0x348] sm:$0xff]
    %v3582 = vld [vmem:[#allocation9 + $0x350] sm:$0xff]
    %v3583 = vld [vmem:[#allocation9 + $0x358] sm:$0xff]
    %v3584 = vld [vmem:[#allocation9 + $0x360] sm:$0xff]
    %v3585 = vld [vmem:[#allocation9 + $0x368] sm:$0xff]
    %v3586 = vld [vmem:[#allocation9 + $0x370] sm:$0xff]
    %v3587 = vld [vmem:[#allocation9 + $0x378] sm:$0xff]
    %v3588 = vld [vmem:[#allocation9 + $0x380] sm:$0xff]
    %v3589 = vld [vmem:[#allocation9 + $0x388] sm:$0xff]
    %v3590 = vld [vmem:[#allocation9 + $0x390] sm:$0xff]
    %v3591 = vld [vmem:[#allocation9 + $0x398] sm:$0xff]
    %v3592 = vld [vmem:[#allocation9 + $0x3a0] sm:$0xff]
    %v3593 = vld [vmem:[#allocation9 + $0x3a8] sm:$0xff]
    %v3594 = vld [vmem:[#allocation9 + $0x3b0] sm:$0xff]
    %v3595 = vld [vmem:[#allocation9 + $0x3b8] sm:$0xff]
    %v3596 = vld [vmem:[#allocation9 + $0x3c0] sm:$0xff]
    %v3597 = vld [vmem:[#allocation9 + $0x3c8] sm:$0xff]
    %v3598 = vld [vmem:[#allocation9 + $0x3d0] sm:$0xff]
    %v3599 = vld [vmem:[#allocation9 + $0x3d8] sm:$0xff]
    %v3600 = vld [vmem:[#allocation9 + $0x3e0] sm:$0xff]
    %v3601 = vld [vmem:[#allocation9 + $0x3e8] sm:$0xff]
    %v3602 = vld [vmem:[#allocation9 + $0x3f0] sm:$0xff]
    %v3603 = vld [vmem:[#allocation9 + $0x3f8] sm:$0xff]
    %v3604 = vld [vmem:[#allocation9 + $0x400] sm:$0xff]
    %v3605 = vld [vmem:[#allocation9 + $0x408] sm:$0xff]
    %v3606 = vld [vmem:[#allocation9 + $0x410] sm:$0xff]
    %v3607 = vld [vmem:[#allocation9 + $0x418] sm:$0xff]
    %v3608 = vld [vmem:[#allocation9 + $0x420] sm:$0xff]
    %v3609 = vld [vmem:[#allocation9 + $0x428] sm:$0xff]
    %v3610 = vld [vmem:[#allocation9 + $0x430] sm:$0xff]
    %v3611 = vld [vmem:[#allocation9 + $0x438] sm:$0xff]
    %v3612 = vld [vmem:[#allocation9 + $0x440] sm:$0xff]
    %v3613 = vld [vmem:[#allocation9 + $0x448] sm:$0xff]
    %v3614 = vld [vmem:[#allocation9 + $0x450] sm:$0xff]
    %v3615 = vld [vmem:[#allocation9 + $0x458] sm:$0xff]
    %v3616 = vld [vmem:[#allocation9 + $0x460] sm:$0xff]
    %v3617 = vld [vmem:[#allocation9 + $0x468] sm:$0xff]
    %v3618 = vld [vmem:[#allocation9 + $0x470] sm:$0xff]
    %v3619 = vld [vmem:[#allocation9 + $0x478] sm:$0xff]
    %v3620 = vld [vmem:[#allocation9 + $0x480] sm:$0xff]
    %v3621 = vld [vmem:[#allocation9 + $0x488] sm:$0xff]
    %v3622 = vld [vmem:[#allocation9 + $0x490] sm:$0xff]
    %v3623 = vld [vmem:[#allocation9 + $0x498] sm:$0xff]
    %v3624 = vld [vmem:[#allocation9 + $0x4a0] sm:$0xff]
    %v3625 = vld [vmem:[#allocation9 + $0x4a8] sm:$0xff]
    %v3626 = vld [vmem:[#allocation9 + $0x4b0] sm:$0xff]
    %v3627 = vld [vmem:[#allocation9 + $0x4b8] sm:$0xff]
    %v3628 = vld [vmem:[#allocation9 + $0x4c0] sm:$0xff]
    %v3629 = vld [vmem:[#allocation9 + $0x4c8] sm:$0xff]
    %v3630 = vld [vmem:[#allocation9 + $0x4d0] sm:$0xff]
    %v3631 = vld [vmem:[#allocation9 + $0x4d8] sm:$0xff]
    %v3632 = vld [vmem:[#allocation9 + $0x4e0] sm:$0xff]
    %v3633 = vld [vmem:[#allocation9 + $0x4e8] sm:$0xff]
    %v3634 = vld [vmem:[#allocation9 + $0x4f0] sm:$0xff]
    %v3635 = vld [vmem:[#allocation9 + $0x4f8] sm:$0xff]
    %v3636 = vld [vmem:[#allocation9 + $0x500] sm:$0xff]
    %v3637 = vld [vmem:[#allocation9 + $0x508] sm:$0xff]
    %v3638 = vld [vmem:[#allocation9 + $0x510] sm:$0xff]
    %v3639 = vld [vmem:[#allocation9 + $0x518] sm:$0xff]
    %v3640 = vld [vmem:[#allocation9 + $0x520] sm:$0xff]
    %v3641 = vld [vmem:[#allocation9 + $0x528] sm:$0xff]
    %v3642 = vld [vmem:[#allocation9 + $0x530] sm:$0xff]
    %v3643 = vld [vmem:[#allocation9 + $0x538] sm:$0xff]
    %v3644 = vld [vmem:[#allocation9 + $0x540] sm:$0xff]
    %v3645 = vld [vmem:[#allocation9 + $0x548] sm:$0xff]
    %v3646 = vld [vmem:[#allocation9 + $0x550] sm:$0xff]
    %v3647 = vld [vmem:[#allocation9 + $0x558] sm:$0xff]
    %v3648 = vld [vmem:[#allocation9 + $0x560] sm:$0xff]
    %v3649 = vld [vmem:[#allocation9 + $0x568] sm:$0xff]
    %v3650 = vld [vmem:[#allocation9 + $0x570] sm:$0xff]
    %v3651 = vld [vmem:[#allocation9 + $0x578] sm:$0xff]
    %v3652 = vld [vmem:[#allocation9 + $0x580] sm:$0xff]
    %v3653 = vld [vmem:[#allocation9 + $0x588] sm:$0xff]
    %v3654 = vld [vmem:[#allocation9 + $0x590] sm:$0xff]
    %v3655 = vld [vmem:[#allocation9 + $0x598] sm:$0xff]
    %v3656 = vld [vmem:[#allocation9 + $0x5a0] sm:$0xff]
    %v3657 = vld [vmem:[#allocation9 + $0x5a8] sm:$0xff]
    %v3658 = vld [vmem:[#allocation9 + $0x5b0] sm:$0xff]
    %v3659 = vld [vmem:[#allocation9 + $0x5b8] sm:$0xff]
    %v3660 = vld [vmem:[#allocation9 + $0x5c0] sm:$0xff]
    %v3661 = vld [vmem:[#allocation9 + $0x5c8] sm:$0xff]
    %v3662 = vld [vmem:[#allocation9 + $0x5d0] sm:$0xff]
    %v3663 = vld [vmem:[#allocation9 + $0x5d8] sm:$0xff]
    %v3664 = vld [vmem:[#allocation9 + $0x5e0] sm:$0xff]
    %v3665 = vld [vmem:[#allocation9 + $0x5e8] sm:$0xff]
    %v3666 = vld [vmem:[#allocation9 + $0x5f0] sm:$0xff]
    %v3667 = vld [vmem:[#allocation9 + $0x5f8] sm:$0xff]
    %v3668 = vld [vmem:[#allocation10] sm:$0xf]
    %v3670 = vperm.slane %v3668, 0
    %v3671 = vperm.slane %v3668, 1
    %v3672 = vperm.slane %v3668, 2
    %v3673 = vperm.slane %v3668, 3
    %v3870 = vunpack.c.l.b16 %v3476
    %v3871 = vunpack.c.h.b16 %v3476
    %v3872 = vunpack.c.l.b16 %v3477
    %v3873 = vunpack.c.h.b16 %v3477
    %v3874 = vunpack.c.l.b16 %v3478
    %v3875 = vunpack.c.h.b16 %v3478
    %v3876 = vunpack.c.l.b16 %v3479
    %v3877 = vunpack.c.h.b16 %v3479
    %v3878 = vunpack.c.l.b16 %v3480
    %v3879 = vunpack.c.h.b16 %v3480
    %v3880 = vunpack.c.l.b16 %v3481
    %v3881 = vunpack.c.h.b16 %v3481
    %v3882 = vunpack.c.l.b16 %v3482
    %v3883 = vunpack.c.h.b16 %v3482
    %v3884 = vunpack.c.l.b16 %v3483
    %v3885 = vunpack.c.h.b16 %v3483
    %v3886 = vunpack.c.l.b16 %v3484
    %v3887 = vunpack.c.h.b16 %v3484
    %v3888 = vunpack.c.l.b16 %v3485
    %v3889 = vunpack.c.h.b16 %v3485
    %v3890 = vunpack.c.l.b16 %v3486
    %v3891 = vunpack.c.h.b16 %v3486
    %v3892 = vunpack.c.l.b16 %v3487
    %v3893 = vunpack.c.h.b16 %v3487
    %v3894 = vunpack.c.l.b16 %v3488
    %v3895 = vunpack.c.h.b16 %v3488
    %v3896 = vunpack.c.l.b16 %v3489
    %v3897 = vunpack.c.h.b16 %v3489
    %v3898 = vunpack.c.l.b16 %v3490
    %v3899 = vunpack.c.h.b16 %v3490
    %v3900 = vunpack.c.l.b16 %v3491
    %v3901 = vunpack.c.h.b16 %v3491
    %v3902 = vunpack.c.l.b16 %v3492
    %v3903 = vunpack.c.h.b16 %v3492
    %v3904 = vunpack.c.l.b16 %v3493
    %v3905 = vunpack.c.h.b16 %v3493
    %v3906 = vunpack.c.l.b16 %v3494
    %v3907 = vunpack.c.h.b16 %v3494
    %v3908 = vunpack.c.l.b16 %v3495
    %v3909 = vunpack.c.h.b16 %v3495
    %v3910 = vunpack.c.l.b16 %v3496
    %v3911 = vunpack.c.h.b16 %v3496
    %v3912 = vunpack.c.l.b16 %v3497
    %v3913 = vunpack.c.h.b16 %v3497
    %v3914 = vunpack.c.l.b16 %v3498
    %v3915 = vunpack.c.h.b16 %v3498
    %v3916 = vunpack.c.l.b16 %v3499
    %v3917 = vunpack.c.h.b16 %v3499
    %v3918 = vunpack.c.l.b16 %v3500
    %v3919 = vunpack.c.h.b16 %v3500
    %v3920 = vunpack.c.l.b16 %v3501
    %v3921 = vunpack.c.h.b16 %v3501
    %v3922 = vunpack.c.l.b16 %v3502
    %v3923 = vunpack.c.h.b16 %v3502
    %v3924 = vunpack.c.l.b16 %v3503
    %v3925 = vunpack.c.h.b16 %v3503
    %v3926 = vunpack.c.l.b16 %v3504
    %v3927 = vunpack.c.h.b16 %v3504
    %v3928 = vunpack.c.l.b16 %v3505
    %v3929 = vunpack.c.h.b16 %v3505
    %v3930 = vunpack.c.l.b16 %v3506
    %v3931 = vunpack.c.h.b16 %v3506
    %v3932 = vunpack.c.l.b16 %v3507
    %v3933 = vunpack.c.h.b16 %v3507
    %v3934 = vunpack.c.l.b16 %v3508
    %v3935 = vunpack.c.h.b16 %v3508
    %v3936 = vunpack.c.l.b16 %v3509
    %v3937 = vunpack.c.h.b16 %v3509
    %v3938 = vunpack.c.l.b16 %v3510
    %v3939 = vunpack.c.h.b16 %v3510
    %v3940 = vunpack.c.l.b16 %v3511
    %v3941 = vunpack.c.h.b16 %v3511
    %v3942 = vunpack.c.l.b16 %v3512
    %v3943 = vunpack.c.h.b16 %v3512
    %v3944 = vunpack.c.l.b16 %v3513
    %v3945 = vunpack.c.h.b16 %v3513
    %v3946 = vunpack.c.l.b16 %v3514
    %v3947 = vunpack.c.h.b16 %v3514
    %v3948 = vunpack.c.l.b16 %v3515
    %v3949 = vunpack.c.h.b16 %v3515
    %v3950 = vunpack.c.l.b16 %v3516
    %v3951 = vunpack.c.h.b16 %v3516
    %v3952 = vunpack.c.l.b16 %v3517
    %v3953 = vunpack.c.h.b16 %v3517
    %v3954 = vunpack.c.l.b16 %v3518
    %v3955 = vunpack.c.h.b16 %v3518
    %v3956 = vunpack.c.l.b16 %v3519
    %v3957 = vunpack.c.h.b16 %v3519
    %v3958 = vunpack.c.l.b16 %v3520
    %v3959 = vunpack.c.h.b16 %v3520
    %v3960 = vunpack.c.l.b16 %v3521
    %v3961 = vunpack.c.h.b16 %v3521
    %v3962 = vunpack.c.l.b16 %v3522
    %v3963 = vunpack.c.h.b16 %v3522
    %v3964 = vunpack.c.l.b16 %v3523
    %v3965 = vunpack.c.h.b16 %v3523
    %v3966 = vunpack.c.l.b16 %v3524
    %v3967 = vunpack.c.h.b16 %v3524
    %v3968 = vunpack.c.l.b16 %v3525
    %v3969 = vunpack.c.h.b16 %v3525
    %v3970 = vunpack.c.l.b16 %v3526
    %v3971 = vunpack.c.h.b16 %v3526
    %v3972 = vunpack.c.l.b16 %v3527
    %v3973 = vunpack.c.h.b16 %v3527
    %v3974 = vunpack.c.l.b16 %v3528
    %v3975 = vunpack.c.h.b16 %v3528
    %v3976 = vunpack.c.l.b16 %v3529
    %v3977 = vunpack.c.h.b16 %v3529
    %v3978 = vunpack.c.l.b16 %v3530
    %v3979 = vunpack.c.h.b16 %v3530
    %v3980 = vunpack.c.l.b16 %v3531
    %v3981 = vunpack.c.h.b16 %v3531
    %v3982 = vunpack.c.l.b16 %v3532
    %v3983 = vunpack.c.h.b16 %v3532
    %v3984 = vunpack.c.l.b16 %v3533
    %v3985 = vunpack.c.h.b16 %v3533
    %v3986 = vunpack.c.l.b16 %v3534
    %v3987 = vunpack.c.h.b16 %v3534
    %v3988 = vunpack.c.l.b16 %v3535
    %v3989 = vunpack.c.h.b16 %v3535
    %v3990 = vunpack.c.l.b16 %v3536
    %v3991 = vunpack.c.h.b16 %v3536
    %v3992 = vunpack.c.l.b16 %v3537
    %v3993 = vunpack.c.h.b16 %v3537
    %v3994 = vunpack.c.l.b16 %v3538
    %v3995 = vunpack.c.h.b16 %v3538
    %v3996 = vunpack.c.l.b16 %v3539
    %v3997 = vunpack.c.h.b16 %v3539
    %v3998 = vunpack.c.l.b16 %v3540
    %v3999 = vunpack.c.h.b16 %v3540
    %v4000 = vunpack.c.l.b16 %v3541
    %v4001 = vunpack.c.h.b16 %v3541
    %v4002 = vunpack.c.l.b16 %v3542
    %v4003 = vunpack.c.h.b16 %v3542
    %v4004 = vunpack.c.l.b16 %v3543
    %v4005 = vunpack.c.h.b16 %v3543
    %v4006 = vunpack.c.l.b16 %v3544
    %v4007 = vunpack.c.h.b16 %v3544
    %v4008 = vunpack.c.l.b16 %v3545
    %v4009 = vunpack.c.h.b16 %v3545
    %v4010 = vunpack.c.l.b16 %v3546
    %v4011 = vunpack.c.h.b16 %v3546
    %v4012 = vunpack.c.l.b16 %v3547
    %v4013 = vunpack.c.h.b16 %v3547
    %v4014 = vunpack.c.l.b16 %v3548
    %v4015 = vunpack.c.h.b16 %v3548
    %v4016 = vunpack.c.l.b16 %v3549
    %v4017 = vunpack.c.h.b16 %v3549
    %v4018 = vunpack.c.l.b16 %v3550
    %v4019 = vunpack.c.h.b16 %v3550
    %v4020 = vunpack.c.l.b16 %v3551
    %v4021 = vunpack.c.h.b16 %v3551
    %v4022 = vunpack.c.l.b16 %v3552
    %v4023 = vunpack.c.h.b16 %v3552
    %v4024 = vunpack.c.l.b16 %v3553
    %v4025 = vunpack.c.h.b16 %v3553
    %v4026 = vunpack.c.l.b16 %v3554
    %v4027 = vunpack.c.h.b16 %v3554
    %v4028 = vunpack.c.l.b16 %v3555
    %v4029 = vunpack.c.h.b16 %v3555
    %v4030 = vunpack.c.l.b16 %v3556
    %v4031 = vunpack.c.h.b16 %v3556
    %v4032 = vunpack.c.l.b16 %v3557
    %v4033 = vunpack.c.h.b16 %v3557
    %v4034 = vunpack.c.l.b16 %v3558
    %v4035 = vunpack.c.h.b16 %v3558
    %v4036 = vunpack.c.l.b16 %v3559
    %v4037 = vunpack.c.h.b16 %v3559
    %v4038 = vunpack.c.l.b16 %v3560
    %v4039 = vunpack.c.h.b16 %v3560
    %v4040 = vunpack.c.l.b16 %v3561
    %v4041 = vunpack.c.h.b16 %v3561
    %v4042 = vunpack.c.l.b16 %v3562
    %v4043 = vunpack.c.h.b16 %v3562
    %v4044 = vunpack.c.l.b16 %v3563
    %v4045 = vunpack.c.h.b16 %v3563
    %v4046 = vunpack.c.l.b16 %v3564
    %v4047 = vunpack.c.h.b16 %v3564
    %v4048 = vunpack.c.l.b16 %v3565
    %v4049 = vunpack.c.h.b16 %v3565
    %v4050 = vunpack.c.l.b16 %v3566
    %v4051 = vunpack.c.h.b16 %v3566
    %v4052 = vunpack.c.l.b16 %v3567
    %v4053 = vunpack.c.h.b16 %v3567
    %v4054 = vunpack.c.l.b16 %v3568
    %v4055 = vunpack.c.h.b16 %v3568
    %v4056 = vunpack.c.l.b16 %v3569
    %v4057 = vunpack.c.h.b16 %v3569
    %v4058 = vunpack.c.l.b16 %v3570
    %v4059 = vunpack.c.h.b16 %v3570
    %v4060 = vunpack.c.l.b16 %v3571
    %v4061 = vunpack.c.h.b16 %v3571
    %v4062 = vunpack.c.l.b16 %v3572
    %v4063 = vunpack.c.h.b16 %v3572
    %v4064 = vunpack.c.l.b16 %v3573
    %v4065 = vunpack.c.h.b16 %v3573
    %v4066 = vunpack.c.l.b16 %v3574
    %v4067 = vunpack.c.h.b16 %v3574
    %v4068 = vunpack.c.l.b16 %v3575
    %v4069 = vunpack.c.h.b16 %v3575
    %v4070 = vunpack.c.l.b16 %v3576
    %v4071 = vunpack.c.h.b16 %v3576
    %v4072 = vunpack.c.l.b16 %v3577
    %v4073 = vunpack.c.h.b16 %v3577
    %v4074 = vunpack.c.l.b16 %v3578
    %v4075 = vunpack.c.h.b16 %v3578
    %v4076 = vunpack.c.l.b16 %v3579
    %v4077 = vunpack.c.h.b16 %v3579
    %v4078 = vunpack.c.l.b16 %v3580
    %v4079 = vunpack.c.h.b16 %v3580
    %v4080 = vunpack.c.l.b16 %v3581
    %v4081 = vunpack.c.h.b16 %v3581
    %v4082 = vunpack.c.l.b16 %v3582
    %v4083 = vunpack.c.h.b16 %v3582
    %v4084 = vunpack.c.l.b16 %v3583
    %v4085 = vunpack.c.h.b16 %v3583
    %v4086 = vunpack.c.l.b16 %v3584
    %v4087 = vunpack.c.h.b16 %v3584
    %v4088 = vunpack.c.l.b16 %v3585
    %v4089 = vunpack.c.h.b16 %v3585
    %v4090 = vunpack.c.l.b16 %v3586
    %v4091 = vunpack.c.h.b16 %v3586
    %v4092 = vunpack.c.l.b16 %v3587
    %v4093 = vunpack.c.h.b16 %v3587
    %v4094 = vunpack.c.l.b16 %v3588
    %v4095 = vunpack.c.h.b16 %v3588
    %v4096 = vunpack.c.l.b16 %v3589
    %v4097 = vunpack.c.h.b16 %v3589
    %v4098 = vunpack.c.l.b16 %v3590
    %v4099 = vunpack.c.h.b16 %v3590
    %v4100 = vunpack.c.l.b16 %v3591
    %v4101 = vunpack.c.h.b16 %v3591
    %v4102 = vunpack.c.l.b16 %v3592
    %v4103 = vunpack.c.h.b16 %v3592
    %v4104 = vunpack.c.l.b16 %v3593
    %v4105 = vunpack.c.h.b16 %v3593
    %v4106 = vunpack.c.l.b16 %v3594
    %v4107 = vunpack.c.h.b16 %v3594
    %v4108 = vunpack.c.l.b16 %v3595
    %v4109 = vunpack.c.h.b16 %v3595
    %v4110 = vunpack.c.l.b16 %v3596
    %v4111 = vunpack.c.h.b16 %v3596
    %v4112 = vunpack.c.l.b16 %v3597
    %v4113 = vunpack.c.h.b16 %v3597
    %v4114 = vunpack.c.l.b16 %v3598
    %v4115 = vunpack.c.h.b16 %v3598
    %v4116 = vunpack.c.l.b16 %v3599
    %v4117 = vunpack.c.h.b16 %v3599
    %v4118 = vunpack.c.l.b16 %v3600
    %v4119 = vunpack.c.h.b16 %v3600
    %v4120 = vunpack.c.l.b16 %v3601
    %v4121 = vunpack.c.h.b16 %v3601
    %v4122 = vunpack.c.l.b16 %v3602
    %v4123 = vunpack.c.h.b16 %v3602
    %v4124 = vunpack.c.l.b16 %v3603
    %v4125 = vunpack.c.h.b16 %v3603
    %v4126 = vunpack.c.l.b16 %v3604
    %v4127 = vunpack.c.h.b16 %v3604
    %v4128 = vunpack.c.l.b16 %v3605
    %v4129 = vunpack.c.h.b16 %v3605
    %v4130 = vunpack.c.l.b16 %v3606
    %v4131 = vunpack.c.h.b16 %v3606
    %v4132 = vunpack.c.l.b16 %v3607
    %v4133 = vunpack.c.h.b16 %v3607
    %v4134 = vunpack.c.l.b16 %v3608
    %v4135 = vunpack.c.h.b16 %v3608
    %v4136 = vunpack.c.l.b16 %v3609
    %v4137 = vunpack.c.h.b16 %v3609
    %v4138 = vunpack.c.l.b16 %v3610
    %v4139 = vunpack.c.h.b16 %v3610
    %v4140 = vunpack.c.l.b16 %v3611
    %v4141 = vunpack.c.h.b16 %v3611
    %v4142 = vunpack.c.l.b16 %v3612
    %v4143 = vunpack.c.h.b16 %v3612
    %v4144 = vunpack.c.l.b16 %v3613
    %v4145 = vunpack.c.h.b16 %v3613
    %v4146 = vunpack.c.l.b16 %v3614
    %v4147 = vunpack.c.h.b16 %v3614
    %v4148 = vunpack.c.l.b16 %v3615
    %v4149 = vunpack.c.h.b16 %v3615
    %v4150 = vunpack.c.l.b16 %v3616
    %v4151 = vunpack.c.h.b16 %v3616
    %v4152 = vunpack.c.l.b16 %v3617
    %v4153 = vunpack.c.h.b16 %v3617
    %v4154 = vunpack.c.l.b16 %v3618
    %v4155 = vunpack.c.h.b16 %v3618
    %v4156 = vunpack.c.l.b16 %v3619
    %v4157 = vunpack.c.h.b16 %v3619
    %v4158 = vunpack.c.l.b16 %v3620
    %v4159 = vunpack.c.h.b16 %v3620
    %v4160 = vunpack.c.l.b16 %v3621
    %v4161 = vunpack.c.h.b16 %v3621
    %v4162 = vunpack.c.l.b16 %v3622
    %v4163 = vunpack.c.h.b16 %v3622
    %v4164 = vunpack.c.l.b16 %v3623
    %v4165 = vunpack.c.h.b16 %v3623
    %v4166 = vunpack.c.l.b16 %v3624
    %v4167 = vunpack.c.h.b16 %v3624
    %v4168 = vunpack.c.l.b16 %v3625
    %v4169 = vunpack.c.h.b16 %v3625
    %v4170 = vunpack.c.l.b16 %v3626
    %v4171 = vunpack.c.h.b16 %v3626
    %v4172 = vunpack.c.l.b16 %v3627
    %v4173 = vunpack.c.h.b16 %v3627
    %v4174 = vunpack.c.l.b16 %v3628
    %v4175 = vunpack.c.h.b16 %v3628
    %v4176 = vunpack.c.l.b16 %v3629
    %v4177 = vunpack.c.h.b16 %v3629
    %v4178 = vunpack.c.l.b16 %v3630
    %v4179 = vunpack.c.h.b16 %v3630
    %v4180 = vunpack.c.l.b16 %v3631
    %v4181 = vunpack.c.h.b16 %v3631
    %v4182 = vunpack.c.l.b16 %v3632
    %v4183 = vunpack.c.h.b16 %v3632
    %v4184 = vunpack.c.l.b16 %v3633
    %v4185 = vunpack.c.h.b16 %v3633
    %v4186 = vunpack.c.l.b16 %v3634
    %v4187 = vunpack.c.h.b16 %v3634
    %v4188 = vunpack.c.l.b16 %v3635
    %v4189 = vunpack.c.h.b16 %v3635
    %v4190 = vunpack.c.l.b16 %v3636
    %v4191 = vunpack.c.h.b16 %v3636
    %v4192 = vunpack.c.l.b16 %v3637
    %v4193 = vunpack.c.h.b16 %v3637
    %v4194 = vunpack.c.l.b16 %v3638
    %v4195 = vunpack.c.h.b16 %v3638
    %v4196 = vunpack.c.l.b16 %v3639
    %v4197 = vunpack.c.h.b16 %v3639
    %v4198 = vunpack.c.l.b16 %v3640
    %v4199 = vunpack.c.h.b16 %v3640
    %v4200 = vunpack.c.l.b16 %v3641
    %v4201 = vunpack.c.h.b16 %v3641
    %v4202 = vunpack.c.l.b16 %v3642
    %v4203 = vunpack.c.h.b16 %v3642
    %v4204 = vunpack.c.l.b16 %v3643
    %v4205 = vunpack.c.h.b16 %v3643
    %v4206 = vunpack.c.l.b16 %v3644
    %v4207 = vunpack.c.h.b16 %v3644
    %v4208 = vunpack.c.l.b16 %v3645
    %v4209 = vunpack.c.h.b16 %v3645
    %v4210 = vunpack.c.l.b16 %v3646
    %v4211 = vunpack.c.h.b16 %v3646
    %v4212 = vunpack.c.l.b16 %v3647
    %v4213 = vunpack.c.h.b16 %v3647
    %v4214 = vunpack.c.l.b16 %v3648
    %v4215 = vunpack.c.h.b16 %v3648
    %v4216 = vunpack.c.l.b16 %v3649
    %v4217 = vunpack.c.h.b16 %v3649
    %v4218 = vunpack.c.l.b16 %v3650
    %v4219 = vunpack.c.h.b16 %v3650
    %v4220 = vunpack.c.l.b16 %v3651
    %v4221 = vunpack.c.h.b16 %v3651
    %v4222 = vunpack.c.l.b16 %v3652
    %v4223 = vunpack.c.h.b16 %v3652
    %v4224 = vunpack.c.l.b16 %v3653
    %v4225 = vunpack.c.h.b16 %v3653
    %v4226 = vunpack.c.l.b16 %v3654
    %v4227 = vunpack.c.h.b16 %v3654
    %v4228 = vunpack.c.l.b16 %v3655
    %v4229 = vunpack.c.h.b16 %v3655
    %v4230 = vunpack.c.l.b16 %v3656
    %v4231 = vunpack.c.h.b16 %v3656
    %v4232 = vunpack.c.l.b16 %v3657
    %v4233 = vunpack.c.h.b16 %v3657
    %v4234 = vunpack.c.l.b16 %v3658
    %v4235 = vunpack.c.h.b16 %v3658
    %v4236 = vunpack.c.l.b16 %v3659
    %v4237 = vunpack.c.h.b16 %v3659
    %v4238 = vunpack.c.l.b16 %v3660
    %v4239 = vunpack.c.h.b16 %v3660
    %v4240 = vunpack.c.l.b16 %v3661
    %v4241 = vunpack.c.h.b16 %v3661
    %v4242 = vunpack.c.l.b16 %v3662
    %v4243 = vunpack.c.h.b16 %v3662
    %v4244 = vunpack.c.l.b16 %v3663
    %v4245 = vunpack.c.h.b16 %v3663
    %v4246 = vunpack.c.l.b16 %v3664
    %v4247 = vunpack.c.h.b16 %v3664
    %v4248 = vunpack.c.l.b16 %v3665
    %v4249 = vunpack.c.h.b16 %v3665
    %v4250 = vunpack.c.l.b16 %v3666
    %v4251 = vunpack.c.h.b16 %v3666
    %v4252 = vunpack.c.l.b16 %v3667
    %v4253 = vunpack.c.h.b16 %v3667
    %v4254 = vpack.c.b16 %v3874, %v3870
    %v4255 = vpack.c.b16 %v3875, %v3871
    %v4256 = vpack.c.b16 %v3876, %v3872
    %v4257 = vpack.c.b16 %v3877, %v3873
    %v4258 = vpack.c.b16 %v3882, %v3878
    %v4259 = vpack.c.b16 %v3883, %v3879
    %v4260 = vpack.c.b16 %v3884, %v3880
    %v4261 = vpack.c.b16 %v3885, %v3881
    %v4262 = vpack.c.b16 %v3890, %v3886
    %v4263 = vpack.c.b16 %v3891, %v3887
    %v4264 = vpack.c.b16 %v3892, %v3888
    %v4265 = vpack.c.b16 %v3893, %v3889
    %v4266 = vpack.c.b16 %v3898, %v3894
    %v4267 = vpack.c.b16 %v3899, %v3895
    %v4268 = vpack.c.b16 %v3900, %v3896
    %v4269 = vpack.c.b16 %v3901, %v3897
    %v4270 = vpack.c.b16 %v3906, %v3902
    %v4271 = vpack.c.b16 %v3907, %v3903
    %v4272 = vpack.c.b16 %v3908, %v3904
    %v4273 = vpack.c.b16 %v3909, %v3905
    %v4274 = vpack.c.b16 %v3914, %v3910
    %v4275 = vpack.c.b16 %v3915, %v3911
    %v4276 = vpack.c.b16 %v3916, %v3912
    %v4277 = vpack.c.b16 %v3917, %v3913
    %v4278 = vpack.c.b16 %v3922, %v3918
    %v4279 = vpack.c.b16 %v3923, %v3919
    %v4280 = vpack.c.b16 %v3924, %v3920
    %v4281 = vpack.c.b16 %v3925, %v3921
    %v4282 = vpack.c.b16 %v3930, %v3926
    %v4283 = vpack.c.b16 %v3931, %v3927
    %v4284 = vpack.c.b16 %v3932, %v3928
    %v4285 = vpack.c.b16 %v3933, %v3929
    %v4286 = vpack.c.b16 %v3938, %v3934
    %v4287 = vpack.c.b16 %v3939, %v3935
    %v4288 = vpack.c.b16 %v3940, %v3936
    %v4289 = vpack.c.b16 %v3941, %v3937
    %v4290 = vpack.c.b16 %v3946, %v3942
    %v4291 = vpack.c.b16 %v3947, %v3943
    %v4292 = vpack.c.b16 %v3948, %v3944
    %v4293 = vpack.c.b16 %v3949, %v3945
    %v4294 = vpack.c.b16 %v3954, %v3950
    %v4295 = vpack.c.b16 %v3955, %v3951
    %v4296 = vpack.c.b16 %v3956, %v3952
    %v4297 = vpack.c.b16 %v3957, %v3953
    %v4298 = vpack.c.b16 %v3962, %v3958
    %v4299 = vpack.c.b16 %v3963, %v3959
    %v4300 = vpack.c.b16 %v3964, %v3960
    %v4301 = vpack.c.b16 %v3965, %v3961
    %v4302 = vpack.c.b16 %v3970, %v3966
    %v4303 = vpack.c.b16 %v3971, %v3967
    %v4304 = vpack.c.b16 %v3972, %v3968
    %v4305 = vpack.c.b16 %v3973, %v3969
    %v4306 = vpack.c.b16 %v3978, %v3974
    %v4307 = vpack.c.b16 %v3979, %v3975
    %v4308 = vpack.c.b16 %v3980, %v3976
    %v4309 = vpack.c.b16 %v3981, %v3977
    %v4310 = vpack.c.b16 %v3986, %v3982
    %v4311 = vpack.c.b16 %v3987, %v3983
    %v4312 = vpack.c.b16 %v3988, %v3984
    %v4313 = vpack.c.b16 %v3989, %v3985
    %v4314 = vpack.c.b16 %v3994, %v3990
    %v4315 = vpack.c.b16 %v3995, %v3991
    %v4316 = vpack.c.b16 %v3996, %v3992
    %v4317 = vpack.c.b16 %v3997, %v3993
    %v4318 = vpack.c.b16 %v4002, %v3998
    %v4319 = vpack.c.b16 %v4003, %v3999
    %v4320 = vpack.c.b16 %v4004, %v4000
    %v4321 = vpack.c.b16 %v4005, %v4001
    %v4322 = vpack.c.b16 %v4010, %v4006
    %v4323 = vpack.c.b16 %v4011, %v4007
    %v4324 = vpack.c.b16 %v4012, %v4008
    %v4325 = vpack.c.b16 %v4013, %v4009
    %v4326 = vpack.c.b16 %v4018, %v4014
    %v4327 = vpack.c.b16 %v4019, %v4015
    %v4328 = vpack.c.b16 %v4020, %v4016
    %v4329 = vpack.c.b16 %v4021, %v4017
    %v4330 = vpack.c.b16 %v4026, %v4022
    %v4331 = vpack.c.b16 %v4027, %v4023
    %v4332 = vpack.c.b16 %v4028, %v4024
    %v4333 = vpack.c.b16 %v4029, %v4025
    %v4334 = vpack.c.b16 %v4034, %v4030
    %v4335 = vpack.c.b16 %v4035, %v4031
    %v4336 = vpack.c.b16 %v4036, %v4032
    %v4337 = vpack.c.b16 %v4037, %v4033
    %v4338 = vpack.c.b16 %v4042, %v4038
    %v4339 = vpack.c.b16 %v4043, %v4039
    %v4340 = vpack.c.b16 %v4044, %v4040
    %v4341 = vpack.c.b16 %v4045, %v4041
    %v4342 = vpack.c.b16 %v4050, %v4046
    %v4343 = vpack.c.b16 %v4051, %v4047
    %v4344 = vpack.c.b16 %v4052, %v4048
    %v4345 = vpack.c.b16 %v4053, %v4049
    %v4346 = vpack.c.b16 %v4058, %v4054
    %v4347 = vpack.c.b16 %v4059, %v4055
    %v4348 = vpack.c.b16 %v4060, %v4056
    %v4349 = vpack.c.b16 %v4061, %v4057
    %v4350 = vpack.c.b16 %v4066, %v4062
    %v4351 = vpack.c.b16 %v4067, %v4063
    %v4352 = vpack.c.b16 %v4068, %v4064
    %v4353 = vpack.c.b16 %v4069, %v4065
    %v4354 = vpack.c.b16 %v4074, %v4070
    %v4355 = vpack.c.b16 %v4075, %v4071
    %v4356 = vpack.c.b16 %v4076, %v4072
    %v4357 = vpack.c.b16 %v4077, %v4073
    %v4358 = vpack.c.b16 %v4082, %v4078
    %v4359 = vpack.c.b16 %v4083, %v4079
    %v4360 = vpack.c.b16 %v4084, %v4080
    %v4361 = vpack.c.b16 %v4085, %v4081
    %v4362 = vpack.c.b16 %v4090, %v4086
    %v4363 = vpack.c.b16 %v4091, %v4087
    %v4364 = vpack.c.b16 %v4092, %v4088
    %v4365 = vpack.c.b16 %v4093, %v4089
    %v4366 = vpack.c.b16 %v4098, %v4094
    %v4367 = vpack.c.b16 %v4099, %v4095
    %v4368 = vpack.c.b16 %v4100, %v4096
    %v4369 = vpack.c.b16 %v4101, %v4097
    %v4370 = vpack.c.b16 %v4106, %v4102
    %v4371 = vpack.c.b16 %v4107, %v4103
    %v4372 = vpack.c.b16 %v4108, %v4104
    %v4373 = vpack.c.b16 %v4109, %v4105
    %v4374 = vpack.c.b16 %v4114, %v4110
    %v4375 = vpack.c.b16 %v4115, %v4111
    %v4376 = vpack.c.b16 %v4116, %v4112
    %v4377 = vpack.c.b16 %v4117, %v4113
    %v4378 = vpack.c.b16 %v4122, %v4118
    %v4379 = vpack.c.b16 %v4123, %v4119
    %v4380 = vpack.c.b16 %v4124, %v4120
    %v4381 = vpack.c.b16 %v4125, %v4121
    %v4382 = vpack.c.b16 %v4130, %v4126
    %v4383 = vpack.c.b16 %v4131, %v4127
    %v4384 = vpack.c.b16 %v4132, %v4128
    %v4385 = vpack.c.b16 %v4133, %v4129
    %v4386 = vpack.c.b16 %v4138, %v4134
    %v4387 = vpack.c.b16 %v4139, %v4135
    %v4388 = vpack.c.b16 %v4140, %v4136
    %v4389 = vpack.c.b16 %v4141, %v4137
    %v4390 = vpack.c.b16 %v4146, %v4142
    %v4391 = vpack.c.b16 %v4147, %v4143
    %v4392 = vpack.c.b16 %v4148, %v4144
    %v4393 = vpack.c.b16 %v4149, %v4145
    %v4394 = vpack.c.b16 %v4154, %v4150
    %v4395 = vpack.c.b16 %v4155, %v4151
    %v4396 = vpack.c.b16 %v4156, %v4152
    %v4397 = vpack.c.b16 %v4157, %v4153
    %v4398 = vpack.c.b16 %v4162, %v4158
    %v4399 = vpack.c.b16 %v4163, %v4159
    %v4400 = vpack.c.b16 %v4164, %v4160
    %v4401 = vpack.c.b16 %v4165, %v4161
    %v4402 = vpack.c.b16 %v4170, %v4166
    %v4403 = vpack.c.b16 %v4171, %v4167
    %v4404 = vpack.c.b16 %v4172, %v4168
    %v4405 = vpack.c.b16 %v4173, %v4169
    %v4406 = vpack.c.b16 %v4178, %v4174
    %v4407 = vpack.c.b16 %v4179, %v4175
    %v4408 = vpack.c.b16 %v4180, %v4176
    %v4409 = vpack.c.b16 %v4181, %v4177
    %v4410 = vpack.c.b16 %v4186, %v4182
    %v4411 = vpack.c.b16 %v4187, %v4183
    %v4412 = vpack.c.b16 %v4188, %v4184
    %v4413 = vpack.c.b16 %v4189, %v4185
    %v4414 = vpack.c.b16 %v4194, %v4190
    %v4415 = vpack.c.b16 %v4195, %v4191
    %v4416 = vpack.c.b16 %v4196, %v4192
    %v4417 = vpack.c.b16 %v4197, %v4193
    %v4418 = vpack.c.b16 %v4202, %v4198
    %v4419 = vpack.c.b16 %v4203, %v4199
    %v4420 = vpack.c.b16 %v4204, %v4200
    %v4421 = vpack.c.b16 %v4205, %v4201
    %v4422 = vpack.c.b16 %v4210, %v4206
    %v4423 = vpack.c.b16 %v4211, %v4207
    %v4424 = vpack.c.b16 %v4212, %v4208
    %v4425 = vpack.c.b16 %v4213, %v4209
    %v4426 = vpack.c.b16 %v4218, %v4214
    %v4427 = vpack.c.b16 %v4219, %v4215
    %v4428 = vpack.c.b16 %v4220, %v4216
    %v4429 = vpack.c.b16 %v4221, %v4217
    %v4430 = vpack.c.b16 %v4226, %v4222
    %v4431 = vpack.c.b16 %v4227, %v4223
    %v4432 = vpack.c.b16 %v4228, %v4224
    %v4433 = vpack.c.b16 %v4229, %v4225
    %v4434 = vpack.c.b16 %v4234, %v4230
    %v4435 = vpack.c.b16 %v4235, %v4231
    %v4436 = vpack.c.b16 %v4236, %v4232
    %v4437 = vpack.c.b16 %v4237, %v4233
    %v4438 = vpack.c.b16 %v4242, %v4238
    %v4439 = vpack.c.b16 %v4243, %v4239
    %v4440 = vpack.c.b16 %v4244, %v4240
    %v4441 = vpack.c.b16 %v4245, %v4241
    %v4442 = vpack.c.b16 %v4250, %v4246
    %v4443 = vpack.c.b16 %v4251, %v4247
    %v4444 = vpack.c.b16 %v4252, %v4248
    %v4445 = vpack.c.b16 %v4253, %v4249
    %4638 = vmatpush.bf16.msra.mxu0 %v4282
    %4639 = vmatpush.bf16.msra.mxu0 %v4278
    %4640 = vmatpush.bf16.msra.mxu0 %v4274
    %4641 = vmatpush.bf16.msra.mxu0 %v4270
    %4642 = vmatpush.bf16.msra.mxu0 %v4266
    %4643 = vmatpush.bf16.msra.mxu0 %v4262
    %4644 = vmatpush.bf16.msra.mxu0 %v4258
    %4645 = vmatpush.bf16.msra.mxu0 %v4254
    %4646 = vmatmul.bf16.gmra.mxu0 %v3470
    %v4647 = vpop.f32.mrf.mxu0
    %v4648 = vadd.f32 %v3670, %v4647
    %v4649 = vpop.f32.mrf.mxu0
    %v4650 = vadd.f32 %v3670, %v4649
    %4651 = vdwg.mxu0
    %4652 = vmatpush.bf16.msra.mxu0 %v4314
    %4653 = vmatpush.bf16.msra.mxu0 %v4310
    %4654 = vmatpush.bf16.msra.mxu0 %v4306
    %4655 = vmatpush.bf16.msra.mxu0 %v4302
    %4656 = vmatpush.bf16.msra.mxu0 %v4298
    %4657 = vmatpush.bf16.msra.mxu0 %v4294
    %4658 = vmatpush.bf16.msra.mxu0 %v4290
    %4659 = vmatpush.bf16.msra.mxu0 %v4286
    %4660 = vmatmul.bf16.gmra.mxu0 %v3471
    %v4661 = vpop.f32.mrf.mxu0
    %v4662 = vadd.f32 %v4648, %v4661
    %v4663 = vpop.f32.mrf.mxu0
    %v4664 = vadd.f32 %v4650, %v4663
    %4665 = vdwg.mxu0
    %4666 = vmatpush.bf16.msra.mxu0 %v4346
    %4667 = vmatpush.bf16.msra.mxu0 %v4342
    %4668 = vmatpush.bf16.msra.mxu0 %v4338
    %4669 = vmatpush.bf16.msra.mxu0 %v4334
    %4670 = vmatpush.bf16.msra.mxu0 %v4330
    %4671 = vmatpush.bf16.msra.mxu0 %v4326
    %4672 = vmatpush.bf16.msra.mxu0 %v4322
    %4673 = vmatpush.bf16.msra.mxu0 %v4318
    %4674 = vmatmul.bf16.gmra.mxu0 %v3472
    %v4675 = vpop.f32.mrf.mxu0
    %v4676 = vadd.f32 %v4662, %v4675
    %v4677 = vpop.f32.mrf.mxu0
    %v4678 = vadd.f32 %v4664, %v4677
    %4679 = vdwg.mxu0
    %4680 = vmatpush.bf16.msra.mxu0 %v4378
    %4681 = vmatpush.bf16.msra.mxu0 %v4374
    %4682 = vmatpush.bf16.msra.mxu0 %v4370
    %4683 = vmatpush.bf16.msra.mxu0 %v4366
    %4684 = vmatpush.bf16.msra.mxu0 %v4362
    %4685 = vmatpush.bf16.msra.mxu0 %v4358
    %4686 = vmatpush.bf16.msra.mxu0 %v4354
    %4687 = vmatpush.bf16.msra.mxu0 %v4350
    %4688 = vmatmul.bf16.gmra.mxu0 %v3473
    %v4689 = vpop.f32.mrf.mxu0
    %v4690 = vadd.f32 %v4676, %v4689
    %v4691 = vpop.f32.mrf.mxu0
    %v4692 = vadd.f32 %v4678, %v4691
    %4693 = vdwg.mxu0
    %4694 = vmatpush.bf16.msra.mxu0 %v4410
    %4695 = vmatpush.bf16.msra.mxu0 %v4406
    %4696 = vmatpush.bf16.msra.mxu0 %v4402
    %4697 = vmatpush.bf16.msra.mxu0 %v4398
    %4698 = vmatpush.bf16.msra.mxu0 %v4394
    %4699 = vmatpush.bf16.msra.mxu0 %v4390
    %4700 = vmatpush.bf16.msra.mxu0 %v4386
    %4701 = vmatpush.bf16.msra.mxu0 %v4382
    %4702 = vmatmul.bf16.gmra.mxu0 %v3474
    %v4703 = vpop.f32.mrf.mxu0
    %v4704 = vadd.f32 %v4690, %v4703
    %v4705 = vpop.f32.mrf.mxu0
    %v4706 = vadd.f32 %v4692, %v4705
    %4707 = vdwg.mxu0
    %4708 = vmatpush.bf16.msra.mxu0 %v4442
    %4709 = vmatpush.bf16.msra.mxu0 %v4438
    %4710 = vmatpush.bf16.msra.mxu0 %v4434
    %4711 = vmatpush.bf16.msra.mxu0 %v4430
    %4712 = vmatpush.bf16.msra.mxu0 %v4426
    %4713 = vmatpush.bf16.msra.mxu0 %v4422
    %4714 = vmatpush.bf16.msra.mxu0 %v4418
    %4715 = vmatpush.bf16.msra.mxu0 %v4414
    %4716 = vmatmul.bf16.gmra.mxu0 %v3475
    %v4717 = vpop.f32.mrf.mxu0
    %v4718 = vadd.f32 %v4704, %v4717
    %v4719 = vpop.f32.mrf.mxu0
    %v4720 = vadd.f32 %v4706, %v4719
    %4721 = vdwg.mxu0
    %4722 = vmatpush.bf16.msra.mxu0 %v4283
    %4723 = vmatpush.bf16.msra.mxu0 %v4279
    %4724 = vmatpush.bf16.msra.mxu0 %v4275
    %4725 = vmatpush.bf16.msra.mxu0 %v4271
    %4726 = vmatpush.bf16.msra.mxu0 %v4267
    %4727 = vmatpush.bf16.msra.mxu0 %v4263
    %4728 = vmatpush.bf16.msra.mxu0 %v4259
    %4729 = vmatpush.bf16.msra.mxu0 %v4255
    %4730 = vmatmul.bf16.gmra.mxu0 %v3470
    %v4731 = vpop.f32.mrf.mxu0
    %v4732 = vadd.f32 %v3671, %v4731
    %v4733 = vpop.f32.mrf.mxu0
    %v4734 = vadd.f32 %v3671, %v4733
    %4735 = vdwg.mxu0
    %4736 = vmatpush.bf16.msra.mxu0 %v4315
    %4737 = vmatpush.bf16.msra.mxu0 %v4311
    %4738 = vmatpush.bf16.msra.mxu0 %v4307
    %4739 = vmatpush.bf16.msra.mxu0 %v4303
    %4740 = vmatpush.bf16.msra.mxu0 %v4299
    %4741 = vmatpush.bf16.msra.mxu0 %v4295
    %4742 = vmatpush.bf16.msra.mxu0 %v4291
    %4743 = vmatpush.bf16.msra.mxu0 %v4287
    %4744 = vmatmul.bf16.gmra.mxu0 %v3471
    %v4745 = vpop.f32.mrf.mxu0
    %v4746 = vadd.f32 %v4732, %v4745
    %v4747 = vpop.f32.mrf.mxu0
    %v4748 = vadd.f32 %v4734, %v4747
    %4749 = vdwg.mxu0
    %4750 = vmatpush.bf16.msra.mxu0 %v4347
    %4751 = vmatpush.bf16.msra.mxu0 %v4343
    %4752 = vmatpush.bf16.msra.mxu0 %v4339
    %4753 = vmatpush.bf16.msra.mxu0 %v4335
    %4754 = vmatpush.bf16.msra.mxu0 %v4331
    %4755 = vmatpush.bf16.msra.mxu0 %v4327
    %4756 = vmatpush.bf16.msra.mxu0 %v4323
    %4757 = vmatpush.bf16.msra.mxu0 %v4319
    %4758 = vmatmul.bf16.gmra.mxu0 %v3472
    %v4759 = vpop.f32.mrf.mxu0
    %v4760 = vadd.f32 %v4746, %v4759
    %v4761 = vpop.f32.mrf.mxu0
    %v4762 = vadd.f32 %v4748, %v4761
    %4763 = vdwg.mxu0
    %4764 = vmatpush.bf16.msra.mxu0 %v4379
    %4765 = vmatpush.bf16.msra.mxu0 %v4375
    %4766 = vmatpush.bf16.msra.mxu0 %v4371
    %4767 = vmatpush.bf16.msra.mxu0 %v4367
    %4768 = vmatpush.bf16.msra.mxu0 %v4363
    %4769 = vmatpush.bf16.msra.mxu0 %v4359
    %4770 = vmatpush.bf16.msra.mxu0 %v4355
    %4771 = vmatpush.bf16.msra.mxu0 %v4351
    %4772 = vmatmul.bf16.gmra.mxu0 %v3473
    %v4773 = vpop.f32.mrf.mxu0
    %v4774 = vadd.f32 %v4760, %v4773
    %v4775 = vpop.f32.mrf.mxu0
    %v4776 = vadd.f32 %v4762, %v4775
    %4777 = vdwg.mxu0
    %4778 = vmatpush.bf16.msra.mxu0 %v4411
    %4779 = vmatpush.bf16.msra.mxu0 %v4407
    %4780 = vmatpush.bf16.msra.mxu0 %v4403
    %4781 = vmatpush.bf16.msra.mxu0 %v4399
    %4782 = vmatpush.bf16.msra.mxu0 %v4395
    %4783 = vmatpush.bf16.msra.mxu0 %v4391
    %4784 = vmatpush.bf16.msra.mxu0 %v4387
    %4785 = vmatpush.bf16.msra.mxu0 %v4383
    %4786 = vmatmul.bf16.gmra.mxu0 %v3474
    %v4787 = vpop.f32.mrf.mxu0
    %v4788 = vadd.f32 %v4774, %v4787
    %v4789 = vpop.f32.mrf.mxu0
    %v4790 = vadd.f32 %v4776, %v4789
    %4791 = vdwg.mxu0
    %4792 = vmatpush.bf16.msra.mxu0 %v4443
    %4793 = vmatpush.bf16.msra.mxu0 %v4439
    %4794 = vmatpush.bf16.msra.mxu0 %v4435
    %4795 = vmatpush.bf16.msra.mxu0 %v4431
    %4796 = vmatpush.bf16.msra.mxu0 %v4427
    %4797 = vmatpush.bf16.msra.mxu0 %v4423
    %4798 = vmatpush.bf16.msra.mxu0 %v4419
    %4799 = vmatpush.bf16.msra.mxu0 %v4415
    %4800 = vmatmul.bf16.gmra.mxu0 %v3475
    %v4801 = vpop.f32.mrf.mxu0
    %v4802 = vadd.f32 %v4788, %v4801
    %v4803 = vpop.f32.mrf.mxu0
    %v4804 = vadd.f32 %v4790, %v4803
    %4805 = vdwg.mxu0
    %4806 = vmatpush.bf16.msra.mxu0 %v4284
    %4807 = vmatpush.bf16.msra.mxu0 %v4280
    %4808 = vmatpush.bf16.msra.mxu0 %v4276
    %4809 = vmatpush.bf16.msra.mxu0 %v4272
    %4810 = vmatpush.bf16.msra.mxu0 %v4268
    %4811 = vmatpush.bf16.msra.mxu0 %v4264
    %4812 = vmatpush.bf16.msra.mxu0 %v4260
    %4813 = vmatpush.bf16.msra.mxu0 %v4256
    %4814 = vmatmul.bf16.gmra.mxu0 %v3470
    %v4815 = vpop.f32.mrf.mxu0
    %v4816 = vadd.f32 %v3672, %v4815
    %v4817 = vpop.f32.mrf.mxu0
    %v4818 = vadd.f32 %v3672, %v4817
    %4819 = vdwg.mxu0
    %4820 = vmatpush.bf16.msra.mxu0 %v4316
    %4821 = vmatpush.bf16.msra.mxu0 %v4312
    %4822 = vmatpush.bf16.msra.mxu0 %v4308
    %4823 = vmatpush.bf16.msra.mxu0 %v4304
    %4824 = vmatpush.bf16.msra.mxu0 %v4300
    %4825 = vmatpush.bf16.msra.mxu0 %v4296
    %4826 = vmatpush.bf16.msra.mxu0 %v4292
    %4827 = vmatpush.bf16.msra.mxu0 %v4288
    %4828 = vmatmul.bf16.gmra.mxu0 %v3471
    %v4829 = vpop.f32.mrf.mxu0
    %v4830 = vadd.f32 %v4816, %v4829
    %v4831 = vpop.f32.mrf.mxu0
    %v4832 = vadd.f32 %v4818, %v4831
    %4833 = vdwg.mxu0
    %4834 = vmatpush.bf16.msra.mxu0 %v4348
    %4835 = vmatpush.bf16.msra.mxu0 %v4344
    %4836 = vmatpush.bf16.msra.mxu0 %v4340
    %4837 = vmatpush.bf16.msra.mxu0 %v4336
    %4838 = vmatpush.bf16.msra.mxu0 %v4332
    %4839 = vmatpush.bf16.msra.mxu0 %v4328
    %4840 = vmatpush.bf16.msra.mxu0 %v4324
    %4841 = vmatpush.bf16.msra.mxu0 %v4320
    %4842 = vmatmul.bf16.gmra.mxu0 %v3472
    %v4843 = vpop.f32.mrf.mxu0
    %v4844 = vadd.f32 %v4830, %v4843
    %v4845 = vpop.f32.mrf.mxu0
    %v4846 = vadd.f32 %v4832, %v4845
    %4847 = vdwg.mxu0
    %4848 = vmatpush.bf16.msra.mxu0 %v4380
    %4849 = vmatpush.bf16.msra.mxu0 %v4376
    %4850 = vmatpush.bf16.msra.mxu0 %v4372
    %4851 = vmatpush.bf16.msra.mxu0 %v4368
    %4852 = vmatpush.bf16.msra.mxu0 %v4364
    %4853 = vmatpush.bf16.msra.mxu0 %v4360
    %4854 = vmatpush.bf16.msra.mxu0 %v4356
    %4855 = vmatpush.bf16.msra.mxu0 %v4352
    %4856 = vmatmul.bf16.gmra.mxu0 %v3473
    %v4857 = vpop.f32.mrf.mxu0
    %v4858 = vadd.f32 %v4844, %v4857
    %v4859 = vpop.f32.mrf.mxu0
    %v4860 = vadd.f32 %v4846, %v4859
    %4861 = vdwg.mxu0
    %4862 = vmatpush.bf16.msra.mxu0 %v4412
    %4863 = vmatpush.bf16.msra.mxu0 %v4408
    %4864 = vmatpush.bf16.msra.mxu0 %v4404
    %4865 = vmatpush.bf16.msra.mxu0 %v4400
    %4866 = vmatpush.bf16.msra.mxu0 %v4396
    %4867 = vmatpush.bf16.msra.mxu0 %v4392
    %4868 = vmatpush.bf16.msra.mxu0 %v4388
    %4869 = vmatpush.bf16.msra.mxu0 %v4384
    %4870 = vmatmul.bf16.gmra.mxu0 %v3474
    %v4871 = vpop.f32.mrf.mxu0
    %v4872 = vadd.f32 %v4858, %v4871
    %v4873 = vpop.f32.mrf.mxu0
    %v4874 = vadd.f32 %v4860, %v4873
    %4875 = vdwg.mxu0
    %4876 = vmatpush.bf16.msra.mxu0 %v4444
    %4877 = vmatpush.bf16.msra.mxu0 %v4440
    %4878 = vmatpush.bf16.msra.mxu0 %v4436
    %4879 = vmatpush.bf16.msra.mxu0 %v4432
    %4880 = vmatpush.bf16.msra.mxu0 %v4428
    %4881 = vmatpush.bf16.msra.mxu0 %v4424
    %4882 = vmatpush.bf16.msra.mxu0 %v4420
    %4883 = vmatpush.bf16.msra.mxu0 %v4416
    %4884 = vmatmul.bf16.gmra.mxu0 %v3475
    %v4885 = vpop.f32.mrf.mxu0
    %v4886 = vadd.f32 %v4872, %v4885
    %v4887 = vpop.f32.mrf.mxu0
    %v4888 = vadd.f32 %v4874, %v4887
    %4889 = vdwg.mxu0
    %4890 = vmatpush.bf16.msra.mxu0 %v4285
    %4891 = vmatpush.bf16.msra.mxu0 %v4281
    %4892 = vmatpush.bf16.msra.mxu0 %v4277
    %4893 = vmatpush.bf16.msra.mxu0 %v4273
    %4894 = vmatpush.bf16.msra.mxu0 %v4269
    %4895 = vmatpush.bf16.msra.mxu0 %v4265
    %4896 = vmatpush.bf16.msra.mxu0 %v4261
    %4897 = vmatpush.bf16.msra.mxu0 %v4257
    %4898 = vmatmul.bf16.gmra.mxu0 %v3470
    %v4899 = vpop.f32.mrf.mxu0
    %v4900 = vadd.f32 %v3673, %v4899
    %v4901 = vpop.f32.mrf.mxu0
    %v4902 = vadd.f32 %v3673, %v4901
    %4903 = vdwg.mxu0
    %4904 = vmatpush.bf16.msra.mxu0 %v4317
    %4905 = vmatpush.bf16.msra.mxu0 %v4313
    %4906 = vmatpush.bf16.msra.mxu0 %v4309
    %4907 = vmatpush.bf16.msra.mxu0 %v4305
    %4908 = vmatpush.bf16.msra.mxu0 %v4301
    %4909 = vmatpush.bf16.msra.mxu0 %v4297
    %4910 = vmatpush.bf16.msra.mxu0 %v4293
    %4911 = vmatpush.bf16.msra.mxu0 %v4289
    %4912 = vmatmul.bf16.gmra.mxu0 %v3471
    %v4913 = vpop.f32.mrf.mxu0
    %v4914 = vadd.f32 %v4900, %v4913
    %v4915 = vpop.f32.mrf.mxu0
    %v4916 = vadd.f32 %v4902, %v4915
    %4917 = vdwg.mxu0
    %4918 = vmatpush.bf16.msra.mxu0 %v4349
    %4919 = vmatpush.bf16.msra.mxu0 %v4345
    %4920 = vmatpush.bf16.msra.mxu0 %v4341
    %4921 = vmatpush.bf16.msra.mxu0 %v4337
    %4922 = vmatpush.bf16.msra.mxu0 %v4333
    %4923 = vmatpush.bf16.msra.mxu0 %v4329
    %4924 = vmatpush.bf16.msra.mxu0 %v4325
    %4925 = vmatpush.bf16.msra.mxu0 %v4321
    %4926 = vmatmul.bf16.gmra.mxu0 %v3472
    %v4927 = vpop.f32.mrf.mxu0
    %v4928 = vadd.f32 %v4914, %v4927
    %v4929 = vpop.f32.mrf.mxu0
    %v4930 = vadd.f32 %v4916, %v4929
    %4931 = vdwg.mxu0
    %4932 = vmatpush.bf16.msra.mxu0 %v4381
    %4933 = vmatpush.bf16.msra.mxu0 %v4377
    %4934 = vmatpush.bf16.msra.mxu0 %v4373
    %4935 = vmatpush.bf16.msra.mxu0 %v4369
    %4936 = vmatpush.bf16.msra.mxu0 %v4365
    %4937 = vmatpush.bf16.msra.mxu0 %v4361
    %4938 = vmatpush.bf16.msra.mxu0 %v4357
    %4939 = vmatpush.bf16.msra.mxu0 %v4353
    %4940 = vmatmul.bf16.gmra.mxu0 %v3473
    %v4941 = vpop.f32.mrf.mxu0
    %v4942 = vadd.f32 %v4928, %v4941
    %v4943 = vpop.f32.mrf.mxu0
    %v4944 = vadd.f32 %v4930, %v4943
    %4945 = vdwg.mxu0
    %4946 = vmatpush.bf16.msra.mxu0 %v4413
    %4947 = vmatpush.bf16.msra.mxu0 %v4409
    %4948 = vmatpush.bf16.msra.mxu0 %v4405
    %4949 = vmatpush.bf16.msra.mxu0 %v4401
    %4950 = vmatpush.bf16.msra.mxu0 %v4397
    %4951 = vmatpush.bf16.msra.mxu0 %v4393
    %4952 = vmatpush.bf16.msra.mxu0 %v4389
    %4953 = vmatpush.bf16.msra.mxu0 %v4385
    %4954 = vmatmul.bf16.gmra.mxu0 %v3474
    %v4955 = vpop.f32.mrf.mxu0
    %v4956 = vadd.f32 %v4942, %v4955
    %v4957 = vpop.f32.mrf.mxu0
    %v4958 = vadd.f32 %v4944, %v4957
    %4959 = vdwg.mxu0
    %4960 = vmatpush.bf16.msra.mxu0 %v4445
    %4961 = vmatpush.bf16.msra.mxu0 %v4441
    %4962 = vmatpush.bf16.msra.mxu0 %v4437
    %4963 = vmatpush.bf16.msra.mxu0 %v4433
    %4964 = vmatpush.bf16.msra.mxu0 %v4429
    %4965 = vmatpush.bf16.msra.mxu0 %v4425
    %4966 = vmatpush.bf16.msra.mxu0 %v4421
    %4967 = vmatpush.bf16.msra.mxu0 %v4417
    %4968 = vmatmul.bf16.gmra.mxu0 %v3475
    %v4969 = vpop.f32.mrf.mxu0
    %v4970 = vadd.f32 %v4956, %v4969
    %v4971 = vpop.f32.mrf.mxu0
    %v4972 = vadd.f32 %v4958, %v4971
    %4973 = vdwg.mxu0
    %4974 = vst [vmem:[%s7] sm:$0xff] %v4718
    %4975 = vst [vmem:[%s7 + $0x8] sm:$0xff] %v4802
    %4976 = vst [vmem:[%s7 + $0x10] sm:$0xff] %v4886
    %4977 = vst [vmem:[%s7 + $0x18] sm:$0xff] %v4970
    %4978 = vst [vmem:[%s7 + $0x20] sm:$0xff] %v4720
    %4979 = vst [vmem:[%s7 + $0x28] sm:$0xff] %v4804
    %4980 = vst [vmem:[%s7 + $0x30] sm:$0xff] %v4888
    %4981 = vst [vmem:[%s7 + $0x38] sm:$0xff] %v4972
    // Predicated region
    $region54: #{res_tcn_driving_global_forward.3} parent=1 // pred_check
      _
    $region55: #{res_tcn_driving_global_forward.3} parent=1 // pred_check_branch
      %4983 = sbr.rel (0) target = $region57
    $region56: #{res_tcn_driving_global_forward.3} parent=1 // pred_region
      _
    $region57: #{res_tcn_driving_global_forward.3} parent=1 // pred_fallthru
      _
    // Predicated region
    $region58: #{res_tcn_driving_global_forward.3} parent=1 // pred_check
      _
    $region59: #{res_tcn_driving_global_forward.3} parent=1 // pred_check_branch
      %4985 = sbr.rel (0) target = $region61
    $region60: #{res_tcn_driving_global_forward.3} parent=1 // pred_region
      _
    $region61: #{res_tcn_driving_global_forward.3} parent=1 // pred_fallthru
      _
    %4986 = vsyncpa [#allocation3], 1
    %4987 = vsyncpa [#allocation5], 1
    %4988 = vsyncpa [#allocation8], 1
    %4989 = vsyncpa [#allocation11], 1

</llo_original>
